<compile_context>
chip_gen: v6e
topology: v6e:2x2x1
jax: 0.10.0
libtpu: 0.0.40
codegen_flags: <defaults>
</compile_context>

<pallas_src>
import functools
import math

import jax
import jax.numpy as jnp
from jax.experimental import pallas as pl
from jax.experimental.pallas import tpu as pltpu

LN_EPS = 1e-5            # torch.nn.LayerNorm default
_F32 = jnp.float32
_BF16 = jnp.bfloat16


def _layer_norm(x, g, b):
    # x: (L, D) f32, g/b: (1, D) f32  (biased variance, like torch)
    m = jnp.mean(x, axis=-1, keepdims=True)
    c = x - m
    v = jnp.mean(c * c, axis=-1, keepdims=True)
    return c * jax.lax.rsqrt(v + LN_EPS) * g + b


def _split_heads(x, n_head, dh):
    # (L, D) -> (H, L, dh) via static lane slices + leading-axis stack (safe lowering).
    return jnp.stack([x[:, h * dh:(h + 1) * dh] for h in range(n_head)], axis=0)


def _mha_single(q, k, v, bias, wo3_ref, bo, n_head, want_attn):
    """Multi-head attention for ONE batch element.

    q: (Lq, D) f32, k/v: (Lk, D) f32 (projection biases already added),
    bias: (1, Lk) or (Lq, Lk) f32 additive mask,
    wo3_ref: (H, dh, D) bf16 output-projection weights (head-major), bo: (1, D) f32.
    Returns (out (Lq, D) f32, head-averaged attn (Lq, Lk) f32 or None)."""
    D = q.shape[-1]
    dh = D // n_head
    scale = 1.0 / math.sqrt(dh)

    # Cast before the split so the relayout moves half the bytes.
    q3 = _split_heads(q.astype(_BF16), n_head, dh)            # (H, Lq, dh)
    k3 = _split_heads(k.astype(_BF16), n_head, dh)            # (H, Lk, dh)
    v3 = _split_heads(v.astype(_BF16), n_head, dh)            # (H, Lk, dh)

    s = jnp.einsum('hqd,hkd->hqk', q3, k3,
                   preferred_element_type=_F32) * scale       # (H, Lq, Lk)
    s = s + bias[None]
    s = s - jnp.max(s, axis=-1, keepdims=True)
    e = jnp.exp(s)
    p = e / jnp.sum(e, axis=-1, keepdims=True)                # exact softmax (f32)

    ctx = jnp.einsum('hqk,hkd->hqd', p.astype(_BF16), v3,
                     preferred_element_type=_F32)             # (H, Lq, dh)
    # Head merge folded into the output projection: sum_h ctx[h] @ wo[h] == concat(ctx) @ wo.
    out = bo
    for h in range(n_head):
        out = out + jnp.dot(ctx[h].astype(_BF16), wo3_ref[h],
                            preferred_element_type=_F32)      # (Lq, D)
    attn = jnp.mean(p, axis=0) if want_attn else None
    return out, attn


# ---------------------------------------------------------------------------
# Fused per-layer kernel: cross-attn + residual, MLP + residual, parse self-attn
# + residual, for one batch TILE (bt elements) per grid step.
# ---------------------------------------------------------------------------
def _hoi_layer_kernel(hoi_ref, img_ref, kp_bias_ref, parse_bias_ref, prompt_kv_ref,
                      ln_ref,
                      c_wq_ref, c_wkv_ref, c_wo3_ref, c_b_ref,
                      p_wq_ref, p_wkv_ref, p_wo3_ref, p_b_ref,
                      w1_ref, b1_ref, w2_ref, b2_ref,
                      out_ref, attn_ref=None, *, n_head, return_attn, bt):
    L_hoi, D = hoi_ref.shape[1], hoi_ref.shape[2]
    L_img = img_ref.shape[1]

    # Flatten the batch tile so projections / MLP run with M = bt*L rows (MXU M-fill).
    if bt > 1:
        hoi2 = jnp.concatenate([hoi_ref[b] for b in range(bt)], axis=0)     # (bt*L_hoi, D)
        img2 = jnp.concatenate([img_ref[b] for b in range(bt)], axis=0)     # (bt*L_img, D)
    else:
        hoi2 = hoi_ref[0]
        img2 = img_ref[0]
    img2 = img2.astype(_F32)                       # bf16 stream -> f32 for LayerNorm

    ln = ln_ref[...]                               # (6, D): ln1_g, ln1_b, ln2_g, ln2_b, lnp_g, lnp_b
    cb = c_b_ref[...]                              # (4, D): [bq, bk, bv, bo] (cross attn)
    pb = p_b_ref[...]                              # (4, D): [bq, bk, bv, bo] (parse attn)

    # ----- [HOI] x [PATCH] cross-attention (ln_1 on both query and key/value sides) -----
    q_in = _layer_norm(hoi2, ln[0:1], ln[1:2])
    kv_in = _layer_norm(img2, ln[0:1], ln[1:2])
    q2 = jnp.dot(q_in.astype(_BF16), c_wq_ref[...],
                 preferred_element_type=_F32) + cb[0:1]                     # (bt*L_hoi, D)
    kv2 = jnp.dot(kv_in.astype(_BF16), c_wkv_ref[...],
                  preferred_element_type=_F32)                              # (bt*L_img, 2D)
    k2 = kv2[:, :D] + cb[1:2]
    v2 = kv2[:, D:] + cb[2:3]

    y_parts = []
    for b in range(bt):
        y_b, attn_b = _mha_single(
            q2[b * L_hoi:(b + 1) * L_hoi],
            k2[b * L_img:(b + 1) * L_img],
            v2[b * L_img:(b + 1) * L_img],
            kp_bias_ref[b],                        # (1, L_img) additive key-padding bias
            c_wo3_ref, cb[3:4], n_head, return_attn)
        y_parts.append(y_b)
        if return_attn:
            attn_ref[b] = attn_b.astype(attn_ref.dtype)
    hoi2 = hoi2 + (jnp.concatenate(y_parts, axis=0) if bt > 1 else y_parts[0])  # dropout1 == id

    # ----- MLP (ln_2 -> c_fc -> QuickGELU -> c_proj) -----
    xn = _layer_norm(hoi2, ln[2:3], ln[3:4])
    h = jnp.dot(xn.astype(_BF16), w1_ref[...], preferred_element_type=_F32) + b1_ref[...]
    h = h * jax.nn.sigmoid(1.702 * h)              # QuickGELU
    hoi2 = hoi2 + jnp.dot(h.astype(_BF16), w2_ref[...],
                          preferred_element_type=_F32) + b2_ref[...]        # dropout2 == id

    # ----- [HOI] x [HOI + prompt] sequential-parsing self-attention (hoi_ln1) -----
    # Queries restricted to the HOI rows (prompt-row outputs are discarded by the module).
    # Prompt-row K/V are batch-invariant and precomputed in the wrapper (prompt_kv_ref).
    hoi_n = _layer_norm(hoi2, ln[4:5], ln[5:6])
    q2p = jnp.dot(hoi_n.astype(_BF16), p_wq_ref[...],
                  preferred_element_type=_F32) + pb[0:1]                    # (bt*L_hoi, D)
    kv2p = jnp.dot(hoi_n.astype(_BF16), p_wkv_ref[...],
                   preferred_element_type=_F32)                             # (bt*L_hoi, 2D)
    k2p = kv2p[:, :D] + pb[1:2]
    v2p = kv2p[:, D:] + pb[2:3]
    pk = prompt_kv_ref[0]                          # (P, D) precomputed prompt keys
    pv = prompt_kv_ref[1]                          # (P, D) precomputed prompt values

    y2_parts = []
    for b in range(bt):
        k_full = jnp.concatenate([k2p[b * L_hoi:(b + 1) * L_hoi], pk], axis=0)
        v_full = jnp.concatenate([v2p[b * L_hoi:(b + 1) * L_hoi], pv], axis=0)
        y2_b, _ = _mha_single(q2p[b * L_hoi:(b + 1) * L_hoi], k_full, v_full,
                              parse_bias_ref[...], p_wo3_ref, pb[3:4], n_head, False)
        y2_parts.append(y2_b)
    hoi2 = hoi2 + (jnp.concatenate(y2_parts, axis=0) if bt > 1 else y2_parts[0])  # dropout3 == id

    for b in range(bt):
        out_ref[b] = hoi2[b * L_hoi:(b + 1) * L_hoi].astype(out_ref.dtype)


def _choose_bt(B, max_bt):
    for bt in range(min(B, max_bt), 0, -1):
        if B % bt == 0:
            return bt
    return 1


def _vmem_limit_bytes():
    # v5e / v6e have 128 MiB physical VMEM per TensorCore; v7x has 64 MiB.
    try:
        kind = jax.devices()[0].device_kind.lower()
    except Exception:
        kind = ""
    if "v7" in kind:
        return 48 * 1024 * 1024
    if ("v5" in kind) or ("v6" in kind):
        return 100 * 1024 * 1024
    return 48 * 1024 * 1024


def hoi_layer(hoi_b, img_b, kp_bias, parse_bias, prompt_kv, params, n_head,
              return_attn, bt):
    """One HOIResidualAttentionBlock.
    hoi_b: (B, L_hoi, D) f32, img_b: (B, L_img, D) bf16,
    kp_bias: (B, 1, L_img) f32 additive key-padding bias,
    parse_bias: (L_hoi, L_hoi+P) f32, prompt_kv: (2, P, D) f32 precomputed prompt K/V."""
    B, L_hoi, D = hoi_b.shape
    L_img = img_b.shape[1]
    L_kv = parse_bias.shape[1]
    P = prompt_kv.shape[1]
    H4 = params['mlp']['w1'].shape[1]
    dh = D // n_head
    n_tiles = B // bt

    # Head-major output-projection weights (free reshape in XLA).
    wo3_c = params['cross']['wo'].reshape(n_head, dh, D)
    wo3_p = params['parse']['wo'].reshape(n_head, dh, D)

    batch3 = lambda i: (i, 0, 0)

    def const_spec(shape):
        # Constant-index blocks never change across the grid: single-buffer them so the
        # weight set is not double-buffered in VMEM (matters most on v7x's 64 MiB VMEM).
        nmap = {2: (lambda i: (0, 0)), 3: (lambda i: (0, 0, 0))}[len(shape)]
        return pl.BlockSpec(shape, nmap, pipeline_mode=pl.Buffered(1))

    in_specs = [
        pl.BlockSpec((bt, L_hoi, D), batch3),                  # hoi residual (f32)
        pl.BlockSpec((bt, L_img, D), batch3),                  # image (bf16 stream)
        pl.BlockSpec((bt, 1, L_img), batch3),                  # key-padding bias
        const_spec((L_hoi, L_kv)),                             # parse mask rows
        const_spec((2, P, D)),                                 # prompt K/V (precomputed)
        const_spec((6, D)),                                    # packed LN params
        const_spec((D, D)), const_spec((D, 2 * D)),
        const_spec((n_head, dh, D)), const_spec((4, D)),       # cross-attn weights
        const_spec((D, D)), const_spec((D, 2 * D)),
        const_spec((n_head, dh, D)), const_spec((4, D)),       # parse-attn weights
        const_spec((D, H4)), const_spec((1, H4)),              # c_fc
        const_spec((H4, D)), const_spec((1, D)),               # c_proj
    ]
    out_shape = [jax.ShapeDtypeStruct((B, L_hoi, D), jnp.float32)]
    out_specs = [pl.BlockSpec((bt, L_hoi, D), batch3)]
    if return_attn:
        out_shape.append(jax.ShapeDtypeStruct((B, L_hoi, L_img), jnp.float32))
        out_specs.append(pl.BlockSpec((bt, L_hoi, L_img), batch3))

    kern = functools.partial(_hoi_layer_kernel, n_head=n_head,
                             return_attn=return_attn, bt=bt)
    res = pl.pallas_call(
        kern,
        out_shape=tuple(out_shape),
        grid=(n_tiles,),
        in_specs=in_specs,
        out_specs=tuple(out_specs),
        compiler_params=pltpu.CompilerParams(
            dimension_semantics=("parallel",),
            vmem_limit_bytes=_vmem_limit_bytes()),
    )(hoi_b, img_b, kp_bias, parse_bias, prompt_kv,
      params['ln'],
      params['cross']['wq'], params['cross']['wkv'], wo3_c, params['cross']['b'],
      params['parse']['wq'], params['parse']['wkv'], wo3_p, params['parse']['b'],
      params['mlp']['w1'], params['mlp']['b1'], params['mlp']['w2'], params['mlp']['b2'])
    out = res[0]
    attn = res[1] if return_attn else None
    return out, attn


# ---------------------------------------------------------------------------
# Parameter init (deterministic, synthetic) and forward pass.
# ---------------------------------------------------------------------------
def _init_attn(keys, D):
    std = 0.02
    wq = (std * jax.random.normal(keys[0], (D, D))).astype(_BF16)
    wk = std * jax.random.normal(keys[1], (D, D))
    wv = std * jax.random.normal(keys[2], (D, D))
    wkv = jnp.concatenate([wk, wv], axis=1).astype(_BF16)              # (D, 2D)
    wo = (std * jax.random.normal(keys[3], (D, D))).astype(_BF16)
    return {'wq': wq, 'wkv': wkv, 'wo': wo,
            'b': jnp.zeros((4, D), jnp.float32)}                       # [bq, bk, bv, bo]


def init_block_params(key, D):
    ks = jax.random.split(key, 10)
    ones = jnp.ones((D,), jnp.float32)
    zeros = jnp.zeros((D,), jnp.float32)
    # rows: [ln_1.g, ln_1.b, ln_2.g, ln_2.b, hoi_ln1.g, hoi_ln1.b]
    ln = jnp.stack([ones, zeros, ones, zeros, ones, zeros], axis=0)
    return {
        'ln': ln,
        'cross': _init_attn(ks[0:4], D),
        'parse': _init_attn(ks[4:8], D),
        'mlp': {'w1': (0.02 * jax.random.normal(ks[8], (D, 4 * D))).astype(_BF16),
                'b1': jnp.zeros((1, 4 * D), jnp.float32),
                'w2': (0.02 * jax.random.normal(ks[9], (4 * D, D))).astype(_BF16),
                'b2': jnp.zeros((1, D), jnp.float32)},
    }


def hoi_transformer_forward(layer_params, image, hoi, mask, prompt_hint,
                            parse_attn_mask, n_head, max_batch_tile=4):
    """image: (L_img, B, D), hoi: (L_hoi, B, D), mask: (B, L_img) bool or None,
    prompt_hint: (P, D) with P >= 1, parse_attn_mask: (1+L_hoi+P, 1+L_hoi+P) additive."""
    L_img, B, D = image.shape
    L_hoi = hoi.shape[0]
    P = prompt_hint.shape[0]
    # TODO(synk): prompt_hint with P == 0 (the PyTorch default torch.zeros(0, 768)) is not
    # supported by the fused kernel; pass at least one prompt token.
    assert P >= 1

    if mask is None:
        kp_bias = jnp.zeros((B, 1, L_img), jnp.float32)
    else:
        kp_bias = jnp.where(mask, -1e9, 0.0).astype(jnp.float32)[:, None, :]
    # parse_attn_mask[1:, 1:] as in the module; only the HOI query rows are needed.
    parse_bias = parse_attn_mask[1:1 + L_hoi, 1:].astype(jnp.float32)  # (L_hoi, L_hoi+P)

    # Image is re-streamed every layer / grid step -> ship it as bf16 (it feeds the MXU as
    # bf16 anyway); the HOI residual stream stays f32.
    img_b = jnp.transpose(image, (1, 0, 2)).astype(_BF16)              # (B, L_img, D)
    hoi_b = jnp.transpose(hoi, (1, 0, 2)).astype(jnp.float32)          # (B, L_hoi, D)
    prompt = prompt_hint.astype(jnp.float32)

    bt = _choose_bt(B, max_batch_tile)

    attn_map = None
    n_layers = len(layer_params)
    for li, p in enumerate(layer_params):
        # Prompt rows of the parse-attention K/V are batch-invariant: compute them once
        # per layer here (plain XLA matmul, identical math to the in-kernel projection).
        ln = p['ln']
        pb = p['parse']['b']
        pr_n = _layer_norm(prompt, ln[4:5], ln[5:6])
        pr_kv = jnp.dot(pr_n.astype(_BF16), p['parse']['wkv'],
                        preferred_element_type=_F32)                   # (P, 2D)
        prompt_kv = jnp.stack([pr_kv[:, :D] + pb[1:2], pr_kv[:, D:] + pb[2:3]], axis=0)

        # Only the last layer's cross-attention map is returned by the module.
        want_attn = (li == n_layers - 1)
        hoi_b, attn = hoi_layer(hoi_b, img_b, kp_bias, parse_bias, prompt_kv,
                                p, n_head, want_attn, bt)
        if want_attn:
            attn_map = attn
    hoi_out = jnp.transpose(hoi_b, (1, 0, 2))                          # back to (L, B, D)
    return image, hoi_out, attn_map


if __name__ == "__main__":
    # Small shapes consistent with the module's forward.
    D, HEADS, LAYERS = 32, 4, 2
    B, L_IMG, L_HOI, P = 2, 16, 8, 4

    key = jax.random.PRNGKey(0)
    k_img, k_hoi, k_prompt, k_params = jax.random.split(key, 4)

    image = jax.random.normal(k_img, (L_IMG, B, D), jnp.float32)
    hoi = jax.random.normal(k_hoi, (L_HOI, B, D), jnp.float32)
    prompt_hint = jax.random.normal(k_prompt, (P, D), jnp.float32)

    # key_padding_mask: True => ignore that image token (pad last 2 of batch 1)
    mask = jnp.zeros((B, L_IMG), jnp.bool_).at[1, -2:].set(True)

    # parse_attn_mask: causal-style additive float mask over (CLS + HOI + prompt)
    full_len = L_HOI + P + 1
    idx = jnp.arange(full_len)
    parse_attn_mask = jnp.where(idx[None, :] <= idx[:, None], 0.0, -1e9).astype(jnp.float32)

    layer_params = [init_block_params(k, D)
                    for k in jax.random.split(k_params, LAYERS)]

    fwd = jax.jit(functools.partial(hoi_transformer_forward, n_head=HEADS))
    image_out, hoi_out, attn_map = fwd(layer_params, image, hoi, mask,
                                       prompt_hint, parse_attn_mask)

    jax.block_until_ready((image_out, hoi_out, attn_map))
    assert image_out.shape == (L_IMG, B, D)
    assert hoi_out.shape == (L_HOI, B, D)
    assert attn_map.shape == (B, L_HOI, L_IMG)
    assert bool(jnp.all(jnp.isfinite(hoi_out)))
    assert bool(jnp.all(jnp.isfinite(attn_map)))
    print("KERNEL_OK")
</pallas_src>

<mosaic_0001>
module attributes {stable_mosaic.version = 11 : i64} {
  func.func @_hoi_layer_kernel(%arg0: i32, %arg1: memref<2x8x32xf32, #tpu.memory_space<vmem>>, %arg2: memref<2x16x32xbf16, #tpu.memory_space<vmem>>, %arg3: memref<2x1x16xf32, #tpu.memory_space<vmem>>, %arg4: memref<8x12xf32, #tpu.memory_space<vmem>>, %arg5: memref<2x4x32xf32, #tpu.memory_space<vmem>>, %arg6: memref<6x32xf32, #tpu.memory_space<vmem>>, %arg7: memref<32x32xbf16, #tpu.memory_space<vmem>>, %arg8: memref<32x64xbf16, #tpu.memory_space<vmem>>, %arg9: memref<4x8x32xbf16, #tpu.memory_space<vmem>>, %arg10: memref<4x32xf32, #tpu.memory_space<vmem>>, %arg11: memref<32x32xbf16, #tpu.memory_space<vmem>>, %arg12: memref<32x64xbf16, #tpu.memory_space<vmem>>, %arg13: memref<4x8x32xbf16, #tpu.memory_space<vmem>>, %arg14: memref<4x32xf32, #tpu.memory_space<vmem>>, %arg15: memref<32x128xbf16, #tpu.memory_space<vmem>>, %arg16: memref<1x128xf32, #tpu.memory_space<vmem>>, %arg17: memref<128x32xbf16, #tpu.memory_space<vmem>>, %arg18: memref<1x32xf32, #tpu.memory_space<vmem>>, %arg19: memref<2x8x32xf32, #tpu.memory_space<vmem>>) attributes {dimension_semantics = [#tpu.dimension_semantics<parallel>], iteration_bounds = array<i64: 1>, scalar_prefetch = 0 : i64, scratch_operands = 0 : i64, tpu.core_type = #tpu.core_type<tc>, window_params = [{transform_indices = @transform_0, window_bounds = array<i64: 2, 8, 32>}, {transform_indices = @transform_1, window_bounds = array<i64: 2, 16, 32>}, {transform_indices = @transform_2, window_bounds = array<i64: 2, 1, 16>}, {pipeline_mode = #tpu.pipeline_mode<synchronous>, transform_indices = @transform_3, window_bounds = array<i64: 8, 12>}, {pipeline_mode = #tpu.pipeline_mode<synchronous>, transform_indices = @transform_4, window_bounds = array<i64: 2, 4, 32>}, {pipeline_mode = #tpu.pipeline_mode<synchronous>, transform_indices = @transform_5, window_bounds = array<i64: 6, 32>}, {pipeline_mode = #tpu.pipeline_mode<synchronous>, transform_indices = @transform_6, window_bounds = array<i64: 32, 32>}, {pipeline_mode = #tpu.pipeline_mode<synchronous>, transform_indices = @transform_7, window_bounds = array<i64: 32, 64>}, {pipeline_mode = #tpu.pipeline_mode<synchronous>, transform_indices = @transform_8, window_bounds = array<i64: 4, 8, 32>}, {pipeline_mode = #tpu.pipeline_mode<synchronous>, transform_indices = @transform_9, window_bounds = array<i64: 4, 32>}, {pipeline_mode = #tpu.pipeline_mode<synchronous>, transform_indices = @transform_10, window_bounds = array<i64: 32, 32>}, {pipeline_mode = #tpu.pipeline_mode<synchronous>, transform_indices = @transform_11, window_bounds = array<i64: 32, 64>}, {pipeline_mode = #tpu.pipeline_mode<synchronous>, transform_indices = @transform_12, window_bounds = array<i64: 4, 8, 32>}, {pipeline_mode = #tpu.pipeline_mode<synchronous>, transform_indices = @transform_13, window_bounds = array<i64: 4, 32>}, {pipeline_mode = #tpu.pipeline_mode<synchronous>, transform_indices = @transform_14, window_bounds = array<i64: 32, 128>}, {pipeline_mode = #tpu.pipeline_mode<synchronous>, transform_indices = @transform_15, window_bounds = array<i64: 1, 128>}, {pipeline_mode = #tpu.pipeline_mode<synchronous>, transform_indices = @transform_16, window_bounds = array<i64: 128, 32>}, {pipeline_mode = #tpu.pipeline_mode<synchronous>, transform_indices = @transform_17, window_bounds = array<i64: 1, 32>}, {transform_indices = @transform_18, window_bounds = array<i64: 2, 8, 32>}]} {
    %c0 = arith.constant 0 : index
    %c0_0 = arith.constant 0 : index
    %c0_1 = arith.constant 0 : index
    %0 = vector.load %arg1[%c0, %c0_0, %c0_1] : memref<2x8x32xf32, #tpu.memory_space<vmem>>, vector<1x8x32xf32>
    %1 = vector.shape_cast %0 : vector<1x8x32xf32> to vector<8x32xf32>
    %c1 = arith.constant 1 : index
    %c0_2 = arith.constant 0 : index
    %c0_3 = arith.constant 0 : index
    %2 = vector.load %arg1[%c1, %c0_2, %c0_3] : memref<2x8x32xf32, #tpu.memory_space<vmem>>, vector<1x8x32xf32>
    %3 = vector.shape_cast %2 : vector<1x8x32xf32> to vector<8x32xf32>
    %4 = tpu.concatenate %1, %3 in 0 : vector<8x32xf32>, vector<8x32xf32> -> vector<16x32xf32>
    %c0_4 = arith.constant 0 : index
    %c0_5 = arith.constant 0 : index
    %c0_6 = arith.constant 0 : index
    %5 = vector.load %arg2[%c0_4, %c0_5, %c0_6] : memref<2x16x32xbf16, #tpu.memory_space<vmem>>, vector<1x16x32xbf16>
    %6 = vector.shape_cast %5 : vector<1x16x32xbf16> to vector<16x32xbf16>
    %c1_7 = arith.constant 1 : index
    %c0_8 = arith.constant 0 : index
    %c0_9 = arith.constant 0 : index
    %7 = vector.load %arg2[%c1_7, %c0_8, %c0_9] : memref<2x16x32xbf16, #tpu.memory_space<vmem>>, vector<1x16x32xbf16>
    %8 = vector.shape_cast %7 : vector<1x16x32xbf16> to vector<16x32xbf16>
    %9 = tpu.concatenate %6, %8 in 0 : vector<16x32xbf16>, vector<16x32xbf16> -> vector<32x32xbf16>
    %10 = arith.extf %9 : vector<32x32xbf16> to vector<32x32xf32>
    %c0_10 = arith.constant 0 : index
    %c0_11 = arith.constant 0 : index
    %11 = vector.load %arg6[%c0_10, %c0_11] : memref<6x32xf32, #tpu.memory_space<vmem>>, vector<6x32xf32>
    %c0_12 = arith.constant 0 : index
    %c0_13 = arith.constant 0 : index
    %12 = vector.load %arg10[%c0_12, %c0_13] : memref<4x32xf32, #tpu.memory_space<vmem>>, vector<4x32xf32>
    %c0_14 = arith.constant 0 : index
    %c0_15 = arith.constant 0 : index
    %13 = vector.load %arg14[%c0_14, %c0_15] : memref<4x32xf32, #tpu.memory_space<vmem>>, vector<4x32xf32>
    %14 = vector.extract_strided_slice %11 {offsets = [0, 0], sizes = [1, 32], strides = [1, 1]} : vector<6x32xf32> to vector<1x32xf32>
    %15 = vector.extract_strided_slice %11 {offsets = [1, 0], sizes = [1, 32], strides = [1, 1]} : vector<6x32xf32> to vector<1x32xf32>
    %cst = arith.constant dense<0.000000e+00> : vector<16xf32>
    %16 = vector.multi_reduction <add>, %4, %cst [1] : vector<16x32xf32> to vector<16xf32>
    %17 = vector.shape_cast %16 : vector<16xf32> to vector<16x1xf32>
    %cst_16 = arith.constant 3.200000e+01 : f32
    %18 = vector.broadcast %cst_16 : f32 to vector<16x1xf32>
    %19 = arith.divf %17, %18 : vector<16x1xf32>
    %20 = vector.broadcast %19 : vector<16x1xf32> to vector<16x32xf32>
    %21 = arith.subf %4, %20 : vector<16x32xf32>
    %22 = arith.mulf %21, %21 : vector<16x32xf32>
    %cst_17 = arith.constant dense<0.000000e+00> : vector<16xf32>
    %23 = vector.multi_reduction <add>, %22, %cst_17 [1] : vector<16x32xf32> to vector<16xf32>
    %24 = vector.shape_cast %23 : vector<16xf32> to vector<16x1xf32>
    %cst_18 = arith.constant 3.200000e+01 : f32
    %25 = vector.broadcast %cst_18 : f32 to vector<16x1xf32>
    %26 = arith.divf %24, %25 : vector<16x1xf32>
    %cst_19 = arith.constant 9.99999974E-6 : f32
    %27 = vector.broadcast %cst_19 : f32 to vector<16x1xf32>
    %28 = arith.addf %26, %27 : vector<16x1xf32>
    %29 = math.rsqrt %28 : vector<16x1xf32>
    %30 = vector.broadcast %29 : vector<16x1xf32> to vector<16x32xf32>
    %31 = arith.mulf %21, %30 : vector<16x32xf32>
    %32 = vector.broadcast %14 : vector<1x32xf32> to vector<16x32xf32>
    %33 = arith.mulf %31, %32 : vector<16x32xf32>
    %34 = vector.broadcast %15 : vector<1x32xf32> to vector<16x32xf32>
    %35 = arith.addf %33, %34 : vector<16x32xf32>
    %36 = vector.extract_strided_slice %11 {offsets = [0, 0], sizes = [1, 32], strides = [1, 1]} : vector<6x32xf32> to vector<1x32xf32>
    %37 = vector.extract_strided_slice %11 {offsets = [1, 0], sizes = [1, 32], strides = [1, 1]} : vector<6x32xf32> to vector<1x32xf32>
    %cst_20 = arith.constant dense<0.000000e+00> : vector<32xf32>
    %38 = vector.multi_reduction <add>, %10, %cst_20 [1] : vector<32x32xf32> to vector<32xf32>
    %39 = vector.shape_cast %38 : vector<32xf32> to vector<32x1xf32>
    %cst_21 = arith.constant 3.200000e+01 : f32
    %40 = vector.broadcast %cst_21 : f32 to vector<32x1xf32>
    %41 = arith.divf %39, %40 : vector<32x1xf32>
    %42 = vector.broadcast %41 : vector<32x1xf32> to vector<32x32xf32>
    %43 = arith.subf %10, %42 : vector<32x32xf32>
    %44 = arith.mulf %43, %43 : vector<32x32xf32>
    %cst_22 = arith.constant dense<0.000000e+00> : vector<32xf32>
    %45 = vector.multi_reduction <add>, %44, %cst_22 [1] : vector<32x32xf32> to vector<32xf32>
    %46 = vector.shape_cast %45 : vector<32xf32> to vector<32x1xf32>
    %cst_23 = arith.constant 3.200000e+01 : f32
    %47 = vector.broadcast %cst_23 : f32 to vector<32x1xf32>
    %48 = arith.divf %46, %47 : vector<32x1xf32>
    %cst_24 = arith.constant 9.99999974E-6 : f32
    %49 = vector.broadcast %cst_24 : f32 to vector<32x1xf32>
    %50 = arith.addf %48, %49 : vector<32x1xf32>
    %51 = math.rsqrt %50 : vector<32x1xf32>
    %52 = vector.broadcast %51 : vector<32x1xf32> to vector<32x32xf32>
    %53 = arith.mulf %43, %52 : vector<32x32xf32>
    %54 = vector.broadcast %36 : vector<1x32xf32> to vector<32x32xf32>
    %55 = arith.mulf %53, %54 : vector<32x32xf32>
    %56 = vector.broadcast %37 : vector<1x32xf32> to vector<32x32xf32>
    %57 = arith.addf %55, %56 : vector<32x32xf32>
    %58 = arith.truncf %35 : vector<16x32xf32> to vector<16x32xbf16>
    %c0_25 = arith.constant 0 : index
    %c0_26 = arith.constant 0 : index
    %59 = vector.load %arg7[%c0_25, %c0_26] : memref<32x32xbf16, #tpu.memory_space<vmem>>, vector<32x32xbf16>
    %cst_27 = arith.constant dense<0.000000e+00> : vector<16x32xf32>
    %60 = tpu.matmul %58, %59, %cst_27 {dimension_numbers = #tpu.dot_dimension_numbers<[1], [0], [0], [1], [0, 0, 1, 1], [], []>} : vector<16x32xbf16>, vector<32x32xbf16>, vector<16x32xf32> -> vector<16x32xf32>
    %61 = vector.extract_strided_slice %12 {offsets = [0, 0], sizes = [1, 32], strides = [1, 1]} : vector<4x32xf32> to vector<1x32xf32>
    %62 = vector.broadcast %61 : vector<1x32xf32> to vector<16x32xf32>
    %63 = arith.addf %60, %62 : vector<16x32xf32>
    %64 = arith.truncf %57 : vector<32x32xf32> to vector<32x32xbf16>
    %c0_28 = arith.constant 0 : index
    %c0_29 = arith.constant 0 : index
    %65 = vector.load %arg8[%c0_28, %c0_29] : memref<32x64xbf16, #tpu.memory_space<vmem>>, vector<32x64xbf16>
    %cst_30 = arith.constant dense<0.000000e+00> : vector<32x64xf32>
    %66 = tpu.matmul %64, %65, %cst_30 {dimension_numbers = #tpu.dot_dimension_numbers<[1], [0], [0], [1], [0, 0, 1, 1], [], []>} : vector<32x32xbf16>, vector<32x64xbf16>, vector<32x64xf32> -> vector<32x64xf32>
    %67 = vector.extract_strided_slice %66 {offsets = [0, 0], sizes = [32, 32], strides = [1, 1]} : vector<32x64xf32> to vector<32x32xf32>
    %68 = vector.extract_strided_slice %12 {offsets = [1, 0], sizes = [1, 32], strides = [1, 1]} : vector<4x32xf32> to vector<1x32xf32>
    %69 = vector.broadcast %68 : vector<1x32xf32> to vector<32x32xf32>
    %70 = arith.addf %67, %69 : vector<32x32xf32>
    %71 = vector.extract_strided_slice %66 {offsets = [0, 32], sizes = [32, 32], strides = [1, 1]} : vector<32x64xf32> to vector<32x32xf32>
    %72 = vector.extract_strided_slice %12 {offsets = [2, 0], sizes = [1, 32], strides = [1, 1]} : vector<4x32xf32> to vector<1x32xf32>
    %73 = vector.broadcast %72 : vector<1x32xf32> to vector<32x32xf32>
    %74 = arith.addf %71, %73 : vector<32x32xf32>
    %75 = vector.extract_strided_slice %63 {offsets = [0, 0], sizes = [8, 32], strides = [1, 1]} : vector<16x32xf32> to vector<8x32xf32>
    %76 = vector.extract_strided_slice %70 {offsets = [0, 0], sizes = [16, 32], strides = [1, 1]} : vector<32x32xf32> to vector<16x32xf32>
    %77 = vector.extract_strided_slice %74 {offsets = [0, 0], sizes = [16, 32], strides = [1, 1]} : vector<32x32xf32> to vector<16x32xf32>
    %c0_31 = arith.constant 0 : index
    %c0_32 = arith.constant 0 : index
    %c0_33 = arith.constant 0 : index
    %78 = vector.load %arg3[%c0_31, %c0_32, %c0_33] : memref<2x1x16xf32, #tpu.memory_space<vmem>>, vector<1x1x16xf32>
    %79 = vector.shape_cast %78 : vector<1x1x16xf32> to vector<1x16xf32>
    %80 = vector.extract_strided_slice %12 {offsets = [3, 0], sizes = [1, 32], strides = [1, 1]} : vector<4x32xf32> to vector<1x32xf32>
    %81 = arith.truncf %75 : vector<8x32xf32> to vector<8x32xbf16>
    %82 = vector.extract_strided_slice %81 {offsets = [0, 0], sizes = [8, 8], strides = [1, 1]} : vector<8x32xbf16> to vector<8x8xbf16>
    %83 = vector.extract_strided_slice %81 {offsets = [0, 8], sizes = [8, 8], strides = [1, 1]} : vector<8x32xbf16> to vector<8x8xbf16>
    %84 = vector.extract_strided_slice %81 {offsets = [0, 16], sizes = [8, 8], strides = [1, 1]} : vector<8x32xbf16> to vector<8x8xbf16>
    %85 = vector.extract_strided_slice %81 {offsets = [0, 24], sizes = [8, 8], strides = [1, 1]} : vector<8x32xbf16> to vector<8x8xbf16>
    %86 = vector.shape_cast %82 : vector<8x8xbf16> to vector<1x8x8xbf16>
    %87 = vector.shape_cast %83 : vector<8x8xbf16> to vector<1x8x8xbf16>
    %88 = vector.shape_cast %84 : vector<8x8xbf16> to vector<1x8x8xbf16>
    %89 = vector.shape_cast %85 : vector<8x8xbf16> to vector<1x8x8xbf16>
    %90 = tpu.concatenate %86, %87, %88, %89 in 0 : vector<1x8x8xbf16>, vector<1x8x8xbf16>, vector<1x8x8xbf16>, vector<1x8x8xbf16> -> vector<4x8x8xbf16>
    %91 = arith.truncf %76 : vector<16x32xf32> to vector<16x32xbf16>
    %92 = vector.extract_strided_slice %91 {offsets = [0, 0], sizes = [16, 8], strides = [1, 1]} : vector<16x32xbf16> to vector<16x8xbf16>
    %93 = vector.extract_strided_slice %91 {offsets = [0, 8], sizes = [16, 8], strides = [1, 1]} : vector<16x32xbf16> to vector<16x8xbf16>
    %94 = vector.extract_strided_slice %91 {offsets = [0, 16], sizes = [16, 8], strides = [1, 1]} : vector<16x32xbf16> to vector<16x8xbf16>
    %95 = vector.extract_strided_slice %91 {offsets = [0, 24], sizes = [16, 8], strides = [1, 1]} : vector<16x32xbf16> to vector<16x8xbf16>
    %96 = vector.shape_cast %92 : vector<16x8xbf16> to vector<1x16x8xbf16>
    %97 = vector.shape_cast %93 : vector<16x8xbf16> to vector<1x16x8xbf16>
    %98 = vector.shape_cast %94 : vector<16x8xbf16> to vector<1x16x8xbf16>
    %99 = vector.shape_cast %95 : vector<16x8xbf16> to vector<1x16x8xbf16>
    %100 = tpu.concatenate %96, %97, %98, %99 in 0 : vector<1x16x8xbf16>, vector<1x16x8xbf16>, vector<1x16x8xbf16>, vector<1x16x8xbf16> -> vector<4x16x8xbf16>
    %101 = arith.truncf %77 : vector<16x32xf32> to vector<16x32xbf16>
    %102 = vector.extract_strided_slice %101 {offsets = [0, 0], sizes = [16, 8], strides = [1, 1]} : vector<16x32xbf16> to vector<16x8xbf16>
    %103 = vector.extract_strided_slice %101 {offsets = [0, 8], sizes = [16, 8], strides = [1, 1]} : vector<16x32xbf16> to vector<16x8xbf16>
    %104 = vector.extract_strided_slice %101 {offsets = [0, 16], sizes = [16, 8], strides = [1, 1]} : vector<16x32xbf16> to vector<16x8xbf16>
    %105 = vector.extract_strided_slice %101 {offsets = [0, 24], sizes = [16, 8], strides = [1, 1]} : vector<16x32xbf16> to vector<16x8xbf16>
    %106 = vector.shape_cast %102 : vector<16x8xbf16> to vector<1x16x8xbf16>
    %107 = vector.shape_cast %103 : vector<16x8xbf16> to vector<1x16x8xbf16>
    %108 = vector.shape_cast %104 : vector<16x8xbf16> to vector<1x16x8xbf16>
    %109 = vector.shape_cast %105 : vector<16x8xbf16> to vector<1x16x8xbf16>
    %110 = tpu.concatenate %106, %107, %108, %109 in 0 : vector<1x16x8xbf16>, vector<1x16x8xbf16>, vector<1x16x8xbf16>, vector<1x16x8xbf16> -> vector<4x16x8xbf16>
    "tpu.trace_start"() <{level = 10 : i32, message = "hqd,hkd->hqk"}> : () -> ()
    %cst_34 = arith.constant dense<0.000000e+00> : vector<4x8x16xf32>
    %111 = tpu.matmul %90, %100, %cst_34 {dimension_numbers = #tpu.dot_dimension_numbers<[2], [2], [1], [1], [0, 0, 0, 1, 1, 1], [0], [0]>} : vector<4x8x8xbf16>, vector<4x16x8xbf16>, vector<4x8x16xf32> -> vector<4x8x16xf32>
    "tpu.trace_stop"() : () -> ()
    %cst_35 = arith.constant 0.353553385 : f32
    %112 = vector.broadcast %cst_35 : f32 to vector<4x8x16xf32>
    %113 = arith.mulf %111, %112 : vector<4x8x16xf32>
    %114 = vector.shape_cast %79 : vector<1x16xf32> to vector<1x1x16xf32>
    %115 = vector.broadcast %114 : vector<1x1x16xf32> to vector<4x8x16xf32>
    %116 = arith.addf %113, %115 : vector<4x8x16xf32>
    %cst_36 = arith.constant dense<0xFF800000> : vector<4x8xf32>
    %117 = vector.multi_reduction <maximumf>, %116, %cst_36 [2] : vector<4x8x16xf32> to vector<4x8xf32>
    %118 = vector.shape_cast %117 : vector<4x8xf32> to vector<4x8x1xf32>
    %119 = vector.broadcast %118 : vector<4x8x1xf32> to vector<4x8x16xf32>
    %120 = arith.subf %116, %119 : vector<4x8x16xf32>
    %121 = math.exp %120 : vector<4x8x16xf32>
    %cst_37 = arith.constant dense<0.000000e+00> : vector<4x8xf32>
    %122 = vector.multi_reduction <add>, %121, %cst_37 [2] : vector<4x8x16xf32> to vector<4x8xf32>
    %123 = vector.shape_cast %122 : vector<4x8xf32> to vector<4x8x1xf32>
    %124 = vector.broadcast %123 : vector<4x8x1xf32> to vector<4x8x16xf32>
    %125 = arith.divf %121, %124 : vector<4x8x16xf32>
    %126 = arith.truncf %125 : vector<4x8x16xf32> to vector<4x8x16xbf16>
    "tpu.trace_start"() <{level = 10 : i32, message = "hqk,hkd->hqd"}> : () -> ()
    %cst_38 = arith.constant dense<0.000000e+00> : vector<4x8x8xf32>
    %127 = tpu.matmul %126, %110, %cst_38 {dimension_numbers = #tpu.dot_dimension_numbers<[2], [1], [1], [2], [0, 0, 0, 1, 1, 2], [0], [0]>} : vector<4x8x16xbf16>, vector<4x16x8xbf16>, vector<4x8x8xf32> -> vector<4x8x8xf32>
    "tpu.trace_stop"() : () -> ()
    %128 = vector.extract_strided_slice %127 {offsets = [0, 0, 0], sizes = [1, 8, 8], strides = [1, 1, 1]} : vector<4x8x8xf32> to vector<1x8x8xf32>
    %129 = vector.shape_cast %128 : vector<1x8x8xf32> to vector<8x8xf32>
    %130 = arith.truncf %129 : vector<8x8xf32> to vector<8x8xbf16>
    %c0_39 = arith.constant 0 : index
    %c0_40 = arith.constant 0 : index
    %c0_41 = arith.constant 0 : index
    %131 = vector.load %arg9[%c0_39, %c0_40, %c0_41] : memref<4x8x32xbf16, #tpu.memory_space<vmem>>, vector<1x8x32xbf16>
    %132 = vector.shape_cast %131 : vector<1x8x32xbf16> to vector<8x32xbf16>
    %cst_42 = arith.constant dense<0.000000e+00> : vector<8x32xf32>
    %133 = tpu.matmul %130, %132, %cst_42 {dimension_numbers = #tpu.dot_dimension_numbers<[1], [0], [0], [1], [0, 0, 1, 1], [], []>} : vector<8x8xbf16>, vector<8x32xbf16>, vector<8x32xf32> -> vector<8x32xf32>
    %134 = vector.broadcast %80 : vector<1x32xf32> to vector<8x32xf32>
    %135 = arith.addf %134, %133 : vector<8x32xf32>
    %136 = vector.extract_strided_slice %127 {offsets = [1, 0, 0], sizes = [1, 8, 8], strides = [1, 1, 1]} : vector<4x8x8xf32> to vector<1x8x8xf32>
    %137 = vector.shape_cast %136 : vector<1x8x8xf32> to vector<8x8xf32>
    %138 = arith.truncf %137 : vector<8x8xf32> to vector<8x8xbf16>
    %c1_43 = arith.constant 1 : index
    %c0_44 = arith.constant 0 : index
    %c0_45 = arith.constant 0 : index
    %139 = vector.load %arg9[%c1_43, %c0_44, %c0_45] : memref<4x8x32xbf16, #tpu.memory_space<vmem>>, vector<1x8x32xbf16>
    %140 = vector.shape_cast %139 : vector<1x8x32xbf16> to vector<8x32xbf16>
    %cst_46 = arith.constant dense<0.000000e+00> : vector<8x32xf32>
    %141 = tpu.matmul %138, %140, %cst_46 {dimension_numbers = #tpu.dot_dimension_numbers<[1], [0], [0], [1], [0, 0, 1, 1], [], []>} : vector<8x8xbf16>, vector<8x32xbf16>, vector<8x32xf32> -> vector<8x32xf32>
    %142 = arith.addf %135, %141 : vector<8x32xf32>
    %143 = vector.extract_strided_slice %127 {offsets = [2, 0, 0], sizes = [1, 8, 8], strides = [1, 1, 1]} : vector<4x8x8xf32> to vector<1x8x8xf32>
    %144 = vector.shape_cast %143 : vector<1x8x8xf32> to vector<8x8xf32>
    %145 = arith.truncf %144 : vector<8x8xf32> to vector<8x8xbf16>
    %c2 = arith.constant 2 : index
    %c0_47 = arith.constant 0 : index
    %c0_48 = arith.constant 0 : index
    %146 = vector.load %arg9[%c2, %c0_47, %c0_48] : memref<4x8x32xbf16, #tpu.memory_space<vmem>>, vector<1x8x32xbf16>
    %147 = vector.shape_cast %146 : vector<1x8x32xbf16> to vector<8x32xbf16>
    %cst_49 = arith.constant dense<0.000000e+00> : vector<8x32xf32>
    %148 = tpu.matmul %145, %147, %cst_49 {dimension_numbers = #tpu.dot_dimension_numbers<[1], [0], [0], [1], [0, 0, 1, 1], [], []>} : vector<8x8xbf16>, vector<8x32xbf16>, vector<8x32xf32> -> vector<8x32xf32>
    %149 = arith.addf %142, %148 : vector<8x32xf32>
    %150 = vector.extract_strided_slice %127 {offsets = [3, 0, 0], sizes = [1, 8, 8], strides = [1, 1, 1]} : vector<4x8x8xf32> to vector<1x8x8xf32>
    %151 = vector.shape_cast %150 : vector<1x8x8xf32> to vector<8x8xf32>
    %152 = arith.truncf %151 : vector<8x8xf32> to vector<8x8xbf16>
    %c3 = arith.constant 3 : index
    %c0_50 = arith.constant 0 : index
    %c0_51 = arith.constant 0 : index
    %153 = vector.load %arg9[%c3, %c0_50, %c0_51] : memref<4x8x32xbf16, #tpu.memory_space<vmem>>, vector<1x8x32xbf16>
    %154 = vector.shape_cast %153 : vector<1x8x32xbf16> to vector<8x32xbf16>
    %cst_52 = arith.constant dense<0.000000e+00> : vector<8x32xf32>
    %155 = tpu.matmul %152, %154, %cst_52 {dimension_numbers = #tpu.dot_dimension_numbers<[1], [0], [0], [1], [0, 0, 1, 1], [], []>} : vector<8x8xbf16>, vector<8x32xbf16>, vector<8x32xf32> -> vector<8x32xf32>
    %156 = arith.addf %149, %155 : vector<8x32xf32>
    %157 = vector.extract_strided_slice %63 {offsets = [8, 0], sizes = [8, 32], strides = [1, 1]} : vector<16x32xf32> to vector<8x32xf32>
    %158 = vector.extract_strided_slice %70 {offsets = [16, 0], sizes = [16, 32], strides = [1, 1]} : vector<32x32xf32> to vector<16x32xf32>
    %159 = vector.extract_strided_slice %74 {offsets = [16, 0], sizes = [16, 32], strides = [1, 1]} : vector<32x32xf32> to vector<16x32xf32>
    %c1_53 = arith.constant 1 : index
    %c0_54 = arith.constant 0 : index
    %c0_55 = arith.constant 0 : index
    %160 = vector.load %arg3[%c1_53, %c0_54, %c0_55] : memref<2x1x16xf32, #tpu.memory_space<vmem>>, vector<1x1x16xf32>
    %161 = vector.shape_cast %160 : vector<1x1x16xf32> to vector<1x16xf32>
    %162 = vector.extract_strided_slice %12 {offsets = [3, 0], sizes = [1, 32], strides = [1, 1]} : vector<4x32xf32> to vector<1x32xf32>
    %163 = arith.truncf %157 : vector<8x32xf32> to vector<8x32xbf16>
    %164 = vector.extract_strided_slice %163 {offsets = [0, 0], sizes = [8, 8], strides = [1, 1]} : vector<8x32xbf16> to vector<8x8xbf16>
    %165 = vector.extract_strided_slice %163 {offsets = [0, 8], sizes = [8, 8], strides = [1, 1]} : vector<8x32xbf16> to vector<8x8xbf16>
    %166 = vector.extract_strided_slice %163 {offsets = [0, 16], sizes = [8, 8], strides = [1, 1]} : vector<8x32xbf16> to vector<8x8xbf16>
    %167 = vector.extract_strided_slice %163 {offsets = [0, 24], sizes = [8, 8], strides = [1, 1]} : vector<8x32xbf16> to vector<8x8xbf16>
    %168 = vector.shape_cast %164 : vector<8x8xbf16> to vector<1x8x8xbf16>
    %169 = vector.shape_cast %165 : vector<8x8xbf16> to vector<1x8x8xbf16>
    %170 = vector.shape_cast %166 : vector<8x8xbf16> to vector<1x8x8xbf16>
    %171 = vector.shape_cast %167 : vector<8x8xbf16> to vector<1x8x8xbf16>
    %172 = tpu.concatenate %168, %169, %170, %171 in 0 : vector<1x8x8xbf16>, vector<1x8x8xbf16>, vector<1x8x8xbf16>, vector<1x8x8xbf16> -> vector<4x8x8xbf16>
    %173 = arith.truncf %158 : vector<16x32xf32> to vector<16x32xbf16>
    %174 = vector.extract_strided_slice %173 {offsets = [0, 0], sizes = [16, 8], strides = [1, 1]} : vector<16x32xbf16> to vector<16x8xbf16>
    %175 = vector.extract_strided_slice %173 {offsets = [0, 8], sizes = [16, 8], strides = [1, 1]} : vector<16x32xbf16> to vector<16x8xbf16>
    %176 = vector.extract_strided_slice %173 {offsets = [0, 16], sizes = [16, 8], strides = [1, 1]} : vector<16x32xbf16> to vector<16x8xbf16>
    %177 = vector.extract_strided_slice %173 {offsets = [0, 24], sizes = [16, 8], strides = [1, 1]} : vector<16x32xbf16> to vector<16x8xbf16>
    %178 = vector.shape_cast %174 : vector<16x8xbf16> to vector<1x16x8xbf16>
    %179 = vector.shape_cast %175 : vector<16x8xbf16> to vector<1x16x8xbf16>
    %180 = vector.shape_cast %176 : vector<16x8xbf16> to vector<1x16x8xbf16>
    %181 = vector.shape_cast %177 : vector<16x8xbf16> to vector<1x16x8xbf16>
    %182 = tpu.concatenate %178, %179, %180, %181 in 0 : vector<1x16x8xbf16>, vector<1x16x8xbf16>, vector<1x16x8xbf16>, vector<1x16x8xbf16> -> vector<4x16x8xbf16>
    %183 = arith.truncf %159 : vector<16x32xf32> to vector<16x32xbf16>
    %184 = vector.extract_strided_slice %183 {offsets = [0, 0], sizes = [16, 8], strides = [1, 1]} : vector<16x32xbf16> to vector<16x8xbf16>
    %185 = vector.extract_strided_slice %183 {offsets = [0, 8], sizes = [16, 8], strides = [1, 1]} : vector<16x32xbf16> to vector<16x8xbf16>
    %186 = vector.extract_strided_slice %183 {offsets = [0, 16], sizes = [16, 8], strides = [1, 1]} : vector<16x32xbf16> to vector<16x8xbf16>
    %187 = vector.extract_strided_slice %183 {offsets = [0, 24], sizes = [16, 8], strides = [1, 1]} : vector<16x32xbf16> to vector<16x8xbf16>
    %188 = vector.shape_cast %184 : vector<16x8xbf16> to vector<1x16x8xbf16>
    %189 = vector.shape_cast %185 : vector<16x8xbf16> to vector<1x16x8xbf16>
    %190 = vector.shape_cast %186 : vector<16x8xbf16> to vector<1x16x8xbf16>
    %191 = vector.shape_cast %187 : vector<16x8xbf16> to vector<1x16x8xbf16>
    %192 = tpu.concatenate %188, %189, %190, %191 in 0 : vector<1x16x8xbf16>, vector<1x16x8xbf16>, vector<1x16x8xbf16>, vector<1x16x8xbf16> -> vector<4x16x8xbf16>
    "tpu.trace_start"() <{level = 10 : i32, message = "hqd,hkd->hqk"}> : () -> ()
    %cst_56 = arith.constant dense<0.000000e+00> : vector<4x8x16xf32>
    %193 = tpu.matmul %172, %182, %cst_56 {dimension_numbers = #tpu.dot_dimension_numbers<[2], [2], [1], [1], [0, 0, 0, 1, 1, 1], [0], [0]>} : vector<4x8x8xbf16>, vector<4x16x8xbf16>, vector<4x8x16xf32> -> vector<4x8x16xf32>
    "tpu.trace_stop"() : () -> ()
    %cst_57 = arith.constant 0.353553385 : f32
    %194 = vector.broadcast %cst_57 : f32 to vector<4x8x16xf32>
    %195 = arith.mulf %193, %194 : vector<4x8x16xf32>
    %196 = vector.shape_cast %161 : vector<1x16xf32> to vector<1x1x16xf32>
    %197 = vector.broadcast %196 : vector<1x1x16xf32> to vector<4x8x16xf32>
    %198 = arith.addf %195, %197 : vector<4x8x16xf32>
    %cst_58 = arith.constant dense<0xFF800000> : vector<4x8xf32>
    %199 = vector.multi_reduction <maximumf>, %198, %cst_58 [2] : vector<4x8x16xf32> to vector<4x8xf32>
    %200 = vector.shape_cast %199 : vector<4x8xf32> to vector<4x8x1xf32>
    %201 = vector.broadcast %200 : vector<4x8x1xf32> to vector<4x8x16xf32>
    %202 = arith.subf %198, %201 : vector<4x8x16xf32>
    %203 = math.exp %202 : vector<4x8x16xf32>
    %cst_59 = arith.constant dense<0.000000e+00> : vector<4x8xf32>
    %204 = vector.multi_reduction <add>, %203, %cst_59 [2] : vector<4x8x16xf32> to vector<4x8xf32>
    %205 = vector.shape_cast %204 : vector<4x8xf32> to vector<4x8x1xf32>
    %206 = vector.broadcast %205 : vector<4x8x1xf32> to vector<4x8x16xf32>
    %207 = arith.divf %203, %206 : vector<4x8x16xf32>
    %208 = arith.truncf %207 : vector<4x8x16xf32> to vector<4x8x16xbf16>
    "tpu.trace_start"() <{level = 10 : i32, message = "hqk,hkd->hqd"}> : () -> ()
    %cst_60 = arith.constant dense<0.000000e+00> : vector<4x8x8xf32>
    %209 = tpu.matmul %208, %192, %cst_60 {dimension_numbers = #tpu.dot_dimension_numbers<[2], [1], [1], [2], [0, 0, 0, 1, 1, 2], [0], [0]>} : vector<4x8x16xbf16>, vector<4x16x8xbf16>, vector<4x8x8xf32> -> vector<4x8x8xf32>
    "tpu.trace_stop"() : () -> ()
    %210 = vector.extract_strided_slice %209 {offsets = [0, 0, 0], sizes = [1, 8, 8], strides = [1, 1, 1]} : vector<4x8x8xf32> to vector<1x8x8xf32>
    %211 = vector.shape_cast %210 : vector<1x8x8xf32> to vector<8x8xf32>
    %212 = arith.truncf %211 : vector<8x8xf32> to vector<8x8xbf16>
    %c0_61 = arith.constant 0 : index
    %c0_62 = arith.constant 0 : index
    %c0_63 = arith.constant 0 : index
    %213 = vector.load %arg9[%c0_61, %c0_62, %c0_63] : memref<4x8x32xbf16, #tpu.memory_space<vmem>>, vector<1x8x32xbf16>
    %214 = vector.shape_cast %213 : vector<1x8x32xbf16> to vector<8x32xbf16>
    %cst_64 = arith.constant dense<0.000000e+00> : vector<8x32xf32>
    %215 = tpu.matmul %212, %214, %cst_64 {dimension_numbers = #tpu.dot_dimension_numbers<[1], [0], [0], [1], [0, 0, 1, 1], [], []>} : vector<8x8xbf16>, vector<8x32xbf16>, vector<8x32xf32> -> vector<8x32xf32>
    %216 = vector.broadcast %162 : vector<1x32xf32> to vector<8x32xf32>
    %217 = arith.addf %216, %215 : vector<8x32xf32>
    %218 = vector.extract_strided_slice %209 {offsets = [1, 0, 0], sizes = [1, 8, 8], strides = [1, 1, 1]} : vector<4x8x8xf32> to vector<1x8x8xf32>
    %219 = vector.shape_cast %218 : vector<1x8x8xf32> to vector<8x8xf32>
    %220 = arith.truncf %219 : vector<8x8xf32> to vector<8x8xbf16>
    %c1_65 = arith.constant 1 : index
    %c0_66 = arith.constant 0 : index
    %c0_67 = arith.constant 0 : index
    %221 = vector.load %arg9[%c1_65, %c0_66, %c0_67] : memref<4x8x32xbf16, #tpu.memory_space<vmem>>, vector<1x8x32xbf16>
    %222 = vector.shape_cast %221 : vector<1x8x32xbf16> to vector<8x32xbf16>
    %cst_68 = arith.constant dense<0.000000e+00> : vector<8x32xf32>
    %223 = tpu.matmul %220, %222, %cst_68 {dimension_numbers = #tpu.dot_dimension_numbers<[1], [0], [0], [1], [0, 0, 1, 1], [], []>} : vector<8x8xbf16>, vector<8x32xbf16>, vector<8x32xf32> -> vector<8x32xf32>
    %224 = arith.addf %217, %223 : vector<8x32xf32>
    %225 = vector.extract_strided_slice %209 {offsets = [2, 0, 0], sizes = [1, 8, 8], strides = [1, 1, 1]} : vector<4x8x8xf32> to vector<1x8x8xf32>
    %226 = vector.shape_cast %225 : vector<1x8x8xf32> to vector<8x8xf32>
    %227 = arith.truncf %226 : vector<8x8xf32> to vector<8x8xbf16>
    %c2_69 = arith.constant 2 : index
    %c0_70 = arith.constant 0 : index
    %c0_71 = arith.constant 0 : index
    %228 = vector.load %arg9[%c2_69, %c0_70, %c0_71] : memref<4x8x32xbf16, #tpu.memory_space<vmem>>, vector<1x8x32xbf16>
    %229 = vector.shape_cast %228 : vector<1x8x32xbf16> to vector<8x32xbf16>
    %cst_72 = arith.constant dense<0.000000e+00> : vector<8x32xf32>
    %230 = tpu.matmul %227, %229, %cst_72 {dimension_numbers = #tpu.dot_dimension_numbers<[1], [0], [0], [1], [0, 0, 1, 1], [], []>} : vector<8x8xbf16>, vector<8x32xbf16>, vector<8x32xf32> -> vector<8x32xf32>
    %231 = arith.addf %224, %230 : vector<8x32xf32>
    %232 = vector.extract_strided_slice %209 {offsets = [3, 0, 0], sizes = [1, 8, 8], strides = [1, 1, 1]} : vector<4x8x8xf32> to vector<1x8x8xf32>
    %233 = vector.shape_cast %232 : vector<1x8x8xf32> to vector<8x8xf32>
    %234 = arith.truncf %233 : vector<8x8xf32> to vector<8x8xbf16>
    %c3_73 = arith.constant 3 : index
    %c0_74 = arith.constant 0 : index
    %c0_75 = arith.constant 0 : index
    %235 = vector.load %arg9[%c3_73, %c0_74, %c0_75] : memref<4x8x32xbf16, #tpu.memory_space<vmem>>, vector<1x8x32xbf16>
    %236 = vector.shape_cast %235 : vector<1x8x32xbf16> to vector<8x32xbf16>
    %cst_76 = arith.constant dense<0.000000e+00> : vector<8x32xf32>
    %237 = tpu.matmul %234, %236, %cst_76 {dimension_numbers = #tpu.dot_dimension_numbers<[1], [0], [0], [1], [0, 0, 1, 1], [], []>} : vector<8x8xbf16>, vector<8x32xbf16>, vector<8x32xf32> -> vector<8x32xf32>
    %238 = arith.addf %231, %237 : vector<8x32xf32>
    %239 = tpu.concatenate %156, %238 in 0 : vector<8x32xf32>, vector<8x32xf32> -> vector<16x32xf32>
    %240 = arith.addf %4, %239 : vector<16x32xf32>
    %241 = vector.extract_strided_slice %11 {offsets = [2, 0], sizes = [1, 32], strides = [1, 1]} : vector<6x32xf32> to vector<1x32xf32>
    %242 = vector.extract_strided_slice %11 {offsets = [3, 0], sizes = [1, 32], strides = [1, 1]} : vector<6x32xf32> to vector<1x32xf32>
    %cst_77 = arith.constant dense<0.000000e+00> : vector<16xf32>
    %243 = vector.multi_reduction <add>, %240, %cst_77 [1] : vector<16x32xf32> to vector<16xf32>
    %244 = vector.shape_cast %243 : vector<16xf32> to vector<16x1xf32>
    %cst_78 = arith.constant 3.200000e+01 : f32
    %245 = vector.broadcast %cst_78 : f32 to vector<16x1xf32>
    %246 = arith.divf %244, %245 : vector<16x1xf32>
    %247 = vector.broadcast %246 : vector<16x1xf32> to vector<16x32xf32>
    %248 = arith.subf %240, %247 : vector<16x32xf32>
    %249 = arith.mulf %248, %248 : vector<16x32xf32>
    %cst_79 = arith.constant dense<0.000000e+00> : vector<16xf32>
    %250 = vector.multi_reduction <add>, %249, %cst_79 [1] : vector<16x32xf32> to vector<16xf32>
    %251 = vector.shape_cast %250 : vector<16xf32> to vector<16x1xf32>
    %cst_80 = arith.constant 3.200000e+01 : f32
    %252 = vector.broadcast %cst_80 : f32 to vector<16x1xf32>
    %253 = arith.divf %251, %252 : vector<16x1xf32>
    %cst_81 = arith.constant 9.99999974E-6 : f32
    %254 = vector.broadcast %cst_81 : f32 to vector<16x1xf32>
    %255 = arith.addf %253, %254 : vector<16x1xf32>
    %256 = math.rsqrt %255 : vector<16x1xf32>
    %257 = vector.broadcast %256 : vector<16x1xf32> to vector<16x32xf32>
    %258 = arith.mulf %248, %257 : vector<16x32xf32>
    %259 = vector.broadcast %241 : vector<1x32xf32> to vector<16x32xf32>
    %260 = arith.mulf %258, %259 : vector<16x32xf32>
    %261 = vector.broadcast %242 : vector<1x32xf32> to vector<16x32xf32>
    %262 = arith.addf %260, %261 : vector<16x32xf32>
    %263 = arith.truncf %262 : vector<16x32xf32> to vector<16x32xbf16>
    %c0_82 = arith.constant 0 : index
    %c0_83 = arith.constant 0 : index
    %264 = vector.load %arg15[%c0_82, %c0_83] : memref<32x128xbf16, #tpu.memory_space<vmem>>, vector<32x128xbf16>
    %cst_84 = arith.constant dense<0.000000e+00> : vector<16x128xf32>
    %265 = tpu.matmul %263, %264, %cst_84 {dimension_numbers = #tpu.dot_dimension_numbers<[1], [0], [0], [1], [0, 0, 1, 1], [], []>} : vector<16x32xbf16>, vector<32x128xbf16>, vector<16x128xf32> -> vector<16x128xf32>
    %c0_85 = arith.constant 0 : index
    %c0_86 = arith.constant 0 : index
    %266 = vector.load %arg16[%c0_85, %c0_86] : memref<1x128xf32, #tpu.memory_space<vmem>>, vector<1x128xf32>
    %267 = vector.broadcast %266 : vector<1x128xf32> to vector<16x128xf32>
    %268 = arith.addf %265, %267 : vector<16x128xf32>
    %cst_87 = arith.constant 1.702000e+00 : f32
    %269 = vector.broadcast %cst_87 : f32 to vector<16x128xf32>
    %270 = arith.mulf %269, %268 : vector<16x128xf32>
    %271 = arith.negf %270 : vector<16x128xf32>
    %272 = math.exp %271 : vector<16x128xf32>
    %cst_88 = arith.constant 1.000000e+00 : f32
    %273 = vector.broadcast %cst_88 : f32 to vector<16x128xf32>
    %274 = arith.addf %273, %272 : vector<16x128xf32>
    %275 = arith.divf %273, %274 : vector<16x128xf32>
    %276 = arith.mulf %268, %275 : vector<16x128xf32>
    %277 = arith.truncf %276 : vector<16x128xf32> to vector<16x128xbf16>
    %c0_89 = arith.constant 0 : index
    %c0_90 = arith.constant 0 : index
    %278 = vector.load %arg17[%c0_89, %c0_90] : memref<128x32xbf16, #tpu.memory_space<vmem>>, vector<128x32xbf16>
    %cst_91 = arith.constant dense<0.000000e+00> : vector<16x32xf32>
    %279 = tpu.matmul %277, %278, %cst_91 {dimension_numbers = #tpu.dot_dimension_numbers<[1], [0], [0], [1], [0, 0, 1, 1], [], []>} : vector<16x128xbf16>, vector<128x32xbf16>, vector<16x32xf32> -> vector<16x32xf32>
    %280 = arith.addf %240, %279 : vector<16x32xf32>
    %c0_92 = arith.constant 0 : index
    %c0_93 = arith.constant 0 : index
    %281 = vector.load %arg18[%c0_92, %c0_93] : memref<1x32xf32, #tpu.memory_space<vmem>>, vector<1x32xf32>
    %282 = vector.broadcast %281 : vector<1x32xf32> to vector<16x32xf32>
    %283 = arith.addf %280, %282 : vector<16x32xf32>
    %284 = vector.extract_strided_slice %11 {offsets = [4, 0], sizes = [1, 32], strides = [1, 1]} : vector<6x32xf32> to vector<1x32xf32>
    %285 = vector.extract_strided_slice %11 {offsets = [5, 0], sizes = [1, 32], strides = [1, 1]} : vector<6x32xf32> to vector<1x32xf32>
    %cst_94 = arith.constant dense<0.000000e+00> : vector<16xf32>
    %286 = vector.multi_reduction <add>, %283, %cst_94 [1] : vector<16x32xf32> to vector<16xf32>
    %287 = vector.shape_cast %286 : vector<16xf32> to vector<16x1xf32>
    %cst_95 = arith.constant 3.200000e+01 : f32
    %288 = vector.broadcast %cst_95 : f32 to vector<16x1xf32>
    %289 = arith.divf %287, %288 : vector<16x1xf32>
    %290 = vector.broadcast %289 : vector<16x1xf32> to vector<16x32xf32>
    %291 = arith.subf %283, %290 : vector<16x32xf32>
    %292 = arith.mulf %291, %291 : vector<16x32xf32>
    %cst_96 = arith.constant dense<0.000000e+00> : vector<16xf32>
    %293 = vector.multi_reduction <add>, %292, %cst_96 [1] : vector<16x32xf32> to vector<16xf32>
    %294 = vector.shape_cast %293 : vector<16xf32> to vector<16x1xf32>
    %cst_97 = arith.constant 3.200000e+01 : f32
    %295 = vector.broadcast %cst_97 : f32 to vector<16x1xf32>
    %296 = arith.divf %294, %295 : vector<16x1xf32>
    %cst_98 = arith.constant 9.99999974E-6 : f32
    %297 = vector.broadcast %cst_98 : f32 to vector<16x1xf32>
    %298 = arith.addf %296, %297 : vector<16x1xf32>
    %299 = math.rsqrt %298 : vector<16x1xf32>
    %300 = vector.broadcast %299 : vector<16x1xf32> to vector<16x32xf32>
    %301 = arith.mulf %291, %300 : vector<16x32xf32>
    %302 = vector.broadcast %284 : vector<1x32xf32> to vector<16x32xf32>
    %303 = arith.mulf %301, %302 : vector<16x32xf32>
    %304 = vector.broadcast %285 : vector<1x32xf32> to vector<16x32xf32>
    %305 = arith.addf %303, %304 : vector<16x32xf32>
    %306 = arith.truncf %305 : vector<16x32xf32> to vector<16x32xbf16>
    %c0_99 = arith.constant 0 : index
    %c0_100 = arith.constant 0 : index
    %307 = vector.load %arg11[%c0_99, %c0_100] : memref<32x32xbf16, #tpu.memory_space<vmem>>, vector<32x32xbf16>
    %cst_101 = arith.constant dense<0.000000e+00> : vector<16x32xf32>
    %308 = tpu.matmul %306, %307, %cst_101 {dimension_numbers = #tpu.dot_dimension_numbers<[1], [0], [0], [1], [0, 0, 1, 1], [], []>} : vector<16x32xbf16>, vector<32x32xbf16>, vector<16x32xf32> -> vector<16x32xf32>
    %309 = vector.extract_strided_slice %13 {offsets = [0, 0], sizes = [1, 32], strides = [1, 1]} : vector<4x32xf32> to vector<1x32xf32>
    %310 = vector.broadcast %309 : vector<1x32xf32> to vector<16x32xf32>
    %311 = arith.addf %308, %310 : vector<16x32xf32>
    %312 = arith.truncf %305 : vector<16x32xf32> to vector<16x32xbf16>
    %c0_102 = arith.constant 0 : index
    %c0_103 = arith.constant 0 : index
    %313 = vector.load %arg12[%c0_102, %c0_103] : memref<32x64xbf16, #tpu.memory_space<vmem>>, vector<32x64xbf16>
    %cst_104 = arith.constant dense<0.000000e+00> : vector<16x64xf32>
    %314 = tpu.matmul %312, %313, %cst_104 {dimension_numbers = #tpu.dot_dimension_numbers<[1], [0], [0], [1], [0, 0, 1, 1], [], []>} : vector<16x32xbf16>, vector<32x64xbf16>, vector<16x64xf32> -> vector<16x64xf32>
    %315 = vector.extract_strided_slice %314 {offsets = [0, 0], sizes = [16, 32], strides = [1, 1]} : vector<16x64xf32> to vector<16x32xf32>
    %316 = vector.extract_strided_slice %13 {offsets = [1, 0], sizes = [1, 32], strides = [1, 1]} : vector<4x32xf32> to vector<1x32xf32>
    %317 = vector.broadcast %316 : vector<1x32xf32> to vector<16x32xf32>
    %318 = arith.addf %315, %317 : vector<16x32xf32>
    %319 = vector.extract_strided_slice %314 {offsets = [0, 32], sizes = [16, 32], strides = [1, 1]} : vector<16x64xf32> to vector<16x32xf32>
    %320 = vector.extract_strided_slice %13 {offsets = [2, 0], sizes = [1, 32], strides = [1, 1]} : vector<4x32xf32> to vector<1x32xf32>
    %321 = vector.broadcast %320 : vector<1x32xf32> to vector<16x32xf32>
    %322 = arith.addf %319, %321 : vector<16x32xf32>
    %c0_105 = arith.constant 0 : index
    %c0_106 = arith.constant 0 : index
    %c0_107 = arith.constant 0 : index
    %323 = vector.load %arg5[%c0_105, %c0_106, %c0_107] : memref<2x4x32xf32, #tpu.memory_space<vmem>>, vector<1x4x32xf32>
    %324 = vector.shape_cast %323 : vector<1x4x32xf32> to vector<4x32xf32>
    %c1_108 = arith.constant 1 : index
    %c0_109 = arith.constant 0 : index
    %c0_110 = arith.constant 0 : index
    %325 = vector.load %arg5[%c1_108, %c0_109, %c0_110] : memref<2x4x32xf32, #tpu.memory_space<vmem>>, vector<1x4x32xf32>
    %326 = vector.shape_cast %325 : vector<1x4x32xf32> to vector<4x32xf32>
    %327 = vector.extract_strided_slice %318 {offsets = [0, 0], sizes = [8, 32], strides = [1, 1]} : vector<16x32xf32> to vector<8x32xf32>
    %328 = tpu.concatenate %327, %324 in 0 : vector<8x32xf32>, vector<4x32xf32> -> vector<12x32xf32>
    %329 = vector.extract_strided_slice %322 {offsets = [0, 0], sizes = [8, 32], strides = [1, 1]} : vector<16x32xf32> to vector<8x32xf32>
    %330 = tpu.concatenate %329, %326 in 0 : vector<8x32xf32>, vector<4x32xf32> -> vector<12x32xf32>
    %331 = vector.extract_strided_slice %311 {offsets = [0, 0], sizes = [8, 32], strides = [1, 1]} : vector<16x32xf32> to vector<8x32xf32>
    %c0_111 = arith.constant 0 : index
    %c0_112 = arith.constant 0 : index
    %332 = vector.load %arg4[%c0_111, %c0_112] : memref<8x12xf32, #tpu.memory_space<vmem>>, vector<8x12xf32>
    %333 = vector.extract_strided_slice %13 {offsets = [3, 0], sizes = [1, 32], strides = [1, 1]} : vector<4x32xf32> to vector<1x32xf32>
    %334 = arith.truncf %331 : vector<8x32xf32> to vector<8x32xbf16>
    %335 = vector.extract_strided_slice %334 {offsets = [0, 0], sizes = [8, 8], strides = [1, 1]} : vector<8x32xbf16> to vector<8x8xbf16>
    %336 = vector.extract_strided_slice %334 {offsets = [0, 8], sizes = [8, 8], strides = [1, 1]} : vector<8x32xbf16> to vector<8x8xbf16>
    %337 = vector.extract_strided_slice %334 {offsets = [0, 16], sizes = [8, 8], strides = [1, 1]} : vector<8x32xbf16> to vector<8x8xbf16>
    %338 = vector.extract_strided_slice %334 {offsets = [0, 24], sizes = [8, 8], strides = [1, 1]} : vector<8x32xbf16> to vector<8x8xbf16>
    %339 = vector.shape_cast %335 : vector<8x8xbf16> to vector<1x8x8xbf16>
    %340 = vector.shape_cast %336 : vector<8x8xbf16> to vector<1x8x8xbf16>
    %341 = vector.shape_cast %337 : vector<8x8xbf16> to vector<1x8x8xbf16>
    %342 = vector.shape_cast %338 : vector<8x8xbf16> to vector<1x8x8xbf16>
    %343 = tpu.concatenate %339, %340, %341, %342 in 0 : vector<1x8x8xbf16>, vector<1x8x8xbf16>, vector<1x8x8xbf16>, vector<1x8x8xbf16> -> vector<4x8x8xbf16>
    %344 = arith.truncf %328 : vector<12x32xf32> to vector<12x32xbf16>
    %345 = vector.extract_strided_slice %344 {offsets = [0, 0], sizes = [12, 8], strides = [1, 1]} : vector<12x32xbf16> to vector<12x8xbf16>
    %346 = vector.extract_strided_slice %344 {offsets = [0, 8], sizes = [12, 8], strides = [1, 1]} : vector<12x32xbf16> to vector<12x8xbf16>
    %347 = vector.extract_strided_slice %344 {offsets = [0, 16], sizes = [12, 8], strides = [1, 1]} : vector<12x32xbf16> to vector<12x8xbf16>
    %348 = vector.extract_strided_slice %344 {offsets = [0, 24], sizes = [12, 8], strides = [1, 1]} : vector<12x32xbf16> to vector<12x8xbf16>
    %349 = vector.shape_cast %345 : vector<12x8xbf16> to vector<1x12x8xbf16>
    %350 = vector.shape_cast %346 : vector<12x8xbf16> to vector<1x12x8xbf16>
    %351 = vector.shape_cast %347 : vector<12x8xbf16> to vector<1x12x8xbf16>
    %352 = vector.shape_cast %348 : vector<12x8xbf16> to vector<1x12x8xbf16>
    %353 = tpu.concatenate %349, %350, %351, %352 in 0 : vector<1x12x8xbf16>, vector<1x12x8xbf16>, vector<1x12x8xbf16>, vector<1x12x8xbf16> -> vector<4x12x8xbf16>
    %354 = arith.truncf %330 : vector<12x32xf32> to vector<12x32xbf16>
    %355 = vector.extract_strided_slice %354 {offsets = [0, 0], sizes = [12, 8], strides = [1, 1]} : vector<12x32xbf16> to vector<12x8xbf16>
    %356 = vector.extract_strided_slice %354 {offsets = [0, 8], sizes = [12, 8], strides = [1, 1]} : vector<12x32xbf16> to vector<12x8xbf16>
    %357 = vector.extract_strided_slice %354 {offsets = [0, 16], sizes = [12, 8], strides = [1, 1]} : vector<12x32xbf16> to vector<12x8xbf16>
    %358 = vector.extract_strided_slice %354 {offsets = [0, 24], sizes = [12, 8], strides = [1, 1]} : vector<12x32xbf16> to vector<12x8xbf16>
    %359 = vector.shape_cast %355 : vector<12x8xbf16> to vector<1x12x8xbf16>
    %360 = vector.shape_cast %356 : vector<12x8xbf16> to vector<1x12x8xbf16>
    %361 = vector.shape_cast %357 : vector<12x8xbf16> to vector<1x12x8xbf16>
    %362 = vector.shape_cast %358 : vector<12x8xbf16> to vector<1x12x8xbf16>
    %363 = tpu.concatenate %359, %360, %361, %362 in 0 : vector<1x12x8xbf16>, vector<1x12x8xbf16>, vector<1x12x8xbf16>, vector<1x12x8xbf16> -> vector<4x12x8xbf16>
    "tpu.trace_start"() <{level = 10 : i32, message = "hqd,hkd->hqk"}> : () -> ()
    %cst_113 = arith.constant dense<0.000000e+00> : vector<4x8x12xf32>
    %364 = tpu.matmul %343, %353, %cst_113 {dimension_numbers = #tpu.dot_dimension_numbers<[2], [2], [1], [1], [0, 0, 0, 1, 1, 1], [0], [0]>} : vector<4x8x8xbf16>, vector<4x12x8xbf16>, vector<4x8x12xf32> -> vector<4x8x12xf32>
    "tpu.trace_stop"() : () -> ()
    %cst_114 = arith.constant 0.353553385 : f32
    %365 = vector.broadcast %cst_114 : f32 to vector<4x8x12xf32>
    %366 = arith.mulf %364, %365 : vector<4x8x12xf32>
    %367 = vector.shape_cast %332 : vector<8x12xf32> to vector<1x8x12xf32>
    %368 = vector.broadcast %367 : vector<1x8x12xf32> to vector<4x8x12xf32>
    %369 = arith.addf %366, %368 : vector<4x8x12xf32>
    %cst_115 = arith.constant dense<0xFF800000> : vector<4x8xf32>
    %370 = vector.multi_reduction <maximumf>, %369, %cst_115 [2] : vector<4x8x12xf32> to vector<4x8xf32>
    %371 = vector.shape_cast %370 : vector<4x8xf32> to vector<4x8x1xf32>
    %372 = vector.broadcast %371 : vector<4x8x1xf32> to vector<4x8x12xf32>
    %373 = arith.subf %369, %372 : vector<4x8x12xf32>
    %374 = math.exp %373 : vector<4x8x12xf32>
    %cst_116 = arith.constant dense<0.000000e+00> : vector<4x8xf32>
    %375 = vector.multi_reduction <add>, %374, %cst_116 [2] : vector<4x8x12xf32> to vector<4x8xf32>
    %376 = vector.shape_cast %375 : vector<4x8xf32> to vector<4x8x1xf32>
    %377 = vector.broadcast %376 : vector<4x8x1xf32> to vector<4x8x12xf32>
    %378 = arith.divf %374, %377 : vector<4x8x12xf32>
    %379 = arith.truncf %378 : vector<4x8x12xf32> to vector<4x8x12xbf16>
    "tpu.trace_start"() <{level = 10 : i32, message = "hqk,hkd->hqd"}> : () -> ()
    %cst_117 = arith.constant dense<0.000000e+00> : vector<4x8x8xf32>
    %380 = tpu.matmul %379, %363, %cst_117 {dimension_numbers = #tpu.dot_dimension_numbers<[2], [1], [1], [2], [0, 0, 0, 1, 1, 2], [0], [0]>} : vector<4x8x12xbf16>, vector<4x12x8xbf16>, vector<4x8x8xf32> -> vector<4x8x8xf32>
    "tpu.trace_stop"() : () -> ()
    %381 = vector.extract_strided_slice %380 {offsets = [0, 0, 0], sizes = [1, 8, 8], strides = [1, 1, 1]} : vector<4x8x8xf32> to vector<1x8x8xf32>
    %382 = vector.shape_cast %381 : vector<1x8x8xf32> to vector<8x8xf32>
    %383 = arith.truncf %382 : vector<8x8xf32> to vector<8x8xbf16>
    %c0_118 = arith.constant 0 : index
    %c0_119 = arith.constant 0 : index
    %c0_120 = arith.constant 0 : index
    %384 = vector.load %arg13[%c0_118, %c0_119, %c0_120] : memref<4x8x32xbf16, #tpu.memory_space<vmem>>, vector<1x8x32xbf16>
    %385 = vector.shape_cast %384 : vector<1x8x32xbf16> to vector<8x32xbf16>
    %cst_121 = arith.constant dense<0.000000e+00> : vector<8x32xf32>
    %386 = tpu.matmul %383, %385, %cst_121 {dimension_numbers = #tpu.dot_dimension_numbers<[1], [0], [0], [1], [0, 0, 1, 1], [], []>} : vector<8x8xbf16>, vector<8x32xbf16>, vector<8x32xf32> -> vector<8x32xf32>
    %387 = vector.broadcast %333 : vector<1x32xf32> to vector<8x32xf32>
    %388 = arith.addf %387, %386 : vector<8x32xf32>
    %389 = vector.extract_strided_slice %380 {offsets = [1, 0, 0], sizes = [1, 8, 8], strides = [1, 1, 1]} : vector<4x8x8xf32> to vector<1x8x8xf32>
    %390 = vector.shape_cast %389 : vector<1x8x8xf32> to vector<8x8xf32>
    %391 = arith.truncf %390 : vector<8x8xf32> to vector<8x8xbf16>
    %c1_122 = arith.constant 1 : index
    %c0_123 = arith.constant 0 : index
    %c0_124 = arith.constant 0 : index
    %392 = vector.load %arg13[%c1_122, %c0_123, %c0_124] : memref<4x8x32xbf16, #tpu.memory_space<vmem>>, vector<1x8x32xbf16>
    %393 = vector.shape_cast %392 : vector<1x8x32xbf16> to vector<8x32xbf16>
    %cst_125 = arith.constant dense<0.000000e+00> : vector<8x32xf32>
    %394 = tpu.matmul %391, %393, %cst_125 {dimension_numbers = #tpu.dot_dimension_numbers<[1], [0], [0], [1], [0, 0, 1, 1], [], []>} : vector<8x8xbf16>, vector<8x32xbf16>, vector<8x32xf32> -> vector<8x32xf32>
    %395 = arith.addf %388, %394 : vector<8x32xf32>
    %396 = vector.extract_strided_slice %380 {offsets = [2, 0, 0], sizes = [1, 8, 8], strides = [1, 1, 1]} : vector<4x8x8xf32> to vector<1x8x8xf32>
    %397 = vector.shape_cast %396 : vector<1x8x8xf32> to vector<8x8xf32>
    %398 = arith.truncf %397 : vector<8x8xf32> to vector<8x8xbf16>
    %c2_126 = arith.constant 2 : index
    %c0_127 = arith.constant 0 : index
    %c0_128 = arith.constant 0 : index
    %399 = vector.load %arg13[%c2_126, %c0_127, %c0_128] : memref<4x8x32xbf16, #tpu.memory_space<vmem>>, vector<1x8x32xbf16>
    %400 = vector.shape_cast %399 : vector<1x8x32xbf16> to vector<8x32xbf16>
    %cst_129 = arith.constant dense<0.000000e+00> : vector<8x32xf32>
    %401 = tpu.matmul %398, %400, %cst_129 {dimension_numbers = #tpu.dot_dimension_numbers<[1], [0], [0], [1], [0, 0, 1, 1], [], []>} : vector<8x8xbf16>, vector<8x32xbf16>, vector<8x32xf32> -> vector<8x32xf32>
    %402 = arith.addf %395, %401 : vector<8x32xf32>
    %403 = vector.extract_strided_slice %380 {offsets = [3, 0, 0], sizes = [1, 8, 8], strides = [1, 1, 1]} : vector<4x8x8xf32> to vector<1x8x8xf32>
    %404 = vector.shape_cast %403 : vector<1x8x8xf32> to vector<8x8xf32>
    %405 = arith.truncf %404 : vector<8x8xf32> to vector<8x8xbf16>
    %c3_130 = arith.constant 3 : index
    %c0_131 = arith.constant 0 : index
    %c0_132 = arith.constant 0 : index
    %406 = vector.load %arg13[%c3_130, %c0_131, %c0_132] : memref<4x8x32xbf16, #tpu.memory_space<vmem>>, vector<1x8x32xbf16>
    %407 = vector.shape_cast %406 : vector<1x8x32xbf16> to vector<8x32xbf16>
    %cst_133 = arith.constant dense<0.000000e+00> : vector<8x32xf32>
    %408 = tpu.matmul %405, %407, %cst_133 {dimension_numbers = #tpu.dot_dimension_numbers<[1], [0], [0], [1], [0, 0, 1, 1], [], []>} : vector<8x8xbf16>, vector<8x32xbf16>, vector<8x32xf32> -> vector<8x32xf32>
    %409 = arith.addf %402, %408 : vector<8x32xf32>
    %410 = vector.extract_strided_slice %318 {offsets = [8, 0], sizes = [8, 32], strides = [1, 1]} : vector<16x32xf32> to vector<8x32xf32>
    %411 = tpu.concatenate %410, %324 in 0 : vector<8x32xf32>, vector<4x32xf32> -> vector<12x32xf32>
    %412 = vector.extract_strided_slice %322 {offsets = [8, 0], sizes = [8, 32], strides = [1, 1]} : vector<16x32xf32> to vector<8x32xf32>
    %413 = tpu.concatenate %412, %326 in 0 : vector<8x32xf32>, vector<4x32xf32> -> vector<12x32xf32>
    %414 = vector.extract_strided_slice %311 {offsets = [8, 0], sizes = [8, 32], strides = [1, 1]} : vector<16x32xf32> to vector<8x32xf32>
    %c0_134 = arith.constant 0 : index
    %c0_135 = arith.constant 0 : index
    %415 = vector.load %arg4[%c0_134, %c0_135] : memref<8x12xf32, #tpu.memory_space<vmem>>, vector<8x12xf32>
    %416 = vector.extract_strided_slice %13 {offsets = [3, 0], sizes = [1, 32], strides = [1, 1]} : vector<4x32xf32> to vector<1x32xf32>
    %417 = arith.truncf %414 : vector<8x32xf32> to vector<8x32xbf16>
    %418 = vector.extract_strided_slice %417 {offsets = [0, 0], sizes = [8, 8], strides = [1, 1]} : vector<8x32xbf16> to vector<8x8xbf16>
    %419 = vector.extract_strided_slice %417 {offsets = [0, 8], sizes = [8, 8], strides = [1, 1]} : vector<8x32xbf16> to vector<8x8xbf16>
    %420 = vector.extract_strided_slice %417 {offsets = [0, 16], sizes = [8, 8], strides = [1, 1]} : vector<8x32xbf16> to vector<8x8xbf16>
    %421 = vector.extract_strided_slice %417 {offsets = [0, 24], sizes = [8, 8], strides = [1, 1]} : vector<8x32xbf16> to vector<8x8xbf16>
    %422 = vector.shape_cast %418 : vector<8x8xbf16> to vector<1x8x8xbf16>
    %423 = vector.shape_cast %419 : vector<8x8xbf16> to vector<1x8x8xbf16>
    %424 = vector.shape_cast %420 : vector<8x8xbf16> to vector<1x8x8xbf16>
    %425 = vector.shape_cast %421 : vector<8x8xbf16> to vector<1x8x8xbf16>
    %426 = tpu.concatenate %422, %423, %424, %425 in 0 : vector<1x8x8xbf16>, vector<1x8x8xbf16>, vector<1x8x8xbf16>, vector<1x8x8xbf16> -> vector<4x8x8xbf16>
    %427 = arith.truncf %411 : vector<12x32xf32> to vector<12x32xbf16>
    %428 = vector.extract_strided_slice %427 {offsets = [0, 0], sizes = [12, 8], strides = [1, 1]} : vector<12x32xbf16> to vector<12x8xbf16>
    %429 = vector.extract_strided_slice %427 {offsets = [0, 8], sizes = [12, 8], strides = [1, 1]} : vector<12x32xbf16> to vector<12x8xbf16>
    %430 = vector.extract_strided_slice %427 {offsets = [0, 16], sizes = [12, 8], strides = [1, 1]} : vector<12x32xbf16> to vector<12x8xbf16>
    %431 = vector.extract_strided_slice %427 {offsets = [0, 24], sizes = [12, 8], strides = [1, 1]} : vector<12x32xbf16> to vector<12x8xbf16>
    %432 = vector.shape_cast %428 : vector<12x8xbf16> to vector<1x12x8xbf16>
    %433 = vector.shape_cast %429 : vector<12x8xbf16> to vector<1x12x8xbf16>
    %434 = vector.shape_cast %430 : vector<12x8xbf16> to vector<1x12x8xbf16>
    %435 = vector.shape_cast %431 : vector<12x8xbf16> to vector<1x12x8xbf16>
    %436 = tpu.concatenate %432, %433, %434, %435 in 0 : vector<1x12x8xbf16>, vector<1x12x8xbf16>, vector<1x12x8xbf16>, vector<1x12x8xbf16> -> vector<4x12x8xbf16>
    %437 = arith.truncf %413 : vector<12x32xf32> to vector<12x32xbf16>
    %438 = vector.extract_strided_slice %437 {offsets = [0, 0], sizes = [12, 8], strides = [1, 1]} : vector<12x32xbf16> to vector<12x8xbf16>
    %439 = vector.extract_strided_slice %437 {offsets = [0, 8], sizes = [12, 8], strides = [1, 1]} : vector<12x32xbf16> to vector<12x8xbf16>
    %440 = vector.extract_strided_slice %437 {offsets = [0, 16], sizes = [12, 8], strides = [1, 1]} : vector<12x32xbf16> to vector<12x8xbf16>
    %441 = vector.extract_strided_slice %437 {offsets = [0, 24], sizes = [12, 8], strides = [1, 1]} : vector<12x32xbf16> to vector<12x8xbf16>
    %442 = vector.shape_cast %438 : vector<12x8xbf16> to vector<1x12x8xbf16>
    %443 = vector.shape_cast %439 : vector<12x8xbf16> to vector<1x12x8xbf16>
    %444 = vector.shape_cast %440 : vector<12x8xbf16> to vector<1x12x8xbf16>
    %445 = vector.shape_cast %441 : vector<12x8xbf16> to vector<1x12x8xbf16>
    %446 = tpu.concatenate %442, %443, %444, %445 in 0 : vector<1x12x8xbf16>, vector<1x12x8xbf16>, vector<1x12x8xbf16>, vector<1x12x8xbf16> -> vector<4x12x8xbf16>
    "tpu.trace_start"() <{level = 10 : i32, message = "hqd,hkd->hqk"}> : () -> ()
    %cst_136 = arith.constant dense<0.000000e+00> : vector<4x8x12xf32>
    %447 = tpu.matmul %426, %436, %cst_136 {dimension_numbers = #tpu.dot_dimension_numbers<[2], [2], [1], [1], [0, 0, 0, 1, 1, 1], [0], [0]>} : vector<4x8x8xbf16>, vector<4x12x8xbf16>, vector<4x8x12xf32> -> vector<4x8x12xf32>
    "tpu.trace_stop"() : () -> ()
    %cst_137 = arith.constant 0.353553385 : f32
    %448 = vector.broadcast %cst_137 : f32 to vector<4x8x12xf32>
    %449 = arith.mulf %447, %448 : vector<4x8x12xf32>
    %450 = vector.shape_cast %415 : vector<8x12xf32> to vector<1x8x12xf32>
    %451 = vector.broadcast %450 : vector<1x8x12xf32> to vector<4x8x12xf32>
    %452 = arith.addf %449, %451 : vector<4x8x12xf32>
    %cst_138 = arith.constant dense<0xFF800000> : vector<4x8xf32>
    %453 = vector.multi_reduction <maximumf>, %452, %cst_138 [2] : vector<4x8x12xf32> to vector<4x8xf32>
    %454 = vector.shape_cast %453 : vector<4x8xf32> to vector<4x8x1xf32>
    %455 = vector.broadcast %454 : vector<4x8x1xf32> to vector<4x8x12xf32>
    %456 = arith.subf %452, %455 : vector<4x8x12xf32>
    %457 = math.exp %456 : vector<4x8x12xf32>
    %cst_139 = arith.constant dense<0.000000e+00> : vector<4x8xf32>
    %458 = vector.multi_reduction <add>, %457, %cst_139 [2] : vector<4x8x12xf32> to vector<4x8xf32>
    %459 = vector.shape_cast %458 : vector<4x8xf32> to vector<4x8x1xf32>
    %460 = vector.broadcast %459 : vector<4x8x1xf32> to vector<4x8x12xf32>
    %461 = arith.divf %457, %460 : vector<4x8x12xf32>
    %462 = arith.truncf %461 : vector<4x8x12xf32> to vector<4x8x12xbf16>
    "tpu.trace_start"() <{level = 10 : i32, message = "hqk,hkd->hqd"}> : () -> ()
    %cst_140 = arith.constant dense<0.000000e+00> : vector<4x8x8xf32>
    %463 = tpu.matmul %462, %446, %cst_140 {dimension_numbers = #tpu.dot_dimension_numbers<[2], [1], [1], [2], [0, 0, 0, 1, 1, 2], [0], [0]>} : vector<4x8x12xbf16>, vector<4x12x8xbf16>, vector<4x8x8xf32> -> vector<4x8x8xf32>
    "tpu.trace_stop"() : () -> ()
    %464 = vector.extract_strided_slice %463 {offsets = [0, 0, 0], sizes = [1, 8, 8], strides = [1, 1, 1]} : vector<4x8x8xf32> to vector<1x8x8xf32>
    %465 = vector.shape_cast %464 : vector<1x8x8xf32> to vector<8x8xf32>
    %466 = arith.truncf %465 : vector<8x8xf32> to vector<8x8xbf16>
    %c0_141 = arith.constant 0 : index
    %c0_142 = arith.constant 0 : index
    %c0_143 = arith.constant 0 : index
    %467 = vector.load %arg13[%c0_141, %c0_142, %c0_143] : memref<4x8x32xbf16, #tpu.memory_space<vmem>>, vector<1x8x32xbf16>
    %468 = vector.shape_cast %467 : vector<1x8x32xbf16> to vector<8x32xbf16>
    %cst_144 = arith.constant dense<0.000000e+00> : vector<8x32xf32>
    %469 = tpu.matmul %466, %468, %cst_144 {dimension_numbers = #tpu.dot_dimension_numbers<[1], [0], [0], [1], [0, 0, 1, 1], [], []>} : vector<8x8xbf16>, vector<8x32xbf16>, vector<8x32xf32> -> vector<8x32xf32>
    %470 = vector.broadcast %416 : vector<1x32xf32> to vector<8x32xf32>
    %471 = arith.addf %470, %469 : vector<8x32xf32>
    %472 = vector.extract_strided_slice %463 {offsets = [1, 0, 0], sizes = [1, 8, 8], strides = [1, 1, 1]} : vector<4x8x8xf32> to vector<1x8x8xf32>
    %473 = vector.shape_cast %472 : vector<1x8x8xf32> to vector<8x8xf32>
    %474 = arith.truncf %473 : vector<8x8xf32> to vector<8x8xbf16>
    %c1_145 = arith.constant 1 : index
    %c0_146 = arith.constant 0 : index
    %c0_147 = arith.constant 0 : index
    %475 = vector.load %arg13[%c1_145, %c0_146, %c0_147] : memref<4x8x32xbf16, #tpu.memory_space<vmem>>, vector<1x8x32xbf16>
    %476 = vector.shape_cast %475 : vector<1x8x32xbf16> to vector<8x32xbf16>
    %cst_148 = arith.constant dense<0.000000e+00> : vector<8x32xf32>
    %477 = tpu.matmul %474, %476, %cst_148 {dimension_numbers = #tpu.dot_dimension_numbers<[1], [0], [0], [1], [0, 0, 1, 1], [], []>} : vector<8x8xbf16>, vector<8x32xbf16>, vector<8x32xf32> -> vector<8x32xf32>
    %478 = arith.addf %471, %477 : vector<8x32xf32>
    %479 = vector.extract_strided_slice %463 {offsets = [2, 0, 0], sizes = [1, 8, 8], strides = [1, 1, 1]} : vector<4x8x8xf32> to vector<1x8x8xf32>
    %480 = vector.shape_cast %479 : vector<1x8x8xf32> to vector<8x8xf32>
    %481 = arith.truncf %480 : vector<8x8xf32> to vector<8x8xbf16>
    %c2_149 = arith.constant 2 : index
    %c0_150 = arith.constant 0 : index
    %c0_151 = arith.constant 0 : index
    %482 = vector.load %arg13[%c2_149, %c0_150, %c0_151] : memref<4x8x32xbf16, #tpu.memory_space<vmem>>, vector<1x8x32xbf16>
    %483 = vector.shape_cast %482 : vector<1x8x32xbf16> to vector<8x32xbf16>
    %cst_152 = arith.constant dense<0.000000e+00> : vector<8x32xf32>
    %484 = tpu.matmul %481, %483, %cst_152 {dimension_numbers = #tpu.dot_dimension_numbers<[1], [0], [0], [1], [0, 0, 1, 1], [], []>} : vector<8x8xbf16>, vector<8x32xbf16>, vector<8x32xf32> -> vector<8x32xf32>
    %485 = arith.addf %478, %484 : vector<8x32xf32>
    %486 = vector.extract_strided_slice %463 {offsets = [3, 0, 0], sizes = [1, 8, 8], strides = [1, 1, 1]} : vector<4x8x8xf32> to vector<1x8x8xf32>
    %487 = vector.shape_cast %486 : vector<1x8x8xf32> to vector<8x8xf32>
    %488 = arith.truncf %487 : vector<8x8xf32> to vector<8x8xbf16>
    %c3_153 = arith.constant 3 : index
    %c0_154 = arith.constant 0 : index
    %c0_155 = arith.constant 0 : index
    %489 = vector.load %arg13[%c3_153, %c0_154, %c0_155] : memref<4x8x32xbf16, #tpu.memory_space<vmem>>, vector<1x8x32xbf16>
    %490 = vector.shape_cast %489 : vector<1x8x32xbf16> to vector<8x32xbf16>
    %cst_156 = arith.constant dense<0.000000e+00> : vector<8x32xf32>
    %491 = tpu.matmul %488, %490, %cst_156 {dimension_numbers = #tpu.dot_dimension_numbers<[1], [0], [0], [1], [0, 0, 1, 1], [], []>} : vector<8x8xbf16>, vector<8x32xbf16>, vector<8x32xf32> -> vector<8x32xf32>
    %492 = arith.addf %485, %491 : vector<8x32xf32>
    %493 = tpu.concatenate %409, %492 in 0 : vector<8x32xf32>, vector<8x32xf32> -> vector<16x32xf32>
    %494 = arith.addf %283, %493 : vector<16x32xf32>
    %495 = vector.extract_strided_slice %494 {offsets = [0, 0], sizes = [8, 32], strides = [1, 1]} : vector<16x32xf32> to vector<8x32xf32>
    %c0_157 = arith.constant 0 : index
    %c0_158 = arith.constant 0 : index
    %c0_159 = arith.constant 0 : index
    %496 = vector.load %arg19[%c0_157, %c0_158, %c0_159] : memref<2x8x32xf32, #tpu.memory_space<vmem>>, vector<1x8x32xf32>
    %497 = vector.shape_cast %496 : vector<1x8x32xf32> to vector<8x32xf32>
    %498 = vector.shape_cast %495 : vector<8x32xf32> to vector<1x8x32xf32>
    tpu.vector_store %arg19[%c0_157, %c0_158, %c0_159], %498 {strides = array<i32>} : memref<2x8x32xf32, #tpu.memory_space<vmem>>, vector<1x8x32xf32>,
    %499 = vector.extract_strided_slice %494 {offsets = [8, 0], sizes = [8, 32], strides = [1, 1]} : vector<16x32xf32> to vector<8x32xf32>
    %c1_160 = arith.constant 1 : index
    %c0_161 = arith.constant 0 : index
    %c0_162 = arith.constant 0 : index
    %500 = vector.load %arg19[%c1_160, %c0_161, %c0_162] : memref<2x8x32xf32, #tpu.memory_space<vmem>>, vector<1x8x32xf32>
    %501 = vector.shape_cast %500 : vector<1x8x32xf32> to vector<8x32xf32>
    %502 = vector.shape_cast %499 : vector<8x32xf32> to vector<1x8x32xf32>
    tpu.vector_store %arg19[%c1_160, %c0_161, %c0_162], %502 {strides = array<i32>} : memref<2x8x32xf32, #tpu.memory_space<vmem>>, vector<1x8x32xf32>,
    return
  }
  func.func @transform_0(%arg0: i32) -> (i32, i32, i32) {
    %c0_i32 = arith.constant 0 : i32
    %c0_i32_0 = arith.constant 0 : i32
    %c0_i32_1 = arith.constant 0 : i32
    return %arg0, %c0_i32, %c0_i32_0 : i32, i32, i32
  }
  func.func @transform_1(%arg0: i32) -> (i32, i32, i32) {
    %c0_i32 = arith.constant 0 : i32
    %c0_i32_0 = arith.constant 0 : i32
    %c0_i32_1 = arith.constant 0 : i32
    return %arg0, %c0_i32, %c0_i32_0 : i32, i32, i32
  }
  func.func @transform_2(%arg0: i32) -> (i32, i32, i32) {
    %c0_i32 = arith.constant 0 : i32
    %c0_i32_0 = arith.constant 0 : i32
    %c0_i32_1 = arith.constant 0 : i32
    return %arg0, %c0_i32, %c0_i32_0 : i32, i32, i32
  }
  func.func @transform_3(%arg0: i32) -> (i32, i32) {
    %c0_i32 = arith.constant 0 : i32
    %c0_i32_0 = arith.constant 0 : i32
    %c0_i32_1 = arith.constant 0 : i32
    return %c0_i32, %c0_i32_0 : i32, i32
  }
  func.func @transform_4(%arg0: i32) -> (i32, i32, i32) {
    %c0_i32 = arith.constant 0 : i32
    %c0_i32_0 = arith.constant 0 : i32
    %c0_i32_1 = arith.constant 0 : i32
    %c0_i32_2 = arith.constant 0 : i32
    return %c0_i32, %c0_i32_0, %c0_i32_1 : i32, i32, i32
  }
  func.func @transform_5(%arg0: i32) -> (i32, i32) {
    %c0_i32 = arith.constant 0 : i32
    %c0_i32_0 = arith.constant 0 : i32
    %c0_i32_1 = arith.constant 0 : i32
    return %c0_i32, %c0_i32_0 : i32, i32
  }
  func.func @transform_6(%arg0: i32) -> (i32, i32) {
    %c0_i32 = arith.constant 0 : i32
    %c0_i32_0 = arith.constant 0 : i32
    %c0_i32_1 = arith.constant 0 : i32
    return %c0_i32, %c0_i32_0 : i32, i32
  }
  func.func @transform_7(%arg0: i32) -> (i32, i32) {
    %c0_i32 = arith.constant 0 : i32
    %c0_i32_0 = arith.constant 0 : i32
    %c0_i32_1 = arith.constant 0 : i32
    return %c0_i32, %c0_i32_0 : i32, i32
  }
  func.func @transform_8(%arg0: i32) -> (i32, i32, i32) {
    %c0_i32 = arith.constant 0 : i32
    %c0_i32_0 = arith.constant 0 : i32
    %c0_i32_1 = arith.constant 0 : i32
    %c0_i32_2 = arith.constant 0 : i32
    return %c0_i32, %c0_i32_0, %c0_i32_1 : i32, i32, i32
  }
  func.func @transform_9(%arg0: i32) -> (i32, i32) {
    %c0_i32 = arith.constant 0 : i32
    %c0_i32_0 = arith.constant 0 : i32
    %c0_i32_1 = arith.constant 0 : i32
    return %c0_i32, %c0_i32_0 : i32, i32
  }
  func.func @transform_10(%arg0: i32) -> (i32, i32) {
    %c0_i32 = arith.constant 0 : i32
    %c0_i32_0 = arith.constant 0 : i32
    %c0_i32_1 = arith.constant 0 : i32
    return %c0_i32, %c0_i32_0 : i32, i32
  }
  func.func @transform_11(%arg0: i32) -> (i32, i32) {
    %c0_i32 = arith.constant 0 : i32
    %c0_i32_0 = arith.constant 0 : i32
    %c0_i32_1 = arith.constant 0 : i32
    return %c0_i32, %c0_i32_0 : i32, i32
  }
  func.func @transform_12(%arg0: i32) -> (i32, i32, i32) {
    %c0_i32 = arith.constant 0 : i32
    %c0_i32_0 = arith.constant 0 : i32
    %c0_i32_1 = arith.constant 0 : i32
    %c0_i32_2 = arith.constant 0 : i32
    return %c0_i32, %c0_i32_0, %c0_i32_1 : i32, i32, i32
  }
  func.func @transform_13(%arg0: i32) -> (i32, i32) {
    %c0_i32 = arith.constant 0 : i32
    %c0_i32_0 = arith.constant 0 : i32
    %c0_i32_1 = arith.constant 0 : i32
    return %c0_i32, %c0_i32_0 : i32, i32
  }
  func.func @transform_14(%arg0: i32) -> (i32, i32) {
    %c0_i32 = arith.constant 0 : i32
    %c0_i32_0 = arith.constant 0 : i32
    %c0_i32_1 = arith.constant 0 : i32
    return %c0_i32, %c0_i32_0 : i32, i32
  }
  func.func @transform_15(%arg0: i32) -> (i32, i32) {
    %c0_i32 = arith.constant 0 : i32
    %c0_i32_0 = arith.constant 0 : i32
    %c0_i32_1 = arith.constant 0 : i32
    return %c0_i32, %c0_i32_0 : i32, i32
  }
  func.func @transform_16(%arg0: i32) -> (i32, i32) {
    %c0_i32 = arith.constant 0 : i32
    %c0_i32_0 = arith.constant 0 : i32
    %c0_i32_1 = arith.constant 0 : i32
    return %c0_i32, %c0_i32_0 : i32, i32
  }
  func.func @transform_17(%arg0: i32) -> (i32, i32) {
    %c0_i32 = arith.constant 0 : i32
    %c0_i32_0 = arith.constant 0 : i32
    %c0_i32_1 = arith.constant 0 : i32
    return %c0_i32, %c0_i32_0 : i32, i32
  }
  func.func @transform_18(%arg0: i32) -> (i32, i32, i32) {
    %c0_i32 = arith.constant 0 : i32
    %c0_i32_0 = arith.constant 0 : i32
    %c0_i32_1 = arith.constant 0 : i32
    return %arg0, %c0_i32, %c0_i32_0 : i32, i32, i32
  }
}

module attributes {stable_mosaic.version = 11 : i64} {
  func.func @_hoi_layer_kernel(%arg0: i32, %arg1: memref<2x8x32xf32, #tpu.memory_space<vmem>>, %arg2: memref<2x16x32xbf16, #tpu.memory_space<vmem>>, %arg3: memref<2x1x16xf32, #tpu.memory_space<vmem>>, %arg4: memref<8x12xf32, #tpu.memory_space<vmem>>, %arg5: memref<2x4x32xf32, #tpu.memory_space<vmem>>, %arg6: memref<6x32xf32, #tpu.memory_space<vmem>>, %arg7: memref<32x32xbf16, #tpu.memory_space<vmem>>, %arg8: memref<32x64xbf16, #tpu.memory_space<vmem>>, %arg9: memref<4x8x32xbf16, #tpu.memory_space<vmem>>, %arg10: memref<4x32xf32, #tpu.memory_space<vmem>>, %arg11: memref<32x32xbf16, #tpu.memory_space<vmem>>, %arg12: memref<32x64xbf16, #tpu.memory_space<vmem>>, %arg13: memref<4x8x32xbf16, #tpu.memory_space<vmem>>, %arg14: memref<4x32xf32, #tpu.memory_space<vmem>>, %arg15: memref<32x128xbf16, #tpu.memory_space<vmem>>, %arg16: memref<1x128xf32, #tpu.memory_space<vmem>>, %arg17: memref<128x32xbf16, #tpu.memory_space<vmem>>, %arg18: memref<1x32xf32, #tpu.memory_space<vmem>>, %arg19: memref<2x8x32xf32, #tpu.memory_space<vmem>>, %arg20: memref<2x8x16xf32, #tpu.memory_space<vmem>>) attributes {dimension_semantics = [#tpu.dimension_semantics<parallel>], iteration_bounds = array<i64: 1>, scalar_prefetch = 0 : i64, scratch_operands = 0 : i64, tpu.core_type = #tpu.core_type<tc>, window_params = [{transform_indices = @transform_0, window_bounds = array<i64: 2, 8, 32>}, {transform_indices = @transform_1, window_bounds = array<i64: 2, 16, 32>}, {transform_indices = @transform_2, window_bounds = array<i64: 2, 1, 16>}, {pipeline_mode = #tpu.pipeline_mode<synchronous>, transform_indices = @transform_3, window_bounds = array<i64: 8, 12>}, {pipeline_mode = #tpu.pipeline_mode<synchronous>, transform_indices = @transform_4, window_bounds = array<i64: 2, 4, 32>}, {pipeline_mode = #tpu.pipeline_mode<synchronous>, transform_indices = @transform_5, window_bounds = array<i64: 6, 32>}, {pipeline_mode = #tpu.pipeline_mode<synchronous>, transform_indices = @transform_6, window_bounds = array<i64: 32, 32>}, {pipeline_mode = #tpu.pipeline_mode<synchronous>, transform_indices = @transform_7, window_bounds = array<i64: 32, 64>}, {pipeline_mode = #tpu.pipeline_mode<synchronous>, transform_indices = @transform_8, window_bounds = array<i64: 4, 8, 32>}, {pipeline_mode = #tpu.pipeline_mode<synchronous>, transform_indices = @transform_9, window_bounds = array<i64: 4, 32>}, {pipeline_mode = #tpu.pipeline_mode<synchronous>, transform_indices = @transform_10, window_bounds = array<i64: 32, 32>}, {pipeline_mode = #tpu.pipeline_mode<synchronous>, transform_indices = @transform_11, window_bounds = array<i64: 32, 64>}, {pipeline_mode = #tpu.pipeline_mode<synchronous>, transform_indices = @transform_12, window_bounds = array<i64: 4, 8, 32>}, {pipeline_mode = #tpu.pipeline_mode<synchronous>, transform_indices = @transform_13, window_bounds = array<i64: 4, 32>}, {pipeline_mode = #tpu.pipeline_mode<synchronous>, transform_indices = @transform_14, window_bounds = array<i64: 32, 128>}, {pipeline_mode = #tpu.pipeline_mode<synchronous>, transform_indices = @transform_15, window_bounds = array<i64: 1, 128>}, {pipeline_mode = #tpu.pipeline_mode<synchronous>, transform_indices = @transform_16, window_bounds = array<i64: 128, 32>}, {pipeline_mode = #tpu.pipeline_mode<synchronous>, transform_indices = @transform_17, window_bounds = array<i64: 1, 32>}, {transform_indices = @transform_18, window_bounds = array<i64: 2, 8, 32>}, {transform_indices = @transform_19, window_bounds = array<i64: 2, 8, 16>}]} {
    %c0 = arith.constant 0 : index
    %c0_0 = arith.constant 0 : index
    %c0_1 = arith.constant 0 : index
    %0 = vector.load %arg1[%c0, %c0_0, %c0_1] : memref<2x8x32xf32, #tpu.memory_space<vmem>>, vector<1x8x32xf32>
    %1 = vector.shape_cast %0 : vector<1x8x32xf32> to vector<8x32xf32>
    %c1 = arith.constant 1 : index
    %c0_2 = arith.constant 0 : index
    %c0_3 = arith.constant 0 : index
    %2 = vector.load %arg1[%c1, %c0_2, %c0_3] : memref<2x8x32xf32, #tpu.memory_space<vmem>>, vector<1x8x32xf32>
    %3 = vector.shape_cast %2 : vector<1x8x32xf32> to vector<8x32xf32>
    %4 = tpu.concatenate %1, %3 in 0 : vector<8x32xf32>, vector<8x32xf32> -> vector<16x32xf32>
    %c0_4 = arith.constant 0 : index
    %c0_5 = arith.constant 0 : index
    %c0_6 = arith.constant 0 : index
    %5 = vector.load %arg2[%c0_4, %c0_5, %c0_6] : memref<2x16x32xbf16, #tpu.memory_space<vmem>>, vector<1x16x32xbf16>
    %6 = vector.shape_cast %5 : vector<1x16x32xbf16> to vector<16x32xbf16>
    %c1_7 = arith.constant 1 : index
    %c0_8 = arith.constant 0 : index
    %c0_9 = arith.constant 0 : index
    %7 = vector.load %arg2[%c1_7, %c0_8, %c0_9] : memref<2x16x32xbf16, #tpu.memory_space<vmem>>, vector<1x16x32xbf16>
    %8 = vector.shape_cast %7 : vector<1x16x32xbf16> to vector<16x32xbf16>
    %9 = tpu.concatenate %6, %8 in 0 : vector<16x32xbf16>, vector<16x32xbf16> -> vector<32x32xbf16>
    %10 = arith.extf %9 : vector<32x32xbf16> to vector<32x32xf32>
    %c0_10 = arith.constant 0 : index
    %c0_11 = arith.constant 0 : index
    %11 = vector.load %arg6[%c0_10, %c0_11] : memref<6x32xf32, #tpu.memory_space<vmem>>, vector<6x32xf32>
    %c0_12 = arith.constant 0 : index
    %c0_13 = arith.constant 0 : index
    %12 = vector.load %arg10[%c0_12, %c0_13] : memref<4x32xf32, #tpu.memory_space<vmem>>, vector<4x32xf32>
    %c0_14 = arith.constant 0 : index
    %c0_15 = arith.constant 0 : index
    %13 = vector.load %arg14[%c0_14, %c0_15] : memref<4x32xf32, #tpu.memory_space<vmem>>, vector<4x32xf32>
    %14 = vector.extract_strided_slice %11 {offsets = [0, 0], sizes = [1, 32], strides = [1, 1]} : vector<6x32xf32> to vector<1x32xf32>
    %15 = vector.extract_strided_slice %11 {offsets = [1, 0], sizes = [1, 32], strides = [1, 1]} : vector<6x32xf32> to vector<1x32xf32>
    %cst = arith.constant dense<0.000000e+00> : vector<16xf32>
    %16 = vector.multi_reduction <add>, %4, %cst [1] : vector<16x32xf32> to vector<16xf32>
    %17 = vector.shape_cast %16 : vector<16xf32> to vector<16x1xf32>
    %cst_16 = arith.constant 3.200000e+01 : f32
    %18 = vector.broadcast %cst_16 : f32 to vector<16x1xf32>
    %19 = arith.divf %17, %18 : vector<16x1xf32>
    %20 = vector.broadcast %19 : vector<16x1xf32> to vector<16x32xf32>
    %21 = arith.subf %4, %20 : vector<16x32xf32>
    %22 = arith.mulf %21, %21 : vector<16x32xf32>
    %cst_17 = arith.constant dense<0.000000e+00> : vector<16xf32>
    %23 = vector.multi_reduction <add>, %22, %cst_17 [1] : vector<16x32xf32> to vector<16xf32>
    %24 = vector.shape_cast %23 : vector<16xf32> to vector<16x1xf32>
    %cst_18 = arith.constant 3.200000e+01 : f32
    %25 = vector.broadcast %cst_18 : f32 to vector<16x1xf32>
    %26 = arith.divf %24, %25 : vector<16x1xf32>
    %cst_19 = arith.constant 9.99999974E-6 : f32
    %27 = vector.broadcast %cst_19 : f32 to vector<16x1xf32>
    %28 = arith.addf %26, %27 : vector<16x1xf32>
    %29 = math.rsqrt %28 : vector<16x1xf32>
    %30 = vector.broadcast %29 : vector<16x1xf32> to vector<16x32xf32>
    %31 = arith.mulf %21, %30 : vector<16x32xf32>
    %32 = vector.broadcast %14 : vector<1x32xf32> to vector<16x32xf32>
    %33 = arith.mulf %31, %32 : vector<16x32xf32>
    %34 = vector.broadcast %15 : vector<1x32xf32> to vector<16x32xf32>
    %35 = arith.addf %33, %34 : vector<16x32xf32>
    %36 = vector.extract_strided_slice %11 {offsets = [0, 0], sizes = [1, 32], strides = [1, 1]} : vector<6x32xf32> to vector<1x32xf32>
    %37 = vector.extract_strided_slice %11 {offsets = [1, 0], sizes = [1, 32], strides = [1, 1]} : vector<6x32xf32> to vector<1x32xf32>
    %cst_20 = arith.constant dense<0.000000e+00> : vector<32xf32>
    %38 = vector.multi_reduction <add>, %10, %cst_20 [1] : vector<32x32xf32> to vector<32xf32>
    %39 = vector.shape_cast %38 : vector<32xf32> to vector<32x1xf32>
    %cst_21 = arith.constant 3.200000e+01 : f32
    %40 = vector.broadcast %cst_21 : f32 to vector<32x1xf32>
    %41 = arith.divf %39, %40 : vector<32x1xf32>
    %42 = vector.broadcast %41 : vector<32x1xf32> to vector<32x32xf32>
    %43 = arith.subf %10, %42 : vector<32x32xf32>
    %44 = arith.mulf %43, %43 : vector<32x32xf32>
    %cst_22 = arith.constant dense<0.000000e+00> : vector<32xf32>
    %45 = vector.multi_reduction <add>, %44, %cst_22 [1] : vector<32x32xf32> to vector<32xf32>
    %46 = vector.shape_cast %45 : vector<32xf32> to vector<32x1xf32>
    %cst_23 = arith.constant 3.200000e+01 : f32
    %47 = vector.broadcast %cst_23 : f32 to vector<32x1xf32>
    %48 = arith.divf %46, %47 : vector<32x1xf32>
    %cst_24 = arith.constant 9.99999974E-6 : f32
    %49 = vector.broadcast %cst_24 : f32 to vector<32x1xf32>
    %50 = arith.addf %48, %49 : vector<32x1xf32>
    %51 = math.rsqrt %50 : vector<32x1xf32>
    %52 = vector.broadcast %51 : vector<32x1xf32> to vector<32x32xf32>
    %53 = arith.mulf %43, %52 : vector<32x32xf32>
    %54 = vector.broadcast %36 : vector<1x32xf32> to vector<32x32xf32>
    %55 = arith.mulf %53, %54 : vector<32x32xf32>
    %56 = vector.broadcast %37 : vector<1x32xf32> to vector<32x32xf32>
    %57 = arith.addf %55, %56 : vector<32x32xf32>
    %58 = arith.truncf %35 : vector<16x32xf32> to vector<16x32xbf16>
    %c0_25 = arith.constant 0 : index
    %c0_26 = arith.constant 0 : index
    %59 = vector.load %arg7[%c0_25, %c0_26] : memref<32x32xbf16, #tpu.memory_space<vmem>>, vector<32x32xbf16>
    %cst_27 = arith.constant dense<0.000000e+00> : vector<16x32xf32>
    %60 = tpu.matmul %58, %59, %cst_27 {dimension_numbers = #tpu.dot_dimension_numbers<[1], [0], [0], [1], [0, 0, 1, 1], [], []>} : vector<16x32xbf16>, vector<32x32xbf16>, vector<16x32xf32> -> vector<16x32xf32>
    %61 = vector.extract_strided_slice %12 {offsets = [0, 0], sizes = [1, 32], strides = [1, 1]} : vector<4x32xf32> to vector<1x32xf32>
    %62 = vector.broadcast %61 : vector<1x32xf32> to vector<16x32xf32>
    %63 = arith.addf %60, %62 : vector<16x32xf32>
    %64 = arith.truncf %57 : vector<32x32xf32> to vector<32x32xbf16>
    %c0_28 = arith.constant 0 : index
    %c0_29 = arith.constant 0 : index
    %65 = vector.load %arg8[%c0_28, %c0_29] : memref<32x64xbf16, #tpu.memory_space<vmem>>, vector<32x64xbf16>
    %cst_30 = arith.constant dense<0.000000e+00> : vector<32x64xf32>
    %66 = tpu.matmul %64, %65, %cst_30 {dimension_numbers = #tpu.dot_dimension_numbers<[1], [0], [0], [1], [0, 0, 1, 1], [], []>} : vector<32x32xbf16>, vector<32x64xbf16>, vector<32x64xf32> -> vector<32x64xf32>
    %67 = vector.extract_strided_slice %66 {offsets = [0, 0], sizes = [32, 32], strides = [1, 1]} : vector<32x64xf32> to vector<32x32xf32>
    %68 = vector.extract_strided_slice %12 {offsets = [1, 0], sizes = [1, 32], strides = [1, 1]} : vector<4x32xf32> to vector<1x32xf32>
    %69 = vector.broadcast %68 : vector<1x32xf32> to vector<32x32xf32>
    %70 = arith.addf %67, %69 : vector<32x32xf32>
    %71 = vector.extract_strided_slice %66 {offsets = [0, 32], sizes = [32, 32], strides = [1, 1]} : vector<32x64xf32> to vector<32x32xf32>
    %72 = vector.extract_strided_slice %12 {offsets = [2, 0], sizes = [1, 32], strides = [1, 1]} : vector<4x32xf32> to vector<1x32xf32>
    %73 = vector.broadcast %72 : vector<1x32xf32> to vector<32x32xf32>
    %74 = arith.addf %71, %73 : vector<32x32xf32>
    %75 = vector.extract_strided_slice %63 {offsets = [0, 0], sizes = [8, 32], strides = [1, 1]} : vector<16x32xf32> to vector<8x32xf32>
    %76 = vector.extract_strided_slice %70 {offsets = [0, 0], sizes = [16, 32], strides = [1, 1]} : vector<32x32xf32> to vector<16x32xf32>
    %77 = vector.extract_strided_slice %74 {offsets = [0, 0], sizes = [16, 32], strides = [1, 1]} : vector<32x32xf32> to vector<16x32xf32>
    %c0_31 = arith.constant 0 : index
    %c0_32 = arith.constant 0 : index
    %c0_33 = arith.constant 0 : index
    %78 = vector.load %arg3[%c0_31, %c0_32, %c0_33] : memref<2x1x16xf32, #tpu.memory_space<vmem>>, vector<1x1x16xf32>
    %79 = vector.shape_cast %78 : vector<1x1x16xf32> to vector<1x16xf32>
    %80 = vector.extract_strided_slice %12 {offsets = [3, 0], sizes = [1, 32], strides = [1, 1]} : vector<4x32xf32> to vector<1x32xf32>
    %81 = arith.truncf %75 : vector<8x32xf32> to vector<8x32xbf16>
    %82 = vector.extract_strided_slice %81 {offsets = [0, 0], sizes = [8, 8], strides = [1, 1]} : vector<8x32xbf16> to vector<8x8xbf16>
    %83 = vector.extract_strided_slice %81 {offsets = [0, 8], sizes = [8, 8], strides = [1, 1]} : vector<8x32xbf16> to vector<8x8xbf16>
    %84 = vector.extract_strided_slice %81 {offsets = [0, 16], sizes = [8, 8], strides = [1, 1]} : vector<8x32xbf16> to vector<8x8xbf16>
    %85 = vector.extract_strided_slice %81 {offsets = [0, 24], sizes = [8, 8], strides = [1, 1]} : vector<8x32xbf16> to vector<8x8xbf16>
    %86 = vector.shape_cast %82 : vector<8x8xbf16> to vector<1x8x8xbf16>
    %87 = vector.shape_cast %83 : vector<8x8xbf16> to vector<1x8x8xbf16>
    %88 = vector.shape_cast %84 : vector<8x8xbf16> to vector<1x8x8xbf16>
    %89 = vector.shape_cast %85 : vector<8x8xbf16> to vector<1x8x8xbf16>
    %90 = tpu.concatenate %86, %87, %88, %89 in 0 : vector<1x8x8xbf16>, vector<1x8x8xbf16>, vector<1x8x8xbf16>, vector<1x8x8xbf16> -> vector<4x8x8xbf16>
    %91 = arith.truncf %76 : vector<16x32xf32> to vector<16x32xbf16>
    %92 = vector.extract_strided_slice %91 {offsets = [0, 0], sizes = [16, 8], strides = [1, 1]} : vector<16x32xbf16> to vector<16x8xbf16>
    %93 = vector.extract_strided_slice %91 {offsets = [0, 8], sizes = [16, 8], strides = [1, 1]} : vector<16x32xbf16> to vector<16x8xbf16>
    %94 = vector.extract_strided_slice %91 {offsets = [0, 16], sizes = [16, 8], strides = [1, 1]} : vector<16x32xbf16> to vector<16x8xbf16>
    %95 = vector.extract_strided_slice %91 {offsets = [0, 24], sizes = [16, 8], strides = [1, 1]} : vector<16x32xbf16> to vector<16x8xbf16>
    %96 = vector.shape_cast %92 : vector<16x8xbf16> to vector<1x16x8xbf16>
    %97 = vector.shape_cast %93 : vector<16x8xbf16> to vector<1x16x8xbf16>
    %98 = vector.shape_cast %94 : vector<16x8xbf16> to vector<1x16x8xbf16>
    %99 = vector.shape_cast %95 : vector<16x8xbf16> to vector<1x16x8xbf16>
    %100 = tpu.concatenate %96, %97, %98, %99 in 0 : vector<1x16x8xbf16>, vector<1x16x8xbf16>, vector<1x16x8xbf16>, vector<1x16x8xbf16> -> vector<4x16x8xbf16>
    %101 = arith.truncf %77 : vector<16x32xf32> to vector<16x32xbf16>
    %102 = vector.extract_strided_slice %101 {offsets = [0, 0], sizes = [16, 8], strides = [1, 1]} : vector<16x32xbf16> to vector<16x8xbf16>
    %103 = vector.extract_strided_slice %101 {offsets = [0, 8], sizes = [16, 8], strides = [1, 1]} : vector<16x32xbf16> to vector<16x8xbf16>
    %104 = vector.extract_strided_slice %101 {offsets = [0, 16], sizes = [16, 8], strides = [1, 1]} : vector<16x32xbf16> to vector<16x8xbf16>
    %105 = vector.extract_strided_slice %101 {offsets = [0, 24], sizes = [16, 8], strides = [1, 1]} : vector<16x32xbf16> to vector<16x8xbf16>
    %106 = vector.shape_cast %102 : vector<16x8xbf16> to vector<1x16x8xbf16>
    %107 = vector.shape_cast %103 : vector<16x8xbf16> to vector<1x16x8xbf16>
    %108 = vector.shape_cast %104 : vector<16x8xbf16> to vector<1x16x8xbf16>
    %109 = vector.shape_cast %105 : vector<16x8xbf16> to vector<1x16x8xbf16>
    %110 = tpu.concatenate %106, %107, %108, %109 in 0 : vector<1x16x8xbf16>, vector<1x16x8xbf16>, vector<1x16x8xbf16>, vector<1x16x8xbf16> -> vector<4x16x8xbf16>
    "tpu.trace_start"() <{level = 10 : i32, message = "hqd,hkd->hqk"}> : () -> ()
    %cst_34 = arith.constant dense<0.000000e+00> : vector<4x8x16xf32>
    %111 = tpu.matmul %90, %100, %cst_34 {dimension_numbers = #tpu.dot_dimension_numbers<[2], [2], [1], [1], [0, 0, 0, 1, 1, 1], [0], [0]>} : vector<4x8x8xbf16>, vector<4x16x8xbf16>, vector<4x8x16xf32> -> vector<4x8x16xf32>
    "tpu.trace_stop"() : () -> ()
    %cst_35 = arith.constant 0.353553385 : f32
    %112 = vector.broadcast %cst_35 : f32 to vector<4x8x16xf32>
    %113 = arith.mulf %111, %112 : vector<4x8x16xf32>
    %114 = vector.shape_cast %79 : vector<1x16xf32> to vector<1x1x16xf32>
    %115 = vector.broadcast %114 : vector<1x1x16xf32> to vector<4x8x16xf32>
    %116 = arith.addf %113, %115 : vector<4x8x16xf32>
    %cst_36 = arith.constant dense<0xFF800000> : vector<4x8xf32>
    %117 = vector.multi_reduction <maximumf>, %116, %cst_36 [2] : vector<4x8x16xf32> to vector<4x8xf32>
    %118 = vector.shape_cast %117 : vector<4x8xf32> to vector<4x8x1xf32>
    %119 = vector.broadcast %118 : vector<4x8x1xf32> to vector<4x8x16xf32>
    %120 = arith.subf %116, %119 : vector<4x8x16xf32>
    %121 = math.exp %120 : vector<4x8x16xf32>
    %cst_37 = arith.constant dense<0.000000e+00> : vector<4x8xf32>
    %122 = vector.multi_reduction <add>, %121, %cst_37 [2] : vector<4x8x16xf32> to vector<4x8xf32>
    %123 = vector.shape_cast %122 : vector<4x8xf32> to vector<4x8x1xf32>
    %124 = vector.broadcast %123 : vector<4x8x1xf32> to vector<4x8x16xf32>
    %125 = arith.divf %121, %124 : vector<4x8x16xf32>
    %126 = arith.truncf %125 : vector<4x8x16xf32> to vector<4x8x16xbf16>
    "tpu.trace_start"() <{level = 10 : i32, message = "hqk,hkd->hqd"}> : () -> ()
    %cst_38 = arith.constant dense<0.000000e+00> : vector<4x8x8xf32>
    %127 = tpu.matmul %126, %110, %cst_38 {dimension_numbers = #tpu.dot_dimension_numbers<[2], [1], [1], [2], [0, 0, 0, 1, 1, 2], [0], [0]>} : vector<4x8x16xbf16>, vector<4x16x8xbf16>, vector<4x8x8xf32> -> vector<4x8x8xf32>
    "tpu.trace_stop"() : () -> ()
    %128 = vector.extract_strided_slice %127 {offsets = [0, 0, 0], sizes = [1, 8, 8], strides = [1, 1, 1]} : vector<4x8x8xf32> to vector<1x8x8xf32>
    %129 = vector.shape_cast %128 : vector<1x8x8xf32> to vector<8x8xf32>
    %130 = arith.truncf %129 : vector<8x8xf32> to vector<8x8xbf16>
    %c0_39 = arith.constant 0 : index
    %c0_40 = arith.constant 0 : index
    %c0_41 = arith.constant 0 : index
    %131 = vector.load %arg9[%c0_39, %c0_40, %c0_41] : memref<4x8x32xbf16, #tpu.memory_space<vmem>>, vector<1x8x32xbf16>
    %132 = vector.shape_cast %131 : vector<1x8x32xbf16> to vector<8x32xbf16>
    %cst_42 = arith.constant dense<0.000000e+00> : vector<8x32xf32>
    %133 = tpu.matmul %130, %132, %cst_42 {dimension_numbers = #tpu.dot_dimension_numbers<[1], [0], [0], [1], [0, 0, 1, 1], [], []>} : vector<8x8xbf16>, vector<8x32xbf16>, vector<8x32xf32> -> vector<8x32xf32>
    %134 = vector.broadcast %80 : vector<1x32xf32> to vector<8x32xf32>
    %135 = arith.addf %134, %133 : vector<8x32xf32>
    %136 = vector.extract_strided_slice %127 {offsets = [1, 0, 0], sizes = [1, 8, 8], strides = [1, 1, 1]} : vector<4x8x8xf32> to vector<1x8x8xf32>
    %137 = vector.shape_cast %136 : vector<1x8x8xf32> to vector<8x8xf32>
    %138 = arith.truncf %137 : vector<8x8xf32> to vector<8x8xbf16>
    %c1_43 = arith.constant 1 : index
    %c0_44 = arith.constant 0 : index
    %c0_45 = arith.constant 0 : index
    %139 = vector.load %arg9[%c1_43, %c0_44, %c0_45] : memref<4x8x32xbf16, #tpu.memory_space<vmem>>, vector<1x8x32xbf16>
    %140 = vector.shape_cast %139 : vector<1x8x32xbf16> to vector<8x32xbf16>
    %cst_46 = arith.constant dense<0.000000e+00> : vector<8x32xf32>
    %141 = tpu.matmul %138, %140, %cst_46 {dimension_numbers = #tpu.dot_dimension_numbers<[1], [0], [0], [1], [0, 0, 1, 1], [], []>} : vector<8x8xbf16>, vector<8x32xbf16>, vector<8x32xf32> -> vector<8x32xf32>
    %142 = arith.addf %135, %141 : vector<8x32xf32>
    %143 = vector.extract_strided_slice %127 {offsets = [2, 0, 0], sizes = [1, 8, 8], strides = [1, 1, 1]} : vector<4x8x8xf32> to vector<1x8x8xf32>
    %144 = vector.shape_cast %143 : vector<1x8x8xf32> to vector<8x8xf32>
    %145 = arith.truncf %144 : vector<8x8xf32> to vector<8x8xbf16>
    %c2 = arith.constant 2 : index
    %c0_47 = arith.constant 0 : index
    %c0_48 = arith.constant 0 : index
    %146 = vector.load %arg9[%c2, %c0_47, %c0_48] : memref<4x8x32xbf16, #tpu.memory_space<vmem>>, vector<1x8x32xbf16>
    %147 = vector.shape_cast %146 : vector<1x8x32xbf16> to vector<8x32xbf16>
    %cst_49 = arith.constant dense<0.000000e+00> : vector<8x32xf32>
    %148 = tpu.matmul %145, %147, %cst_49 {dimension_numbers = #tpu.dot_dimension_numbers<[1], [0], [0], [1], [0, 0, 1, 1], [], []>} : vector<8x8xbf16>, vector<8x32xbf16>, vector<8x32xf32> -> vector<8x32xf32>
    %149 = arith.addf %142, %148 : vector<8x32xf32>
    %150 = vector.extract_strided_slice %127 {offsets = [3, 0, 0], sizes = [1, 8, 8], strides = [1, 1, 1]} : vector<4x8x8xf32> to vector<1x8x8xf32>
    %151 = vector.shape_cast %150 : vector<1x8x8xf32> to vector<8x8xf32>
    %152 = arith.truncf %151 : vector<8x8xf32> to vector<8x8xbf16>
    %c3 = arith.constant 3 : index
    %c0_50 = arith.constant 0 : index
    %c0_51 = arith.constant 0 : index
    %153 = vector.load %arg9[%c3, %c0_50, %c0_51] : memref<4x8x32xbf16, #tpu.memory_space<vmem>>, vector<1x8x32xbf16>
    %154 = vector.shape_cast %153 : vector<1x8x32xbf16> to vector<8x32xbf16>
    %cst_52 = arith.constant dense<0.000000e+00> : vector<8x32xf32>
    %155 = tpu.matmul %152, %154, %cst_52 {dimension_numbers = #tpu.dot_dimension_numbers<[1], [0], [0], [1], [0, 0, 1, 1], [], []>} : vector<8x8xbf16>, vector<8x32xbf16>, vector<8x32xf32> -> vector<8x32xf32>
    %156 = arith.addf %149, %155 : vector<8x32xf32>
    %cst_53 = arith.constant dense<0.000000e+00> : vector<8x16xf32>
    %157 = vector.multi_reduction <add>, %125, %cst_53 [0] : vector<4x8x16xf32> to vector<8x16xf32>
    %cst_54 = arith.constant 4.000000e+00 : f32
    %158 = vector.broadcast %cst_54 : f32 to vector<8x16xf32>
    %159 = arith.divf %157, %158 : vector<8x16xf32>
    %c0_55 = arith.constant 0 : index
    %c0_56 = arith.constant 0 : index
    %c0_57 = arith.constant 0 : index
    %160 = vector.load %arg20[%c0_55, %c0_56, %c0_57] : memref<2x8x16xf32, #tpu.memory_space<vmem>>, vector<1x8x16xf32>
    %161 = vector.shape_cast %160 : vector<1x8x16xf32> to vector<8x16xf32>
    %162 = vector.shape_cast %159 : vector<8x16xf32> to vector<1x8x16xf32>
    tpu.vector_store %arg20[%c0_55, %c0_56, %c0_57], %162 {strides = array<i32>} : memref<2x8x16xf32, #tpu.memory_space<vmem>>, vector<1x8x16xf32>,
    %163 = vector.extract_strided_slice %63 {offsets = [8, 0], sizes = [8, 32], strides = [1, 1]} : vector<16x32xf32> to vector<8x32xf32>
    %164 = vector.extract_strided_slice %70 {offsets = [16, 0], sizes = [16, 32], strides = [1, 1]} : vector<32x32xf32> to vector<16x32xf32>
    %165 = vector.extract_strided_slice %74 {offsets = [16, 0], sizes = [16, 32], strides = [1, 1]} : vector<32x32xf32> to vector<16x32xf32>
    %c1_58 = arith.constant 1 : index
    %c0_59 = arith.constant 0 : index
    %c0_60 = arith.constant 0 : index
    %166 = vector.load %arg3[%c1_58, %c0_59, %c0_60] : memref<2x1x16xf32, #tpu.memory_space<vmem>>, vector<1x1x16xf32>
    %167 = vector.shape_cast %166 : vector<1x1x16xf32> to vector<1x16xf32>
    %168 = vector.extract_strided_slice %12 {offsets = [3, 0], sizes = [1, 32], strides = [1, 1]} : vector<4x32xf32> to vector<1x32xf32>
    %169 = arith.truncf %163 : vector<8x32xf32> to vector<8x32xbf16>
    %170 = vector.extract_strided_slice %169 {offsets = [0, 0], sizes = [8, 8], strides = [1, 1]} : vector<8x32xbf16> to vector<8x8xbf16>
    %171 = vector.extract_strided_slice %169 {offsets = [0, 8], sizes = [8, 8], strides = [1, 1]} : vector<8x32xbf16> to vector<8x8xbf16>
    %172 = vector.extract_strided_slice %169 {offsets = [0, 16], sizes = [8, 8], strides = [1, 1]} : vector<8x32xbf16> to vector<8x8xbf16>
    %173 = vector.extract_strided_slice %169 {offsets = [0, 24], sizes = [8, 8], strides = [1, 1]} : vector<8x32xbf16> to vector<8x8xbf16>
    %174 = vector.shape_cast %170 : vector<8x8xbf16> to vector<1x8x8xbf16>
    %175 = vector.shape_cast %171 : vector<8x8xbf16> to vector<1x8x8xbf16>
    %176 = vector.shape_cast %172 : vector<8x8xbf16> to vector<1x8x8xbf16>
    %177 = vector.shape_cast %173 : vector<8x8xbf16> to vector<1x8x8xbf16>
    %178 = tpu.concatenate %174, %175, %176, %177 in 0 : vector<1x8x8xbf16>, vector<1x8x8xbf16>, vector<1x8x8xbf16>, vector<1x8x8xbf16> -> vector<4x8x8xbf16>
    %179 = arith.truncf %164 : vector<16x32xf32> to vector<16x32xbf16>
    %180 = vector.extract_strided_slice %179 {offsets = [0, 0], sizes = [16, 8], strides = [1, 1]} : vector<16x32xbf16> to vector<16x8xbf16>
    %181 = vector.extract_strided_slice %179 {offsets = [0, 8], sizes = [16, 8], strides = [1, 1]} : vector<16x32xbf16> to vector<16x8xbf16>
    %182 = vector.extract_strided_slice %179 {offsets = [0, 16], sizes = [16, 8], strides = [1, 1]} : vector<16x32xbf16> to vector<16x8xbf16>
    %183 = vector.extract_strided_slice %179 {offsets = [0, 24], sizes = [16, 8], strides = [1, 1]} : vector<16x32xbf16> to vector<16x8xbf16>
    %184 = vector.shape_cast %180 : vector<16x8xbf16> to vector<1x16x8xbf16>
    %185 = vector.shape_cast %181 : vector<16x8xbf16> to vector<1x16x8xbf16>
    %186 = vector.shape_cast %182 : vector<16x8xbf16> to vector<1x16x8xbf16>
    %187 = vector.shape_cast %183 : vector<16x8xbf16> to vector<1x16x8xbf16>
    %188 = tpu.concatenate %184, %185, %186, %187 in 0 : vector<1x16x8xbf16>, vector<1x16x8xbf16>, vector<1x16x8xbf16>, vector<1x16x8xbf16> -> vector<4x16x8xbf16>
    %189 = arith.truncf %165 : vector<16x32xf32> to vector<16x32xbf16>
    %190 = vector.extract_strided_slice %189 {offsets = [0, 0], sizes = [16, 8], strides = [1, 1]} : vector<16x32xbf16> to vector<16x8xbf16>
    %191 = vector.extract_strided_slice %189 {offsets = [0, 8], sizes = [16, 8], strides = [1, 1]} : vector<16x32xbf16> to vector<16x8xbf16>
    %192 = vector.extract_strided_slice %189 {offsets = [0, 16], sizes = [16, 8], strides = [1, 1]} : vector<16x32xbf16> to vector<16x8xbf16>
    %193 = vector.extract_strided_slice %189 {offsets = [0, 24], sizes = [16, 8], strides = [1, 1]} : vector<16x32xbf16> to vector<16x8xbf16>
    %194 = vector.shape_cast %190 : vector<16x8xbf16> to vector<1x16x8xbf16>
    %195 = vector.shape_cast %191 : vector<16x8xbf16> to vector<1x16x8xbf16>
    %196 = vector.shape_cast %192 : vector<16x8xbf16> to vector<1x16x8xbf16>
    %197 = vector.shape_cast %193 : vector<16x8xbf16> to vector<1x16x8xbf16>
    %198 = tpu.concatenate %194, %195, %196, %197 in 0 : vector<1x16x8xbf16>, vector<1x16x8xbf16>, vector<1x16x8xbf16>, vector<1x16x8xbf16> -> vector<4x16x8xbf16>
    "tpu.trace_start"() <{level = 10 : i32, message = "hqd,hkd->hqk"}> : () -> ()
    %cst_61 = arith.constant dense<0.000000e+00> : vector<4x8x16xf32>
    %199 = tpu.matmul %178, %188, %cst_61 {dimension_numbers = #tpu.dot_dimension_numbers<[2], [2], [1], [1], [0, 0, 0, 1, 1, 1], [0], [0]>} : vector<4x8x8xbf16>, vector<4x16x8xbf16>, vector<4x8x16xf32> -> vector<4x8x16xf32>
    "tpu.trace_stop"() : () -> ()
    %cst_62 = arith.constant 0.353553385 : f32
    %200 = vector.broadcast %cst_62 : f32 to vector<4x8x16xf32>
    %201 = arith.mulf %199, %200 : vector<4x8x16xf32>
    %202 = vector.shape_cast %167 : vector<1x16xf32> to vector<1x1x16xf32>
    %203 = vector.broadcast %202 : vector<1x1x16xf32> to vector<4x8x16xf32>
    %204 = arith.addf %201, %203 : vector<4x8x16xf32>
    %cst_63 = arith.constant dense<0xFF800000> : vector<4x8xf32>
    %205 = vector.multi_reduction <maximumf>, %204, %cst_63 [2] : vector<4x8x16xf32> to vector<4x8xf32>
    %206 = vector.shape_cast %205 : vector<4x8xf32> to vector<4x8x1xf32>
    %207 = vector.broadcast %206 : vector<4x8x1xf32> to vector<4x8x16xf32>
    %208 = arith.subf %204, %207 : vector<4x8x16xf32>
    %209 = math.exp %208 : vector<4x8x16xf32>
    %cst_64 = arith.constant dense<0.000000e+00> : vector<4x8xf32>
    %210 = vector.multi_reduction <add>, %209, %cst_64 [2] : vector<4x8x16xf32> to vector<4x8xf32>
    %211 = vector.shape_cast %210 : vector<4x8xf32> to vector<4x8x1xf32>
    %212 = vector.broadcast %211 : vector<4x8x1xf32> to vector<4x8x16xf32>
    %213 = arith.divf %209, %212 : vector<4x8x16xf32>
    %214 = arith.truncf %213 : vector<4x8x16xf32> to vector<4x8x16xbf16>
    "tpu.trace_start"() <{level = 10 : i32, message = "hqk,hkd->hqd"}> : () -> ()
    %cst_65 = arith.constant dense<0.000000e+00> : vector<4x8x8xf32>
    %215 = tpu.matmul %214, %198, %cst_65 {dimension_numbers = #tpu.dot_dimension_numbers<[2], [1], [1], [2], [0, 0, 0, 1, 1, 2], [0], [0]>} : vector<4x8x16xbf16>, vector<4x16x8xbf16>, vector<4x8x8xf32> -> vector<4x8x8xf32>
    "tpu.trace_stop"() : () -> ()
    %216 = vector.extract_strided_slice %215 {offsets = [0, 0, 0], sizes = [1, 8, 8], strides = [1, 1, 1]} : vector<4x8x8xf32> to vector<1x8x8xf32>
    %217 = vector.shape_cast %216 : vector<1x8x8xf32> to vector<8x8xf32>
    %218 = arith.truncf %217 : vector<8x8xf32> to vector<8x8xbf16>
    %c0_66 = arith.constant 0 : index
    %c0_67 = arith.constant 0 : index
    %c0_68 = arith.constant 0 : index
    %219 = vector.load %arg9[%c0_66, %c0_67, %c0_68] : memref<4x8x32xbf16, #tpu.memory_space<vmem>>, vector<1x8x32xbf16>
    %220 = vector.shape_cast %219 : vector<1x8x32xbf16> to vector<8x32xbf16>
    %cst_69 = arith.constant dense<0.000000e+00> : vector<8x32xf32>
    %221 = tpu.matmul %218, %220, %cst_69 {dimension_numbers = #tpu.dot_dimension_numbers<[1], [0], [0], [1], [0, 0, 1, 1], [], []>} : vector<8x8xbf16>, vector<8x32xbf16>, vector<8x32xf32> -> vector<8x32xf32>
    %222 = vector.broadcast %168 : vector<1x32xf32> to vector<8x32xf32>
    %223 = arith.addf %222, %221 : vector<8x32xf32>
    %224 = vector.extract_strided_slice %215 {offsets = [1, 0, 0], sizes = [1, 8, 8], strides = [1, 1, 1]} : vector<4x8x8xf32> to vector<1x8x8xf32>
    %225 = vector.shape_cast %224 : vector<1x8x8xf32> to vector<8x8xf32>
    %226 = arith.truncf %225 : vector<8x8xf32> to vector<8x8xbf16>
    %c1_70 = arith.constant 1 : index
    %c0_71 = arith.constant 0 : index
    %c0_72 = arith.constant 0 : index
    %227 = vector.load %arg9[%c1_70, %c0_71, %c0_72] : memref<4x8x32xbf16, #tpu.memory_space<vmem>>, vector<1x8x32xbf16>
    %228 = vector.shape_cast %227 : vector<1x8x32xbf16> to vector<8x32xbf16>
    %cst_73 = arith.constant dense<0.000000e+00> : vector<8x32xf32>
    %229 = tpu.matmul %226, %228, %cst_73 {dimension_numbers = #tpu.dot_dimension_numbers<[1], [0], [0], [1], [0, 0, 1, 1], [], []>} : vector<8x8xbf16>, vector<8x32xbf16>, vector<8x32xf32> -> vector<8x32xf32>
    %230 = arith.addf %223, %229 : vector<8x32xf32>
    %231 = vector.extract_strided_slice %215 {offsets = [2, 0, 0], sizes = [1, 8, 8], strides = [1, 1, 1]} : vector<4x8x8xf32> to vector<1x8x8xf32>
    %232 = vector.shape_cast %231 : vector<1x8x8xf32> to vector<8x8xf32>
    %233 = arith.truncf %232 : vector<8x8xf32> to vector<8x8xbf16>
    %c2_74 = arith.constant 2 : index
    %c0_75 = arith.constant 0 : index
    %c0_76 = arith.constant 0 : index
    %234 = vector.load %arg9[%c2_74, %c0_75, %c0_76] : memref<4x8x32xbf16, #tpu.memory_space<vmem>>, vector<1x8x32xbf16>
    %235 = vector.shape_cast %234 : vector<1x8x32xbf16> to vector<8x32xbf16>
    %cst_77 = arith.constant dense<0.000000e+00> : vector<8x32xf32>
    %236 = tpu.matmul %233, %235, %cst_77 {dimension_numbers = #tpu.dot_dimension_numbers<[1], [0], [0], [1], [0, 0, 1, 1], [], []>} : vector<8x8xbf16>, vector<8x32xbf16>, vector<8x32xf32> -> vector<8x32xf32>
    %237 = arith.addf %230, %236 : vector<8x32xf32>
    %238 = vector.extract_strided_slice %215 {offsets = [3, 0, 0], sizes = [1, 8, 8], strides = [1, 1, 1]} : vector<4x8x8xf32> to vector<1x8x8xf32>
    %239 = vector.shape_cast %238 : vector<1x8x8xf32> to vector<8x8xf32>
    %240 = arith.truncf %239 : vector<8x8xf32> to vector<8x8xbf16>
    %c3_78 = arith.constant 3 : index
    %c0_79 = arith.constant 0 : index
    %c0_80 = arith.constant 0 : index
    %241 = vector.load %arg9[%c3_78, %c0_79, %c0_80] : memref<4x8x32xbf16, #tpu.memory_space<vmem>>, vector<1x8x32xbf16>
    %242 = vector.shape_cast %241 : vector<1x8x32xbf16> to vector<8x32xbf16>
    %cst_81 = arith.constant dense<0.000000e+00> : vector<8x32xf32>
    %243 = tpu.matmul %240, %242, %cst_81 {dimension_numbers = #tpu.dot_dimension_numbers<[1], [0], [0], [1], [0, 0, 1, 1], [], []>} : vector<8x8xbf16>, vector<8x32xbf16>, vector<8x32xf32> -> vector<8x32xf32>
    %244 = arith.addf %237, %243 : vector<8x32xf32>
    %cst_82 = arith.constant dense<0.000000e+00> : vector<8x16xf32>
    %245 = vector.multi_reduction <add>, %213, %cst_82 [0] : vector<4x8x16xf32> to vector<8x16xf32>
    %cst_83 = arith.constant 4.000000e+00 : f32
    %246 = vector.broadcast %cst_83 : f32 to vector<8x16xf32>
    %247 = arith.divf %245, %246 : vector<8x16xf32>
    %c1_84 = arith.constant 1 : index
    %c0_85 = arith.constant 0 : index
    %c0_86 = arith.constant 0 : index
    %248 = vector.load %arg20[%c1_84, %c0_85, %c0_86] : memref<2x8x16xf32, #tpu.memory_space<vmem>>, vector<1x8x16xf32>
    %249 = vector.shape_cast %248 : vector<1x8x16xf32> to vector<8x16xf32>
    %250 = vector.shape_cast %247 : vector<8x16xf32> to vector<1x8x16xf32>
    tpu.vector_store %arg20[%c1_84, %c0_85, %c0_86], %250 {strides = array<i32>} : memref<2x8x16xf32, #tpu.memory_space<vmem>>, vector<1x8x16xf32>,
    %251 = tpu.concatenate %156, %244 in 0 : vector<8x32xf32>, vector<8x32xf32> -> vector<16x32xf32>
    %252 = arith.addf %4, %251 : vector<16x32xf32>
    %253 = vector.extract_strided_slice %11 {offsets = [2, 0], sizes = [1, 32], strides = [1, 1]} : vector<6x32xf32> to vector<1x32xf32>
    %254 = vector.extract_strided_slice %11 {offsets = [3, 0], sizes = [1, 32], strides = [1, 1]} : vector<6x32xf32> to vector<1x32xf32>
    %cst_87 = arith.constant dense<0.000000e+00> : vector<16xf32>
    %255 = vector.multi_reduction <add>, %252, %cst_87 [1] : vector<16x32xf32> to vector<16xf32>
    %256 = vector.shape_cast %255 : vector<16xf32> to vector<16x1xf32>
    %cst_88 = arith.constant 3.200000e+01 : f32
    %257 = vector.broadcast %cst_88 : f32 to vector<16x1xf32>
    %258 = arith.divf %256, %257 : vector<16x1xf32>
    %259 = vector.broadcast %258 : vector<16x1xf32> to vector<16x32xf32>
    %260 = arith.subf %252, %259 : vector<16x32xf32>
    %261 = arith.mulf %260, %260 : vector<16x32xf32>
    %cst_89 = arith.constant dense<0.000000e+00> : vector<16xf32>
    %262 = vector.multi_reduction <add>, %261, %cst_89 [1] : vector<16x32xf32> to vector<16xf32>
    %263 = vector.shape_cast %262 : vector<16xf32> to vector<16x1xf32>
    %cst_90 = arith.constant 3.200000e+01 : f32
    %264 = vector.broadcast %cst_90 : f32 to vector<16x1xf32>
    %265 = arith.divf %263, %264 : vector<16x1xf32>
    %cst_91 = arith.constant 9.99999974E-6 : f32
    %266 = vector.broadcast %cst_91 : f32 to vector<16x1xf32>
    %267 = arith.addf %265, %266 : vector<16x1xf32>
    %268 = math.rsqrt %267 : vector<16x1xf32>
    %269 = vector.broadcast %268 : vector<16x1xf32> to vector<16x32xf32>
    %270 = arith.mulf %260, %269 : vector<16x32xf32>
    %271 = vector.broadcast %253 : vector<1x32xf32> to vector<16x32xf32>
    %272 = arith.mulf %270, %271 : vector<16x32xf32>
    %273 = vector.broadcast %254 : vector<1x32xf32> to vector<16x32xf32>
    %274 = arith.addf %272, %273 : vector<16x32xf32>
    %275 = arith.truncf %274 : vector<16x32xf32> to vector<16x32xbf16>
    %c0_92 = arith.constant 0 : index
    %c0_93 = arith.constant 0 : index
    %276 = vector.load %arg15[%c0_92, %c0_93] : memref<32x128xbf16, #tpu.memory_space<vmem>>, vector<32x128xbf16>
    %cst_94 = arith.constant dense<0.000000e+00> : vector<16x128xf32>
    %277 = tpu.matmul %275, %276, %cst_94 {dimension_numbers = #tpu.dot_dimension_numbers<[1], [0], [0], [1], [0, 0, 1, 1], [], []>} : vector<16x32xbf16>, vector<32x128xbf16>, vector<16x128xf32> -> vector<16x128xf32>
    %c0_95 = arith.constant 0 : index
    %c0_96 = arith.constant 0 : index
    %278 = vector.load %arg16[%c0_95, %c0_96] : memref<1x128xf32, #tpu.memory_space<vmem>>, vector<1x128xf32>
    %279 = vector.broadcast %278 : vector<1x128xf32> to vector<16x128xf32>
    %280 = arith.addf %277, %279 : vector<16x128xf32>
    %cst_97 = arith.constant 1.702000e+00 : f32
    %281 = vector.broadcast %cst_97 : f32 to vector<16x128xf32>
    %282 = arith.mulf %281, %280 : vector<16x128xf32>
    %283 = arith.negf %282 : vector<16x128xf32>
    %284 = math.exp %283 : vector<16x128xf32>
    %cst_98 = arith.constant 1.000000e+00 : f32
    %285 = vector.broadcast %cst_98 : f32 to vector<16x128xf32>
    %286 = arith.addf %285, %284 : vector<16x128xf32>
    %287 = arith.divf %285, %286 : vector<16x128xf32>
    %288 = arith.mulf %280, %287 : vector<16x128xf32>
    %289 = arith.truncf %288 : vector<16x128xf32> to vector<16x128xbf16>
    %c0_99 = arith.constant 0 : index
    %c0_100 = arith.constant 0 : index
    %290 = vector.load %arg17[%c0_99, %c0_100] : memref<128x32xbf16, #tpu.memory_space<vmem>>, vector<128x32xbf16>
    %cst_101 = arith.constant dense<0.000000e+00> : vector<16x32xf32>
    %291 = tpu.matmul %289, %290, %cst_101 {dimension_numbers = #tpu.dot_dimension_numbers<[1], [0], [0], [1], [0, 0, 1, 1], [], []>} : vector<16x128xbf16>, vector<128x32xbf16>, vector<16x32xf32> -> vector<16x32xf32>
    %292 = arith.addf %252, %291 : vector<16x32xf32>
    %c0_102 = arith.constant 0 : index
    %c0_103 = arith.constant 0 : index
    %293 = vector.load %arg18[%c0_102, %c0_103] : memref<1x32xf32, #tpu.memory_space<vmem>>, vector<1x32xf32>
    %294 = vector.broadcast %293 : vector<1x32xf32> to vector<16x32xf32>
    %295 = arith.addf %292, %294 : vector<16x32xf32>
    %296 = vector.extract_strided_slice %11 {offsets = [4, 0], sizes = [1, 32], strides = [1, 1]} : vector<6x32xf32> to vector<1x32xf32>
    %297 = vector.extract_strided_slice %11 {offsets = [5, 0], sizes = [1, 32], strides = [1, 1]} : vector<6x32xf32> to vector<1x32xf32>
    %cst_104 = arith.constant dense<0.000000e+00> : vector<16xf32>
    %298 = vector.multi_reduction <add>, %295, %cst_104 [1] : vector<16x32xf32> to vector<16xf32>
    %299 = vector.shape_cast %298 : vector<16xf32> to vector<16x1xf32>
    %cst_105 = arith.constant 3.200000e+01 : f32
    %300 = vector.broadcast %cst_105 : f32 to vector<16x1xf32>
    %301 = arith.divf %299, %300 : vector<16x1xf32>
    %302 = vector.broadcast %301 : vector<16x1xf32> to vector<16x32xf32>
    %303 = arith.subf %295, %302 : vector<16x32xf32>
    %304 = arith.mulf %303, %303 : vector<16x32xf32>
    %cst_106 = arith.constant dense<0.000000e+00> : vector<16xf32>
    %305 = vector.multi_reduction <add>, %304, %cst_106 [1] : vector<16x32xf32> to vector<16xf32>
    %306 = vector.shape_cast %305 : vector<16xf32> to vector<16x1xf32>
    %cst_107 = arith.constant 3.200000e+01 : f32
    %307 = vector.broadcast %cst_107 : f32 to vector<16x1xf32>
    %308 = arith.divf %306, %307 : vector<16x1xf32>
    %cst_108 = arith.constant 9.99999974E-6 : f32
    %309 = vector.broadcast %cst_108 : f32 to vector<16x1xf32>
    %310 = arith.addf %308, %309 : vector<16x1xf32>
    %311 = math.rsqrt %310 : vector<16x1xf32>
    %312 = vector.broadcast %311 : vector<16x1xf32> to vector<16x32xf32>
    %313 = arith.mulf %303, %312 : vector<16x32xf32>
    %314 = vector.broadcast %296 : vector<1x32xf32> to vector<16x32xf32>
    %315 = arith.mulf %313, %314 : vector<16x32xf32>
    %316 = vector.broadcast %297 : vector<1x32xf32> to vector<16x32xf32>
    %317 = arith.addf %315, %316 : vector<16x32xf32>
    %318 = arith.truncf %317 : vector<16x32xf32> to vector<16x32xbf16>
    %c0_109 = arith.constant 0 : index
    %c0_110 = arith.constant 0 : index
    %319 = vector.load %arg11[%c0_109, %c0_110] : memref<32x32xbf16, #tpu.memory_space<vmem>>, vector<32x32xbf16>
    %cst_111 = arith.constant dense<0.000000e+00> : vector<16x32xf32>
    %320 = tpu.matmul %318, %319, %cst_111 {dimension_numbers = #tpu.dot_dimension_numbers<[1], [0], [0], [1], [0, 0, 1, 1], [], []>} : vector<16x32xbf16>, vector<32x32xbf16>, vector<16x32xf32> -> vector<16x32xf32>
    %321 = vector.extract_strided_slice %13 {offsets = [0, 0], sizes = [1, 32], strides = [1, 1]} : vector<4x32xf32> to vector<1x32xf32>
    %322 = vector.broadcast %321 : vector<1x32xf32> to vector<16x32xf32>
    %323 = arith.addf %320, %322 : vector<16x32xf32>
    %324 = arith.truncf %317 : vector<16x32xf32> to vector<16x32xbf16>
    %c0_112 = arith.constant 0 : index
    %c0_113 = arith.constant 0 : index
    %325 = vector.load %arg12[%c0_112, %c0_113] : memref<32x64xbf16, #tpu.memory_space<vmem>>, vector<32x64xbf16>
    %cst_114 = arith.constant dense<0.000000e+00> : vector<16x64xf32>
    %326 = tpu.matmul %324, %325, %cst_114 {dimension_numbers = #tpu.dot_dimension_numbers<[1], [0], [0], [1], [0, 0, 1, 1], [], []>} : vector<16x32xbf16>, vector<32x64xbf16>, vector<16x64xf32> -> vector<16x64xf32>
    %327 = vector.extract_strided_slice %326 {offsets = [0, 0], sizes = [16, 32], strides = [1, 1]} : vector<16x64xf32> to vector<16x32xf32>
    %328 = vector.extract_strided_slice %13 {offsets = [1, 0], sizes = [1, 32], strides = [1, 1]} : vector<4x32xf32> to vector<1x32xf32>
    %329 = vector.broadcast %328 : vector<1x32xf32> to vector<16x32xf32>
    %330 = arith.addf %327, %329 : vector<16x32xf32>
    %331 = vector.extract_strided_slice %326 {offsets = [0, 32], sizes = [16, 32], strides = [1, 1]} : vector<16x64xf32> to vector<16x32xf32>
    %332 = vector.extract_strided_slice %13 {offsets = [2, 0], sizes = [1, 32], strides = [1, 1]} : vector<4x32xf32> to vector<1x32xf32>
    %333 = vector.broadcast %332 : vector<1x32xf32> to vector<16x32xf32>
    %334 = arith.addf %331, %333 : vector<16x32xf32>
    %c0_115 = arith.constant 0 : index
    %c0_116 = arith.constant 0 : index
    %c0_117 = arith.constant 0 : index
    %335 = vector.load %arg5[%c0_115, %c0_116, %c0_117] : memref<2x4x32xf32, #tpu.memory_space<vmem>>, vector<1x4x32xf32>
    %336 = vector.shape_cast %335 : vector<1x4x32xf32> to vector<4x32xf32>
    %c1_118 = arith.constant 1 : index
    %c0_119 = arith.constant 0 : index
    %c0_120 = arith.constant 0 : index
    %337 = vector.load %arg5[%c1_118, %c0_119, %c0_120] : memref<2x4x32xf32, #tpu.memory_space<vmem>>, vector<1x4x32xf32>
    %338 = vector.shape_cast %337 : vector<1x4x32xf32> to vector<4x32xf32>
    %339 = vector.extract_strided_slice %330 {offsets = [0, 0], sizes = [8, 32], strides = [1, 1]} : vector<16x32xf32> to vector<8x32xf32>
    %340 = tpu.concatenate %339, %336 in 0 : vector<8x32xf32>, vector<4x32xf32> -> vector<12x32xf32>
    %341 = vector.extract_strided_slice %334 {offsets = [0, 0], sizes = [8, 32], strides = [1, 1]} : vector<16x32xf32> to vector<8x32xf32>
    %342 = tpu.concatenate %341, %338 in 0 : vector<8x32xf32>, vector<4x32xf32> -> vector<12x32xf32>
    %343 = vector.extract_strided_slice %323 {offsets = [0, 0], sizes = [8, 32], strides = [1, 1]} : vector<16x32xf32> to vector<8x32xf32>
    %c0_121 = arith.constant 0 : index
    %c0_122 = arith.constant 0 : index
    %344 = vector.load %arg4[%c0_121, %c0_122] : memref<8x12xf32, #tpu.memory_space<vmem>>, vector<8x12xf32>
    %345 = vector.extract_strided_slice %13 {offsets = [3, 0], sizes = [1, 32], strides = [1, 1]} : vector<4x32xf32> to vector<1x32xf32>
    %346 = arith.truncf %343 : vector<8x32xf32> to vector<8x32xbf16>
    %347 = vector.extract_strided_slice %346 {offsets = [0, 0], sizes = [8, 8], strides = [1, 1]} : vector<8x32xbf16> to vector<8x8xbf16>
    %348 = vector.extract_strided_slice %346 {offsets = [0, 8], sizes = [8, 8], strides = [1, 1]} : vector<8x32xbf16> to vector<8x8xbf16>
    %349 = vector.extract_strided_slice %346 {offsets = [0, 16], sizes = [8, 8], strides = [1, 1]} : vector<8x32xbf16> to vector<8x8xbf16>
    %350 = vector.extract_strided_slice %346 {offsets = [0, 24], sizes = [8, 8], strides = [1, 1]} : vector<8x32xbf16> to vector<8x8xbf16>
    %351 = vector.shape_cast %347 : vector<8x8xbf16> to vector<1x8x8xbf16>
    %352 = vector.shape_cast %348 : vector<8x8xbf16> to vector<1x8x8xbf16>
    %353 = vector.shape_cast %349 : vector<8x8xbf16> to vector<1x8x8xbf16>
    %354 = vector.shape_cast %350 : vector<8x8xbf16> to vector<1x8x8xbf16>
    %355 = tpu.concatenate %351, %352, %353, %354 in 0 : vector<1x8x8xbf16>, vector<1x8x8xbf16>, vector<1x8x8xbf16>, vector<1x8x8xbf16> -> vector<4x8x8xbf16>
    %356 = arith.truncf %340 : vector<12x32xf32> to vector<12x32xbf16>
    %357 = vector.extract_strided_slice %356 {offsets = [0, 0], sizes = [12, 8], strides = [1, 1]} : vector<12x32xbf16> to vector<12x8xbf16>
    %358 = vector.extract_strided_slice %356 {offsets = [0, 8], sizes = [12, 8], strides = [1, 1]} : vector<12x32xbf16> to vector<12x8xbf16>
    %359 = vector.extract_strided_slice %356 {offsets = [0, 16], sizes = [12, 8], strides = [1, 1]} : vector<12x32xbf16> to vector<12x8xbf16>
    %360 = vector.extract_strided_slice %356 {offsets = [0, 24], sizes = [12, 8], strides = [1, 1]} : vector<12x32xbf16> to vector<12x8xbf16>
    %361 = vector.shape_cast %357 : vector<12x8xbf16> to vector<1x12x8xbf16>
    %362 = vector.shape_cast %358 : vector<12x8xbf16> to vector<1x12x8xbf16>
    %363 = vector.shape_cast %359 : vector<12x8xbf16> to vector<1x12x8xbf16>
    %364 = vector.shape_cast %360 : vector<12x8xbf16> to vector<1x12x8xbf16>
    %365 = tpu.concatenate %361, %362, %363, %364 in 0 : vector<1x12x8xbf16>, vector<1x12x8xbf16>, vector<1x12x8xbf16>, vector<1x12x8xbf16> -> vector<4x12x8xbf16>
    %366 = arith.truncf %342 : vector<12x32xf32> to vector<12x32xbf16>
    %367 = vector.extract_strided_slice %366 {offsets = [0, 0], sizes = [12, 8], strides = [1, 1]} : vector<12x32xbf16> to vector<12x8xbf16>
    %368 = vector.extract_strided_slice %366 {offsets = [0, 8], sizes = [12, 8], strides = [1, 1]} : vector<12x32xbf16> to vector<12x8xbf16>
    %369 = vector.extract_strided_slice %366 {offsets = [0, 16], sizes = [12, 8], strides = [1, 1]} : vector<12x32xbf16> to vector<12x8xbf16>
    %370 = vector.extract_strided_slice %366 {offsets = [0, 24], sizes = [12, 8], strides = [1, 1]} : vector<12x32xbf16> to vector<12x8xbf16>
    %371 = vector.shape_cast %367 : vector<12x8xbf16> to vector<1x12x8xbf16>
    %372 = vector.shape_cast %368 : vector<12x8xbf16> to vector<1x12x8xbf16>
    %373 = vector.shape_cast %369 : vector<12x8xbf16> to vector<1x12x8xbf16>
    %374 = vector.shape_cast %370 : vector<12x8xbf16> to vector<1x12x8xbf16>
    %375 = tpu.concatenate %371, %372, %373, %374 in 0 : vector<1x12x8xbf16>, vector<1x12x8xbf16>, vector<1x12x8xbf16>, vector<1x12x8xbf16> -> vector<4x12x8xbf16>
    "tpu.trace_start"() <{level = 10 : i32, message = "hqd,hkd->hqk"}> : () -> ()
    %cst_123 = arith.constant dense<0.000000e+00> : vector<4x8x12xf32>
    %376 = tpu.matmul %355, %365, %cst_123 {dimension_numbers = #tpu.dot_dimension_numbers<[2], [2], [1], [1], [0, 0, 0, 1, 1, 1], [0], [0]>} : vector<4x8x8xbf16>, vector<4x12x8xbf16>, vector<4x8x12xf32> -> vector<4x8x12xf32>
    "tpu.trace_stop"() : () -> ()
    %cst_124 = arith.constant 0.353553385 : f32
    %377 = vector.broadcast %cst_124 : f32 to vector<4x8x12xf32>
    %378 = arith.mulf %376, %377 : vector<4x8x12xf32>
    %379 = vector.shape_cast %344 : vector<8x12xf32> to vector<1x8x12xf32>
    %380 = vector.broadcast %379 : vector<1x8x12xf32> to vector<4x8x12xf32>
    %381 = arith.addf %378, %380 : vector<4x8x12xf32>
    %cst_125 = arith.constant dense<0xFF800000> : vector<4x8xf32>
    %382 = vector.multi_reduction <maximumf>, %381, %cst_125 [2] : vector<4x8x12xf32> to vector<4x8xf32>
    %383 = vector.shape_cast %382 : vector<4x8xf32> to vector<4x8x1xf32>
    %384 = vector.broadcast %383 : vector<4x8x1xf32> to vector<4x8x12xf32>
    %385 = arith.subf %381, %384 : vector<4x8x12xf32>
    %386 = math.exp %385 : vector<4x8x12xf32>
    %cst_126 = arith.constant dense<0.000000e+00> : vector<4x8xf32>
    %387 = vector.multi_reduction <add>, %386, %cst_126 [2] : vector<4x8x12xf32> to vector<4x8xf32>
    %388 = vector.shape_cast %387 : vector<4x8xf32> to vector<4x8x1xf32>
    %389 = vector.broadcast %388 : vector<4x8x1xf32> to vector<4x8x12xf32>
    %390 = arith.divf %386, %389 : vector<4x8x12xf32>
    %391 = arith.truncf %390 : vector<4x8x12xf32> to vector<4x8x12xbf16>
    "tpu.trace_start"() <{level = 10 : i32, message = "hqk,hkd->hqd"}> : () -> ()
    %cst_127 = arith.constant dense<0.000000e+00> : vector<4x8x8xf32>
    %392 = tpu.matmul %391, %375, %cst_127 {dimension_numbers = #tpu.dot_dimension_numbers<[2], [1], [1], [2], [0, 0, 0, 1, 1, 2], [0], [0]>} : vector<4x8x12xbf16>, vector<4x12x8xbf16>, vector<4x8x8xf32> -> vector<4x8x8xf32>
    "tpu.trace_stop"() : () -> ()
    %393 = vector.extract_strided_slice %392 {offsets = [0, 0, 0], sizes = [1, 8, 8], strides = [1, 1, 1]} : vector<4x8x8xf32> to vector<1x8x8xf32>
    %394 = vector.shape_cast %393 : vector<1x8x8xf32> to vector<8x8xf32>
    %395 = arith.truncf %394 : vector<8x8xf32> to vector<8x8xbf16>
    %c0_128 = arith.constant 0 : index
    %c0_129 = arith.constant 0 : index
    %c0_130 = arith.constant 0 : index
    %396 = vector.load %arg13[%c0_128, %c0_129, %c0_130] : memref<4x8x32xbf16, #tpu.memory_space<vmem>>, vector<1x8x32xbf16>
    %397 = vector.shape_cast %396 : vector<1x8x32xbf16> to vector<8x32xbf16>
    %cst_131 = arith.constant dense<0.000000e+00> : vector<8x32xf32>
    %398 = tpu.matmul %395, %397, %cst_131 {dimension_numbers = #tpu.dot_dimension_numbers<[1], [0], [0], [1], [0, 0, 1, 1], [], []>} : vector<8x8xbf16>, vector<8x32xbf16>, vector<8x32xf32> -> vector<8x32xf32>
    %399 = vector.broadcast %345 : vector<1x32xf32> to vector<8x32xf32>
    %400 = arith.addf %399, %398 : vector<8x32xf32>
    %401 = vector.extract_strided_slice %392 {offsets = [1, 0, 0], sizes = [1, 8, 8], strides = [1, 1, 1]} : vector<4x8x8xf32> to vector<1x8x8xf32>
    %402 = vector.shape_cast %401 : vector<1x8x8xf32> to vector<8x8xf32>
    %403 = arith.truncf %402 : vector<8x8xf32> to vector<8x8xbf16>
    %c1_132 = arith.constant 1 : index
    %c0_133 = arith.constant 0 : index
    %c0_134 = arith.constant 0 : index
    %404 = vector.load %arg13[%c1_132, %c0_133, %c0_134] : memref<4x8x32xbf16, #tpu.memory_space<vmem>>, vector<1x8x32xbf16>
    %405 = vector.shape_cast %404 : vector<1x8x32xbf16> to vector<8x32xbf16>
    %cst_135 = arith.constant dense<0.000000e+00> : vector<8x32xf32>
    %406 = tpu.matmul %403, %405, %cst_135 {dimension_numbers = #tpu.dot_dimension_numbers<[1], [0], [0], [1], [0, 0, 1, 1], [], []>} : vector<8x8xbf16>, vector<8x32xbf16>, vector<8x32xf32> -> vector<8x32xf32>
    %407 = arith.addf %400, %406 : vector<8x32xf32>
    %408 = vector.extract_strided_slice %392 {offsets = [2, 0, 0], sizes = [1, 8, 8], strides = [1, 1, 1]} : vector<4x8x8xf32> to vector<1x8x8xf32>
    %409 = vector.shape_cast %408 : vector<1x8x8xf32> to vector<8x8xf32>
    %410 = arith.truncf %409 : vector<8x8xf32> to vector<8x8xbf16>
    %c2_136 = arith.constant 2 : index
    %c0_137 = arith.constant 0 : index
    %c0_138 = arith.constant 0 : index
    %411 = vector.load %arg13[%c2_136, %c0_137, %c0_138] : memref<4x8x32xbf16, #tpu.memory_space<vmem>>, vector<1x8x32xbf16>
    %412 = vector.shape_cast %411 : vector<1x8x32xbf16> to vector<8x32xbf16>
    %cst_139 = arith.constant dense<0.000000e+00> : vector<8x32xf32>
    %413 = tpu.matmul %410, %412, %cst_139 {dimension_numbers = #tpu.dot_dimension_numbers<[1], [0], [0], [1], [0, 0, 1, 1], [], []>} : vector<8x8xbf16>, vector<8x32xbf16>, vector<8x32xf32> -> vector<8x32xf32>
    %414 = arith.addf %407, %413 : vector<8x32xf32>
    %415 = vector.extract_strided_slice %392 {offsets = [3, 0, 0], sizes = [1, 8, 8], strides = [1, 1, 1]} : vector<4x8x8xf32> to vector<1x8x8xf32>
    %416 = vector.shape_cast %415 : vector<1x8x8xf32> to vector<8x8xf32>
    %417 = arith.truncf %416 : vector<8x8xf32> to vector<8x8xbf16>
    %c3_140 = arith.constant 3 : index
    %c0_141 = arith.constant 0 : index
    %c0_142 = arith.constant 0 : index
    %418 = vector.load %arg13[%c3_140, %c0_141, %c0_142] : memref<4x8x32xbf16, #tpu.memory_space<vmem>>, vector<1x8x32xbf16>
    %419 = vector.shape_cast %418 : vector<1x8x32xbf16> to vector<8x32xbf16>
    %cst_143 = arith.constant dense<0.000000e+00> : vector<8x32xf32>
    %420 = tpu.matmul %417, %419, %cst_143 {dimension_numbers = #tpu.dot_dimension_numbers<[1], [0], [0], [1], [0, 0, 1, 1], [], []>} : vector<8x8xbf16>, vector<8x32xbf16>, vector<8x32xf32> -> vector<8x32xf32>
    %421 = arith.addf %414, %420 : vector<8x32xf32>
    %422 = vector.extract_strided_slice %330 {offsets = [8, 0], sizes = [8, 32], strides = [1, 1]} : vector<16x32xf32> to vector<8x32xf32>
    %423 = tpu.concatenate %422, %336 in 0 : vector<8x32xf32>, vector<4x32xf32> -> vector<12x32xf32>
    %424 = vector.extract_strided_slice %334 {offsets = [8, 0], sizes = [8, 32], strides = [1, 1]} : vector<16x32xf32> to vector<8x32xf32>
    %425 = tpu.concatenate %424, %338 in 0 : vector<8x32xf32>, vector<4x32xf32> -> vector<12x32xf32>
    %426 = vector.extract_strided_slice %323 {offsets = [8, 0], sizes = [8, 32], strides = [1, 1]} : vector<16x32xf32> to vector<8x32xf32>
    %c0_144 = arith.constant 0 : index
    %c0_145 = arith.constant 0 : index
    %427 = vector.load %arg4[%c0_144, %c0_145] : memref<8x12xf32, #tpu.memory_space<vmem>>, vector<8x12xf32>
    %428 = vector.extract_strided_slice %13 {offsets = [3, 0], sizes = [1, 32], strides = [1, 1]} : vector<4x32xf32> to vector<1x32xf32>
    %429 = arith.truncf %426 : vector<8x32xf32> to vector<8x32xbf16>
    %430 = vector.extract_strided_slice %429 {offsets = [0, 0], sizes = [8, 8], strides = [1, 1]} : vector<8x32xbf16> to vector<8x8xbf16>
    %431 = vector.extract_strided_slice %429 {offsets = [0, 8], sizes = [8, 8], strides = [1, 1]} : vector<8x32xbf16> to vector<8x8xbf16>
    %432 = vector.extract_strided_slice %429 {offsets = [0, 16], sizes = [8, 8], strides = [1, 1]} : vector<8x32xbf16> to vector<8x8xbf16>
    %433 = vector.extract_strided_slice %429 {offsets = [0, 24], sizes = [8, 8], strides = [1, 1]} : vector<8x32xbf16> to vector<8x8xbf16>
    %434 = vector.shape_cast %430 : vector<8x8xbf16> to vector<1x8x8xbf16>
    %435 = vector.shape_cast %431 : vector<8x8xbf16> to vector<1x8x8xbf16>
    %436 = vector.shape_cast %432 : vector<8x8xbf16> to vector<1x8x8xbf16>
    %437 = vector.shape_cast %433 : vector<8x8xbf16> to vector<1x8x8xbf16>
    %438 = tpu.concatenate %434, %435, %436, %437 in 0 : vector<1x8x8xbf16>, vector<1x8x8xbf16>, vector<1x8x8xbf16>, vector<1x8x8xbf16> -> vector<4x8x8xbf16>
    %439 = arith.truncf %423 : vector<12x32xf32> to vector<12x32xbf16>
    %440 = vector.extract_strided_slice %439 {offsets = [0, 0], sizes = [12, 8], strides = [1, 1]} : vector<12x32xbf16> to vector<12x8xbf16>
    %441 = vector.extract_strided_slice %439 {offsets = [0, 8], sizes = [12, 8], strides = [1, 1]} : vector<12x32xbf16> to vector<12x8xbf16>
    %442 = vector.extract_strided_slice %439 {offsets = [0, 16], sizes = [12, 8], strides = [1, 1]} : vector<12x32xbf16> to vector<12x8xbf16>
    %443 = vector.extract_strided_slice %439 {offsets = [0, 24], sizes = [12, 8], strides = [1, 1]} : vector<12x32xbf16> to vector<12x8xbf16>
    %444 = vector.shape_cast %440 : vector<12x8xbf16> to vector<1x12x8xbf16>
    %445 = vector.shape_cast %441 : vector<12x8xbf16> to vector<1x12x8xbf16>
    %446 = vector.shape_cast %442 : vector<12x8xbf16> to vector<1x12x8xbf16>
    %447 = vector.shape_cast %443 : vector<12x8xbf16> to vector<1x12x8xbf16>
    %448 = tpu.concatenate %444, %445, %446, %447 in 0 : vector<1x12x8xbf16>, vector<1x12x8xbf16>, vector<1x12x8xbf16>, vector<1x12x8xbf16> -> vector<4x12x8xbf16>
    %449 = arith.truncf %425 : vector<12x32xf32> to vector<12x32xbf16>
    %450 = vector.extract_strided_slice %449 {offsets = [0, 0], sizes = [12, 8], strides = [1, 1]} : vector<12x32xbf16> to vector<12x8xbf16>
    %451 = vector.extract_strided_slice %449 {offsets = [0, 8], sizes = [12, 8], strides = [1, 1]} : vector<12x32xbf16> to vector<12x8xbf16>
    %452 = vector.extract_strided_slice %449 {offsets = [0, 16], sizes = [12, 8], strides = [1, 1]} : vector<12x32xbf16> to vector<12x8xbf16>
    %453 = vector.extract_strided_slice %449 {offsets = [0, 24], sizes = [12, 8], strides = [1, 1]} : vector<12x32xbf16> to vector<12x8xbf16>
    %454 = vector.shape_cast %450 : vector<12x8xbf16> to vector<1x12x8xbf16>
    %455 = vector.shape_cast %451 : vector<12x8xbf16> to vector<1x12x8xbf16>
    %456 = vector.shape_cast %452 : vector<12x8xbf16> to vector<1x12x8xbf16>
    %457 = vector.shape_cast %453 : vector<12x8xbf16> to vector<1x12x8xbf16>
    %458 = tpu.concatenate %454, %455, %456, %457 in 0 : vector<1x12x8xbf16>, vector<1x12x8xbf16>, vector<1x12x8xbf16>, vector<1x12x8xbf16> -> vector<4x12x8xbf16>
    "tpu.trace_start"() <{level = 10 : i32, message = "hqd,hkd->hqk"}> : () -> ()
    %cst_146 = arith.constant dense<0.000000e+00> : vector<4x8x12xf32>
    %459 = tpu.matmul %438, %448, %cst_146 {dimension_numbers = #tpu.dot_dimension_numbers<[2], [2], [1], [1], [0, 0, 0, 1, 1, 1], [0], [0]>} : vector<4x8x8xbf16>, vector<4x12x8xbf16>, vector<4x8x12xf32> -> vector<4x8x12xf32>
    "tpu.trace_stop"() : () -> ()
    %cst_147 = arith.constant 0.353553385 : f32
    %460 = vector.broadcast %cst_147 : f32 to vector<4x8x12xf32>
    %461 = arith.mulf %459, %460 : vector<4x8x12xf32>
    %462 = vector.shape_cast %427 : vector<8x12xf32> to vector<1x8x12xf32>
    %463 = vector.broadcast %462 : vector<1x8x12xf32> to vector<4x8x12xf32>
    %464 = arith.addf %461, %463 : vector<4x8x12xf32>
    %cst_148 = arith.constant dense<0xFF800000> : vector<4x8xf32>
    %465 = vector.multi_reduction <maximumf>, %464, %cst_148 [2] : vector<4x8x12xf32> to vector<4x8xf32>
    %466 = vector.shape_cast %465 : vector<4x8xf32> to vector<4x8x1xf32>
    %467 = vector.broadcast %466 : vector<4x8x1xf32> to vector<4x8x12xf32>
    %468 = arith.subf %464, %467 : vector<4x8x12xf32>
    %469 = math.exp %468 : vector<4x8x12xf32>
    %cst_149 = arith.constant dense<0.000000e+00> : vector<4x8xf32>
    %470 = vector.multi_reduction <add>, %469, %cst_149 [2] : vector<4x8x12xf32> to vector<4x8xf32>
    %471 = vector.shape_cast %470 : vector<4x8xf32> to vector<4x8x1xf32>
    %472 = vector.broadcast %471 : vector<4x8x1xf32> to vector<4x8x12xf32>
    %473 = arith.divf %469, %472 : vector<4x8x12xf32>
    %474 = arith.truncf %473 : vector<4x8x12xf32> to vector<4x8x12xbf16>
    "tpu.trace_start"() <{level = 10 : i32, message = "hqk,hkd->hqd"}> : () -> ()
    %cst_150 = arith.constant dense<0.000000e+00> : vector<4x8x8xf32>
    %475 = tpu.matmul %474, %458, %cst_150 {dimension_numbers = #tpu.dot_dimension_numbers<[2], [1], [1], [2], [0, 0, 0, 1, 1, 2], [0], [0]>} : vector<4x8x12xbf16>, vector<4x12x8xbf16>, vector<4x8x8xf32> -> vector<4x8x8xf32>
    "tpu.trace_stop"() : () -> ()
    %476 = vector.extract_strided_slice %475 {offsets = [0, 0, 0], sizes = [1, 8, 8], strides = [1, 1, 1]} : vector<4x8x8xf32> to vector<1x8x8xf32>
    %477 = vector.shape_cast %476 : vector<1x8x8xf32> to vector<8x8xf32>
    %478 = arith.truncf %477 : vector<8x8xf32> to vector<8x8xbf16>
    %c0_151 = arith.constant 0 : index
    %c0_152 = arith.constant 0 : index
    %c0_153 = arith.constant 0 : index
    %479 = vector.load %arg13[%c0_151, %c0_152, %c0_153] : memref<4x8x32xbf16, #tpu.memory_space<vmem>>, vector<1x8x32xbf16>
    %480 = vector.shape_cast %479 : vector<1x8x32xbf16> to vector<8x32xbf16>
    %cst_154 = arith.constant dense<0.000000e+00> : vector<8x32xf32>
    %481 = tpu.matmul %478, %480, %cst_154 {dimension_numbers = #tpu.dot_dimension_numbers<[1], [0], [0], [1], [0, 0, 1, 1], [], []>} : vector<8x8xbf16>, vector<8x32xbf16>, vector<8x32xf32> -> vector<8x32xf32>
    %482 = vector.broadcast %428 : vector<1x32xf32> to vector<8x32xf32>
    %483 = arith.addf %482, %481 : vector<8x32xf32>
    %484 = vector.extract_strided_slice %475 {offsets = [1, 0, 0], sizes = [1, 8, 8], strides = [1, 1, 1]} : vector<4x8x8xf32> to vector<1x8x8xf32>
    %485 = vector.shape_cast %484 : vector<1x8x8xf32> to vector<8x8xf32>
    %486 = arith.truncf %485 : vector<8x8xf32> to vector<8x8xbf16>
    %c1_155 = arith.constant 1 : index
    %c0_156 = arith.constant 0 : index
    %c0_157 = arith.constant 0 : index
    %487 = vector.load %arg13[%c1_155, %c0_156, %c0_157] : memref<4x8x32xbf16, #tpu.memory_space<vmem>>, vector<1x8x32xbf16>
    %488 = vector.shape_cast %487 : vector<1x8x32xbf16> to vector<8x32xbf16>
    %cst_158 = arith.constant dense<0.000000e+00> : vector<8x32xf32>
    %489 = tpu.matmul %486, %488, %cst_158 {dimension_numbers = #tpu.dot_dimension_numbers<[1], [0], [0], [1], [0, 0, 1, 1], [], []>} : vector<8x8xbf16>, vector<8x32xbf16>, vector<8x32xf32> -> vector<8x32xf32>
    %490 = arith.addf %483, %489 : vector<8x32xf32>
    %491 = vector.extract_strided_slice %475 {offsets = [2, 0, 0], sizes = [1, 8, 8], strides = [1, 1, 1]} : vector<4x8x8xf32> to vector<1x8x8xf32>
    %492 = vector.shape_cast %491 : vector<1x8x8xf32> to vector<8x8xf32>
    %493 = arith.truncf %492 : vector<8x8xf32> to vector<8x8xbf16>
    %c2_159 = arith.constant 2 : index
    %c0_160 = arith.constant 0 : index
    %c0_161 = arith.constant 0 : index
    %494 = vector.load %arg13[%c2_159, %c0_160, %c0_161] : memref<4x8x32xbf16, #tpu.memory_space<vmem>>, vector<1x8x32xbf16>
    %495 = vector.shape_cast %494 : vector<1x8x32xbf16> to vector<8x32xbf16>
    %cst_162 = arith.constant dense<0.000000e+00> : vector<8x32xf32>
    %496 = tpu.matmul %493, %495, %cst_162 {dimension_numbers = #tpu.dot_dimension_numbers<[1], [0], [0], [1], [0, 0, 1, 1], [], []>} : vector<8x8xbf16>, vector<8x32xbf16>, vector<8x32xf32> -> vector<8x32xf32>
    %497 = arith.addf %490, %496 : vector<8x32xf32>
    %498 = vector.extract_strided_slice %475 {offsets = [3, 0, 0], sizes = [1, 8, 8], strides = [1, 1, 1]} : vector<4x8x8xf32> to vector<1x8x8xf32>
    %499 = vector.shape_cast %498 : vector<1x8x8xf32> to vector<8x8xf32>
    %500 = arith.truncf %499 : vector<8x8xf32> to vector<8x8xbf16>
    %c3_163 = arith.constant 3 : index
    %c0_164 = arith.constant 0 : index
    %c0_165 = arith.constant 0 : index
    %501 = vector.load %arg13[%c3_163, %c0_164, %c0_165] : memref<4x8x32xbf16, #tpu.memory_space<vmem>>, vector<1x8x32xbf16>
    %502 = vector.shape_cast %501 : vector<1x8x32xbf16> to vector<8x32xbf16>
    %cst_166 = arith.constant dense<0.000000e+00> : vector<8x32xf32>
    %503 = tpu.matmul %500, %502, %cst_166 {dimension_numbers = #tpu.dot_dimension_numbers<[1], [0], [0], [1], [0, 0, 1, 1], [], []>} : vector<8x8xbf16>, vector<8x32xbf16>, vector<8x32xf32> -> vector<8x32xf32>
    %504 = arith.addf %497, %503 : vector<8x32xf32>
    %505 = tpu.concatenate %421, %504 in 0 : vector<8x32xf32>, vector<8x32xf32> -> vector<16x32xf32>
    %506 = arith.addf %295, %505 : vector<16x32xf32>
    %507 = vector.extract_strided_slice %506 {offsets = [0, 0], sizes = [8, 32], strides = [1, 1]} : vector<16x32xf32> to vector<8x32xf32>
    %c0_167 = arith.constant 0 : index
    %c0_168 = arith.constant 0 : index
    %c0_169 = arith.constant 0 : index
    %508 = vector.load %arg19[%c0_167, %c0_168, %c0_169] : memref<2x8x32xf32, #tpu.memory_space<vmem>>, vector<1x8x32xf32>
    %509 = vector.shape_cast %508 : vector<1x8x32xf32> to vector<8x32xf32>
    %510 = vector.shape_cast %507 : vector<8x32xf32> to vector<1x8x32xf32>
    tpu.vector_store %arg19[%c0_167, %c0_168, %c0_169], %510 {strides = array<i32>} : memref<2x8x32xf32, #tpu.memory_space<vmem>>, vector<1x8x32xf32>,
    %511 = vector.extract_strided_slice %506 {offsets = [8, 0], sizes = [8, 32], strides = [1, 1]} : vector<16x32xf32> to vector<8x32xf32>
    %c1_170 = arith.constant 1 : index
    %c0_171 = arith.constant 0 : index
    %c0_172 = arith.constant 0 : index
    %512 = vector.load %arg19[%c1_170, %c0_171, %c0_172] : memref<2x8x32xf32, #tpu.memory_space<vmem>>, vector<1x8x32xf32>
    %513 = vector.shape_cast %512 : vector<1x8x32xf32> to vector<8x32xf32>
    %514 = vector.shape_cast %511 : vector<8x32xf32> to vector<1x8x32xf32>
    tpu.vector_store %arg19[%c1_170, %c0_171, %c0_172], %514 {strides = array<i32>} : memref<2x8x32xf32, #tpu.memory_space<vmem>>, vector<1x8x32xf32>,
    return
  }
  func.func @transform_0(%arg0: i32) -> (i32, i32, i32) {
    %c0_i32 = arith.constant 0 : i32
    %c0_i32_0 = arith.constant 0 : i32
    %c0_i32_1 = arith.constant 0 : i32
    return %arg0, %c0_i32, %c0_i32_0 : i32, i32, i32
  }
  func.func @transform_1(%arg0: i32) -> (i32, i32, i32) {
    %c0_i32 = arith.constant 0 : i32
    %c0_i32_0 = arith.constant 0 : i32
    %c0_i32_1 = arith.constant 0 : i32
    return %arg0, %c0_i32, %c0_i32_0 : i32, i32, i32
  }
  func.func @transform_2(%arg0: i32) -> (i32, i32, i32) {
    %c0_i32 = arith.constant 0 : i32
    %c0_i32_0 = arith.constant 0 : i32
    %c0_i32_1 = arith.constant 0 : i32
    return %arg0, %c0_i32, %c0_i32_0 : i32, i32, i32
  }
  func.func @transform_3(%arg0: i32) -> (i32, i32) {
    %c0_i32 = arith.constant 0 : i32
    %c0_i32_0 = arith.constant 0 : i32
    %c0_i32_1 = arith.constant 0 : i32
    return %c0_i32, %c0_i32_0 : i32, i32
  }
  func.func @transform_4(%arg0: i32) -> (i32, i32, i32) {
    %c0_i32 = arith.constant 0 : i32
    %c0_i32_0 = arith.constant 0 : i32
    %c0_i32_1 = arith.constant 0 : i32
    %c0_i32_2 = arith.constant 0 : i32
    return %c0_i32, %c0_i32_0, %c0_i32_1 : i32, i32, i32
  }
  func.func @transform_5(%arg0: i32) -> (i32, i32) {
    %c0_i32 = arith.constant 0 : i32
    %c0_i32_0 = arith.constant 0 : i32
    %c0_i32_1 = arith.constant 0 : i32
    return %c0_i32, %c0_i32_0 : i32, i32
  }
  func.func @transform_6(%arg0: i32) -> (i32, i32) {
    %c0_i32 = arith.constant 0 : i32
    %c0_i32_0 = arith.constant 0 : i32
    %c0_i32_1 = arith.constant 0 : i32
    return %c0_i32, %c0_i32_0 : i32, i32
  }
  func.func @transform_7(%arg0: i32) -> (i32, i32) {
    %c0_i32 = arith.constant 0 : i32
    %c0_i32_0 = arith.constant 0 : i32
    %c0_i32_1 = arith.constant 0 : i32
    return %c0_i32, %c0_i32_0 : i32, i32
  }
  func.func @transform_8(%arg0: i32) -> (i32, i32, i32) {
    %c0_i32 = arith.constant 0 : i32
    %c0_i32_0 = arith.constant 0 : i32
    %c0_i32_1 = arith.constant 0 : i32
    %c0_i32_2 = arith.constant 0 : i32
    return %c0_i32, %c0_i32_0, %c0_i32_1 : i32, i32, i32
  }
  func.func @transform_9(%arg0: i32) -> (i32, i32) {
    %c0_i32 = arith.constant 0 : i32
    %c0_i32_0 = arith.constant 0 : i32
    %c0_i32_1 = arith.constant 0 : i32
    return %c0_i32, %c0_i32_0 : i32, i32
  }
  func.func @transform_10(%arg0: i32) -> (i32, i32) {
    %c0_i32 = arith.constant 0 : i32
    %c0_i32_0 = arith.constant 0 : i32
    %c0_i32_1 = arith.constant 0 : i32
    return %c0_i32, %c0_i32_0 : i32, i32
  }
  func.func @transform_11(%arg0: i32) -> (i32, i32) {
    %c0_i32 = arith.constant 0 : i32
    %c0_i32_0 = arith.constant 0 : i32
    %c0_i32_1 = arith.constant 0 : i32
    return %c0_i32, %c0_i32_0 : i32, i32
  }
  func.func @transform_12(%arg0: i32) -> (i32, i32, i32) {
    %c0_i32 = arith.constant 0 : i32
    %c0_i32_0 = arith.constant 0 : i32
    %c0_i32_1 = arith.constant 0 : i32
    %c0_i32_2 = arith.constant 0 : i32
    return %c0_i32, %c0_i32_0, %c0_i32_1 : i32, i32, i32
  }
  func.func @transform_13(%arg0: i32) -> (i32, i32) {
    %c0_i32 = arith.constant 0 : i32
    %c0_i32_0 = arith.constant 0 : i32
    %c0_i32_1 = arith.constant 0 : i32
    return %c0_i32, %c0_i32_0 : i32, i32
  }
  func.func @transform_14(%arg0: i32) -> (i32, i32) {
    %c0_i32 = arith.constant 0 : i32
    %c0_i32_0 = arith.constant 0 : i32
    %c0_i32_1 = arith.constant 0 : i32
    return %c0_i32, %c0_i32_0 : i32, i32
  }
  func.func @transform_15(%arg0: i32) -> (i32, i32) {
    %c0_i32 = arith.constant 0 : i32
    %c0_i32_0 = arith.constant 0 : i32
    %c0_i32_1 = arith.constant 0 : i32
    return %c0_i32, %c0_i32_0 : i32, i32
  }
  func.func @transform_16(%arg0: i32) -> (i32, i32) {
    %c0_i32 = arith.constant 0 : i32
    %c0_i32_0 = arith.constant 0 : i32
    %c0_i32_1 = arith.constant 0 : i32
    return %c0_i32, %c0_i32_0 : i32, i32
  }
  func.func @transform_17(%arg0: i32) -> (i32, i32) {
    %c0_i32 = arith.constant 0 : i32
    %c0_i32_0 = arith.constant 0 : i32
    %c0_i32_1 = arith.constant 0 : i32
    return %c0_i32, %c0_i32_0 : i32, i32
  }
  func.func @transform_18(%arg0: i32) -> (i32, i32, i32) {
    %c0_i32 = arith.constant 0 : i32
    %c0_i32_0 = arith.constant 0 : i32
    %c0_i32_1 = arith.constant 0 : i32
    return %arg0, %c0_i32, %c0_i32_0 : i32, i32, i32
  }
  func.func @transform_19(%arg0: i32) -> (i32, i32, i32) {
    %c0_i32 = arith.constant 0 : i32
    %c0_i32_0 = arith.constant 0 : i32
    %c0_i32_1 = arith.constant 0 : i32
    return %arg0, %c0_i32, %c0_i32_0 : i32, i32, i32
  }
}

</mosaic_0001>

<llo_original>
// kernel: hoi_transformer_forward.2
$region0: #{hoi_transformer_forward.2}
  #allocation0 [shape = 'u32[]', space=smem, size = 0x4, offset = 0x4, fixed_abs, tag = 'smem constant byte address 0x4 - core index']
  #allocation1 [shape = 'u32[144,128]{1,0:T(1,128)}', space=vmem, size = 0x12000, scoped, tag = 'internal scratch']
  %s0 = inlined_call_operand.vmem [shape: f32[2,8,32], index: 0, kind: input, shape index: {}]
  %s1 = inlined_call_operand.vmem [shape: bf16[2,16,32], index: 1, kind: input, shape index: {}]
  %s2 = inlined_call_operand.vmem [shape: f32[2,1,16], index: 2, kind: input, shape index: {}]
  %s3 = inlined_call_operand.vmem [shape: f32[8,12], index: 3, kind: input, shape index: {}]
  %s4 = inlined_call_operand.vmem [shape: f32[2,4,32], index: 4, kind: input, shape index: {}]
  %s5 = inlined_call_operand.vmem [shape: f32[6,32], index: 5, kind: input, shape index: {}]
  %s6 = inlined_call_operand.vmem [shape: bf16[32,32], index: 6, kind: input, shape index: {}]
  %s7 = inlined_call_operand.vmem [shape: bf16[32,64], index: 7, kind: input, shape index: {}]
  %s8 = inlined_call_operand.vmem [shape: bf16[4,8,32], index: 8, kind: input, shape index: {}]
  %s9 = inlined_call_operand.vmem [shape: f32[4,32], index: 9, kind: input, shape index: {}]
  %s10 = inlined_call_operand.vmem [shape: bf16[32,32], index: 10, kind: input, shape index: {}]
  %s11 = inlined_call_operand.vmem [shape: bf16[32,64], index: 11, kind: input, shape index: {}]
  %s12 = inlined_call_operand.vmem [shape: bf16[4,8,32], index: 12, kind: input, shape index: {}]
  %s13 = inlined_call_operand.vmem [shape: f32[4,32], index: 13, kind: input, shape index: {}]
  %s14 = inlined_call_operand.vmem [shape: bf16[32,128], index: 14, kind: input, shape index: {}]
  %s15 = inlined_call_operand.vmem [shape: f32[1,128], index: 15, kind: input, shape index: {}]
  %s16 = inlined_call_operand.vmem [shape: bf16[128,32], index: 16, kind: input, shape index: {}]
  %s17 = inlined_call_operand.vmem [shape: f32[1,32], index: 17, kind: input, shape index: {}]
  %s18 = inlined_call_operand.vmem [shape: f32[2,8,32], index: 18, kind: output, shape index: {}]
  %s19 = sld [smem:[#allocation0]]
  $region82: #{hoi_transformer_forward.2} parent=0
    _
  %s21 = ssub.s32 1, %s19
  %s22 = scalar_select 0, %s21, %s19
  // Predicated region
  $region2: #{hoi_transformer_forward.2} parent=0 // pred_check
    _
  $region3: #{hoi_transformer_forward.2} parent=0 // pred_check_branch
    %24 = sbr.rel (0) target = $region5
  $region4: #{hoi_transformer_forward.2} parent=0 // pred_region
    _
  $region5: #{hoi_transformer_forward.2} parent=0 // pred_fallthru
    _
  // Predicated region
  $region6: #{hoi_transformer_forward.2} parent=0 // pred_check
    _
  $region7: #{hoi_transformer_forward.2} parent=0 // pred_check_branch
    %26 = sbr.rel (0) target = $region9
  $region8: #{hoi_transformer_forward.2} parent=0 // pred_region
    _
  $region9: #{hoi_transformer_forward.2} parent=0 // pred_fallthru
    _
  // Predicated region
  $region10: #{hoi_transformer_forward.2} parent=0 // pred_check
    _
  $region11: #{hoi_transformer_forward.2} parent=0 // pred_check_branch
    %28 = sbr.rel (0) target = $region13
  $region12: #{hoi_transformer_forward.2} parent=0 // pred_region
    _
  $region13: #{hoi_transformer_forward.2} parent=0 // pred_fallthru
    _
  // Predicated region
  $region14: #{hoi_transformer_forward.2} parent=0 // pred_check
    _
  $region15: #{hoi_transformer_forward.2} parent=0 // pred_check_branch
    %30 = sbr.rel (0) target = $region17
  $region16: #{hoi_transformer_forward.2} parent=0 // pred_region
    _
  $region17: #{hoi_transformer_forward.2} parent=0 // pred_fallthru
    _
  // Predicated region
  $region18: #{hoi_transformer_forward.2} parent=0 // pred_check
    _
  $region19: #{hoi_transformer_forward.2} parent=0 // pred_check_branch
    %32 = sbr.rel (0) target = $region21
  $region20: #{hoi_transformer_forward.2} parent=0 // pred_region
    _
  $region21: #{hoi_transformer_forward.2} parent=0 // pred_fallthru
    _
  // Predicated region
  $region22: #{hoi_transformer_forward.2} parent=0 // pred_check
    _
  $region23: #{hoi_transformer_forward.2} parent=0 // pred_check_branch
    %34 = sbr.rel (0) target = $region25
  $region24: #{hoi_transformer_forward.2} parent=0 // pred_region
    _
  $region25: #{hoi_transformer_forward.2} parent=0 // pred_fallthru
    _
  // Predicated region
  $region26: #{hoi_transformer_forward.2} parent=0 // pred_check
    _
  $region27: #{hoi_transformer_forward.2} parent=0 // pred_check_branch
    %36 = sbr.rel (0) target = $region29
  $region28: #{hoi_transformer_forward.2} parent=0 // pred_region
    _
  $region29: #{hoi_transformer_forward.2} parent=0 // pred_fallthru
    _
  // Predicated region
  $region30: #{hoi_transformer_forward.2} parent=0 // pred_check
    _
  $region31: #{hoi_transformer_forward.2} parent=0 // pred_check_branch
    %38 = sbr.rel (0) target = $region33
  $region32: #{hoi_transformer_forward.2} parent=0 // pred_region
    _
  $region33: #{hoi_transformer_forward.2} parent=0 // pred_fallthru
    _
  // Predicated region
  $region34: #{hoi_transformer_forward.2} parent=0 // pred_check
    _
  $region35: #{hoi_transformer_forward.2} parent=0 // pred_check_branch
    %40 = sbr.rel (0) target = $region37
  $region36: #{hoi_transformer_forward.2} parent=0 // pred_region
    _
  $region37: #{hoi_transformer_forward.2} parent=0 // pred_fallthru
    _
  // Predicated region
  $region38: #{hoi_transformer_forward.2} parent=0 // pred_check
    _
  $region39: #{hoi_transformer_forward.2} parent=0 // pred_check_branch
    %42 = sbr.rel (0) target = $region41
  $region40: #{hoi_transformer_forward.2} parent=0 // pred_region
    _
  $region41: #{hoi_transformer_forward.2} parent=0 // pred_fallthru
    _
  // Predicated region
  $region42: #{hoi_transformer_forward.2} parent=0 // pred_check
    _
  $region43: #{hoi_transformer_forward.2} parent=0 // pred_check_branch
    %44 = sbr.rel (0) target = $region45
  $region44: #{hoi_transformer_forward.2} parent=0 // pred_region
    _
  $region45: #{hoi_transformer_forward.2} parent=0 // pred_fallthru
    _
  // Predicated region
  $region46: #{hoi_transformer_forward.2} parent=0 // pred_check
    _
  $region47: #{hoi_transformer_forward.2} parent=0 // pred_check_branch
    %46 = sbr.rel (0) target = $region49
  $region48: #{hoi_transformer_forward.2} parent=0 // pred_region
    _
  $region49: #{hoi_transformer_forward.2} parent=0 // pred_fallthru
    _
  // Predicated region
  $region50: #{hoi_transformer_forward.2} parent=0 // pred_check
    _
  $region51: #{hoi_transformer_forward.2} parent=0 // pred_check_branch
    %48 = sbr.rel (0) target = $region53
  $region52: #{hoi_transformer_forward.2} parent=0 // pred_region
    _
  $region53: #{hoi_transformer_forward.2} parent=0 // pred_fallthru
    _
  // Predicated region
  $region54: #{hoi_transformer_forward.2} parent=0 // pred_check
    _
  $region55: #{hoi_transformer_forward.2} parent=0 // pred_check_branch
    %50 = sbr.rel (0) target = $region57
  $region56: #{hoi_transformer_forward.2} parent=0 // pred_region
    _
  $region57: #{hoi_transformer_forward.2} parent=0 // pred_fallthru
    _
  // Predicated region
  $region58: #{hoi_transformer_forward.2} parent=0 // pred_check
    _
  $region59: #{hoi_transformer_forward.2} parent=0 // pred_check_branch
    %52 = sbr.rel (0) target = $region61
  $region60: #{hoi_transformer_forward.2} parent=0 // pred_region
    _
  $region61: #{hoi_transformer_forward.2} parent=0 // pred_fallthru
    _
  // Predicated region
  $region62: #{hoi_transformer_forward.2} parent=0 // pred_check
    _
  $region63: #{hoi_transformer_forward.2} parent=0 // pred_check_branch
    %54 = sbr.rel (0) target = $region65
  $region64: #{hoi_transformer_forward.2} parent=0 // pred_region
    _
  $region65: #{hoi_transformer_forward.2} parent=0 // pred_fallthru
    _
  // Predicated region
  $region66: #{hoi_transformer_forward.2} parent=0 // pred_check
    _
  $region67: #{hoi_transformer_forward.2} parent=0 // pred_check_branch
    %56 = sbr.rel (0) target = $region69
  $region68: #{hoi_transformer_forward.2} parent=0 // pred_region
    _
  $region69: #{hoi_transformer_forward.2} parent=0 // pred_fallthru
    _
  // Predicated region
  $region70: #{hoi_transformer_forward.2} parent=0 // pred_check
    _
  $region71: #{hoi_transformer_forward.2} parent=0 // pred_check_branch
    %58 = sbr.rel (0) target = $region73
  $region72: #{hoi_transformer_forward.2} parent=0 // pred_region
    _
  $region73: #{hoi_transformer_forward.2} parent=0 // pred_fallthru
    _
  %v60 = vld [vmem:[%s0] sm:$0xff]
  %s61 = scalar_lea.vmem %s0, 8
  %v62 = vld [vmem:[%s61] sm:$0xff]
  %v63 = vld [vmem:[%s1] sm:$0xf]
  %v64 = vld [vmem:[%s1 + $0x4] sm:$0xf]
  %s65 = scalar_lea.vmem %s1, 8
  %v66 = vld [vmem:[%s65] sm:$0xf]
  %v67 = vld [vmem:[%s65 + $0x4] sm:$0xf]
  %v70 = vunpack.c.l.b16 %v63
  %v71 = vunpack.c.l.b16 %v64
  %v72 = vpack.c.b16 %v71, %v70
  %v76 = vunpack.c.l.b16 %v66
  %v77 = vunpack.c.l.b16 %v67
  %v78 = vpack.c.b16 %v77, %v76
  %v80 = vunpack.c.l.bf16 %v72
  %v81 = vunpack.c.h.bf16 %v72
  %v82 = vunpack.c.l.bf16 %v78
  %v83 = vunpack.c.h.bf16 %v78
  %v84 = vld [vmem:[%s5] sm:$0x3f]
  %v85 = vld [vmem:[%s9] sm:$0xf]
  %v86 = vld [vmem:[%s13] sm:$0xf]
  %vm87 = vcmask 261120
  %v88 = vsel %vm87, %v60, 0.0
  %89 = vadd.xlane.f32.xlu0 %v88
  %v90 = vpop.xlane.xlu0 %89
  %v91 = vsel %vm87, %v62, 0.0
  %92 = vadd.xlane.f32.xlu0 %v91
  %v93 = vpop.xlane.xlu0 %92
  %v94 = vrcp.pop 32.0
  %v95 = vmul.f32 %v90, %v94
  %v96 = vmul.f32 %v93, %v94
  %v97 = vsub.f32 %v60, %v95
  %v98 = vsub.f32 %v62, %v96
  %v99 = vmul.f32 %v97, %v97
  %v100 = vmul.f32 %v98, %v98
  %v101 = vsel %vm87, %v99, 0.0
  %102 = vadd.xlane.f32.xlu0 %v101
  %v103 = vpop.xlane.xlu0 %102
  %v104 = vsel %vm87, %v100, 0.0
  %105 = vadd.xlane.f32.xlu0 %v104
  %v106 = vpop.xlane.xlu0 %105
  %v107 = vmul.f32 %v103, %v94
  %v108 = vmul.f32 %v106, %v94
  %v109 = vadd.f32 %v107, 1e-05
  %v110 = vadd.f32 %v108, 1e-05
  %v111 = vrsqrt.pop %v109
  %v112 = vrsqrt.pop %v110
  %v113 = vmul.f32 %v97, %v111
  %v114 = vmul.f32 %v98, %v112
  %v115 = vlaneseq
  %v116 = vshrl.u32 %v115, 7
  %v117 = vsub.s32 0, %v116
  %v118 = vrot.slane %v84, %v117
  %v119 = vmul.f32 %v113, %v118
  %v120 = vmul.f32 %v114, %v118
  %v121 = vlaneseq
  %v122 = vshrl.u32 %v121, 7
  %v123 = vsub.s32 1, %v122
  %v124 = vrot.slane %v84, %v123
  %v125 = vadd.f32 %v119, %v124
  %v126 = vadd.f32 %v120, %v124
  %v127 = vsel %vm87, %v80, 0.0
  %128 = vadd.xlane.f32.xlu0 %v127
  %v129 = vpop.xlane.xlu0 %128
  %v130 = vsel %vm87, %v81, 0.0
  %131 = vadd.xlane.f32.xlu0 %v130
  %v132 = vpop.xlane.xlu0 %131
  %v133 = vsel %vm87, %v82, 0.0
  %134 = vadd.xlane.f32.xlu0 %v133
  %v135 = vpop.xlane.xlu0 %134
  %v136 = vsel %vm87, %v83, 0.0
  %137 = vadd.xlane.f32.xlu0 %v136
  %v138 = vpop.xlane.xlu0 %137
  %v139 = vmul.f32 %v129, %v94
  %v140 = vmul.f32 %v132, %v94
  %v141 = vmul.f32 %v135, %v94
  %v142 = vmul.f32 %v138, %v94
  %v143 = vsub.f32 %v80, %v139
  %v144 = vsub.f32 %v81, %v140
  %v145 = vsub.f32 %v82, %v141
  %v146 = vsub.f32 %v83, %v142
  %v147 = vmul.f32 %v143, %v143
  %v148 = vmul.f32 %v144, %v144
  %v149 = vmul.f32 %v145, %v145
  %v150 = vmul.f32 %v146, %v146
  %v151 = vsel %vm87, %v147, 0.0
  %152 = vadd.xlane.f32.xlu0 %v151
  %v153 = vpop.xlane.xlu0 %152
  %v154 = vsel %vm87, %v148, 0.0
  %155 = vadd.xlane.f32.xlu0 %v154
  %v156 = vpop.xlane.xlu0 %155
  %v157 = vsel %vm87, %v149, 0.0
  %158 = vadd.xlane.f32.xlu0 %v157
  %v159 = vpop.xlane.xlu0 %158
  %v160 = vsel %vm87, %v150, 0.0
  %161 = vadd.xlane.f32.xlu0 %v160
  %v162 = vpop.xlane.xlu0 %161
  %v163 = vmul.f32 %v153, %v94
  %v164 = vmul.f32 %v156, %v94
  %v165 = vmul.f32 %v159, %v94
  %v166 = vmul.f32 %v162, %v94
  %v167 = vadd.f32 %v163, 1e-05
  %v168 = vadd.f32 %v164, 1e-05
  %v169 = vadd.f32 %v165, 1e-05
  %v170 = vadd.f32 %v166, 1e-05
  %v171 = vrsqrt.pop %v167
  %v172 = vrsqrt.pop %v168
  %v173 = vrsqrt.pop %v169
  %v174 = vrsqrt.pop %v170
  %v175 = vmul.f32 %v143, %v171
  %v176 = vmul.f32 %v144, %v172
  %v177 = vmul.f32 %v145, %v173
  %v178 = vmul.f32 %v146, %v174
  %v179 = vmul.f32 %v175, %v118
  %v180 = vmul.f32 %v176, %v118
  %v181 = vmul.f32 %v177, %v118
  %v182 = vmul.f32 %v178, %v118
  %v183 = vadd.f32 %v179, %v124
  %v184 = vadd.f32 %v180, %v124
  %v185 = vadd.f32 %v181, %v124
  %v186 = vadd.f32 %v182, %v124
  %v187 = vpack.c.bf16 %v126, %v125
  %v188 = vld [vmem:[%s6] sm:$0xf]
  %v189 = vld [vmem:[%s6 + $0x4] sm:$0xf]
  %v190 = vld [vmem:[%s6 + $0x8] sm:$0xf]
  %v191 = vld [vmem:[%s6 + $0xc] sm:$0xf]
  %v192 = vlaneseq
  %v193 = vshrl.u32 %v192, 7
  %v194 = vsub.s32 0, %v193
  %v195 = vrot.slane %v85, %v194
  %v200 = vunpack.c.l.b16 %v188
  %v201 = vunpack.c.l.b16 %v189
  %v202 = vunpack.c.l.b16 %v190
  %v203 = vunpack.c.l.b16 %v191
  %v204 = vpack.c.b16 %v201, %v200
  %v205 = vpack.c.b16 %v203, %v202
  %v209 = vsel %vm87, %v187, 0
  %211 = vmatprep.subr.bf16.mxu0 0
  %212 = vmatpush1.bf16.msra.mxu0 0
  %213 = vmatprep.subr.bf16.mxu0 0
  %214 = vmatpush1.bf16.msra.mxu0 0
  %215 = vmatprep.subr.bf16.mxu0 0
  %216 = vmatpush1.bf16.msra.mxu0 0
  %217 = vmatprep.subr.bf16.mxu0 0
  %218 = vmatpush1.bf16.msra.mxu0 0
  %219 = vmatprep.subr.bf16.mxu0 0
  %220 = vmatpush1.bf16.msra.mxu0 0
  %221 = vmatprep.subr.bf16.mxu0 0
  %222 = vmatpush1.bf16.msra.mxu0 0
  %223 = vmatprep.subr.bf16.mxu0 0
  %224 = vmatpush1.bf16.msra.mxu0 %v205
  %225 = vmatprep.subr.bf16.mxu0 0
  %226 = vmatpush1.bf16.msra.mxu0 %v204
  %227 = vmatprep.subr.bf16.mxu0 0
  %228 = vmatpush2.bf16.msra.mxu0 0
  %229 = vmatprep.subr.bf16.mxu0 0
  %230 = vmatpush2.bf16.msra.mxu0 0
  %231 = vmatprep.subr.bf16.mxu0 0
  %232 = vmatpush2.bf16.msra.mxu0 0
  %233 = vmatprep.subr.bf16.mxu0 0
  %234 = vmatpush2.bf16.msra.mxu0 0
  %235 = vmatprep.subr.bf16.mxu0 0
  %236 = vmatpush2.bf16.msra.mxu0 0
  %237 = vmatprep.subr.bf16.mxu0 0
  %238 = vmatpush2.bf16.msra.mxu0 0
  %239 = vmatprep.subr.bf16.mxu0 0
  %240 = vmatpush2.bf16.msra.mxu0 0
  %241 = vmatprep.subr.bf16.mxu0 0
  %242 = vmatpush2.bf16.msra.mxu0 0
  %243 = vmatprep.mubr.bf16.mxu0 0
  %244 = vmatmul.mubr.bf16.gmra.mxu0 %v209
  %v245 = vpop.f32.mrf.mxu0
  %v246 = vadd.f32 %v195, %v245
  %v247 = vpop.f32.mrf.mxu0
  %v248 = vpop.f32.mrf.mxu0
  %v249 = vadd.f32 %v195, %v248
  %v250 = vpop.f32.mrf.mxu0
  %251 = vdwg.mxu0
  %v252 = vpack.c.bf16 %v184, %v183
  %v253 = vpack.c.bf16 %v186, %v185
  %v254 = vld [vmem:[%s7] sm:$0xf]
  %v255 = vld [vmem:[%s7 + $0x4] sm:$0xf]
  %v256 = vld [vmem:[%s7 + $0x8] sm:$0xf]
  %v257 = vld [vmem:[%s7 + $0xc] sm:$0xf]
  %v262 = vunpack.c.l.b16 %v254
  %v263 = vunpack.c.l.b16 %v255
  %v264 = vunpack.c.l.b16 %v256
  %v265 = vunpack.c.l.b16 %v257
  %v266 = vpack.c.b16 %v263, %v262
  %v267 = vpack.c.b16 %v265, %v264
  %v271 = vsel %vm87, %v252, 0
  %v274 = vsel %vm87, %v253, 0
  %276 = vmatprep.subr.bf16.mxu0 0
  %277 = vmatpush1.bf16.msra.mxu0 0
  %278 = vmatprep.subr.bf16.mxu0 0
  %279 = vmatpush1.bf16.msra.mxu0 0
  %280 = vmatprep.subr.bf16.mxu0 0
  %281 = vmatpush1.bf16.msra.mxu0 0
  %282 = vmatprep.subr.bf16.mxu0 0
  %283 = vmatpush1.bf16.msra.mxu0 0
  %284 = vmatprep.subr.bf16.mxu0 0
  %285 = vmatpush1.bf16.msra.mxu0 0
  %286 = vmatprep.subr.bf16.mxu0 0
  %287 = vmatpush1.bf16.msra.mxu0 0
  %288 = vmatprep.subr.bf16.mxu0 0
  %289 = vmatpush1.bf16.msra.mxu0 %v267
  %290 = vmatprep.subr.bf16.mxu0 0
  %291 = vmatpush1.bf16.msra.mxu0 %v266
  %292 = vmatprep.subr.bf16.mxu0 0
  %293 = vmatpush2.bf16.msra.mxu0 0
  %294 = vmatprep.subr.bf16.mxu0 0
  %295 = vmatpush2.bf16.msra.mxu0 0
  %296 = vmatprep.subr.bf16.mxu0 0
  %297 = vmatpush2.bf16.msra.mxu0 0
  %298 = vmatprep.subr.bf16.mxu0 0
  %299 = vmatpush2.bf16.msra.mxu0 0
  %300 = vmatprep.subr.bf16.mxu0 0
  %301 = vmatpush2.bf16.msra.mxu0 0
  %302 = vmatprep.subr.bf16.mxu0 0
  %303 = vmatpush2.bf16.msra.mxu0 0
  %304 = vmatprep.subr.bf16.mxu0 0
  %305 = vmatpush2.bf16.msra.mxu0 0
  %306 = vmatprep.subr.bf16.mxu0 0
  %307 = vmatpush2.bf16.msra.mxu0 0
  %308 = vmatprep.mubr.bf16.mxu0 0
  %309 = vmatmul.mubr.bf16.gmra.mxu0 %v271
  %v310 = vpop.f32.mrf.mxu0
  %v311 = vadd.f32 0.0, %v310
  %v312 = vpop.f32.mrf.mxu0
  %v313 = vpop.f32.mrf.mxu0
  %v314 = vadd.f32 0.0, %v313
  %v315 = vpop.f32.mrf.mxu0
  %316 = vmatprep.mubr.bf16.mxu0 0
  %317 = vmatmul.mubr.bf16.gmra.mxu0 %v274
  %v318 = vpop.f32.mrf.mxu0
  %v319 = vadd.f32 0.0, %v318
  %v320 = vpop.f32.mrf.mxu0
  %v321 = vpop.f32.mrf.mxu0
  %v322 = vadd.f32 0.0, %v321
  %v323 = vpop.f32.mrf.mxu0
  %324 = vdwg.mxu0
  %v325 = vlaneseq
  %v326 = vshrl.u32 %v325, 7
  %v327 = vsub.s32 1, %v326
  %v328 = vrot.slane %v85, %v327
  %v329 = vadd.f32 %v311, %v328
  %v330 = vadd.f32 %v314, %v328
  %v331 = vadd.f32 %v319, %v328
  %v332 = vadd.f32 %v322, %v328
  %v333 = vlaneseq
  %v334 = vshrl.u32 %v333, 7
  %v335 = vsub.s32 2, %v334
  %v336 = vrot.slane %v85, %v335
  %338 = vrot.lane.b32.xlu0 %v336, 32
  %v339 = vpop.permute.xlu0 %338
  %v341 = vadd.f32 %v311, %v339
  %v342 = vadd.f32 %v314, %v339
  %v343 = vadd.f32 %v319, %v339
  %v344 = vadd.f32 %v322, %v339
  %v345 = vld [vmem:[%s2] sm:$0x1]
  %v346 = vpack.c.bf16 %v246, %v246
  %348 = vrot.lane.b32.xlu0 %v346, 120
  %v349 = vpop.permute.xlu0 %348
  %350 = vrot.lane.b32.xlu0 %v346, 112
  %v351 = vpop.permute.xlu0 %350
  %352 = vrot.lane.b32.xlu0 %v346, 104
  %v353 = vpop.permute.xlu0 %352
  %v354 = vpack.c.bf16 %v330, %v329
  %356 = vrot.lane.b32.xlu0 %v354, 120
  %v357 = vpop.permute.xlu0 %356
  %358 = vrot.lane.b32.xlu0 %v354, 112
  %v359 = vpop.permute.xlu0 %358
  %360 = vrot.lane.b32.xlu0 %v354, 104
  %v361 = vpop.permute.xlu0 %360
  %v362 = vpack.c.bf16 %v342, %v341
  %364 = vrot.lane.b32.xlu0 %v362, 120
  %v365 = vpop.permute.xlu0 %364
  %366 = vrot.lane.b32.xlu0 %v362, 112
  %v367 = vpop.permute.xlu0 %366
  %368 = vrot.lane.b32.xlu0 %v362, 104
  %v369 = vpop.permute.xlu0 %368
  %vm370 = vcmask 64512
  %v372 = vsel %vm370, %v346, 0
  %v375 = vsel %vm370, %v354, 0
  %377 = vmatprep.subr.bf16.mxu0 0
  %378 = vmatpush1.bf16.xpose.msra.mxu0 0
  %379 = vmatprep.subr.bf16.mxu0 0
  %380 = vmatpush1.bf16.xpose.msra.mxu0 0
  %381 = vmatprep.subr.bf16.mxu0 0
  %382 = vmatpush1.bf16.xpose.msra.mxu0 0
  %383 = vmatprep.subr.bf16.mxu0 0
  %384 = vmatpush1.bf16.xpose.msra.mxu0 0
  %385 = vmatprep.subr.bf16.mxu0 0
  %386 = vmatpush1.bf16.xpose.msra.mxu0 0
  %387 = vmatprep.subr.bf16.mxu0 0
  %388 = vmatpush1.bf16.xpose.msra.mxu0 0
  %389 = vmatprep.subr.bf16.mxu0 0
  %390 = vmatpush1.bf16.xpose.msra.mxu0 0
  %391 = vmatprep.subr.bf16.mxu0 0
  %392 = vmatpush1.bf16.xpose.msra.mxu0 %v375
  %393 = vmatprep.subr.bf16.mxu0 0
  %394 = vmatpush2.bf16.xpose.msra.mxu0 0
  %395 = vmatprep.subr.bf16.mxu0 0
  %396 = vmatpush2.bf16.xpose.msra.mxu0 0
  %397 = vmatprep.subr.bf16.mxu0 0
  %398 = vmatpush2.bf16.xpose.msra.mxu0 0
  %399 = vmatprep.subr.bf16.mxu0 0
  %400 = vmatpush2.bf16.xpose.msra.mxu0 0
  %401 = vmatprep.subr.bf16.mxu0 0
  %402 = vmatpush2.bf16.xpose.msra.mxu0 0
  %403 = vmatprep.subr.bf16.mxu0 0
  %404 = vmatpush2.bf16.xpose.msra.mxu0 0
  %405 = vmatprep.subr.bf16.mxu0 0
  %406 = vmatpush2.bf16.xpose.msra.mxu0 0
  %407 = vmatprep.subr.bf16.mxu0 0
  %408 = vmatpush2.bf16.xpose.msra.mxu0 0
  %409 = vmatprep.mubr.bf16.mxu0 0
  %410 = vmatmul.mubr.bf16.gmra.mxu0 %v372
  %v411 = vpop.f32.mrf.mxu0
  %v412 = vadd.f32 0.0, %v411
  %v413 = vpop.f32.mrf.mxu0
  %v414 = vpop.f32.mrf.mxu0
  %v415 = vpop.f32.mrf.mxu0
  %416 = vdwg.mxu0
  %v418 = vsel %vm370, %v349, 0
  %v421 = vsel %vm370, %v357, 0
  %423 = vmatprep.subr.bf16.mxu0 0
  %424 = vmatpush1.bf16.xpose.msra.mxu0 0
  %425 = vmatprep.subr.bf16.mxu0 0
  %426 = vmatpush1.bf16.xpose.msra.mxu0 0
  %427 = vmatprep.subr.bf16.mxu0 0
  %428 = vmatpush1.bf16.xpose.msra.mxu0 0
  %429 = vmatprep.subr.bf16.mxu0 0
  %430 = vmatpush1.bf16.xpose.msra.mxu0 0
  %431 = vmatprep.subr.bf16.mxu0 0
  %432 = vmatpush1.bf16.xpose.msra.mxu0 0
  %433 = vmatprep.subr.bf16.mxu0 0
  %434 = vmatpush1.bf16.xpose.msra.mxu0 0
  %435 = vmatprep.subr.bf16.mxu0 0
  %436 = vmatpush1.bf16.xpose.msra.mxu0 0
  %437 = vmatprep.subr.bf16.mxu0 0
  %438 = vmatpush1.bf16.xpose.msra.mxu0 %v421
  %439 = vmatprep.subr.bf16.mxu0 0
  %440 = vmatpush2.bf16.xpose.msra.mxu0 0
  %441 = vmatprep.subr.bf16.mxu0 0
  %442 = vmatpush2.bf16.xpose.msra.mxu0 0
  %443 = vmatprep.subr.bf16.mxu0 0
  %444 = vmatpush2.bf16.xpose.msra.mxu0 0
  %445 = vmatprep.subr.bf16.mxu0 0
  %446 = vmatpush2.bf16.xpose.msra.mxu0 0
  %447 = vmatprep.subr.bf16.mxu0 0
  %448 = vmatpush2.bf16.xpose.msra.mxu0 0
  %449 = vmatprep.subr.bf16.mxu0 0
  %450 = vmatpush2.bf16.xpose.msra.mxu0 0
  %451 = vmatprep.subr.bf16.mxu0 0
  %452 = vmatpush2.bf16.xpose.msra.mxu0 0
  %453 = vmatprep.subr.bf16.mxu0 0
  %454 = vmatpush2.bf16.xpose.msra.mxu0 0
  %455 = vmatprep.mubr.bf16.mxu0 0
  %456 = vmatmul.mubr.bf16.gmra.mxu0 %v418
  %v457 = vpop.f32.mrf.mxu0
  %v458 = vadd.f32 0.0, %v457
  %v459 = vpop.f32.mrf.mxu0
  %v460 = vpop.f32.mrf.mxu0
  %v461 = vpop.f32.mrf.mxu0
  %462 = vdwg.mxu0
  %v464 = vsel %vm370, %v351, 0
  %v467 = vsel %vm370, %v359, 0
  %469 = vmatprep.subr.bf16.mxu0 0
  %470 = vmatpush1.bf16.xpose.msra.mxu0 0
  %471 = vmatprep.subr.bf16.mxu0 0
  %472 = vmatpush1.bf16.xpose.msra.mxu0 0
  %473 = vmatprep.subr.bf16.mxu0 0
  %474 = vmatpush1.bf16.xpose.msra.mxu0 0
  %475 = vmatprep.subr.bf16.mxu0 0
  %476 = vmatpush1.bf16.xpose.msra.mxu0 0
  %477 = vmatprep.subr.bf16.mxu0 0
  %478 = vmatpush1.bf16.xpose.msra.mxu0 0
  %479 = vmatprep.subr.bf16.mxu0 0
  %480 = vmatpush1.bf16.xpose.msra.mxu0 0
  %481 = vmatprep.subr.bf16.mxu0 0
  %482 = vmatpush1.bf16.xpose.msra.mxu0 0
  %483 = vmatprep.subr.bf16.mxu0 0
  %484 = vmatpush1.bf16.xpose.msra.mxu0 %v467
  %485 = vmatprep.subr.bf16.mxu0 0
  %486 = vmatpush2.bf16.xpose.msra.mxu0 0
  %487 = vmatprep.subr.bf16.mxu0 0
  %488 = vmatpush2.bf16.xpose.msra.mxu0 0
  %489 = vmatprep.subr.bf16.mxu0 0
  %490 = vmatpush2.bf16.xpose.msra.mxu0 0
  %491 = vmatprep.subr.bf16.mxu0 0
  %492 = vmatpush2.bf16.xpose.msra.mxu0 0
  %493 = vmatprep.subr.bf16.mxu0 0
  %494 = vmatpush2.bf16.xpose.msra.mxu0 0
  %495 = vmatprep.subr.bf16.mxu0 0
  %496 = vmatpush2.bf16.xpose.msra.mxu0 0
  %497 = vmatprep.subr.bf16.mxu0 0
  %498 = vmatpush2.bf16.xpose.msra.mxu0 0
  %499 = vmatprep.subr.bf16.mxu0 0
  %500 = vmatpush2.bf16.xpose.msra.mxu0 0
  %501 = vmatprep.mubr.bf16.mxu0 0
  %502 = vmatmul.mubr.bf16.gmra.mxu0 %v464
  %v503 = vpop.f32.mrf.mxu0
  %v504 = vadd.f32 0.0, %v503
  %v505 = vpop.f32.mrf.mxu0
  %v506 = vpop.f32.mrf.mxu0
  %v507 = vpop.f32.mrf.mxu0
  %508 = vdwg.mxu0
  %v510 = vsel %vm370, %v353, 0
  %v513 = vsel %vm370, %v361, 0
  %515 = vmatprep.subr.bf16.mxu0 0
  %516 = vmatpush1.bf16.xpose.msra.mxu0 0
  %517 = vmatprep.subr.bf16.mxu0 0
  %518 = vmatpush1.bf16.xpose.msra.mxu0 0
  %519 = vmatprep.subr.bf16.mxu0 0
  %520 = vmatpush1.bf16.xpose.msra.mxu0 0
  %521 = vmatprep.subr.bf16.mxu0 0
  %522 = vmatpush1.bf16.xpose.msra.mxu0 0
  %523 = vmatprep.subr.bf16.mxu0 0
  %524 = vmatpush1.bf16.xpose.msra.mxu0 0
  %525 = vmatprep.subr.bf16.mxu0 0
  %526 = vmatpush1.bf16.xpose.msra.mxu0 0
  %527 = vmatprep.subr.bf16.mxu0 0
  %528 = vmatpush1.bf16.xpose.msra.mxu0 0
  %529 = vmatprep.subr.bf16.mxu0 0
  %530 = vmatpush1.bf16.xpose.msra.mxu0 %v513
  %531 = vmatprep.subr.bf16.mxu0 0
  %532 = vmatpush2.bf16.xpose.msra.mxu0 0
  %533 = vmatprep.subr.bf16.mxu0 0
  %534 = vmatpush2.bf16.xpose.msra.mxu0 0
  %535 = vmatprep.subr.bf16.mxu0 0
  %536 = vmatpush2.bf16.xpose.msra.mxu0 0
  %537 = vmatprep.subr.bf16.mxu0 0
  %538 = vmatpush2.bf16.xpose.msra.mxu0 0
  %539 = vmatprep.subr.bf16.mxu0 0
  %540 = vmatpush2.bf16.xpose.msra.mxu0 0
  %541 = vmatprep.subr.bf16.mxu0 0
  %542 = vmatpush2.bf16.xpose.msra.mxu0 0
  %543 = vmatprep.subr.bf16.mxu0 0
  %544 = vmatpush2.bf16.xpose.msra.mxu0 0
  %545 = vmatprep.subr.bf16.mxu0 0
  %546 = vmatpush2.bf16.xpose.msra.mxu0 0
  %547 = vmatprep.mubr.bf16.mxu0 0
  %548 = vmatmul.mubr.bf16.gmra.mxu0 %v510
  %v549 = vpop.f32.mrf.mxu0
  %v550 = vadd.f32 0.0, %v549
  %v551 = vpop.f32.mrf.mxu0
  %v552 = vpop.f32.mrf.mxu0
  %v553 = vpop.f32.mrf.mxu0
  %554 = vdwg.mxu0
  %v555 = vmul.f32 %v412, 0.35355338
  %v556 = vmul.f32 %v458, 0.35355338
  %v557 = vmul.f32 %v504, 0.35355338
  %v558 = vmul.f32 %v550, 0.35355338
  %v560 = vlaneseq
  %v561 = vshrl.u32 %v560, 7
  %v562 = vsub.s32 0, %v561
  %v563 = vrot.slane %v345, %v562
  %v565 = vadd.f32 %v555, %v563
  %v566 = vadd.f32 %v556, %v563
  %v567 = vadd.f32 %v557, %v563
  %v568 = vadd.f32 %v558, %v563
  %vm569 = vcmask 130048
  %v570 = vsel %vm569, %v565, -inf
  %571 = vmax.xlane.f32.xlu0 %v570
  %v572 = vpop.xlane.xlu0 %571
  %v573 = vsel %vm569, %v566, -inf
  %574 = vmax.xlane.f32.xlu0 %v573
  %v575 = vpop.xlane.xlu0 %574
  %v576 = vsel %vm569, %v567, -inf
  %577 = vmax.xlane.f32.xlu0 %v576
  %v578 = vpop.xlane.xlu0 %577
  %v579 = vsel %vm569, %v568, -inf
  %580 = vmax.xlane.f32.xlu0 %v579
  %v581 = vpop.xlane.xlu0 %580
  %v582 = vsub.f32 %v565, %v572
  %v583 = vsub.f32 %v566, %v575
  %v584 = vsub.f32 %v567, %v578
  %v585 = vsub.f32 %v568, %v581
  %v586 = vmul.f32 %v582, 1.442695
  %v587 = vpow.pop %v586
  %v588 = vmul.f32 %v583, 1.442695
  %v589 = vpow.pop %v588
  %v590 = vmul.f32 %v584, 1.442695
  %v591 = vpow.pop %v590
  %v592 = vmul.f32 %v585, 1.442695
  %v593 = vpow.pop %v592
  %v594 = vsel %vm569, %v587, 0.0
  %595 = vadd.xlane.f32.xlu0 %v594
  %v596 = vpop.xlane.xlu0 %595
  %v597 = vsel %vm569, %v589, 0.0
  %598 = vadd.xlane.f32.xlu0 %v597
  %v599 = vpop.xlane.xlu0 %598
  %v600 = vsel %vm569, %v591, 0.0
  %601 = vadd.xlane.f32.xlu0 %v600
  %v602 = vpop.xlane.xlu0 %601
  %v603 = vsel %vm569, %v593, 0.0
  %604 = vadd.xlane.f32.xlu0 %v603
  %v605 = vpop.xlane.xlu0 %604
  %v606 = vrcp.pop %v596
  %v607 = vmul.f32 %v587, %v606
  %v608 = vrcp.pop %v599
  %v609 = vmul.f32 %v589, %v608
  %v610 = vrcp.pop %v602
  %v611 = vmul.f32 %v591, %v610
  %v612 = vrcp.pop %v605
  %v613 = vmul.f32 %v593, %v612
  %v614 = vpack.c.bf16 %v607, %v607
  %v615 = vpack.c.bf16 %v609, %v609
  %v616 = vpack.c.bf16 %v611, %v611
  %v617 = vpack.c.bf16 %v613, %v613
  %618 = vrot.lane.b32.xlu0 %v362, 96
  %v619 = vpop.permute.xlu0 %618
  %v622 = vsel %vm569, %v614, 0
  %624 = vmatprep.subr.bf16.mxu0 0
  %625 = vmatpush1.bf16.msra.mxu0 0
  %626 = vmatprep.subr.bf16.mxu0 0
  %627 = vmatpush1.bf16.msra.mxu0 0
  %628 = vmatprep.subr.bf16.mxu0 0
  %629 = vmatpush1.bf16.msra.mxu0 0
  %630 = vmatprep.subr.bf16.mxu0 0
  %631 = vmatpush1.bf16.msra.mxu0 0
  %632 = vmatprep.subr.bf16.mxu0 0
  %633 = vmatpush1.bf16.msra.mxu0 0
  %634 = vmatprep.subr.bf16.mxu0 0
  %635 = vmatpush1.bf16.msra.mxu0 0
  %636 = vmatprep.subr.bf16.mxu0 0
  %637 = vmatpush1.bf16.msra.mxu0 0
  %638 = vmatprep.subr.bf16.mxu0 0
  %639 = vmatpush1.bf16.msra.mxu0 %v619
  %640 = vmatprep.subr.bf16.mxu0 0
  %641 = vmatpush2.bf16.msra.mxu0 0
  %642 = vmatprep.subr.bf16.mxu0 0
  %643 = vmatpush2.bf16.msra.mxu0 0
  %644 = vmatprep.subr.bf16.mxu0 0
  %645 = vmatpush2.bf16.msra.mxu0 0
  %646 = vmatprep.subr.bf16.mxu0 0
  %647 = vmatpush2.bf16.msra.mxu0 0
  %648 = vmatprep.subr.bf16.mxu0 0
  %649 = vmatpush2.bf16.msra.mxu0 0
  %650 = vmatprep.subr.bf16.mxu0 0
  %651 = vmatpush2.bf16.msra.mxu0 0
  %652 = vmatprep.subr.bf16.mxu0 0
  %653 = vmatpush2.bf16.msra.mxu0 0
  %654 = vmatprep.subr.bf16.mxu0 0
  %655 = vmatpush2.bf16.msra.mxu0 0
  %656 = vmatprep.mubr.bf16.mxu0 0
  %657 = vmatmul.mubr.bf16.gmra.mxu0 %v622
  %v658 = vpop.f32.mrf.mxu0
  %v659 = vadd.f32 0.0, %v658
  %v660 = vpop.f32.mrf.mxu0
  %v661 = vpop.f32.mrf.mxu0
  %v662 = vpop.f32.mrf.mxu0
  %663 = vdwg.mxu0
  %664 = vrot.lane.b32.xlu0 %v365, 96
  %v665 = vpop.permute.xlu0 %664
  %v668 = vsel %vm569, %v615, 0
  %670 = vmatprep.subr.bf16.mxu0 0
  %671 = vmatpush1.bf16.msra.mxu0 0
  %672 = vmatprep.subr.bf16.mxu0 0
  %673 = vmatpush1.bf16.msra.mxu0 0
  %674 = vmatprep.subr.bf16.mxu0 0
  %675 = vmatpush1.bf16.msra.mxu0 0
  %676 = vmatprep.subr.bf16.mxu0 0
  %677 = vmatpush1.bf16.msra.mxu0 0
  %678 = vmatprep.subr.bf16.mxu0 0
  %679 = vmatpush1.bf16.msra.mxu0 0
  %680 = vmatprep.subr.bf16.mxu0 0
  %681 = vmatpush1.bf16.msra.mxu0 0
  %682 = vmatprep.subr.bf16.mxu0 0
  %683 = vmatpush1.bf16.msra.mxu0 0
  %684 = vmatprep.subr.bf16.mxu0 0
  %685 = vmatpush1.bf16.msra.mxu0 %v665
  %686 = vmatprep.subr.bf16.mxu0 0
  %687 = vmatpush2.bf16.msra.mxu0 0
  %688 = vmatprep.subr.bf16.mxu0 0
  %689 = vmatpush2.bf16.msra.mxu0 0
  %690 = vmatprep.subr.bf16.mxu0 0
  %691 = vmatpush2.bf16.msra.mxu0 0
  %692 = vmatprep.subr.bf16.mxu0 0
  %693 = vmatpush2.bf16.msra.mxu0 0
  %694 = vmatprep.subr.bf16.mxu0 0
  %695 = vmatpush2.bf16.msra.mxu0 0
  %696 = vmatprep.subr.bf16.mxu0 0
  %697 = vmatpush2.bf16.msra.mxu0 0
  %698 = vmatprep.subr.bf16.mxu0 0
  %699 = vmatpush2.bf16.msra.mxu0 0
  %700 = vmatprep.subr.bf16.mxu0 0
  %701 = vmatpush2.bf16.msra.mxu0 0
  %702 = vmatprep.mubr.bf16.mxu0 0
  %703 = vmatmul.mubr.bf16.gmra.mxu0 %v668
  %v704 = vpop.f32.mrf.mxu0
  %v705 = vadd.f32 0.0, %v704
  %v706 = vpop.f32.mrf.mxu0
  %v707 = vpop.f32.mrf.mxu0
  %v708 = vpop.f32.mrf.mxu0
  %709 = vdwg.mxu0
  %710 = vrot.lane.b32.xlu0 %v367, 96
  %v711 = vpop.permute.xlu0 %710
  %v714 = vsel %vm569, %v616, 0
  %716 = vmatprep.subr.bf16.mxu0 0
  %717 = vmatpush1.bf16.msra.mxu0 0
  %718 = vmatprep.subr.bf16.mxu0 0
  %719 = vmatpush1.bf16.msra.mxu0 0
  %720 = vmatprep.subr.bf16.mxu0 0
  %721 = vmatpush1.bf16.msra.mxu0 0
  %722 = vmatprep.subr.bf16.mxu0 0
  %723 = vmatpush1.bf16.msra.mxu0 0
  %724 = vmatprep.subr.bf16.mxu0 0
  %725 = vmatpush1.bf16.msra.mxu0 0
  %726 = vmatprep.subr.bf16.mxu0 0
  %727 = vmatpush1.bf16.msra.mxu0 0
  %728 = vmatprep.subr.bf16.mxu0 0
  %729 = vmatpush1.bf16.msra.mxu0 0
  %730 = vmatprep.subr.bf16.mxu0 0
  %731 = vmatpush1.bf16.msra.mxu0 %v711
  %732 = vmatprep.subr.bf16.mxu0 0
  %733 = vmatpush2.bf16.msra.mxu0 0
  %734 = vmatprep.subr.bf16.mxu0 0
  %735 = vmatpush2.bf16.msra.mxu0 0
  %736 = vmatprep.subr.bf16.mxu0 0
  %737 = vmatpush2.bf16.msra.mxu0 0
  %738 = vmatprep.subr.bf16.mxu0 0
  %739 = vmatpush2.bf16.msra.mxu0 0
  %740 = vmatprep.subr.bf16.mxu0 0
  %741 = vmatpush2.bf16.msra.mxu0 0
  %742 = vmatprep.subr.bf16.mxu0 0
  %743 = vmatpush2.bf16.msra.mxu0 0
  %744 = vmatprep.subr.bf16.mxu0 0
  %745 = vmatpush2.bf16.msra.mxu0 0
  %746 = vmatprep.subr.bf16.mxu0 0
  %747 = vmatpush2.bf16.msra.mxu0 0
  %748 = vmatprep.mubr.bf16.mxu0 0
  %749 = vmatmul.mubr.bf16.gmra.mxu0 %v714
  %v750 = vpop.f32.mrf.mxu0
  %v751 = vadd.f32 0.0, %v750
  %v752 = vpop.f32.mrf.mxu0
  %v753 = vpop.f32.mrf.mxu0
  %v754 = vpop.f32.mrf.mxu0
  %755 = vdwg.mxu0
  %756 = vrot.lane.b32.xlu0 %v369, 96
  %v757 = vpop.permute.xlu0 %756
  %v760 = vsel %vm569, %v617, 0
  %762 = vmatprep.subr.bf16.mxu0 0
  %763 = vmatpush1.bf16.msra.mxu0 0
  %764 = vmatprep.subr.bf16.mxu0 0
  %765 = vmatpush1.bf16.msra.mxu0 0
  %766 = vmatprep.subr.bf16.mxu0 0
  %767 = vmatpush1.bf16.msra.mxu0 0
  %768 = vmatprep.subr.bf16.mxu0 0
  %769 = vmatpush1.bf16.msra.mxu0 0
  %770 = vmatprep.subr.bf16.mxu0 0
  %771 = vmatpush1.bf16.msra.mxu0 0
  %772 = vmatprep.subr.bf16.mxu0 0
  %773 = vmatpush1.bf16.msra.mxu0 0
  %774 = vmatprep.subr.bf16.mxu0 0
  %775 = vmatpush1.bf16.msra.mxu0 0
  %776 = vmatprep.subr.bf16.mxu0 0
  %777 = vmatpush1.bf16.msra.mxu0 %v757
  %778 = vmatprep.subr.bf16.mxu0 0
  %779 = vmatpush2.bf16.msra.mxu0 0
  %780 = vmatprep.subr.bf16.mxu0 0
  %781 = vmatpush2.bf16.msra.mxu0 0
  %782 = vmatprep.subr.bf16.mxu0 0
  %783 = vmatpush2.bf16.msra.mxu0 0
  %784 = vmatprep.subr.bf16.mxu0 0
  %785 = vmatpush2.bf16.msra.mxu0 0
  %786 = vmatprep.subr.bf16.mxu0 0
  %787 = vmatpush2.bf16.msra.mxu0 0
  %788 = vmatprep.subr.bf16.mxu0 0
  %789 = vmatpush2.bf16.msra.mxu0 0
  %790 = vmatprep.subr.bf16.mxu0 0
  %791 = vmatpush2.bf16.msra.mxu0 0
  %792 = vmatprep.subr.bf16.mxu0 0
  %793 = vmatpush2.bf16.msra.mxu0 0
  %794 = vmatprep.mubr.bf16.mxu0 0
  %795 = vmatmul.mubr.bf16.gmra.mxu0 %v760
  %v796 = vpop.f32.mrf.mxu0
  %v797 = vadd.f32 0.0, %v796
  %v798 = vpop.f32.mrf.mxu0
  %v799 = vpop.f32.mrf.mxu0
  %v800 = vpop.f32.mrf.mxu0
  %801 = vdwg.mxu0
  %v802 = vpack.c.bf16 %v659, %v659
  %v803 = vld [vmem:[%s8] sm:$0xf]
  %v805 = vsel %vm370, %v802, 0
  %vm807 = vcmask 1043456
  %v809 = vsel %vm807, %v803, 0
  %811 = vmatprep.subr.bf16.mxu0 0
  %812 = vmatpush1.bf16.msra.mxu0 0
  %813 = vmatprep.subr.bf16.mxu0 0
  %814 = vmatpush1.bf16.msra.mxu0 0
  %815 = vmatprep.subr.bf16.mxu0 0
  %816 = vmatpush1.bf16.msra.mxu0 0
  %817 = vmatprep.subr.bf16.mxu0 0
  %818 = vmatpush1.bf16.msra.mxu0 0
  %819 = vmatprep.subr.bf16.mxu0 0
  %820 = vmatpush1.bf16.msra.mxu0 0
  %821 = vmatprep.subr.bf16.mxu0 0
  %822 = vmatpush1.bf16.msra.mxu0 0
  %823 = vmatprep.subr.bf16.mxu0 0
  %824 = vmatpush1.bf16.msra.mxu0 0
  %825 = vmatprep.subr.bf16.mxu0 0
  %826 = vmatpush1.bf16.msra.mxu0 %v809
  %827 = vmatprep.subr.bf16.mxu0 0
  %828 = vmatpush2.bf16.msra.mxu0 0
  %829 = vmatprep.subr.bf16.mxu0 0
  %830 = vmatpush2.bf16.msra.mxu0 0
  %831 = vmatprep.subr.bf16.mxu0 0
  %832 = vmatpush2.bf16.msra.mxu0 0
  %833 = vmatprep.subr.bf16.mxu0 0
  %834 = vmatpush2.bf16.msra.mxu0 0
  %835 = vmatprep.subr.bf16.mxu0 0
  %836 = vmatpush2.bf16.msra.mxu0 0
  %837 = vmatprep.subr.bf16.mxu0 0
  %838 = vmatpush2.bf16.msra.mxu0 0
  %839 = vmatprep.subr.bf16.mxu0 0
  %840 = vmatpush2.bf16.msra.mxu0 0
  %841 = vmatprep.subr.bf16.mxu0 0
  %842 = vmatpush2.bf16.msra.mxu0 0
  %843 = vmatprep.mubr.bf16.mxu0 0
  %844 = vmatmul.mubr.bf16.gmra.mxu0 %v805
  %v845 = vpop.f32.mrf.mxu0
  %v846 = vadd.f32 0.0, %v845
  %v847 = vpop.f32.mrf.mxu0
  %v848 = vpop.f32.mrf.mxu0
  %v849 = vpop.f32.mrf.mxu0
  %850 = vdwg.mxu0
  %v851 = vlaneseq
  %v852 = vshrl.u32 %v851, 7
  %v853 = vsub.s32 3, %v852
  %v854 = vrot.slane %v85, %v853
  %v855 = vadd.f32 %v854, %v846
  %v856 = vpack.c.bf16 %v705, %v705
  %s857 = scalar_lea.vmem %s8, 4
  %v858 = vld [vmem:[%s857] sm:$0xf]
  %v860 = vsel %vm370, %v856, 0
  %v863 = vsel %vm807, %v858, 0
  %865 = vmatprep.subr.bf16.mxu0 0
  %866 = vmatpush1.bf16.msra.mxu0 0
  %867 = vmatprep.subr.bf16.mxu0 0
  %868 = vmatpush1.bf16.msra.mxu0 0
  %869 = vmatprep.subr.bf16.mxu0 0
  %870 = vmatpush1.bf16.msra.mxu0 0
  %871 = vmatprep.subr.bf16.mxu0 0
  %872 = vmatpush1.bf16.msra.mxu0 0
  %873 = vmatprep.subr.bf16.mxu0 0
  %874 = vmatpush1.bf16.msra.mxu0 0
  %875 = vmatprep.subr.bf16.mxu0 0
  %876 = vmatpush1.bf16.msra.mxu0 0
  %877 = vmatprep.subr.bf16.mxu0 0
  %878 = vmatpush1.bf16.msra.mxu0 0
  %879 = vmatprep.subr.bf16.mxu0 0
  %880 = vmatpush1.bf16.msra.mxu0 %v863
  %881 = vmatprep.subr.bf16.mxu0 0
  %882 = vmatpush2.bf16.msra.mxu0 0
  %883 = vmatprep.subr.bf16.mxu0 0
  %884 = vmatpush2.bf16.msra.mxu0 0
  %885 = vmatprep.subr.bf16.mxu0 0
  %886 = vmatpush2.bf16.msra.mxu0 0
  %887 = vmatprep.subr.bf16.mxu0 0
  %888 = vmatpush2.bf16.msra.mxu0 0
  %889 = vmatprep.subr.bf16.mxu0 0
  %890 = vmatpush2.bf16.msra.mxu0 0
  %891 = vmatprep.subr.bf16.mxu0 0
  %892 = vmatpush2.bf16.msra.mxu0 0
  %893 = vmatprep.subr.bf16.mxu0 0
  %894 = vmatpush2.bf16.msra.mxu0 0
  %895 = vmatprep.subr.bf16.mxu0 0
  %896 = vmatpush2.bf16.msra.mxu0 0
  %897 = vmatprep.mubr.bf16.mxu0 0
  %898 = vmatmul.mubr.bf16.gmra.mxu0 %v860
  %v899 = vpop.f32.mrf.mxu0
  %v900 = vadd.f32 0.0, %v899
  %v901 = vpop.f32.mrf.mxu0
  %v902 = vpop.f32.mrf.mxu0
  %v903 = vpop.f32.mrf.mxu0
  %904 = vdwg.mxu0
  %v905 = vadd.f32 %v855, %v900
  %v906 = vpack.c.bf16 %v751, %v751
  %s907 = scalar_lea.vmem %s8, 8
  %v908 = vld [vmem:[%s907] sm:$0xf]
  %v910 = vsel %vm370, %v906, 0
  %v913 = vsel %vm807, %v908, 0
  %915 = vmatprep.subr.bf16.mxu0 0
  %916 = vmatpush1.bf16.msra.mxu0 0
  %917 = vmatprep.subr.bf16.mxu0 0
  %918 = vmatpush1.bf16.msra.mxu0 0
  %919 = vmatprep.subr.bf16.mxu0 0
  %920 = vmatpush1.bf16.msra.mxu0 0
  %921 = vmatprep.subr.bf16.mxu0 0
  %922 = vmatpush1.bf16.msra.mxu0 0
  %923 = vmatprep.subr.bf16.mxu0 0
  %924 = vmatpush1.bf16.msra.mxu0 0
  %925 = vmatprep.subr.bf16.mxu0 0
  %926 = vmatpush1.bf16.msra.mxu0 0
  %927 = vmatprep.subr.bf16.mxu0 0
  %928 = vmatpush1.bf16.msra.mxu0 0
  %929 = vmatprep.subr.bf16.mxu0 0
  %930 = vmatpush1.bf16.msra.mxu0 %v913
  %931 = vmatprep.subr.bf16.mxu0 0
  %932 = vmatpush2.bf16.msra.mxu0 0
  %933 = vmatprep.subr.bf16.mxu0 0
  %934 = vmatpush2.bf16.msra.mxu0 0
  %935 = vmatprep.subr.bf16.mxu0 0
  %936 = vmatpush2.bf16.msra.mxu0 0
  %937 = vmatprep.subr.bf16.mxu0 0
  %938 = vmatpush2.bf16.msra.mxu0 0
  %939 = vmatprep.subr.bf16.mxu0 0
  %940 = vmatpush2.bf16.msra.mxu0 0
  %941 = vmatprep.subr.bf16.mxu0 0
  %942 = vmatpush2.bf16.msra.mxu0 0
  %943 = vmatprep.subr.bf16.mxu0 0
  %944 = vmatpush2.bf16.msra.mxu0 0
  %945 = vmatprep.subr.bf16.mxu0 0
  %946 = vmatpush2.bf16.msra.mxu0 0
  %947 = vmatprep.mubr.bf16.mxu0 0
  %948 = vmatmul.mubr.bf16.gmra.mxu0 %v910
  %v949 = vpop.f32.mrf.mxu0
  %v950 = vadd.f32 0.0, %v949
  %v951 = vpop.f32.mrf.mxu0
  %v952 = vpop.f32.mrf.mxu0
  %v953 = vpop.f32.mrf.mxu0
  %954 = vdwg.mxu0
  %v955 = vadd.f32 %v905, %v950
  %v956 = vpack.c.bf16 %v797, %v797
  %s957 = scalar_lea.vmem %s8, 12
  %v958 = vld [vmem:[%s957] sm:$0xf]
  %v960 = vsel %vm370, %v956, 0
  %v963 = vsel %vm807, %v958, 0
  %965 = vmatprep.subr.bf16.mxu0 0
  %966 = vmatpush1.bf16.msra.mxu0 0
  %967 = vmatprep.subr.bf16.mxu0 0
  %968 = vmatpush1.bf16.msra.mxu0 0
  %969 = vmatprep.subr.bf16.mxu0 0
  %970 = vmatpush1.bf16.msra.mxu0 0
  %971 = vmatprep.subr.bf16.mxu0 0
  %972 = vmatpush1.bf16.msra.mxu0 0
  %973 = vmatprep.subr.bf16.mxu0 0
  %974 = vmatpush1.bf16.msra.mxu0 0
  %975 = vmatprep.subr.bf16.mxu0 0
  %976 = vmatpush1.bf16.msra.mxu0 0
  %977 = vmatprep.subr.bf16.mxu0 0
  %978 = vmatpush1.bf16.msra.mxu0 0
  %979 = vmatprep.subr.bf16.mxu0 0
  %980 = vmatpush1.bf16.msra.mxu0 %v963
  %981 = vmatprep.subr.bf16.mxu0 0
  %982 = vmatpush2.bf16.msra.mxu0 0
  %983 = vmatprep.subr.bf16.mxu0 0
  %984 = vmatpush2.bf16.msra.mxu0 0
  %985 = vmatprep.subr.bf16.mxu0 0
  %986 = vmatpush2.bf16.msra.mxu0 0
  %987 = vmatprep.subr.bf16.mxu0 0
  %988 = vmatpush2.bf16.msra.mxu0 0
  %989 = vmatprep.subr.bf16.mxu0 0
  %990 = vmatpush2.bf16.msra.mxu0 0
  %991 = vmatprep.subr.bf16.mxu0 0
  %992 = vmatpush2.bf16.msra.mxu0 0
  %993 = vmatprep.subr.bf16.mxu0 0
  %994 = vmatpush2.bf16.msra.mxu0 0
  %995 = vmatprep.subr.bf16.mxu0 0
  %996 = vmatpush2.bf16.msra.mxu0 0
  %997 = vmatprep.mubr.bf16.mxu0 0
  %998 = vmatmul.mubr.bf16.gmra.mxu0 %v960
  %v999 = vpop.f32.mrf.mxu0
  %v1000 = vadd.f32 0.0, %v999
  %v1001 = vpop.f32.mrf.mxu0
  %v1002 = vpop.f32.mrf.mxu0
  %v1003 = vpop.f32.mrf.mxu0
  %1004 = vdwg.mxu0
  %v1005 = vadd.f32 %v955, %v1000
  %s1006 = scalar_lea.vmem %s2, 1
  %v1007 = vld [vmem:[%s1006] sm:$0x1]
  %v1008 = vpack.c.bf16 %v249, %v249
  %1010 = vrot.lane.b32.xlu0 %v1008, 120
  %v1011 = vpop.permute.xlu0 %1010
  %1012 = vrot.lane.b32.xlu0 %v1008, 112
  %v1013 = vpop.permute.xlu0 %1012
  %1014 = vrot.lane.b32.xlu0 %v1008, 104
  %v1015 = vpop.permute.xlu0 %1014
  %v1016 = vpack.c.bf16 %v332, %v331
  %1018 = vrot.lane.b32.xlu0 %v1016, 120
  %v1019 = vpop.permute.xlu0 %1018
  %1020 = vrot.lane.b32.xlu0 %v1016, 112
  %v1021 = vpop.permute.xlu0 %1020
  %1022 = vrot.lane.b32.xlu0 %v1016, 104
  %v1023 = vpop.permute.xlu0 %1022
  %v1024 = vpack.c.bf16 %v344, %v343
  %1026 = vrot.lane.b32.xlu0 %v1024, 120
  %v1027 = vpop.permute.xlu0 %1026
  %1028 = vrot.lane.b32.xlu0 %v1024, 112
  %v1029 = vpop.permute.xlu0 %1028
  %1030 = vrot.lane.b32.xlu0 %v1024, 104
  %v1031 = vpop.permute.xlu0 %1030
  %v1033 = vsel %vm370, %v1008, 0
  %v1036 = vsel %vm370, %v1016, 0
  %1038 = vmatprep.subr.bf16.mxu0 0
  %1039 = vmatpush1.bf16.xpose.msra.mxu0 0
  %1040 = vmatprep.subr.bf16.mxu0 0
  %1041 = vmatpush1.bf16.xpose.msra.mxu0 0
  %1042 = vmatprep.subr.bf16.mxu0 0
  %1043 = vmatpush1.bf16.xpose.msra.mxu0 0
  %1044 = vmatprep.subr.bf16.mxu0 0
  %1045 = vmatpush1.bf16.xpose.msra.mxu0 0
  %1046 = vmatprep.subr.bf16.mxu0 0
  %1047 = vmatpush1.bf16.xpose.msra.mxu0 0
  %1048 = vmatprep.subr.bf16.mxu0 0
  %1049 = vmatpush1.bf16.xpose.msra.mxu0 0
  %1050 = vmatprep.subr.bf16.mxu0 0
  %1051 = vmatpush1.bf16.xpose.msra.mxu0 0
  %1052 = vmatprep.subr.bf16.mxu0 0
  %1053 = vmatpush1.bf16.xpose.msra.mxu0 %v1036
  %1054 = vmatprep.subr.bf16.mxu0 0
  %1055 = vmatpush2.bf16.xpose.msra.mxu0 0
  %1056 = vmatprep.subr.bf16.mxu0 0
  %1057 = vmatpush2.bf16.xpose.msra.mxu0 0
  %1058 = vmatprep.subr.bf16.mxu0 0
  %1059 = vmatpush2.bf16.xpose.msra.mxu0 0
  %1060 = vmatprep.subr.bf16.mxu0 0
  %1061 = vmatpush2.bf16.xpose.msra.mxu0 0
  %1062 = vmatprep.subr.bf16.mxu0 0
  %1063 = vmatpush2.bf16.xpose.msra.mxu0 0
  %1064 = vmatprep.subr.bf16.mxu0 0
  %1065 = vmatpush2.bf16.xpose.msra.mxu0 0
  %1066 = vmatprep.subr.bf16.mxu0 0
  %1067 = vmatpush2.bf16.xpose.msra.mxu0 0
  %1068 = vmatprep.subr.bf16.mxu0 0
  %1069 = vmatpush2.bf16.xpose.msra.mxu0 0
  %1070 = vmatprep.mubr.bf16.mxu0 0
  %1071 = vmatmul.mubr.bf16.gmra.mxu0 %v1033
  %v1072 = vpop.f32.mrf.mxu0
  %v1073 = vadd.f32 0.0, %v1072
  %v1074 = vpop.f32.mrf.mxu0
  %v1075 = vpop.f32.mrf.mxu0
  %v1076 = vpop.f32.mrf.mxu0
  %1077 = vdwg.mxu0
  %v1079 = vsel %vm370, %v1011, 0
  %v1082 = vsel %vm370, %v1019, 0
  %1084 = vmatprep.subr.bf16.mxu0 0
  %1085 = vmatpush1.bf16.xpose.msra.mxu0 0
  %1086 = vmatprep.subr.bf16.mxu0 0
  %1087 = vmatpush1.bf16.xpose.msra.mxu0 0
  %1088 = vmatprep.subr.bf16.mxu0 0
  %1089 = vmatpush1.bf16.xpose.msra.mxu0 0
  %1090 = vmatprep.subr.bf16.mxu0 0
  %1091 = vmatpush1.bf16.xpose.msra.mxu0 0
  %1092 = vmatprep.subr.bf16.mxu0 0
  %1093 = vmatpush1.bf16.xpose.msra.mxu0 0
  %1094 = vmatprep.subr.bf16.mxu0 0
  %1095 = vmatpush1.bf16.xpose.msra.mxu0 0
  %1096 = vmatprep.subr.bf16.mxu0 0
  %1097 = vmatpush1.bf16.xpose.msra.mxu0 0
  %1098 = vmatprep.subr.bf16.mxu0 0
  %1099 = vmatpush1.bf16.xpose.msra.mxu0 %v1082
  %1100 = vmatprep.subr.bf16.mxu0 0
  %1101 = vmatpush2.bf16.xpose.msra.mxu0 0
  %1102 = vmatprep.subr.bf16.mxu0 0
  %1103 = vmatpush2.bf16.xpose.msra.mxu0 0
  %1104 = vmatprep.subr.bf16.mxu0 0
  %1105 = vmatpush2.bf16.xpose.msra.mxu0 0
  %1106 = vmatprep.subr.bf16.mxu0 0
  %1107 = vmatpush2.bf16.xpose.msra.mxu0 0
  %1108 = vmatprep.subr.bf16.mxu0 0
  %1109 = vmatpush2.bf16.xpose.msra.mxu0 0
  %1110 = vmatprep.subr.bf16.mxu0 0
  %1111 = vmatpush2.bf16.xpose.msra.mxu0 0
  %1112 = vmatprep.subr.bf16.mxu0 0
  %1113 = vmatpush2.bf16.xpose.msra.mxu0 0
  %1114 = vmatprep.subr.bf16.mxu0 0
  %1115 = vmatpush2.bf16.xpose.msra.mxu0 0
  %1116 = vmatprep.mubr.bf16.mxu0 0
  %1117 = vmatmul.mubr.bf16.gmra.mxu0 %v1079
  %v1118 = vpop.f32.mrf.mxu0
  %v1119 = vadd.f32 0.0, %v1118
  %v1120 = vpop.f32.mrf.mxu0
  %v1121 = vpop.f32.mrf.mxu0
  %v1122 = vpop.f32.mrf.mxu0
  %1123 = vdwg.mxu0
  %v1125 = vsel %vm370, %v1013, 0
  %v1128 = vsel %vm370, %v1021, 0
  %1130 = vmatprep.subr.bf16.mxu0 0
  %1131 = vmatpush1.bf16.xpose.msra.mxu0 0
  %1132 = vmatprep.subr.bf16.mxu0 0
  %1133 = vmatpush1.bf16.xpose.msra.mxu0 0
  %1134 = vmatprep.subr.bf16.mxu0 0
  %1135 = vmatpush1.bf16.xpose.msra.mxu0 0
  %1136 = vmatprep.subr.bf16.mxu0 0
  %1137 = vmatpush1.bf16.xpose.msra.mxu0 0
  %1138 = vmatprep.subr.bf16.mxu0 0
  %1139 = vmatpush1.bf16.xpose.msra.mxu0 0
  %1140 = vmatprep.subr.bf16.mxu0 0
  %1141 = vmatpush1.bf16.xpose.msra.mxu0 0
  %1142 = vmatprep.subr.bf16.mxu0 0
  %1143 = vmatpush1.bf16.xpose.msra.mxu0 0
  %1144 = vmatprep.subr.bf16.mxu0 0
  %1145 = vmatpush1.bf16.xpose.msra.mxu0 %v1128
  %1146 = vmatprep.subr.bf16.mxu0 0
  %1147 = vmatpush2.bf16.xpose.msra.mxu0 0
  %1148 = vmatprep.subr.bf16.mxu0 0
  %1149 = vmatpush2.bf16.xpose.msra.mxu0 0
  %1150 = vmatprep.subr.bf16.mxu0 0
  %1151 = vmatpush2.bf16.xpose.msra.mxu0 0
  %1152 = vmatprep.subr.bf16.mxu0 0
  %1153 = vmatpush2.bf16.xpose.msra.mxu0 0
  %1154 = vmatprep.subr.bf16.mxu0 0
  %1155 = vmatpush2.bf16.xpose.msra.mxu0 0
  %1156 = vmatprep.subr.bf16.mxu0 0
  %1157 = vmatpush2.bf16.xpose.msra.mxu0 0
  %1158 = vmatprep.subr.bf16.mxu0 0
  %1159 = vmatpush2.bf16.xpose.msra.mxu0 0
  %1160 = vmatprep.subr.bf16.mxu0 0
  %1161 = vmatpush2.bf16.xpose.msra.mxu0 0
  %1162 = vmatprep.mubr.bf16.mxu0 0
  %1163 = vmatmul.mubr.bf16.gmra.mxu0 %v1125
  %v1164 = vpop.f32.mrf.mxu0
  %v1165 = vadd.f32 0.0, %v1164
  %v1166 = vpop.f32.mrf.mxu0
  %v1167 = vpop.f32.mrf.mxu0
  %v1168 = vpop.f32.mrf.mxu0
  %1169 = vdwg.mxu0
  %v1171 = vsel %vm370, %v1015, 0
  %v1174 = vsel %vm370, %v1023, 0
  %1176 = vmatprep.subr.bf16.mxu0 0
  %1177 = vmatpush1.bf16.xpose.msra.mxu0 0
  %1178 = vmatprep.subr.bf16.mxu0 0
  %1179 = vmatpush1.bf16.xpose.msra.mxu0 0
  %1180 = vmatprep.subr.bf16.mxu0 0
  %1181 = vmatpush1.bf16.xpose.msra.mxu0 0
  %1182 = vmatprep.subr.bf16.mxu0 0
  %1183 = vmatpush1.bf16.xpose.msra.mxu0 0
  %1184 = vmatprep.subr.bf16.mxu0 0
  %1185 = vmatpush1.bf16.xpose.msra.mxu0 0
  %1186 = vmatprep.subr.bf16.mxu0 0
  %1187 = vmatpush1.bf16.xpose.msra.mxu0 0
  %1188 = vmatprep.subr.bf16.mxu0 0
  %1189 = vmatpush1.bf16.xpose.msra.mxu0 0
  %1190 = vmatprep.subr.bf16.mxu0 0
  %1191 = vmatpush1.bf16.xpose.msra.mxu0 %v1174
  %1192 = vmatprep.subr.bf16.mxu0 0
  %1193 = vmatpush2.bf16.xpose.msra.mxu0 0
  %1194 = vmatprep.subr.bf16.mxu0 0
  %1195 = vmatpush2.bf16.xpose.msra.mxu0 0
  %1196 = vmatprep.subr.bf16.mxu0 0
  %1197 = vmatpush2.bf16.xpose.msra.mxu0 0
  %1198 = vmatprep.subr.bf16.mxu0 0
  %1199 = vmatpush2.bf16.xpose.msra.mxu0 0
  %1200 = vmatprep.subr.bf16.mxu0 0
  %1201 = vmatpush2.bf16.xpose.msra.mxu0 0
  %1202 = vmatprep.subr.bf16.mxu0 0
  %1203 = vmatpush2.bf16.xpose.msra.mxu0 0
  %1204 = vmatprep.subr.bf16.mxu0 0
  %1205 = vmatpush2.bf16.xpose.msra.mxu0 0
  %1206 = vmatprep.subr.bf16.mxu0 0
  %1207 = vmatpush2.bf16.xpose.msra.mxu0 0
  %1208 = vmatprep.mubr.bf16.mxu0 0
  %1209 = vmatmul.mubr.bf16.gmra.mxu0 %v1171
  %v1210 = vpop.f32.mrf.mxu0
  %v1211 = vadd.f32 0.0, %v1210
  %v1212 = vpop.f32.mrf.mxu0
  %v1213 = vpop.f32.mrf.mxu0
  %v1214 = vpop.f32.mrf.mxu0
  %1215 = vdwg.mxu0
  %v1216 = vmul.f32 %v1073, 0.35355338
  %v1217 = vmul.f32 %v1119, 0.35355338
  %v1218 = vmul.f32 %v1165, 0.35355338
  %v1219 = vmul.f32 %v1211, 0.35355338
  %v1221 = vlaneseq
  %v1222 = vshrl.u32 %v1221, 7
  %v1223 = vsub.s32 0, %v1222
  %v1224 = vrot.slane %v1007, %v1223
  %v1226 = vadd.f32 %v1216, %v1224
  %v1227 = vadd.f32 %v1217, %v1224
  %v1228 = vadd.f32 %v1218, %v1224
  %v1229 = vadd.f32 %v1219, %v1224
  %v1230 = vsel %vm569, %v1226, -inf
  %1231 = vmax.xlane.f32.xlu0 %v1230
  %v1232 = vpop.xlane.xlu0 %1231
  %v1233 = vsel %vm569, %v1227, -inf
  %1234 = vmax.xlane.f32.xlu0 %v1233
  %v1235 = vpop.xlane.xlu0 %1234
  %v1236 = vsel %vm569, %v1228, -inf
  %1237 = vmax.xlane.f32.xlu0 %v1236
  %v1238 = vpop.xlane.xlu0 %1237
  %v1239 = vsel %vm569, %v1229, -inf
  %1240 = vmax.xlane.f32.xlu0 %v1239
  %v1241 = vpop.xlane.xlu0 %1240
  %v1242 = vsub.f32 %v1226, %v1232
  %v1243 = vsub.f32 %v1227, %v1235
  %v1244 = vsub.f32 %v1228, %v1238
  %v1245 = vsub.f32 %v1229, %v1241
  %v1246 = vmul.f32 %v1242, 1.442695
  %v1247 = vpow.pop %v1246
  %v1248 = vmul.f32 %v1243, 1.442695
  %v1249 = vpow.pop %v1248
  %v1250 = vmul.f32 %v1244, 1.442695
  %v1251 = vpow.pop %v1250
  %v1252 = vmul.f32 %v1245, 1.442695
  %v1253 = vpow.pop %v1252
  %v1254 = vsel %vm569, %v1247, 0.0
  %1255 = vadd.xlane.f32.xlu0 %v1254
  %v1256 = vpop.xlane.xlu0 %1255
  %v1257 = vsel %vm569, %v1249, 0.0
  %1258 = vadd.xlane.f32.xlu0 %v1257
  %v1259 = vpop.xlane.xlu0 %1258
  %v1260 = vsel %vm569, %v1251, 0.0
  %1261 = vadd.xlane.f32.xlu0 %v1260
  %v1262 = vpop.xlane.xlu0 %1261
  %v1263 = vsel %vm569, %v1253, 0.0
  %1264 = vadd.xlane.f32.xlu0 %v1263
  %v1265 = vpop.xlane.xlu0 %1264
  %v1266 = vrcp.pop %v1256
  %v1267 = vmul.f32 %v1247, %v1266
  %v1268 = vrcp.pop %v1259
  %v1269 = vmul.f32 %v1249, %v1268
  %v1270 = vrcp.pop %v1262
  %v1271 = vmul.f32 %v1251, %v1270
  %v1272 = vrcp.pop %v1265
  %v1273 = vmul.f32 %v1253, %v1272
  %v1274 = vpack.c.bf16 %v1267, %v1267
  %v1275 = vpack.c.bf16 %v1269, %v1269
  %v1276 = vpack.c.bf16 %v1271, %v1271
  %v1277 = vpack.c.bf16 %v1273, %v1273
  %1278 = vrot.lane.b32.xlu0 %v1024, 96
  %v1279 = vpop.permute.xlu0 %1278
  %v1282 = vsel %vm569, %v1274, 0
  %1284 = vmatprep.subr.bf16.mxu0 0
  %1285 = vmatpush1.bf16.msra.mxu0 0
  %1286 = vmatprep.subr.bf16.mxu0 0
  %1287 = vmatpush1.bf16.msra.mxu0 0
  %1288 = vmatprep.subr.bf16.mxu0 0
  %1289 = vmatpush1.bf16.msra.mxu0 0
  %1290 = vmatprep.subr.bf16.mxu0 0
  %1291 = vmatpush1.bf16.msra.mxu0 0
  %1292 = vmatprep.subr.bf16.mxu0 0
  %1293 = vmatpush1.bf16.msra.mxu0 0
  %1294 = vmatprep.subr.bf16.mxu0 0
  %1295 = vmatpush1.bf16.msra.mxu0 0
  %1296 = vmatprep.subr.bf16.mxu0 0
  %1297 = vmatpush1.bf16.msra.mxu0 0
  %1298 = vmatprep.subr.bf16.mxu0 0
  %1299 = vmatpush1.bf16.msra.mxu0 %v1279
  %1300 = vmatprep.subr.bf16.mxu0 0
  %1301 = vmatpush2.bf16.msra.mxu0 0
  %1302 = vmatprep.subr.bf16.mxu0 0
  %1303 = vmatpush2.bf16.msra.mxu0 0
  %1304 = vmatprep.subr.bf16.mxu0 0
  %1305 = vmatpush2.bf16.msra.mxu0 0
  %1306 = vmatprep.subr.bf16.mxu0 0
  %1307 = vmatpush2.bf16.msra.mxu0 0
  %1308 = vmatprep.subr.bf16.mxu0 0
  %1309 = vmatpush2.bf16.msra.mxu0 0
  %1310 = vmatprep.subr.bf16.mxu0 0
  %1311 = vmatpush2.bf16.msra.mxu0 0
  %1312 = vmatprep.subr.bf16.mxu0 0
  %1313 = vmatpush2.bf16.msra.mxu0 0
  %1314 = vmatprep.subr.bf16.mxu0 0
  %1315 = vmatpush2.bf16.msra.mxu0 0
  %1316 = vmatprep.mubr.bf16.mxu0 0
  %1317 = vmatmul.mubr.bf16.gmra.mxu0 %v1282
  %v1318 = vpop.f32.mrf.mxu0
  %v1319 = vadd.f32 0.0, %v1318
  %v1320 = vpop.f32.mrf.mxu0
  %v1321 = vpop.f32.mrf.mxu0
  %v1322 = vpop.f32.mrf.mxu0
  %1323 = vdwg.mxu0
  %1324 = vrot.lane.b32.xlu0 %v1027, 96
  %v1325 = vpop.permute.xlu0 %1324
  %v1328 = vsel %vm569, %v1275, 0
  %1330 = vmatprep.subr.bf16.mxu0 0
  %1331 = vmatpush1.bf16.msra.mxu0 0
  %1332 = vmatprep.subr.bf16.mxu0 0
  %1333 = vmatpush1.bf16.msra.mxu0 0
  %1334 = vmatprep.subr.bf16.mxu0 0
  %1335 = vmatpush1.bf16.msra.mxu0 0
  %1336 = vmatprep.subr.bf16.mxu0 0
  %1337 = vmatpush1.bf16.msra.mxu0 0
  %1338 = vmatprep.subr.bf16.mxu0 0
  %1339 = vmatpush1.bf16.msra.mxu0 0
  %1340 = vmatprep.subr.bf16.mxu0 0
  %1341 = vmatpush1.bf16.msra.mxu0 0
  %1342 = vmatprep.subr.bf16.mxu0 0
  %1343 = vmatpush1.bf16.msra.mxu0 0
  %1344 = vmatprep.subr.bf16.mxu0 0
  %1345 = vmatpush1.bf16.msra.mxu0 %v1325
  %1346 = vmatprep.subr.bf16.mxu0 0
  %1347 = vmatpush2.bf16.msra.mxu0 0
  %1348 = vmatprep.subr.bf16.mxu0 0
  %1349 = vmatpush2.bf16.msra.mxu0 0
  %1350 = vmatprep.subr.bf16.mxu0 0
  %1351 = vmatpush2.bf16.msra.mxu0 0
  %1352 = vmatprep.subr.bf16.mxu0 0
  %1353 = vmatpush2.bf16.msra.mxu0 0
  %1354 = vmatprep.subr.bf16.mxu0 0
  %1355 = vmatpush2.bf16.msra.mxu0 0
  %1356 = vmatprep.subr.bf16.mxu0 0
  %1357 = vmatpush2.bf16.msra.mxu0 0
  %1358 = vmatprep.subr.bf16.mxu0 0
  %1359 = vmatpush2.bf16.msra.mxu0 0
  %1360 = vmatprep.subr.bf16.mxu0 0
  %1361 = vmatpush2.bf16.msra.mxu0 0
  %1362 = vmatprep.mubr.bf16.mxu0 0
  %1363 = vmatmul.mubr.bf16.gmra.mxu0 %v1328
  %v1364 = vpop.f32.mrf.mxu0
  %v1365 = vadd.f32 0.0, %v1364
  %v1366 = vpop.f32.mrf.mxu0
  %v1367 = vpop.f32.mrf.mxu0
  %v1368 = vpop.f32.mrf.mxu0
  %1369 = vdwg.mxu0
  %1370 = vrot.lane.b32.xlu0 %v1029, 96
  %v1371 = vpop.permute.xlu0 %1370
  %v1374 = vsel %vm569, %v1276, 0
  %1376 = vmatprep.subr.bf16.mxu0 0
  %1377 = vmatpush1.bf16.msra.mxu0 0
  %1378 = vmatprep.subr.bf16.mxu0 0
  %1379 = vmatpush1.bf16.msra.mxu0 0
  %1380 = vmatprep.subr.bf16.mxu0 0
  %1381 = vmatpush1.bf16.msra.mxu0 0
  %1382 = vmatprep.subr.bf16.mxu0 0
  %1383 = vmatpush1.bf16.msra.mxu0 0
  %1384 = vmatprep.subr.bf16.mxu0 0
  %1385 = vmatpush1.bf16.msra.mxu0 0
  %1386 = vmatprep.subr.bf16.mxu0 0
  %1387 = vmatpush1.bf16.msra.mxu0 0
  %1388 = vmatprep.subr.bf16.mxu0 0
  %1389 = vmatpush1.bf16.msra.mxu0 0
  %1390 = vmatprep.subr.bf16.mxu0 0
  %1391 = vmatpush1.bf16.msra.mxu0 %v1371
  %1392 = vmatprep.subr.bf16.mxu0 0
  %1393 = vmatpush2.bf16.msra.mxu0 0
  %1394 = vmatprep.subr.bf16.mxu0 0
  %1395 = vmatpush2.bf16.msra.mxu0 0
  %1396 = vmatprep.subr.bf16.mxu0 0
  %1397 = vmatpush2.bf16.msra.mxu0 0
  %1398 = vmatprep.subr.bf16.mxu0 0
  %1399 = vmatpush2.bf16.msra.mxu0 0
  %1400 = vmatprep.subr.bf16.mxu0 0
  %1401 = vmatpush2.bf16.msra.mxu0 0
  %1402 = vmatprep.subr.bf16.mxu0 0
  %1403 = vmatpush2.bf16.msra.mxu0 0
  %1404 = vmatprep.subr.bf16.mxu0 0
  %1405 = vmatpush2.bf16.msra.mxu0 0
  %1406 = vmatprep.subr.bf16.mxu0 0
  %1407 = vmatpush2.bf16.msra.mxu0 0
  %1408 = vmatprep.mubr.bf16.mxu0 0
  %1409 = vmatmul.mubr.bf16.gmra.mxu0 %v1374
  %v1410 = vpop.f32.mrf.mxu0
  %v1411 = vadd.f32 0.0, %v1410
  %v1412 = vpop.f32.mrf.mxu0
  %v1413 = vpop.f32.mrf.mxu0
  %v1414 = vpop.f32.mrf.mxu0
  %1415 = vdwg.mxu0
  %1416 = vrot.lane.b32.xlu0 %v1031, 96
  %v1417 = vpop.permute.xlu0 %1416
  %v1420 = vsel %vm569, %v1277, 0
  %1422 = vmatprep.subr.bf16.mxu0 0
  %1423 = vmatpush1.bf16.msra.mxu0 0
  %1424 = vmatprep.subr.bf16.mxu0 0
  %1425 = vmatpush1.bf16.msra.mxu0 0
  %1426 = vmatprep.subr.bf16.mxu0 0
  %1427 = vmatpush1.bf16.msra.mxu0 0
  %1428 = vmatprep.subr.bf16.mxu0 0
  %1429 = vmatpush1.bf16.msra.mxu0 0
  %1430 = vmatprep.subr.bf16.mxu0 0
  %1431 = vmatpush1.bf16.msra.mxu0 0
  %1432 = vmatprep.subr.bf16.mxu0 0
  %1433 = vmatpush1.bf16.msra.mxu0 0
  %1434 = vmatprep.subr.bf16.mxu0 0
  %1435 = vmatpush1.bf16.msra.mxu0 0
  %1436 = vmatprep.subr.bf16.mxu0 0
  %1437 = vmatpush1.bf16.msra.mxu0 %v1417
  %1438 = vmatprep.subr.bf16.mxu0 0
  %1439 = vmatpush2.bf16.msra.mxu0 0
  %1440 = vmatprep.subr.bf16.mxu0 0
  %1441 = vmatpush2.bf16.msra.mxu0 0
  %1442 = vmatprep.subr.bf16.mxu0 0
  %1443 = vmatpush2.bf16.msra.mxu0 0
  %1444 = vmatprep.subr.bf16.mxu0 0
  %1445 = vmatpush2.bf16.msra.mxu0 0
  %1446 = vmatprep.subr.bf16.mxu0 0
  %1447 = vmatpush2.bf16.msra.mxu0 0
  %1448 = vmatprep.subr.bf16.mxu0 0
  %1449 = vmatpush2.bf16.msra.mxu0 0
  %1450 = vmatprep.subr.bf16.mxu0 0
  %1451 = vmatpush2.bf16.msra.mxu0 0
  %1452 = vmatprep.subr.bf16.mxu0 0
  %1453 = vmatpush2.bf16.msra.mxu0 0
  %1454 = vmatprep.mubr.bf16.mxu0 0
  %1455 = vmatmul.mubr.bf16.gmra.mxu0 %v1420
  %v1456 = vpop.f32.mrf.mxu0
  %v1457 = vadd.f32 0.0, %v1456
  %v1458 = vpop.f32.mrf.mxu0
  %v1459 = vpop.f32.mrf.mxu0
  %v1460 = vpop.f32.mrf.mxu0
  %1461 = vdwg.mxu0
  %v1462 = vpack.c.bf16 %v1319, %v1319
  %v1463 = vld [vmem:[%s8] sm:$0xf]
  %v1465 = vsel %vm370, %v1462, 0
  %v1468 = vsel %vm807, %v1463, 0
  %1470 = vmatprep.subr.bf16.mxu0 0
  %1471 = vmatpush1.bf16.msra.mxu0 0
  %1472 = vmatprep.subr.bf16.mxu0 0
  %1473 = vmatpush1.bf16.msra.mxu0 0
  %1474 = vmatprep.subr.bf16.mxu0 0
  %1475 = vmatpush1.bf16.msra.mxu0 0
  %1476 = vmatprep.subr.bf16.mxu0 0
  %1477 = vmatpush1.bf16.msra.mxu0 0
  %1478 = vmatprep.subr.bf16.mxu0 0
  %1479 = vmatpush1.bf16.msra.mxu0 0
  %1480 = vmatprep.subr.bf16.mxu0 0
  %1481 = vmatpush1.bf16.msra.mxu0 0
  %1482 = vmatprep.subr.bf16.mxu0 0
  %1483 = vmatpush1.bf16.msra.mxu0 0
  %1484 = vmatprep.subr.bf16.mxu0 0
  %1485 = vmatpush1.bf16.msra.mxu0 %v1468
  %1486 = vmatprep.subr.bf16.mxu0 0
  %1487 = vmatpush2.bf16.msra.mxu0 0
  %1488 = vmatprep.subr.bf16.mxu0 0
  %1489 = vmatpush2.bf16.msra.mxu0 0
  %1490 = vmatprep.subr.bf16.mxu0 0
  %1491 = vmatpush2.bf16.msra.mxu0 0
  %1492 = vmatprep.subr.bf16.mxu0 0
  %1493 = vmatpush2.bf16.msra.mxu0 0
  %1494 = vmatprep.subr.bf16.mxu0 0
  %1495 = vmatpush2.bf16.msra.mxu0 0
  %1496 = vmatprep.subr.bf16.mxu0 0
  %1497 = vmatpush2.bf16.msra.mxu0 0
  %1498 = vmatprep.subr.bf16.mxu0 0
  %1499 = vmatpush2.bf16.msra.mxu0 0
  %1500 = vmatprep.subr.bf16.mxu0 0
  %1501 = vmatpush2.bf16.msra.mxu0 0
  %1502 = vmatprep.mubr.bf16.mxu0 0
  %1503 = vmatmul.mubr.bf16.gmra.mxu0 %v1465
  %v1504 = vpop.f32.mrf.mxu0
  %v1505 = vadd.f32 0.0, %v1504
  %v1506 = vpop.f32.mrf.mxu0
  %v1507 = vpop.f32.mrf.mxu0
  %v1508 = vpop.f32.mrf.mxu0
  %1509 = vdwg.mxu0
  %v1510 = vadd.f32 %v854, %v1505
  %v1511 = vpack.c.bf16 %v1365, %v1365
  %v1512 = vld [vmem:[%s857] sm:$0xf]
  %v1514 = vsel %vm370, %v1511, 0
  %v1517 = vsel %vm807, %v1512, 0
  %1519 = vmatprep.subr.bf16.mxu0 0
  %1520 = vmatpush1.bf16.msra.mxu0 0
  %1521 = vmatprep.subr.bf16.mxu0 0
  %1522 = vmatpush1.bf16.msra.mxu0 0
  %1523 = vmatprep.subr.bf16.mxu0 0
  %1524 = vmatpush1.bf16.msra.mxu0 0
  %1525 = vmatprep.subr.bf16.mxu0 0
  %1526 = vmatpush1.bf16.msra.mxu0 0
  %1527 = vmatprep.subr.bf16.mxu0 0
  %1528 = vmatpush1.bf16.msra.mxu0 0
  %1529 = vmatprep.subr.bf16.mxu0 0
  %1530 = vmatpush1.bf16.msra.mxu0 0
  %1531 = vmatprep.subr.bf16.mxu0 0
  %1532 = vmatpush1.bf16.msra.mxu0 0
  %1533 = vmatprep.subr.bf16.mxu0 0
  %1534 = vmatpush1.bf16.msra.mxu0 %v1517
  %1535 = vmatprep.subr.bf16.mxu0 0
  %1536 = vmatpush2.bf16.msra.mxu0 0
  %1537 = vmatprep.subr.bf16.mxu0 0
  %1538 = vmatpush2.bf16.msra.mxu0 0
  %1539 = vmatprep.subr.bf16.mxu0 0
  %1540 = vmatpush2.bf16.msra.mxu0 0
  %1541 = vmatprep.subr.bf16.mxu0 0
  %1542 = vmatpush2.bf16.msra.mxu0 0
  %1543 = vmatprep.subr.bf16.mxu0 0
  %1544 = vmatpush2.bf16.msra.mxu0 0
  %1545 = vmatprep.subr.bf16.mxu0 0
  %1546 = vmatpush2.bf16.msra.mxu0 0
  %1547 = vmatprep.subr.bf16.mxu0 0
  %1548 = vmatpush2.bf16.msra.mxu0 0
  %1549 = vmatprep.subr.bf16.mxu0 0
  %1550 = vmatpush2.bf16.msra.mxu0 0
  %1551 = vmatprep.mubr.bf16.mxu0 0
  %1552 = vmatmul.mubr.bf16.gmra.mxu0 %v1514
  %v1553 = vpop.f32.mrf.mxu0
  %v1554 = vadd.f32 0.0, %v1553
  %v1555 = vpop.f32.mrf.mxu0
  %v1556 = vpop.f32.mrf.mxu0
  %v1557 = vpop.f32.mrf.mxu0
  %1558 = vdwg.mxu0
  %v1559 = vadd.f32 %v1510, %v1554
  %v1560 = vpack.c.bf16 %v1411, %v1411
  %v1561 = vld [vmem:[%s907] sm:$0xf]
  %v1563 = vsel %vm370, %v1560, 0
  %v1566 = vsel %vm807, %v1561, 0
  %1568 = vmatprep.subr.bf16.mxu0 0
  %1569 = vmatpush1.bf16.msra.mxu0 0
  %1570 = vmatprep.subr.bf16.mxu0 0
  %1571 = vmatpush1.bf16.msra.mxu0 0
  %1572 = vmatprep.subr.bf16.mxu0 0
  %1573 = vmatpush1.bf16.msra.mxu0 0
  %1574 = vmatprep.subr.bf16.mxu0 0
  %1575 = vmatpush1.bf16.msra.mxu0 0
  %1576 = vmatprep.subr.bf16.mxu0 0
  %1577 = vmatpush1.bf16.msra.mxu0 0
  %1578 = vmatprep.subr.bf16.mxu0 0
  %1579 = vmatpush1.bf16.msra.mxu0 0
  %1580 = vmatprep.subr.bf16.mxu0 0
  %1581 = vmatpush1.bf16.msra.mxu0 0
  %1582 = vmatprep.subr.bf16.mxu0 0
  %1583 = vmatpush1.bf16.msra.mxu0 %v1566
  %1584 = vmatprep.subr.bf16.mxu0 0
  %1585 = vmatpush2.bf16.msra.mxu0 0
  %1586 = vmatprep.subr.bf16.mxu0 0
  %1587 = vmatpush2.bf16.msra.mxu0 0
  %1588 = vmatprep.subr.bf16.mxu0 0
  %1589 = vmatpush2.bf16.msra.mxu0 0
  %1590 = vmatprep.subr.bf16.mxu0 0
  %1591 = vmatpush2.bf16.msra.mxu0 0
  %1592 = vmatprep.subr.bf16.mxu0 0
  %1593 = vmatpush2.bf16.msra.mxu0 0
  %1594 = vmatprep.subr.bf16.mxu0 0
  %1595 = vmatpush2.bf16.msra.mxu0 0
  %1596 = vmatprep.subr.bf16.mxu0 0
  %1597 = vmatpush2.bf16.msra.mxu0 0
  %1598 = vmatprep.subr.bf16.mxu0 0
  %1599 = vmatpush2.bf16.msra.mxu0 0
  %1600 = vmatprep.mubr.bf16.mxu0 0
  %1601 = vmatmul.mubr.bf16.gmra.mxu0 %v1563
  %v1602 = vpop.f32.mrf.mxu0
  %v1603 = vadd.f32 0.0, %v1602
  %v1604 = vpop.f32.mrf.mxu0
  %v1605 = vpop.f32.mrf.mxu0
  %v1606 = vpop.f32.mrf.mxu0
  %1607 = vdwg.mxu0
  %v1608 = vadd.f32 %v1559, %v1603
  %v1609 = vpack.c.bf16 %v1457, %v1457
  %v1610 = vld [vmem:[%s957] sm:$0xf]
  %v1612 = vsel %vm370, %v1609, 0
  %v1615 = vsel %vm807, %v1610, 0
  %1617 = vmatprep.subr.bf16.mxu0 0
  %1618 = vmatpush1.bf16.msra.mxu0 0
  %1619 = vmatprep.subr.bf16.mxu0 0
  %1620 = vmatpush1.bf16.msra.mxu0 0
  %1621 = vmatprep.subr.bf16.mxu0 0
  %1622 = vmatpush1.bf16.msra.mxu0 0
  %1623 = vmatprep.subr.bf16.mxu0 0
  %1624 = vmatpush1.bf16.msra.mxu0 0
  %1625 = vmatprep.subr.bf16.mxu0 0
  %1626 = vmatpush1.bf16.msra.mxu0 0
  %1627 = vmatprep.subr.bf16.mxu0 0
  %1628 = vmatpush1.bf16.msra.mxu0 0
  %1629 = vmatprep.subr.bf16.mxu0 0
  %1630 = vmatpush1.bf16.msra.mxu0 0
  %1631 = vmatprep.subr.bf16.mxu0 0
  %1632 = vmatpush1.bf16.msra.mxu0 %v1615
  %1633 = vmatprep.subr.bf16.mxu0 0
  %1634 = vmatpush2.bf16.msra.mxu0 0
  %1635 = vmatprep.subr.bf16.mxu0 0
  %1636 = vmatpush2.bf16.msra.mxu0 0
  %1637 = vmatprep.subr.bf16.mxu0 0
  %1638 = vmatpush2.bf16.msra.mxu0 0
  %1639 = vmatprep.subr.bf16.mxu0 0
  %1640 = vmatpush2.bf16.msra.mxu0 0
  %1641 = vmatprep.subr.bf16.mxu0 0
  %1642 = vmatpush2.bf16.msra.mxu0 0
  %1643 = vmatprep.subr.bf16.mxu0 0
  %1644 = vmatpush2.bf16.msra.mxu0 0
  %1645 = vmatprep.subr.bf16.mxu0 0
  %1646 = vmatpush2.bf16.msra.mxu0 0
  %1647 = vmatprep.subr.bf16.mxu0 0
  %1648 = vmatpush2.bf16.msra.mxu0 0
  %1649 = vmatprep.mubr.bf16.mxu0 0
  %1650 = vmatmul.mubr.bf16.gmra.mxu0 %v1612
  %v1651 = vpop.f32.mrf.mxu0
  %v1652 = vadd.f32 0.0, %v1651
  %v1653 = vpop.f32.mrf.mxu0
  %v1654 = vpop.f32.mrf.mxu0
  %v1655 = vpop.f32.mrf.mxu0
  %1656 = vdwg.mxu0
  %v1657 = vadd.f32 %v1608, %v1652
  %v1658 = vadd.f32 %v60, %v1005
  %v1659 = vadd.f32 %v62, %v1657
  %v1660 = vsel %vm87, %v1658, 0.0
  %1661 = vadd.xlane.f32.xlu0 %v1660
  %v1662 = vpop.xlane.xlu0 %1661
  %v1663 = vsel %vm87, %v1659, 0.0
  %1664 = vadd.xlane.f32.xlu0 %v1663
  %v1665 = vpop.xlane.xlu0 %1664
  %v1666 = vmul.f32 %v1662, %v94
  %v1667 = vmul.f32 %v1665, %v94
  %v1668 = vsub.f32 %v1658, %v1666
  %v1669 = vsub.f32 %v1659, %v1667
  %v1670 = vmul.f32 %v1668, %v1668
  %v1671 = vmul.f32 %v1669, %v1669
  %v1672 = vsel %vm87, %v1670, 0.0
  %1673 = vadd.xlane.f32.xlu0 %v1672
  %v1674 = vpop.xlane.xlu0 %1673
  %v1675 = vsel %vm87, %v1671, 0.0
  %1676 = vadd.xlane.f32.xlu0 %v1675
  %v1677 = vpop.xlane.xlu0 %1676
  %v1678 = vmul.f32 %v1674, %v94
  %v1679 = vmul.f32 %v1677, %v94
  %v1680 = vadd.f32 %v1678, 1e-05
  %v1681 = vadd.f32 %v1679, 1e-05
  %v1682 = vrsqrt.pop %v1680
  %v1683 = vrsqrt.pop %v1681
  %v1684 = vmul.f32 %v1668, %v1682
  %v1685 = vmul.f32 %v1669, %v1683
  %v1686 = vlaneseq
  %v1687 = vshrl.u32 %v1686, 7
  %v1688 = vsub.s32 2, %v1687
  %v1689 = vrot.slane %v84, %v1688
  %v1690 = vmul.f32 %v1684, %v1689
  %v1691 = vmul.f32 %v1685, %v1689
  %v1692 = vlaneseq
  %v1693 = vshrl.u32 %v1692, 7
  %v1694 = vsub.s32 3, %v1693
  %v1695 = vrot.slane %v84, %v1694
  %v1696 = vadd.f32 %v1690, %v1695
  %v1697 = vadd.f32 %v1691, %v1695
  %v1698 = vpack.c.bf16 %v1697, %v1696
  %v1699 = vld [vmem:[%s14] sm:$0xf]
  %v1700 = vld [vmem:[%s14 + $0x4] sm:$0xf]
  %v1701 = vld [vmem:[%s14 + $0x8] sm:$0xf]
  %v1702 = vld [vmem:[%s14 + $0xc] sm:$0xf]
  %v1703 = vld [vmem:[%s15] sm:$0x1]
  %v1705 = vlaneseq
  %v1706 = vshrl.u32 %v1705, 7
  %v1707 = vsub.s32 0, %v1706
  %v1708 = vrot.slane %v1703, %v1707
  %v1714 = vunpack.c.l.b16 %v1699
  %v1715 = vunpack.c.l.b16 %v1700
  %v1716 = vunpack.c.l.b16 %v1701
  %v1717 = vunpack.c.l.b16 %v1702
  %v1718 = vpack.c.b16 %v1715, %v1714
  %v1719 = vpack.c.b16 %v1717, %v1716
  %v1723 = vsel %vm87, %v1698, 0
  %1725 = vmatprep.subr.bf16.mxu0 0
  %1726 = vmatpush1.bf16.msra.mxu0 0
  %1727 = vmatprep.subr.bf16.mxu0 0
  %1728 = vmatpush1.bf16.msra.mxu0 0
  %1729 = vmatprep.subr.bf16.mxu0 0
  %1730 = vmatpush1.bf16.msra.mxu0 0
  %1731 = vmatprep.subr.bf16.mxu0 0
  %1732 = vmatpush1.bf16.msra.mxu0 0
  %1733 = vmatprep.subr.bf16.mxu0 0
  %1734 = vmatpush1.bf16.msra.mxu0 0
  %1735 = vmatprep.subr.bf16.mxu0 0
  %1736 = vmatpush1.bf16.msra.mxu0 0
  %1737 = vmatprep.subr.bf16.mxu0 0
  %1738 = vmatpush1.bf16.msra.mxu0 %v1719
  %1739 = vmatprep.subr.bf16.mxu0 0
  %1740 = vmatpush1.bf16.msra.mxu0 %v1718
  %1741 = vmatprep.subr.bf16.mxu0 0
  %1742 = vmatpush2.bf16.msra.mxu0 0
  %1743 = vmatprep.subr.bf16.mxu0 0
  %1744 = vmatpush2.bf16.msra.mxu0 0
  %1745 = vmatprep.subr.bf16.mxu0 0
  %1746 = vmatpush2.bf16.msra.mxu0 0
  %1747 = vmatprep.subr.bf16.mxu0 0
  %1748 = vmatpush2.bf16.msra.mxu0 0
  %1749 = vmatprep.subr.bf16.mxu0 0
  %1750 = vmatpush2.bf16.msra.mxu0 0
  %1751 = vmatprep.subr.bf16.mxu0 0
  %1752 = vmatpush2.bf16.msra.mxu0 0
  %1753 = vmatprep.subr.bf16.mxu0 0
  %1754 = vmatpush2.bf16.msra.mxu0 0
  %1755 = vmatprep.subr.bf16.mxu0 0
  %1756 = vmatpush2.bf16.msra.mxu0 0
  %1757 = vmatprep.mubr.bf16.mxu0 0
  %1758 = vmatmul.mubr.bf16.gmra.mxu0 %v1723
  %v1759 = vpop.f32.mrf.mxu0
  %v1760 = vadd.f32 %v1708, %v1759
  %v1761 = vpop.f32.mrf.mxu0
  %v1762 = vpop.f32.mrf.mxu0
  %v1763 = vadd.f32 %v1708, %v1762
  %v1764 = vpop.f32.mrf.mxu0
  %1765 = vdwg.mxu0
  %v1766 = vmul.f32 %v1760, 1.702
  %v1767 = vmul.f32 %v1763, 1.702
  %v1768 = vxor.u32 %v1766, 2147483648
  %v1769 = vxor.u32 %v1767, 2147483648
  %v1770 = vmul.f32 %v1768, 1.442695
  %v1771 = vpow.pop %v1770
  %v1772 = vmul.f32 %v1769, 1.442695
  %v1773 = vpow.pop %v1772
  %v1774 = vadd.f32 %v1771, 1.0
  %v1775 = vadd.f32 %v1773, 1.0
  %v1776 = vrcp.pop %v1774
  %v1777 = vmul.f32 1.0, %v1776
  %v1778 = vrcp.pop %v1775
  %v1779 = vmul.f32 1.0, %v1778
  %v1780 = vmul.f32 %v1760, %v1777
  %v1781 = vmul.f32 %v1763, %v1779
  %v1782 = vpack.c.bf16 %v1781, %v1780
  %v1783 = vld [vmem:[%s16] sm:$0xf]
  %v1784 = vld [vmem:[%s16 + $0x4] sm:$0xf]
  %v1785 = vld [vmem:[%s16 + $0x8] sm:$0xf]
  %v1786 = vld [vmem:[%s16 + $0xc] sm:$0xf]
  %v1787 = vld [vmem:[%s16 + $0x10] sm:$0xf]
  %v1788 = vld [vmem:[%s16 + $0x14] sm:$0xf]
  %v1789 = vld [vmem:[%s16 + $0x18] sm:$0xf]
  %v1790 = vld [vmem:[%s16 + $0x1c] sm:$0xf]
  %v1791 = vld [vmem:[%s16 + $0x20] sm:$0xf]
  %v1792 = vld [vmem:[%s16 + $0x24] sm:$0xf]
  %v1793 = vld [vmem:[%s16 + $0x28] sm:$0xf]
  %v1794 = vld [vmem:[%s16 + $0x2c] sm:$0xf]
  %v1795 = vld [vmem:[%s16 + $0x30] sm:$0xf]
  %v1796 = vld [vmem:[%s16 + $0x34] sm:$0xf]
  %v1797 = vld [vmem:[%s16 + $0x38] sm:$0xf]
  %v1798 = vld [vmem:[%s16 + $0x3c] sm:$0xf]
  %v1815 = vunpack.c.l.b16 %v1783
  %v1816 = vunpack.c.l.b16 %v1784
  %v1817 = vunpack.c.l.b16 %v1785
  %v1818 = vunpack.c.l.b16 %v1786
  %v1819 = vunpack.c.l.b16 %v1787
  %v1820 = vunpack.c.l.b16 %v1788
  %v1821 = vunpack.c.l.b16 %v1789
  %v1822 = vunpack.c.l.b16 %v1790
  %v1823 = vunpack.c.l.b16 %v1791
  %v1824 = vunpack.c.l.b16 %v1792
  %v1825 = vunpack.c.l.b16 %v1793
  %v1826 = vunpack.c.l.b16 %v1794
  %v1827 = vunpack.c.l.b16 %v1795
  %v1828 = vunpack.c.l.b16 %v1796
  %v1829 = vunpack.c.l.b16 %v1797
  %v1830 = vunpack.c.l.b16 %v1798
  %v1831 = vpack.c.b16 %v1816, %v1815
  %v1832 = vpack.c.b16 %v1818, %v1817
  %v1833 = vpack.c.b16 %v1820, %v1819
  %v1834 = vpack.c.b16 %v1822, %v1821
  %v1835 = vpack.c.b16 %v1824, %v1823
  %v1836 = vpack.c.b16 %v1826, %v1825
  %v1837 = vpack.c.b16 %v1828, %v1827
  %v1838 = vpack.c.b16 %v1830, %v1829
  %1847 = vmatprep.subr.bf16.mxu0 0
  %1848 = vmatpush1.bf16.msra.mxu0 %v1838
  %1849 = vmatprep.subr.bf16.mxu0 0
  %1850 = vmatpush1.bf16.msra.mxu0 %v1837
  %1851 = vmatprep.subr.bf16.mxu0 0
  %1852 = vmatpush1.bf16.msra.mxu0 %v1836
  %1853 = vmatprep.subr.bf16.mxu0 0
  %1854 = vmatpush1.bf16.msra.mxu0 %v1835
  %1855 = vmatprep.subr.bf16.mxu0 0
  %1856 = vmatpush1.bf16.msra.mxu0 %v1834
  %1857 = vmatprep.subr.bf16.mxu0 0
  %1858 = vmatpush1.bf16.msra.mxu0 %v1833
  %1859 = vmatprep.subr.bf16.mxu0 0
  %1860 = vmatpush1.bf16.msra.mxu0 %v1832
  %1861 = vmatprep.subr.bf16.mxu0 0
  %1862 = vmatpush1.bf16.msra.mxu0 %v1831
  %1863 = vmatprep.subr.bf16.mxu0 0
  %1864 = vmatpush2.bf16.msra.mxu0 0
  %1865 = vmatprep.subr.bf16.mxu0 0
  %1866 = vmatpush2.bf16.msra.mxu0 0
  %1867 = vmatprep.subr.bf16.mxu0 0
  %1868 = vmatpush2.bf16.msra.mxu0 0
  %1869 = vmatprep.subr.bf16.mxu0 0
  %1870 = vmatpush2.bf16.msra.mxu0 0
  %1871 = vmatprep.subr.bf16.mxu0 0
  %1872 = vmatpush2.bf16.msra.mxu0 0
  %1873 = vmatprep.subr.bf16.mxu0 0
  %1874 = vmatpush2.bf16.msra.mxu0 0
  %1875 = vmatprep.subr.bf16.mxu0 0
  %1876 = vmatpush2.bf16.msra.mxu0 0
  %1877 = vmatprep.subr.bf16.mxu0 0
  %1878 = vmatpush2.bf16.msra.mxu0 0
  %1879 = vmatprep.mubr.bf16.mxu0 0
  %1880 = vmatmul.mubr.bf16.gmra.mxu0 %v1782
  %v1881 = vpop.f32.mrf.mxu0
  %v1882 = vadd.f32 0.0, %v1881
  %v1883 = vpop.f32.mrf.mxu0
  %v1884 = vpop.f32.mrf.mxu0
  %v1885 = vadd.f32 0.0, %v1884
  %v1886 = vpop.f32.mrf.mxu0
  %1887 = vdwg.mxu0
  %v1888 = vadd.f32 %v1658, %v1882
  %v1889 = vadd.f32 %v1659, %v1885
  %v1890 = vld [vmem:[%s17] sm:$0x1]
  %v1892 = vlaneseq
  %v1893 = vshrl.u32 %v1892, 7
  %v1894 = vsub.s32 0, %v1893
  %v1895 = vrot.slane %v1890, %v1894
  %v1897 = vadd.f32 %v1888, %v1895
  %v1898 = vadd.f32 %v1889, %v1895
  %v1899 = vsel %vm87, %v1897, 0.0
  %1900 = vadd.xlane.f32.xlu0 %v1899
  %v1901 = vpop.xlane.xlu0 %1900
  %v1902 = vsel %vm87, %v1898, 0.0
  %1903 = vadd.xlane.f32.xlu0 %v1902
  %v1904 = vpop.xlane.xlu0 %1903
  %v1905 = vmul.f32 %v1901, %v94
  %v1906 = vmul.f32 %v1904, %v94
  %v1907 = vsub.f32 %v1897, %v1905
  %v1908 = vsub.f32 %v1898, %v1906
  %v1909 = vmul.f32 %v1907, %v1907
  %v1910 = vmul.f32 %v1908, %v1908
  %v1911 = vsel %vm87, %v1909, 0.0
  %1912 = vadd.xlane.f32.xlu0 %v1911
  %v1913 = vpop.xlane.xlu0 %1912
  %v1914 = vsel %vm87, %v1910, 0.0
  %1915 = vadd.xlane.f32.xlu0 %v1914
  %v1916 = vpop.xlane.xlu0 %1915
  %v1917 = vmul.f32 %v1913, %v94
  %v1918 = vmul.f32 %v1916, %v94
  %v1919 = vadd.f32 %v1917, 1e-05
  %v1920 = vadd.f32 %v1918, 1e-05
  %v1921 = vrsqrt.pop %v1919
  %v1922 = vrsqrt.pop %v1920
  %v1923 = vmul.f32 %v1907, %v1921
  %v1924 = vmul.f32 %v1908, %v1922
  %v1925 = vlaneseq
  %v1926 = vshrl.u32 %v1925, 7
  %v1927 = vsub.s32 4, %v1926
  %v1928 = vrot.slane %v84, %v1927
  %v1929 = vmul.f32 %v1923, %v1928
  %v1930 = vmul.f32 %v1924, %v1928
  %v1931 = vlaneseq
  %v1932 = vshrl.u32 %v1931, 7
  %v1933 = vsub.s32 5, %v1932
  %v1934 = vrot.slane %v84, %v1933
  %v1935 = vadd.f32 %v1929, %v1934
  %v1936 = vadd.f32 %v1930, %v1934
  %v1937 = vpack.c.bf16 %v1936, %v1935
  %v1938 = vld [vmem:[%s10] sm:$0xf]
  %v1939 = vld [vmem:[%s10 + $0x4] sm:$0xf]
  %v1940 = vld [vmem:[%s10 + $0x8] sm:$0xf]
  %v1941 = vld [vmem:[%s10 + $0xc] sm:$0xf]
  %v1942 = vlaneseq
  %v1943 = vshrl.u32 %v1942, 7
  %v1944 = vsub.s32 0, %v1943
  %v1945 = vrot.slane %v86, %v1944
  %v1950 = vunpack.c.l.b16 %v1938
  %v1951 = vunpack.c.l.b16 %v1939
  %v1952 = vunpack.c.l.b16 %v1940
  %v1953 = vunpack.c.l.b16 %v1941
  %v1954 = vpack.c.b16 %v1951, %v1950
  %v1955 = vpack.c.b16 %v1953, %v1952
  %v1959 = vsel %vm87, %v1937, 0
  %1961 = vmatprep.subr.bf16.mxu0 0
  %1962 = vmatpush1.bf16.msra.mxu0 0
  %1963 = vmatprep.subr.bf16.mxu0 0
  %1964 = vmatpush1.bf16.msra.mxu0 0
  %1965 = vmatprep.subr.bf16.mxu0 0
  %1966 = vmatpush1.bf16.msra.mxu0 0
  %1967 = vmatprep.subr.bf16.mxu0 0
  %1968 = vmatpush1.bf16.msra.mxu0 0
  %1969 = vmatprep.subr.bf16.mxu0 0
  %1970 = vmatpush1.bf16.msra.mxu0 0
  %1971 = vmatprep.subr.bf16.mxu0 0
  %1972 = vmatpush1.bf16.msra.mxu0 0
  %1973 = vmatprep.subr.bf16.mxu0 0
  %1974 = vmatpush1.bf16.msra.mxu0 %v1955
  %1975 = vmatprep.subr.bf16.mxu0 0
  %1976 = vmatpush1.bf16.msra.mxu0 %v1954
  %1977 = vmatprep.subr.bf16.mxu0 0
  %1978 = vmatpush2.bf16.msra.mxu0 0
  %1979 = vmatprep.subr.bf16.mxu0 0
  %1980 = vmatpush2.bf16.msra.mxu0 0
  %1981 = vmatprep.subr.bf16.mxu0 0
  %1982 = vmatpush2.bf16.msra.mxu0 0
  %1983 = vmatprep.subr.bf16.mxu0 0
  %1984 = vmatpush2.bf16.msra.mxu0 0
  %1985 = vmatprep.subr.bf16.mxu0 0
  %1986 = vmatpush2.bf16.msra.mxu0 0
  %1987 = vmatprep.subr.bf16.mxu0 0
  %1988 = vmatpush2.bf16.msra.mxu0 0
  %1989 = vmatprep.subr.bf16.mxu0 0
  %1990 = vmatpush2.bf16.msra.mxu0 0
  %1991 = vmatprep.subr.bf16.mxu0 0
  %1992 = vmatpush2.bf16.msra.mxu0 0
  %1993 = vmatprep.mubr.bf16.mxu0 0
  %1994 = vmatmul.mubr.bf16.gmra.mxu0 %v1959
  %v1995 = vpop.f32.mrf.mxu0
  %v1996 = vadd.f32 %v1945, %v1995
  %v1997 = vpop.f32.mrf.mxu0
  %v1998 = vpop.f32.mrf.mxu0
  %v1999 = vadd.f32 %v1945, %v1998
  %v2000 = vpop.f32.mrf.mxu0
  %2001 = vdwg.mxu0
  %v2002 = vld [vmem:[%s11] sm:$0xf]
  %v2003 = vld [vmem:[%s11 + $0x4] sm:$0xf]
  %v2004 = vld [vmem:[%s11 + $0x8] sm:$0xf]
  %v2005 = vld [vmem:[%s11 + $0xc] sm:$0xf]
  %v2010 = vunpack.c.l.b16 %v2002
  %v2011 = vunpack.c.l.b16 %v2003
  %v2012 = vunpack.c.l.b16 %v2004
  %v2013 = vunpack.c.l.b16 %v2005
  %v2014 = vpack.c.b16 %v2011, %v2010
  %v2015 = vpack.c.b16 %v2013, %v2012
  %2018 = vmatprep.subr.bf16.mxu0 0
  %2019 = vmatpush1.bf16.msra.mxu0 0
  %2020 = vmatprep.subr.bf16.mxu0 0
  %2021 = vmatpush1.bf16.msra.mxu0 0
  %2022 = vmatprep.subr.bf16.mxu0 0
  %2023 = vmatpush1.bf16.msra.mxu0 0
  %2024 = vmatprep.subr.bf16.mxu0 0
  %2025 = vmatpush1.bf16.msra.mxu0 0
  %2026 = vmatprep.subr.bf16.mxu0 0
  %2027 = vmatpush1.bf16.msra.mxu0 0
  %2028 = vmatprep.subr.bf16.mxu0 0
  %2029 = vmatpush1.bf16.msra.mxu0 0
  %2030 = vmatprep.subr.bf16.mxu0 0
  %2031 = vmatpush1.bf16.msra.mxu0 %v2015
  %2032 = vmatprep.subr.bf16.mxu0 0
  %2033 = vmatpush1.bf16.msra.mxu0 %v2014
  %2034 = vmatprep.subr.bf16.mxu0 0
  %2035 = vmatpush2.bf16.msra.mxu0 0
  %2036 = vmatprep.subr.bf16.mxu0 0
  %2037 = vmatpush2.bf16.msra.mxu0 0
  %2038 = vmatprep.subr.bf16.mxu0 0
  %2039 = vmatpush2.bf16.msra.mxu0 0
  %2040 = vmatprep.subr.bf16.mxu0 0
  %2041 = vmatpush2.bf16.msra.mxu0 0
  %2042 = vmatprep.subr.bf16.mxu0 0
  %2043 = vmatpush2.bf16.msra.mxu0 0
  %2044 = vmatprep.subr.bf16.mxu0 0
  %2045 = vmatpush2.bf16.msra.mxu0 0
  %2046 = vmatprep.subr.bf16.mxu0 0
  %2047 = vmatpush2.bf16.msra.mxu0 0
  %2048 = vmatprep.subr.bf16.mxu0 0
  %2049 = vmatpush2.bf16.msra.mxu0 0
  %2050 = vmatprep.mubr.bf16.mxu0 0
  %2051 = vmatmul.mubr.bf16.gmra.mxu0 %v1959
  %v2052 = vpop.f32.mrf.mxu0
  %v2053 = vadd.f32 0.0, %v2052
  %v2054 = vpop.f32.mrf.mxu0
  %v2055 = vpop.f32.mrf.mxu0
  %v2056 = vadd.f32 0.0, %v2055
  %v2057 = vpop.f32.mrf.mxu0
  %2058 = vdwg.mxu0
  %v2059 = vlaneseq
  %v2060 = vshrl.u32 %v2059, 7
  %v2061 = vsub.s32 1, %v2060
  %v2062 = vrot.slane %v86, %v2061
  %v2063 = vadd.f32 %v2053, %v2062
  %v2064 = vadd.f32 %v2056, %v2062
  %v2065 = vlaneseq
  %v2066 = vshrl.u32 %v2065, 7
  %v2067 = vsub.s32 2, %v2066
  %v2068 = vrot.slane %v86, %v2067
  %2070 = vrot.lane.b32.xlu0 %v2068, 32
  %v2071 = vpop.permute.xlu0 %2070
  %v2073 = vadd.f32 %v2053, %v2071
  %v2074 = vadd.f32 %v2056, %v2071
  %v2075 = vld [vmem:[%s4] sm:$0xf]
  %s2076 = scalar_lea.vmem %s4, 4
  %v2077 = vld [vmem:[%s2076] sm:$0xf]
  %2079 = vrot.lane.b32.xlu0 %v2077, 32
  %v2080 = vpop.permute.xlu0 %2079
  %v2082 = vld [vmem:[%s3] sm:$0xff]
  %v2083 = vpack.c.bf16 %v1996, %v1996
  %2085 = vrot.lane.b32.xlu0 %v2083, 120
  %v2086 = vpop.permute.xlu0 %2085
  %2087 = vrot.lane.b32.xlu0 %v2083, 112
  %v2088 = vpop.permute.xlu0 %2087
  %2089 = vrot.lane.b32.xlu0 %v2083, 104
  %v2090 = vpop.permute.xlu0 %2089
  %v2091 = vpack.c.bf16 %v2075, %v2063
  %2093 = vrot.lane.b32.xlu0 %v2091, 120
  %v2094 = vpop.permute.xlu0 %2093
  %2095 = vrot.lane.b32.xlu0 %v2091, 112
  %v2096 = vpop.permute.xlu0 %2095
  %2097 = vrot.lane.b32.xlu0 %v2091, 104
  %v2098 = vpop.permute.xlu0 %2097
  %v2099 = vpack.c.bf16 %v2080, %v2073
  %2101 = vrot.lane.b32.xlu0 %v2099, 120
  %v2102 = vpop.permute.xlu0 %2101
  %2103 = vrot.lane.b32.xlu0 %v2099, 112
  %v2104 = vpop.permute.xlu0 %2103
  %2105 = vrot.lane.b32.xlu0 %v2099, 104
  %v2106 = vpop.permute.xlu0 %2105
  %v2108 = vsel %vm370, %v2083, 0
  %v2111 = vsel %vm370, %v2091, 0
  %2113 = vmatprep.subr.bf16.mxu0 0
  %2114 = vmatpush1.bf16.xpose.msra.mxu0 0
  %2115 = vmatprep.subr.bf16.mxu0 0
  %2116 = vmatpush1.bf16.xpose.msra.mxu0 0
  %2117 = vmatprep.subr.bf16.mxu0 0
  %2118 = vmatpush1.bf16.xpose.msra.mxu0 0
  %2119 = vmatprep.subr.bf16.mxu0 0
  %2120 = vmatpush1.bf16.xpose.msra.mxu0 0
  %2121 = vmatprep.subr.bf16.mxu0 0
  %2122 = vmatpush1.bf16.xpose.msra.mxu0 0
  %2123 = vmatprep.subr.bf16.mxu0 0
  %2124 = vmatpush1.bf16.xpose.msra.mxu0 0
  %2125 = vmatprep.subr.bf16.mxu0 0
  %2126 = vmatpush1.bf16.xpose.msra.mxu0 0
  %2127 = vmatprep.subr.bf16.mxu0 0
  %2128 = vmatpush1.bf16.xpose.msra.mxu0 %v2111
  %2129 = vmatprep.subr.bf16.mxu0 0
  %2130 = vmatpush2.bf16.xpose.msra.mxu0 0
  %2131 = vmatprep.subr.bf16.mxu0 0
  %2132 = vmatpush2.bf16.xpose.msra.mxu0 0
  %2133 = vmatprep.subr.bf16.mxu0 0
  %2134 = vmatpush2.bf16.xpose.msra.mxu0 0
  %2135 = vmatprep.subr.bf16.mxu0 0
  %2136 = vmatpush2.bf16.xpose.msra.mxu0 0
  %2137 = vmatprep.subr.bf16.mxu0 0
  %2138 = vmatpush2.bf16.xpose.msra.mxu0 0
  %2139 = vmatprep.subr.bf16.mxu0 0
  %2140 = vmatpush2.bf16.xpose.msra.mxu0 0
  %2141 = vmatprep.subr.bf16.mxu0 0
  %2142 = vmatpush2.bf16.xpose.msra.mxu0 0
  %2143 = vmatprep.subr.bf16.mxu0 0
  %2144 = vmatpush2.bf16.xpose.msra.mxu0 0
  %2145 = vmatprep.mubr.bf16.mxu0 0
  %2146 = vmatmul.mubr.bf16.gmra.mxu0 %v2108
  %v2147 = vpop.f32.mrf.mxu0
  %v2148 = vadd.f32 0.0, %v2147
  %v2149 = vpop.f32.mrf.mxu0
  %v2150 = vpop.f32.mrf.mxu0
  %v2151 = vpop.f32.mrf.mxu0
  %2152 = vdwg.mxu0
  %v2154 = vsel %vm370, %v2086, 0
  %v2157 = vsel %vm370, %v2094, 0
  %2159 = vmatprep.subr.bf16.mxu0 0
  %2160 = vmatpush1.bf16.xpose.msra.mxu0 0
  %2161 = vmatprep.subr.bf16.mxu0 0
  %2162 = vmatpush1.bf16.xpose.msra.mxu0 0
  %2163 = vmatprep.subr.bf16.mxu0 0
  %2164 = vmatpush1.bf16.xpose.msra.mxu0 0
  %2165 = vmatprep.subr.bf16.mxu0 0
  %2166 = vmatpush1.bf16.xpose.msra.mxu0 0
  %2167 = vmatprep.subr.bf16.mxu0 0
  %2168 = vmatpush1.bf16.xpose.msra.mxu0 0
  %2169 = vmatprep.subr.bf16.mxu0 0
  %2170 = vmatpush1.bf16.xpose.msra.mxu0 0
  %2171 = vmatprep.subr.bf16.mxu0 0
  %2172 = vmatpush1.bf16.xpose.msra.mxu0 0
  %2173 = vmatprep.subr.bf16.mxu0 0
  %2174 = vmatpush1.bf16.xpose.msra.mxu0 %v2157
  %2175 = vmatprep.subr.bf16.mxu0 0
  %2176 = vmatpush2.bf16.xpose.msra.mxu0 0
  %2177 = vmatprep.subr.bf16.mxu0 0
  %2178 = vmatpush2.bf16.xpose.msra.mxu0 0
  %2179 = vmatprep.subr.bf16.mxu0 0
  %2180 = vmatpush2.bf16.xpose.msra.mxu0 0
  %2181 = vmatprep.subr.bf16.mxu0 0
  %2182 = vmatpush2.bf16.xpose.msra.mxu0 0
  %2183 = vmatprep.subr.bf16.mxu0 0
  %2184 = vmatpush2.bf16.xpose.msra.mxu0 0
  %2185 = vmatprep.subr.bf16.mxu0 0
  %2186 = vmatpush2.bf16.xpose.msra.mxu0 0
  %2187 = vmatprep.subr.bf16.mxu0 0
  %2188 = vmatpush2.bf16.xpose.msra.mxu0 0
  %2189 = vmatprep.subr.bf16.mxu0 0
  %2190 = vmatpush2.bf16.xpose.msra.mxu0 0
  %2191 = vmatprep.mubr.bf16.mxu0 0
  %2192 = vmatmul.mubr.bf16.gmra.mxu0 %v2154
  %v2193 = vpop.f32.mrf.mxu0
  %v2194 = vadd.f32 0.0, %v2193
  %v2195 = vpop.f32.mrf.mxu0
  %v2196 = vpop.f32.mrf.mxu0
  %v2197 = vpop.f32.mrf.mxu0
  %2198 = vdwg.mxu0
  %v2200 = vsel %vm370, %v2088, 0
  %v2203 = vsel %vm370, %v2096, 0
  %2205 = vmatprep.subr.bf16.mxu0 0
  %2206 = vmatpush1.bf16.xpose.msra.mxu0 0
  %2207 = vmatprep.subr.bf16.mxu0 0
  %2208 = vmatpush1.bf16.xpose.msra.mxu0 0
  %2209 = vmatprep.subr.bf16.mxu0 0
  %2210 = vmatpush1.bf16.xpose.msra.mxu0 0
  %2211 = vmatprep.subr.bf16.mxu0 0
  %2212 = vmatpush1.bf16.xpose.msra.mxu0 0
  %2213 = vmatprep.subr.bf16.mxu0 0
  %2214 = vmatpush1.bf16.xpose.msra.mxu0 0
  %2215 = vmatprep.subr.bf16.mxu0 0
  %2216 = vmatpush1.bf16.xpose.msra.mxu0 0
  %2217 = vmatprep.subr.bf16.mxu0 0
  %2218 = vmatpush1.bf16.xpose.msra.mxu0 0
  %2219 = vmatprep.subr.bf16.mxu0 0
  %2220 = vmatpush1.bf16.xpose.msra.mxu0 %v2203
  %2221 = vmatprep.subr.bf16.mxu0 0
  %2222 = vmatpush2.bf16.xpose.msra.mxu0 0
  %2223 = vmatprep.subr.bf16.mxu0 0
  %2224 = vmatpush2.bf16.xpose.msra.mxu0 0
  %2225 = vmatprep.subr.bf16.mxu0 0
  %2226 = vmatpush2.bf16.xpose.msra.mxu0 0
  %2227 = vmatprep.subr.bf16.mxu0 0
  %2228 = vmatpush2.bf16.xpose.msra.mxu0 0
  %2229 = vmatprep.subr.bf16.mxu0 0
  %2230 = vmatpush2.bf16.xpose.msra.mxu0 0
  %2231 = vmatprep.subr.bf16.mxu0 0
  %2232 = vmatpush2.bf16.xpose.msra.mxu0 0
  %2233 = vmatprep.subr.bf16.mxu0 0
  %2234 = vmatpush2.bf16.xpose.msra.mxu0 0
  %2235 = vmatprep.subr.bf16.mxu0 0
  %2236 = vmatpush2.bf16.xpose.msra.mxu0 0
  %2237 = vmatprep.mubr.bf16.mxu0 0
  %2238 = vmatmul.mubr.bf16.gmra.mxu0 %v2200
  %v2239 = vpop.f32.mrf.mxu0
  %v2240 = vadd.f32 0.0, %v2239
  %v2241 = vpop.f32.mrf.mxu0
  %v2242 = vpop.f32.mrf.mxu0
  %v2243 = vpop.f32.mrf.mxu0
  %2244 = vdwg.mxu0
  %v2246 = vsel %vm370, %v2090, 0
  %v2249 = vsel %vm370, %v2098, 0
  %2251 = vmatprep.subr.bf16.mxu0 0
  %2252 = vmatpush1.bf16.xpose.msra.mxu0 0
  %2253 = vmatprep.subr.bf16.mxu0 0
  %2254 = vmatpush1.bf16.xpose.msra.mxu0 0
  %2255 = vmatprep.subr.bf16.mxu0 0
  %2256 = vmatpush1.bf16.xpose.msra.mxu0 0
  %2257 = vmatprep.subr.bf16.mxu0 0
  %2258 = vmatpush1.bf16.xpose.msra.mxu0 0
  %2259 = vmatprep.subr.bf16.mxu0 0
  %2260 = vmatpush1.bf16.xpose.msra.mxu0 0
  %2261 = vmatprep.subr.bf16.mxu0 0
  %2262 = vmatpush1.bf16.xpose.msra.mxu0 0
  %2263 = vmatprep.subr.bf16.mxu0 0
  %2264 = vmatpush1.bf16.xpose.msra.mxu0 0
  %2265 = vmatprep.subr.bf16.mxu0 0
  %2266 = vmatpush1.bf16.xpose.msra.mxu0 %v2249
  %2267 = vmatprep.subr.bf16.mxu0 0
  %2268 = vmatpush2.bf16.xpose.msra.mxu0 0
  %2269 = vmatprep.subr.bf16.mxu0 0
  %2270 = vmatpush2.bf16.xpose.msra.mxu0 0
  %2271 = vmatprep.subr.bf16.mxu0 0
  %2272 = vmatpush2.bf16.xpose.msra.mxu0 0
  %2273 = vmatprep.subr.bf16.mxu0 0
  %2274 = vmatpush2.bf16.xpose.msra.mxu0 0
  %2275 = vmatprep.subr.bf16.mxu0 0
  %2276 = vmatpush2.bf16.xpose.msra.mxu0 0
  %2277 = vmatprep.subr.bf16.mxu0 0
  %2278 = vmatpush2.bf16.xpose.msra.mxu0 0
  %2279 = vmatprep.subr.bf16.mxu0 0
  %2280 = vmatpush2.bf16.xpose.msra.mxu0 0
  %2281 = vmatprep.subr.bf16.mxu0 0
  %2282 = vmatpush2.bf16.xpose.msra.mxu0 0
  %2283 = vmatprep.mubr.bf16.mxu0 0
  %2284 = vmatmul.mubr.bf16.gmra.mxu0 %v2246
  %v2285 = vpop.f32.mrf.mxu0
  %v2286 = vadd.f32 0.0, %v2285
  %v2287 = vpop.f32.mrf.mxu0
  %v2288 = vpop.f32.mrf.mxu0
  %v2289 = vpop.f32.mrf.mxu0
  %2290 = vdwg.mxu0
  %v2291 = vmul.f32 %v2148, 0.35355338
  %v2292 = vmul.f32 %v2194, 0.35355338
  %v2293 = vmul.f32 %v2240, 0.35355338
  %v2294 = vmul.f32 %v2286, 0.35355338
  %v2295 = vadd.f32 %v2291, %v2082
  %v2296 = vadd.f32 %v2292, %v2082
  %v2297 = vadd.f32 %v2293, %v2082
  %v2298 = vadd.f32 %v2294, %v2082
  %vm2299 = vcmask 97280
  %v2300 = vsel %vm2299, %v2295, -inf
  %2301 = vmax.xlane.f32.xlu0 %v2300
  %v2302 = vpop.xlane.xlu0 %2301
  %v2303 = vsel %vm2299, %v2296, -inf
  %2304 = vmax.xlane.f32.xlu0 %v2303
  %v2305 = vpop.xlane.xlu0 %2304
  %v2306 = vsel %vm2299, %v2297, -inf
  %2307 = vmax.xlane.f32.xlu0 %v2306
  %v2308 = vpop.xlane.xlu0 %2307
  %v2309 = vsel %vm2299, %v2298, -inf
  %2310 = vmax.xlane.f32.xlu0 %v2309
  %v2311 = vpop.xlane.xlu0 %2310
  %v2312 = vsub.f32 %v2295, %v2302
  %v2313 = vsub.f32 %v2296, %v2305
  %v2314 = vsub.f32 %v2297, %v2308
  %v2315 = vsub.f32 %v2298, %v2311
  %v2316 = vmul.f32 %v2312, 1.442695
  %v2317 = vpow.pop %v2316
  %v2318 = vmul.f32 %v2313, 1.442695
  %v2319 = vpow.pop %v2318
  %v2320 = vmul.f32 %v2314, 1.442695
  %v2321 = vpow.pop %v2320
  %v2322 = vmul.f32 %v2315, 1.442695
  %v2323 = vpow.pop %v2322
  %v2324 = vsel %vm2299, %v2317, 0.0
  %2325 = vadd.xlane.f32.xlu0 %v2324
  %v2326 = vpop.xlane.xlu0 %2325
  %v2327 = vsel %vm2299, %v2319, 0.0
  %2328 = vadd.xlane.f32.xlu0 %v2327
  %v2329 = vpop.xlane.xlu0 %2328
  %v2330 = vsel %vm2299, %v2321, 0.0
  %2331 = vadd.xlane.f32.xlu0 %v2330
  %v2332 = vpop.xlane.xlu0 %2331
  %v2333 = vsel %vm2299, %v2323, 0.0
  %2334 = vadd.xlane.f32.xlu0 %v2333
  %v2335 = vpop.xlane.xlu0 %2334
  %v2336 = vrcp.pop %v2326
  %v2337 = vmul.f32 %v2317, %v2336
  %v2338 = vrcp.pop %v2329
  %v2339 = vmul.f32 %v2319, %v2338
  %v2340 = vrcp.pop %v2332
  %v2341 = vmul.f32 %v2321, %v2340
  %v2342 = vrcp.pop %v2335
  %v2343 = vmul.f32 %v2323, %v2342
  %v2344 = vpack.c.bf16 %v2337, %v2337
  %v2345 = vpack.c.bf16 %v2339, %v2339
  %v2346 = vpack.c.bf16 %v2341, %v2341
  %v2347 = vpack.c.bf16 %v2343, %v2343
  %2348 = vrot.lane.b32.xlu0 %v2099, 96
  %v2349 = vpop.permute.xlu0 %2348
  %v2351 = vsel %vm2299, %v2344, 0
  %vm2353 = vcmask 1045504
  %v2355 = vsel %vm2353, %v2349, 0
  %2357 = vmatprep.subr.bf16.mxu0 0
  %2358 = vmatpush1.bf16.msra.mxu0 0
  %2359 = vmatprep.subr.bf16.mxu0 0
  %2360 = vmatpush1.bf16.msra.mxu0 0
  %2361 = vmatprep.subr.bf16.mxu0 0
  %2362 = vmatpush1.bf16.msra.mxu0 0
  %2363 = vmatprep.subr.bf16.mxu0 0
  %2364 = vmatpush1.bf16.msra.mxu0 0
  %2365 = vmatprep.subr.bf16.mxu0 0
  %2366 = vmatpush1.bf16.msra.mxu0 0
  %2367 = vmatprep.subr.bf16.mxu0 0
  %2368 = vmatpush1.bf16.msra.mxu0 0
  %2369 = vmatprep.subr.bf16.mxu0 0
  %2370 = vmatpush1.bf16.msra.mxu0 0
  %2371 = vmatprep.subr.bf16.mxu0 0
  %2372 = vmatpush1.bf16.msra.mxu0 %v2355
  %2373 = vmatprep.subr.bf16.mxu0 0
  %2374 = vmatpush2.bf16.msra.mxu0 0
  %2375 = vmatprep.subr.bf16.mxu0 0
  %2376 = vmatpush2.bf16.msra.mxu0 0
  %2377 = vmatprep.subr.bf16.mxu0 0
  %2378 = vmatpush2.bf16.msra.mxu0 0
  %2379 = vmatprep.subr.bf16.mxu0 0
  %2380 = vmatpush2.bf16.msra.mxu0 0
  %2381 = vmatprep.subr.bf16.mxu0 0
  %2382 = vmatpush2.bf16.msra.mxu0 0
  %2383 = vmatprep.subr.bf16.mxu0 0
  %2384 = vmatpush2.bf16.msra.mxu0 0
  %2385 = vmatprep.subr.bf16.mxu0 0
  %2386 = vmatpush2.bf16.msra.mxu0 0
  %2387 = vmatprep.subr.bf16.mxu0 0
  %2388 = vmatpush2.bf16.msra.mxu0 0
  %2389 = vmatprep.mubr.bf16.mxu0 0
  %2390 = vmatmul.mubr.bf16.gmra.mxu0 %v2351
  %v2391 = vpop.f32.mrf.mxu0
  %v2392 = vadd.f32 0.0, %v2391
  %v2393 = vpop.f32.mrf.mxu0
  %v2394 = vpop.f32.mrf.mxu0
  %v2395 = vpop.f32.mrf.mxu0
  %2396 = vdwg.mxu0
  %2397 = vrot.lane.b32.xlu0 %v2102, 96
  %v2398 = vpop.permute.xlu0 %2397
  %v2400 = vsel %vm2299, %v2345, 0
  %v2403 = vsel %vm2353, %v2398, 0
  %2405 = vmatprep.subr.bf16.mxu0 0
  %2406 = vmatpush1.bf16.msra.mxu0 0
  %2407 = vmatprep.subr.bf16.mxu0 0
  %2408 = vmatpush1.bf16.msra.mxu0 0
  %2409 = vmatprep.subr.bf16.mxu0 0
  %2410 = vmatpush1.bf16.msra.mxu0 0
  %2411 = vmatprep.subr.bf16.mxu0 0
  %2412 = vmatpush1.bf16.msra.mxu0 0
  %2413 = vmatprep.subr.bf16.mxu0 0
  %2414 = vmatpush1.bf16.msra.mxu0 0
  %2415 = vmatprep.subr.bf16.mxu0 0
  %2416 = vmatpush1.bf16.msra.mxu0 0
  %2417 = vmatprep.subr.bf16.mxu0 0
  %2418 = vmatpush1.bf16.msra.mxu0 0
  %2419 = vmatprep.subr.bf16.mxu0 0
  %2420 = vmatpush1.bf16.msra.mxu0 %v2403
  %2421 = vmatprep.subr.bf16.mxu0 0
  %2422 = vmatpush2.bf16.msra.mxu0 0
  %2423 = vmatprep.subr.bf16.mxu0 0
  %2424 = vmatpush2.bf16.msra.mxu0 0
  %2425 = vmatprep.subr.bf16.mxu0 0
  %2426 = vmatpush2.bf16.msra.mxu0 0
  %2427 = vmatprep.subr.bf16.mxu0 0
  %2428 = vmatpush2.bf16.msra.mxu0 0
  %2429 = vmatprep.subr.bf16.mxu0 0
  %2430 = vmatpush2.bf16.msra.mxu0 0
  %2431 = vmatprep.subr.bf16.mxu0 0
  %2432 = vmatpush2.bf16.msra.mxu0 0
  %2433 = vmatprep.subr.bf16.mxu0 0
  %2434 = vmatpush2.bf16.msra.mxu0 0
  %2435 = vmatprep.subr.bf16.mxu0 0
  %2436 = vmatpush2.bf16.msra.mxu0 0
  %2437 = vmatprep.mubr.bf16.mxu0 0
  %2438 = vmatmul.mubr.bf16.gmra.mxu0 %v2400
  %v2439 = vpop.f32.mrf.mxu0
  %v2440 = vadd.f32 0.0, %v2439
  %v2441 = vpop.f32.mrf.mxu0
  %v2442 = vpop.f32.mrf.mxu0
  %v2443 = vpop.f32.mrf.mxu0
  %2444 = vdwg.mxu0
  %2445 = vrot.lane.b32.xlu0 %v2104, 96
  %v2446 = vpop.permute.xlu0 %2445
  %v2448 = vsel %vm2299, %v2346, 0
  %v2451 = vsel %vm2353, %v2446, 0
  %2453 = vmatprep.subr.bf16.mxu0 0
  %2454 = vmatpush1.bf16.msra.mxu0 0
  %2455 = vmatprep.subr.bf16.mxu0 0
  %2456 = vmatpush1.bf16.msra.mxu0 0
  %2457 = vmatprep.subr.bf16.mxu0 0
  %2458 = vmatpush1.bf16.msra.mxu0 0
  %2459 = vmatprep.subr.bf16.mxu0 0
  %2460 = vmatpush1.bf16.msra.mxu0 0
  %2461 = vmatprep.subr.bf16.mxu0 0
  %2462 = vmatpush1.bf16.msra.mxu0 0
  %2463 = vmatprep.subr.bf16.mxu0 0
  %2464 = vmatpush1.bf16.msra.mxu0 0
  %2465 = vmatprep.subr.bf16.mxu0 0
  %2466 = vmatpush1.bf16.msra.mxu0 0
  %2467 = vmatprep.subr.bf16.mxu0 0
  %2468 = vmatpush1.bf16.msra.mxu0 %v2451
  %2469 = vmatprep.subr.bf16.mxu0 0
  %2470 = vmatpush2.bf16.msra.mxu0 0
  %2471 = vmatprep.subr.bf16.mxu0 0
  %2472 = vmatpush2.bf16.msra.mxu0 0
  %2473 = vmatprep.subr.bf16.mxu0 0
  %2474 = vmatpush2.bf16.msra.mxu0 0
  %2475 = vmatprep.subr.bf16.mxu0 0
  %2476 = vmatpush2.bf16.msra.mxu0 0
  %2477 = vmatprep.subr.bf16.mxu0 0
  %2478 = vmatpush2.bf16.msra.mxu0 0
  %2479 = vmatprep.subr.bf16.mxu0 0
  %2480 = vmatpush2.bf16.msra.mxu0 0
  %2481 = vmatprep.subr.bf16.mxu0 0
  %2482 = vmatpush2.bf16.msra.mxu0 0
  %2483 = vmatprep.subr.bf16.mxu0 0
  %2484 = vmatpush2.bf16.msra.mxu0 0
  %2485 = vmatprep.mubr.bf16.mxu0 0
  %2486 = vmatmul.mubr.bf16.gmra.mxu0 %v2448
  %v2487 = vpop.f32.mrf.mxu0
  %v2488 = vadd.f32 0.0, %v2487
  %v2489 = vpop.f32.mrf.mxu0
  %v2490 = vpop.f32.mrf.mxu0
  %v2491 = vpop.f32.mrf.mxu0
  %2492 = vdwg.mxu0
  %2493 = vrot.lane.b32.xlu0 %v2106, 96
  %v2494 = vpop.permute.xlu0 %2493
  %v2496 = vsel %vm2299, %v2347, 0
  %v2499 = vsel %vm2353, %v2494, 0
  %2501 = vmatprep.subr.bf16.mxu0 0
  %2502 = vmatpush1.bf16.msra.mxu0 0
  %2503 = vmatprep.subr.bf16.mxu0 0
  %2504 = vmatpush1.bf16.msra.mxu0 0
  %2505 = vmatprep.subr.bf16.mxu0 0
  %2506 = vmatpush1.bf16.msra.mxu0 0
  %2507 = vmatprep.subr.bf16.mxu0 0
  %2508 = vmatpush1.bf16.msra.mxu0 0
  %2509 = vmatprep.subr.bf16.mxu0 0
  %2510 = vmatpush1.bf16.msra.mxu0 0
  %2511 = vmatprep.subr.bf16.mxu0 0
  %2512 = vmatpush1.bf16.msra.mxu0 0
  %2513 = vmatprep.subr.bf16.mxu0 0
  %2514 = vmatpush1.bf16.msra.mxu0 0
  %2515 = vmatprep.subr.bf16.mxu0 0
  %2516 = vmatpush1.bf16.msra.mxu0 %v2499
  %2517 = vmatprep.subr.bf16.mxu0 0
  %2518 = vmatpush2.bf16.msra.mxu0 0
  %2519 = vmatprep.subr.bf16.mxu0 0
  %2520 = vmatpush2.bf16.msra.mxu0 0
  %2521 = vmatprep.subr.bf16.mxu0 0
  %2522 = vmatpush2.bf16.msra.mxu0 0
  %2523 = vmatprep.subr.bf16.mxu0 0
  %2524 = vmatpush2.bf16.msra.mxu0 0
  %2525 = vmatprep.subr.bf16.mxu0 0
  %2526 = vmatpush2.bf16.msra.mxu0 0
  %2527 = vmatprep.subr.bf16.mxu0 0
  %2528 = vmatpush2.bf16.msra.mxu0 0
  %2529 = vmatprep.subr.bf16.mxu0 0
  %2530 = vmatpush2.bf16.msra.mxu0 0
  %2531 = vmatprep.subr.bf16.mxu0 0
  %2532 = vmatpush2.bf16.msra.mxu0 0
  %2533 = vmatprep.mubr.bf16.mxu0 0
  %2534 = vmatmul.mubr.bf16.gmra.mxu0 %v2496
  %v2535 = vpop.f32.mrf.mxu0
  %v2536 = vadd.f32 0.0, %v2535
  %v2537 = vpop.f32.mrf.mxu0
  %v2538 = vpop.f32.mrf.mxu0
  %v2539 = vpop.f32.mrf.mxu0
  %2540 = vdwg.mxu0
  %v2541 = vpack.c.bf16 %v2392, %v2392
  %v2542 = vld [vmem:[%s12] sm:$0xf]
  %v2544 = vsel %vm370, %v2541, 0
  %v2547 = vsel %vm807, %v2542, 0
  %2549 = vmatprep.subr.bf16.mxu0 0
  %2550 = vmatpush1.bf16.msra.mxu0 0
  %2551 = vmatprep.subr.bf16.mxu0 0
  %2552 = vmatpush1.bf16.msra.mxu0 0
  %2553 = vmatprep.subr.bf16.mxu0 0
  %2554 = vmatpush1.bf16.msra.mxu0 0
  %2555 = vmatprep.subr.bf16.mxu0 0
  %2556 = vmatpush1.bf16.msra.mxu0 0
  %2557 = vmatprep.subr.bf16.mxu0 0
  %2558 = vmatpush1.bf16.msra.mxu0 0
  %2559 = vmatprep.subr.bf16.mxu0 0
  %2560 = vmatpush1.bf16.msra.mxu0 0
  %2561 = vmatprep.subr.bf16.mxu0 0
  %2562 = vmatpush1.bf16.msra.mxu0 0
  %2563 = vmatprep.subr.bf16.mxu0 0
  %2564 = vmatpush1.bf16.msra.mxu0 %v2547
  %2565 = vmatprep.subr.bf16.mxu0 0
  %2566 = vmatpush2.bf16.msra.mxu0 0
  %2567 = vmatprep.subr.bf16.mxu0 0
  %2568 = vmatpush2.bf16.msra.mxu0 0
  %2569 = vmatprep.subr.bf16.mxu0 0
  %2570 = vmatpush2.bf16.msra.mxu0 0
  %2571 = vmatprep.subr.bf16.mxu0 0
  %2572 = vmatpush2.bf16.msra.mxu0 0
  %2573 = vmatprep.subr.bf16.mxu0 0
  %2574 = vmatpush2.bf16.msra.mxu0 0
  %2575 = vmatprep.subr.bf16.mxu0 0
  %2576 = vmatpush2.bf16.msra.mxu0 0
  %2577 = vmatprep.subr.bf16.mxu0 0
  %2578 = vmatpush2.bf16.msra.mxu0 0
  %2579 = vmatprep.subr.bf16.mxu0 0
  %2580 = vmatpush2.bf16.msra.mxu0 0
  %2581 = vmatprep.mubr.bf16.mxu0 0
  %2582 = vmatmul.mubr.bf16.gmra.mxu0 %v2544
  %v2583 = vpop.f32.mrf.mxu0
  %v2584 = vadd.f32 0.0, %v2583
  %v2585 = vpop.f32.mrf.mxu0
  %v2586 = vpop.f32.mrf.mxu0
  %v2587 = vpop.f32.mrf.mxu0
  %2588 = vdwg.mxu0
  %v2589 = vlaneseq
  %v2590 = vshrl.u32 %v2589, 7
  %v2591 = vsub.s32 3, %v2590
  %v2592 = vrot.slane %v86, %v2591
  %v2593 = vadd.f32 %v2592, %v2584
  %v2594 = vpack.c.bf16 %v2440, %v2440
  %s2595 = scalar_lea.vmem %s12, 4
  %v2596 = vld [vmem:[%s2595] sm:$0xf]
  %v2598 = vsel %vm370, %v2594, 0
  %v2601 = vsel %vm807, %v2596, 0
  %2603 = vmatprep.subr.bf16.mxu0 0
  %2604 = vmatpush1.bf16.msra.mxu0 0
  %2605 = vmatprep.subr.bf16.mxu0 0
  %2606 = vmatpush1.bf16.msra.mxu0 0
  %2607 = vmatprep.subr.bf16.mxu0 0
  %2608 = vmatpush1.bf16.msra.mxu0 0
  %2609 = vmatprep.subr.bf16.mxu0 0
  %2610 = vmatpush1.bf16.msra.mxu0 0
  %2611 = vmatprep.subr.bf16.mxu0 0
  %2612 = vmatpush1.bf16.msra.mxu0 0
  %2613 = vmatprep.subr.bf16.mxu0 0
  %2614 = vmatpush1.bf16.msra.mxu0 0
  %2615 = vmatprep.subr.bf16.mxu0 0
  %2616 = vmatpush1.bf16.msra.mxu0 0
  %2617 = vmatprep.subr.bf16.mxu0 0
  %2618 = vmatpush1.bf16.msra.mxu0 %v2601
  %2619 = vmatprep.subr.bf16.mxu0 0
  %2620 = vmatpush2.bf16.msra.mxu0 0
  %2621 = vmatprep.subr.bf16.mxu0 0
  %2622 = vmatpush2.bf16.msra.mxu0 0
  %2623 = vmatprep.subr.bf16.mxu0 0
  %2624 = vmatpush2.bf16.msra.mxu0 0
  %2625 = vmatprep.subr.bf16.mxu0 0
  %2626 = vmatpush2.bf16.msra.mxu0 0
  %2627 = vmatprep.subr.bf16.mxu0 0
  %2628 = vmatpush2.bf16.msra.mxu0 0
  %2629 = vmatprep.subr.bf16.mxu0 0
  %2630 = vmatpush2.bf16.msra.mxu0 0
  %2631 = vmatprep.subr.bf16.mxu0 0
  %2632 = vmatpush2.bf16.msra.mxu0 0
  %2633 = vmatprep.subr.bf16.mxu0 0
  %2634 = vmatpush2.bf16.msra.mxu0 0
  %2635 = vmatprep.mubr.bf16.mxu0 0
  %2636 = vmatmul.mubr.bf16.gmra.mxu0 %v2598
  %v2637 = vpop.f32.mrf.mxu0
  %v2638 = vadd.f32 0.0, %v2637
  %v2639 = vpop.f32.mrf.mxu0
  %v2640 = vpop.f32.mrf.mxu0
  %v2641 = vpop.f32.mrf.mxu0
  %2642 = vdwg.mxu0
  %v2643 = vadd.f32 %v2593, %v2638
  %v2644 = vpack.c.bf16 %v2488, %v2488
  %s2645 = scalar_lea.vmem %s12, 8
  %v2646 = vld [vmem:[%s2645] sm:$0xf]
  %v2648 = vsel %vm370, %v2644, 0
  %v2651 = vsel %vm807, %v2646, 0
  %2653 = vmatprep.subr.bf16.mxu0 0
  %2654 = vmatpush1.bf16.msra.mxu0 0
  %2655 = vmatprep.subr.bf16.mxu0 0
  %2656 = vmatpush1.bf16.msra.mxu0 0
  %2657 = vmatprep.subr.bf16.mxu0 0
  %2658 = vmatpush1.bf16.msra.mxu0 0
  %2659 = vmatprep.subr.bf16.mxu0 0
  %2660 = vmatpush1.bf16.msra.mxu0 0
  %2661 = vmatprep.subr.bf16.mxu0 0
  %2662 = vmatpush1.bf16.msra.mxu0 0
  %2663 = vmatprep.subr.bf16.mxu0 0
  %2664 = vmatpush1.bf16.msra.mxu0 0
  %2665 = vmatprep.subr.bf16.mxu0 0
  %2666 = vmatpush1.bf16.msra.mxu0 0
  %2667 = vmatprep.subr.bf16.mxu0 0
  %2668 = vmatpush1.bf16.msra.mxu0 %v2651
  %2669 = vmatprep.subr.bf16.mxu0 0
  %2670 = vmatpush2.bf16.msra.mxu0 0
  %2671 = vmatprep.subr.bf16.mxu0 0
  %2672 = vmatpush2.bf16.msra.mxu0 0
  %2673 = vmatprep.subr.bf16.mxu0 0
  %2674 = vmatpush2.bf16.msra.mxu0 0
  %2675 = vmatprep.subr.bf16.mxu0 0
  %2676 = vmatpush2.bf16.msra.mxu0 0
  %2677 = vmatprep.subr.bf16.mxu0 0
  %2678 = vmatpush2.bf16.msra.mxu0 0
  %2679 = vmatprep.subr.bf16.mxu0 0
  %2680 = vmatpush2.bf16.msra.mxu0 0
  %2681 = vmatprep.subr.bf16.mxu0 0
  %2682 = vmatpush2.bf16.msra.mxu0 0
  %2683 = vmatprep.subr.bf16.mxu0 0
  %2684 = vmatpush2.bf16.msra.mxu0 0
  %2685 = vmatprep.mubr.bf16.mxu0 0
  %2686 = vmatmul.mubr.bf16.gmra.mxu0 %v2648
  %v2687 = vpop.f32.mrf.mxu0
  %v2688 = vadd.f32 0.0, %v2687
  %v2689 = vpop.f32.mrf.mxu0
  %v2690 = vpop.f32.mrf.mxu0
  %v2691 = vpop.f32.mrf.mxu0
  %2692 = vdwg.mxu0
  %v2693 = vadd.f32 %v2643, %v2688
  %v2694 = vpack.c.bf16 %v2536, %v2536
  %s2695 = scalar_lea.vmem %s12, 12
  %v2696 = vld [vmem:[%s2695] sm:$0xf]
  %v2698 = vsel %vm370, %v2694, 0
  %v2701 = vsel %vm807, %v2696, 0
  %2703 = vmatprep.subr.bf16.mxu0 0
  %2704 = vmatpush1.bf16.msra.mxu0 0
  %2705 = vmatprep.subr.bf16.mxu0 0
  %2706 = vmatpush1.bf16.msra.mxu0 0
  %2707 = vmatprep.subr.bf16.mxu0 0
  %2708 = vmatpush1.bf16.msra.mxu0 0
  %2709 = vmatprep.subr.bf16.mxu0 0
  %2710 = vmatpush1.bf16.msra.mxu0 0
  %2711 = vmatprep.subr.bf16.mxu0 0
  %2712 = vmatpush1.bf16.msra.mxu0 0
  %2713 = vmatprep.subr.bf16.mxu0 0
  %2714 = vmatpush1.bf16.msra.mxu0 0
  %2715 = vmatprep.subr.bf16.mxu0 0
  %2716 = vmatpush1.bf16.msra.mxu0 0
  %2717 = vmatprep.subr.bf16.mxu0 0
  %2718 = vmatpush1.bf16.msra.mxu0 %v2701
  %2719 = vmatprep.subr.bf16.mxu0 0
  %2720 = vmatpush2.bf16.msra.mxu0 0
  %2721 = vmatprep.subr.bf16.mxu0 0
  %2722 = vmatpush2.bf16.msra.mxu0 0
  %2723 = vmatprep.subr.bf16.mxu0 0
  %2724 = vmatpush2.bf16.msra.mxu0 0
  %2725 = vmatprep.subr.bf16.mxu0 0
  %2726 = vmatpush2.bf16.msra.mxu0 0
  %2727 = vmatprep.subr.bf16.mxu0 0
  %2728 = vmatpush2.bf16.msra.mxu0 0
  %2729 = vmatprep.subr.bf16.mxu0 0
  %2730 = vmatpush2.bf16.msra.mxu0 0
  %2731 = vmatprep.subr.bf16.mxu0 0
  %2732 = vmatpush2.bf16.msra.mxu0 0
  %2733 = vmatprep.subr.bf16.mxu0 0
  %2734 = vmatpush2.bf16.msra.mxu0 0
  %2735 = vmatprep.mubr.bf16.mxu0 0
  %2736 = vmatmul.mubr.bf16.gmra.mxu0 %v2698
  %v2737 = vpop.f32.mrf.mxu0
  %v2738 = vadd.f32 0.0, %v2737
  %v2739 = vpop.f32.mrf.mxu0
  %v2740 = vpop.f32.mrf.mxu0
  %v2741 = vpop.f32.mrf.mxu0
  %2742 = vdwg.mxu0
  %v2743 = vadd.f32 %v2693, %v2738
  %v2744 = vld [vmem:[%s3] sm:$0xff]
  %v2745 = vpack.c.bf16 %v1999, %v1999
  %2747 = vrot.lane.b32.xlu0 %v2745, 120
  %v2748 = vpop.permute.xlu0 %2747
  %2749 = vrot.lane.b32.xlu0 %v2745, 112
  %v2750 = vpop.permute.xlu0 %2749
  %2751 = vrot.lane.b32.xlu0 %v2745, 104
  %v2752 = vpop.permute.xlu0 %2751
  %v2753 = vpack.c.bf16 %v2075, %v2064
  %2755 = vrot.lane.b32.xlu0 %v2753, 120
  %v2756 = vpop.permute.xlu0 %2755
  %2757 = vrot.lane.b32.xlu0 %v2753, 112
  %v2758 = vpop.permute.xlu0 %2757
  %2759 = vrot.lane.b32.xlu0 %v2753, 104
  %v2760 = vpop.permute.xlu0 %2759
  %v2761 = vpack.c.bf16 %v2080, %v2074
  %2763 = vrot.lane.b32.xlu0 %v2761, 120
  %v2764 = vpop.permute.xlu0 %2763
  %2765 = vrot.lane.b32.xlu0 %v2761, 112
  %v2766 = vpop.permute.xlu0 %2765
  %2767 = vrot.lane.b32.xlu0 %v2761, 104
  %v2768 = vpop.permute.xlu0 %2767
  %v2770 = vsel %vm370, %v2745, 0
  %v2773 = vsel %vm370, %v2753, 0
  %2775 = vmatprep.subr.bf16.mxu0 0
  %2776 = vmatpush1.bf16.xpose.msra.mxu0 0
  %2777 = vmatprep.subr.bf16.mxu0 0
  %2778 = vmatpush1.bf16.xpose.msra.mxu0 0
  %2779 = vmatprep.subr.bf16.mxu0 0
  %2780 = vmatpush1.bf16.xpose.msra.mxu0 0
  %2781 = vmatprep.subr.bf16.mxu0 0
  %2782 = vmatpush1.bf16.xpose.msra.mxu0 0
  %2783 = vmatprep.subr.bf16.mxu0 0
  %2784 = vmatpush1.bf16.xpose.msra.mxu0 0
  %2785 = vmatprep.subr.bf16.mxu0 0
  %2786 = vmatpush1.bf16.xpose.msra.mxu0 0
  %2787 = vmatprep.subr.bf16.mxu0 0
  %2788 = vmatpush1.bf16.xpose.msra.mxu0 0
  %2789 = vmatprep.subr.bf16.mxu0 0
  %2790 = vmatpush1.bf16.xpose.msra.mxu0 %v2773
  %2791 = vmatprep.subr.bf16.mxu0 0
  %2792 = vmatpush2.bf16.xpose.msra.mxu0 0
  %2793 = vmatprep.subr.bf16.mxu0 0
  %2794 = vmatpush2.bf16.xpose.msra.mxu0 0
  %2795 = vmatprep.subr.bf16.mxu0 0
  %2796 = vmatpush2.bf16.xpose.msra.mxu0 0
  %2797 = vmatprep.subr.bf16.mxu0 0
  %2798 = vmatpush2.bf16.xpose.msra.mxu0 0
  %2799 = vmatprep.subr.bf16.mxu0 0
  %2800 = vmatpush2.bf16.xpose.msra.mxu0 0
  %2801 = vmatprep.subr.bf16.mxu0 0
  %2802 = vmatpush2.bf16.xpose.msra.mxu0 0
  %2803 = vmatprep.subr.bf16.mxu0 0
  %2804 = vmatpush2.bf16.xpose.msra.mxu0 0
  %2805 = vmatprep.subr.bf16.mxu0 0
  %2806 = vmatpush2.bf16.xpose.msra.mxu0 0
  %2807 = vmatprep.mubr.bf16.mxu0 0
  %2808 = vmatmul.mubr.bf16.gmra.mxu0 %v2770
  %v2809 = vpop.f32.mrf.mxu0
  %v2810 = vadd.f32 0.0, %v2809
  %v2811 = vpop.f32.mrf.mxu0
  %v2812 = vpop.f32.mrf.mxu0
  %v2813 = vpop.f32.mrf.mxu0
  %2814 = vdwg.mxu0
  %v2816 = vsel %vm370, %v2748, 0
  %v2819 = vsel %vm370, %v2756, 0
  %2821 = vmatprep.subr.bf16.mxu0 0
  %2822 = vmatpush1.bf16.xpose.msra.mxu0 0
  %2823 = vmatprep.subr.bf16.mxu0 0
  %2824 = vmatpush1.bf16.xpose.msra.mxu0 0
  %2825 = vmatprep.subr.bf16.mxu0 0
  %2826 = vmatpush1.bf16.xpose.msra.mxu0 0
  %2827 = vmatprep.subr.bf16.mxu0 0
  %2828 = vmatpush1.bf16.xpose.msra.mxu0 0
  %2829 = vmatprep.subr.bf16.mxu0 0
  %2830 = vmatpush1.bf16.xpose.msra.mxu0 0
  %2831 = vmatprep.subr.bf16.mxu0 0
  %2832 = vmatpush1.bf16.xpose.msra.mxu0 0
  %2833 = vmatprep.subr.bf16.mxu0 0
  %2834 = vmatpush1.bf16.xpose.msra.mxu0 0
  %2835 = vmatprep.subr.bf16.mxu0 0
  %2836 = vmatpush1.bf16.xpose.msra.mxu0 %v2819
  %2837 = vmatprep.subr.bf16.mxu0 0
  %2838 = vmatpush2.bf16.xpose.msra.mxu0 0
  %2839 = vmatprep.subr.bf16.mxu0 0
  %2840 = vmatpush2.bf16.xpose.msra.mxu0 0
  %2841 = vmatprep.subr.bf16.mxu0 0
  %2842 = vmatpush2.bf16.xpose.msra.mxu0 0
  %2843 = vmatprep.subr.bf16.mxu0 0
  %2844 = vmatpush2.bf16.xpose.msra.mxu0 0
  %2845 = vmatprep.subr.bf16.mxu0 0
  %2846 = vmatpush2.bf16.xpose.msra.mxu0 0
  %2847 = vmatprep.subr.bf16.mxu0 0
  %2848 = vmatpush2.bf16.xpose.msra.mxu0 0
  %2849 = vmatprep.subr.bf16.mxu0 0
  %2850 = vmatpush2.bf16.xpose.msra.mxu0 0
  %2851 = vmatprep.subr.bf16.mxu0 0
  %2852 = vmatpush2.bf16.xpose.msra.mxu0 0
  %2853 = vmatprep.mubr.bf16.mxu0 0
  %2854 = vmatmul.mubr.bf16.gmra.mxu0 %v2816
  %v2855 = vpop.f32.mrf.mxu0
  %v2856 = vadd.f32 0.0, %v2855
  %v2857 = vpop.f32.mrf.mxu0
  %v2858 = vpop.f32.mrf.mxu0
  %v2859 = vpop.f32.mrf.mxu0
  %2860 = vdwg.mxu0
  %v2862 = vsel %vm370, %v2750, 0
  %v2865 = vsel %vm370, %v2758, 0
  %2867 = vmatprep.subr.bf16.mxu0 0
  %2868 = vmatpush1.bf16.xpose.msra.mxu0 0
  %2869 = vmatprep.subr.bf16.mxu0 0
  %2870 = vmatpush1.bf16.xpose.msra.mxu0 0
  %2871 = vmatprep.subr.bf16.mxu0 0
  %2872 = vmatpush1.bf16.xpose.msra.mxu0 0
  %2873 = vmatprep.subr.bf16.mxu0 0
  %2874 = vmatpush1.bf16.xpose.msra.mxu0 0
  %2875 = vmatprep.subr.bf16.mxu0 0
  %2876 = vmatpush1.bf16.xpose.msra.mxu0 0
  %2877 = vmatprep.subr.bf16.mxu0 0
  %2878 = vmatpush1.bf16.xpose.msra.mxu0 0
  %2879 = vmatprep.subr.bf16.mxu0 0
  %2880 = vmatpush1.bf16.xpose.msra.mxu0 0
  %2881 = vmatprep.subr.bf16.mxu0 0
  %2882 = vmatpush1.bf16.xpose.msra.mxu0 %v2865
  %2883 = vmatprep.subr.bf16.mxu0 0
  %2884 = vmatpush2.bf16.xpose.msra.mxu0 0
  %2885 = vmatprep.subr.bf16.mxu0 0
  %2886 = vmatpush2.bf16.xpose.msra.mxu0 0
  %2887 = vmatprep.subr.bf16.mxu0 0
  %2888 = vmatpush2.bf16.xpose.msra.mxu0 0
  %2889 = vmatprep.subr.bf16.mxu0 0
  %2890 = vmatpush2.bf16.xpose.msra.mxu0 0
  %2891 = vmatprep.subr.bf16.mxu0 0
  %2892 = vmatpush2.bf16.xpose.msra.mxu0 0
  %2893 = vmatprep.subr.bf16.mxu0 0
  %2894 = vmatpush2.bf16.xpose.msra.mxu0 0
  %2895 = vmatprep.subr.bf16.mxu0 0
  %2896 = vmatpush2.bf16.xpose.msra.mxu0 0
  %2897 = vmatprep.subr.bf16.mxu0 0
  %2898 = vmatpush2.bf16.xpose.msra.mxu0 0
  %2899 = vmatprep.mubr.bf16.mxu0 0
  %2900 = vmatmul.mubr.bf16.gmra.mxu0 %v2862
  %v2901 = vpop.f32.mrf.mxu0
  %v2902 = vadd.f32 0.0, %v2901
  %v2903 = vpop.f32.mrf.mxu0
  %v2904 = vpop.f32.mrf.mxu0
  %v2905 = vpop.f32.mrf.mxu0
  %2906 = vdwg.mxu0
  %v2908 = vsel %vm370, %v2752, 0
  %v2911 = vsel %vm370, %v2760, 0
  %2913 = vmatprep.subr.bf16.mxu0 0
  %2914 = vmatpush1.bf16.xpose.msra.mxu0 0
  %2915 = vmatprep.subr.bf16.mxu0 0
  %2916 = vmatpush1.bf16.xpose.msra.mxu0 0
  %2917 = vmatprep.subr.bf16.mxu0 0
  %2918 = vmatpush1.bf16.xpose.msra.mxu0 0
  %2919 = vmatprep.subr.bf16.mxu0 0
  %2920 = vmatpush1.bf16.xpose.msra.mxu0 0
  %2921 = vmatprep.subr.bf16.mxu0 0
  %2922 = vmatpush1.bf16.xpose.msra.mxu0 0
  %2923 = vmatprep.subr.bf16.mxu0 0
  %2924 = vmatpush1.bf16.xpose.msra.mxu0 0
  %2925 = vmatprep.subr.bf16.mxu0 0
  %2926 = vmatpush1.bf16.xpose.msra.mxu0 0
  %2927 = vmatprep.subr.bf16.mxu0 0
  %2928 = vmatpush1.bf16.xpose.msra.mxu0 %v2911
  %2929 = vmatprep.subr.bf16.mxu0 0
  %2930 = vmatpush2.bf16.xpose.msra.mxu0 0
  %2931 = vmatprep.subr.bf16.mxu0 0
  %2932 = vmatpush2.bf16.xpose.msra.mxu0 0
  %2933 = vmatprep.subr.bf16.mxu0 0
  %2934 = vmatpush2.bf16.xpose.msra.mxu0 0
  %2935 = vmatprep.subr.bf16.mxu0 0
  %2936 = vmatpush2.bf16.xpose.msra.mxu0 0
  %2937 = vmatprep.subr.bf16.mxu0 0
  %2938 = vmatpush2.bf16.xpose.msra.mxu0 0
  %2939 = vmatprep.subr.bf16.mxu0 0
  %2940 = vmatpush2.bf16.xpose.msra.mxu0 0
  %2941 = vmatprep.subr.bf16.mxu0 0
  %2942 = vmatpush2.bf16.xpose.msra.mxu0 0
  %2943 = vmatprep.subr.bf16.mxu0 0
  %2944 = vmatpush2.bf16.xpose.msra.mxu0 0
  %2945 = vmatprep.mubr.bf16.mxu0 0
  %2946 = vmatmul.mubr.bf16.gmra.mxu0 %v2908
  %v2947 = vpop.f32.mrf.mxu0
  %v2948 = vadd.f32 0.0, %v2947
  %v2949 = vpop.f32.mrf.mxu0
  %v2950 = vpop.f32.mrf.mxu0
  %v2951 = vpop.f32.mrf.mxu0
  %2952 = vdwg.mxu0
  %v2953 = vmul.f32 %v2810, 0.35355338
  %v2954 = vmul.f32 %v2856, 0.35355338
  %v2955 = vmul.f32 %v2902, 0.35355338
  %v2956 = vmul.f32 %v2948, 0.35355338
  %v2957 = vadd.f32 %v2953, %v2744
  %v2958 = vadd.f32 %v2954, %v2744
  %v2959 = vadd.f32 %v2955, %v2744
  %v2960 = vadd.f32 %v2956, %v2744
  %v2961 = vsel %vm2299, %v2957, -inf
  %2962 = vmax.xlane.f32.xlu0 %v2961
  %v2963 = vpop.xlane.xlu0 %2962
  %v2964 = vsel %vm2299, %v2958, -inf
  %2965 = vmax.xlane.f32.xlu0 %v2964
  %v2966 = vpop.xlane.xlu0 %2965
  %v2967 = vsel %vm2299, %v2959, -inf
  %2968 = vmax.xlane.f32.xlu0 %v2967
  %v2969 = vpop.xlane.xlu0 %2968
  %v2970 = vsel %vm2299, %v2960, -inf
  %2971 = vmax.xlane.f32.xlu0 %v2970
  %v2972 = vpop.xlane.xlu0 %2971
  %v2973 = vsub.f32 %v2957, %v2963
  %v2974 = vsub.f32 %v2958, %v2966
  %v2975 = vsub.f32 %v2959, %v2969
  %v2976 = vsub.f32 %v2960, %v2972
  %v2977 = vmul.f32 %v2973, 1.442695
  %v2978 = vpow.pop %v2977
  %v2979 = vmul.f32 %v2974, 1.442695
  %v2980 = vpow.pop %v2979
  %v2981 = vmul.f32 %v2975, 1.442695
  %v2982 = vpow.pop %v2981
  %v2983 = vmul.f32 %v2976, 1.442695
  %v2984 = vpow.pop %v2983
  %v2985 = vsel %vm2299, %v2978, 0.0
  %2986 = vadd.xlane.f32.xlu0 %v2985
  %v2987 = vpop.xlane.xlu0 %2986
  %v2988 = vsel %vm2299, %v2980, 0.0
  %2989 = vadd.xlane.f32.xlu0 %v2988
  %v2990 = vpop.xlane.xlu0 %2989
  %v2991 = vsel %vm2299, %v2982, 0.0
  %2992 = vadd.xlane.f32.xlu0 %v2991
  %v2993 = vpop.xlane.xlu0 %2992
  %v2994 = vsel %vm2299, %v2984, 0.0
  %2995 = vadd.xlane.f32.xlu0 %v2994
  %v2996 = vpop.xlane.xlu0 %2995
  %v2997 = vrcp.pop %v2987
  %v2998 = vmul.f32 %v2978, %v2997
  %v2999 = vrcp.pop %v2990
  %v3000 = vmul.f32 %v2980, %v2999
  %v3001 = vrcp.pop %v2993
  %v3002 = vmul.f32 %v2982, %v3001
  %v3003 = vrcp.pop %v2996
  %v3004 = vmul.f32 %v2984, %v3003
  %v3005 = vpack.c.bf16 %v2998, %v2998
  %v3006 = vpack.c.bf16 %v3000, %v3000
  %v3007 = vpack.c.bf16 %v3002, %v3002
  %v3008 = vpack.c.bf16 %v3004, %v3004
  %3009 = vrot.lane.b32.xlu0 %v2761, 96
  %v3010 = vpop.permute.xlu0 %3009
  %v3012 = vsel %vm2299, %v3005, 0
  %v3015 = vsel %vm2353, %v3010, 0
  %3017 = vmatprep.subr.bf16.mxu0 0
  %3018 = vmatpush1.bf16.msra.mxu0 0
  %3019 = vmatprep.subr.bf16.mxu0 0
  %3020 = vmatpush1.bf16.msra.mxu0 0
  %3021 = vmatprep.subr.bf16.mxu0 0
  %3022 = vmatpush1.bf16.msra.mxu0 0
  %3023 = vmatprep.subr.bf16.mxu0 0
  %3024 = vmatpush1.bf16.msra.mxu0 0
  %3025 = vmatprep.subr.bf16.mxu0 0
  %3026 = vmatpush1.bf16.msra.mxu0 0
  %3027 = vmatprep.subr.bf16.mxu0 0
  %3028 = vmatpush1.bf16.msra.mxu0 0
  %3029 = vmatprep.subr.bf16.mxu0 0
  %3030 = vmatpush1.bf16.msra.mxu0 0
  %3031 = vmatprep.subr.bf16.mxu0 0
  %3032 = vmatpush1.bf16.msra.mxu0 %v3015
  %3033 = vmatprep.subr.bf16.mxu0 0
  %3034 = vmatpush2.bf16.msra.mxu0 0
  %3035 = vmatprep.subr.bf16.mxu0 0
  %3036 = vmatpush2.bf16.msra.mxu0 0
  %3037 = vmatprep.subr.bf16.mxu0 0
  %3038 = vmatpush2.bf16.msra.mxu0 0
  %3039 = vmatprep.subr.bf16.mxu0 0
  %3040 = vmatpush2.bf16.msra.mxu0 0
  %3041 = vmatprep.subr.bf16.mxu0 0
  %3042 = vmatpush2.bf16.msra.mxu0 0
  %3043 = vmatprep.subr.bf16.mxu0 0
  %3044 = vmatpush2.bf16.msra.mxu0 0
  %3045 = vmatprep.subr.bf16.mxu0 0
  %3046 = vmatpush2.bf16.msra.mxu0 0
  %3047 = vmatprep.subr.bf16.mxu0 0
  %3048 = vmatpush2.bf16.msra.mxu0 0
  %3049 = vmatprep.mubr.bf16.mxu0 0
  %3050 = vmatmul.mubr.bf16.gmra.mxu0 %v3012
  %v3051 = vpop.f32.mrf.mxu0
  %v3052 = vadd.f32 0.0, %v3051
  %v3053 = vpop.f32.mrf.mxu0
  %v3054 = vpop.f32.mrf.mxu0
  %v3055 = vpop.f32.mrf.mxu0
  %3056 = vdwg.mxu0
  %3057 = vrot.lane.b32.xlu0 %v2764, 96
  %v3058 = vpop.permute.xlu0 %3057
  %v3060 = vsel %vm2299, %v3006, 0
  %v3063 = vsel %vm2353, %v3058, 0
  %3065 = vmatprep.subr.bf16.mxu0 0
  %3066 = vmatpush1.bf16.msra.mxu0 0
  %3067 = vmatprep.subr.bf16.mxu0 0
  %3068 = vmatpush1.bf16.msra.mxu0 0
  %3069 = vmatprep.subr.bf16.mxu0 0
  %3070 = vmatpush1.bf16.msra.mxu0 0
  %3071 = vmatprep.subr.bf16.mxu0 0
  %3072 = vmatpush1.bf16.msra.mxu0 0
  %3073 = vmatprep.subr.bf16.mxu0 0
  %3074 = vmatpush1.bf16.msra.mxu0 0
  %3075 = vmatprep.subr.bf16.mxu0 0
  %3076 = vmatpush1.bf16.msra.mxu0 0
  %3077 = vmatprep.subr.bf16.mxu0 0
  %3078 = vmatpush1.bf16.msra.mxu0 0
  %3079 = vmatprep.subr.bf16.mxu0 0
  %3080 = vmatpush1.bf16.msra.mxu0 %v3063
  %3081 = vmatprep.subr.bf16.mxu0 0
  %3082 = vmatpush2.bf16.msra.mxu0 0
  %3083 = vmatprep.subr.bf16.mxu0 0
  %3084 = vmatpush2.bf16.msra.mxu0 0
  %3085 = vmatprep.subr.bf16.mxu0 0
  %3086 = vmatpush2.bf16.msra.mxu0 0
  %3087 = vmatprep.subr.bf16.mxu0 0
  %3088 = vmatpush2.bf16.msra.mxu0 0
  %3089 = vmatprep.subr.bf16.mxu0 0
  %3090 = vmatpush2.bf16.msra.mxu0 0
  %3091 = vmatprep.subr.bf16.mxu0 0
  %3092 = vmatpush2.bf16.msra.mxu0 0
  %3093 = vmatprep.subr.bf16.mxu0 0
  %3094 = vmatpush2.bf16.msra.mxu0 0
  %3095 = vmatprep.subr.bf16.mxu0 0
  %3096 = vmatpush2.bf16.msra.mxu0 0
  %3097 = vmatprep.mubr.bf16.mxu0 0
  %3098 = vmatmul.mubr.bf16.gmra.mxu0 %v3060
  %v3099 = vpop.f32.mrf.mxu0
  %v3100 = vadd.f32 0.0, %v3099
  %v3101 = vpop.f32.mrf.mxu0
  %v3102 = vpop.f32.mrf.mxu0
  %v3103 = vpop.f32.mrf.mxu0
  %3104 = vdwg.mxu0
  %3105 = vrot.lane.b32.xlu0 %v2766, 96
  %v3106 = vpop.permute.xlu0 %3105
  %v3108 = vsel %vm2299, %v3007, 0
  %v3111 = vsel %vm2353, %v3106, 0
  %3113 = vmatprep.subr.bf16.mxu0 0
  %3114 = vmatpush1.bf16.msra.mxu0 0
  %3115 = vmatprep.subr.bf16.mxu0 0
  %3116 = vmatpush1.bf16.msra.mxu0 0
  %3117 = vmatprep.subr.bf16.mxu0 0
  %3118 = vmatpush1.bf16.msra.mxu0 0
  %3119 = vmatprep.subr.bf16.mxu0 0
  %3120 = vmatpush1.bf16.msra.mxu0 0
  %3121 = vmatprep.subr.bf16.mxu0 0
  %3122 = vmatpush1.bf16.msra.mxu0 0
  %3123 = vmatprep.subr.bf16.mxu0 0
  %3124 = vmatpush1.bf16.msra.mxu0 0
  %3125 = vmatprep.subr.bf16.mxu0 0
  %3126 = vmatpush1.bf16.msra.mxu0 0
  %3127 = vmatprep.subr.bf16.mxu0 0
  %3128 = vmatpush1.bf16.msra.mxu0 %v3111
  %3129 = vmatprep.subr.bf16.mxu0 0
  %3130 = vmatpush2.bf16.msra.mxu0 0
  %3131 = vmatprep.subr.bf16.mxu0 0
  %3132 = vmatpush2.bf16.msra.mxu0 0
  %3133 = vmatprep.subr.bf16.mxu0 0
  %3134 = vmatpush2.bf16.msra.mxu0 0
  %3135 = vmatprep.subr.bf16.mxu0 0
  %3136 = vmatpush2.bf16.msra.mxu0 0
  %3137 = vmatprep.subr.bf16.mxu0 0
  %3138 = vmatpush2.bf16.msra.mxu0 0
  %3139 = vmatprep.subr.bf16.mxu0 0
  %3140 = vmatpush2.bf16.msra.mxu0 0
  %3141 = vmatprep.subr.bf16.mxu0 0
  %3142 = vmatpush2.bf16.msra.mxu0 0
  %3143 = vmatprep.subr.bf16.mxu0 0
  %3144 = vmatpush2.bf16.msra.mxu0 0
  %3145 = vmatprep.mubr.bf16.mxu0 0
  %3146 = vmatmul.mubr.bf16.gmra.mxu0 %v3108
  %v3147 = vpop.f32.mrf.mxu0
  %v3148 = vadd.f32 0.0, %v3147
  %v3149 = vpop.f32.mrf.mxu0
  %v3150 = vpop.f32.mrf.mxu0
  %v3151 = vpop.f32.mrf.mxu0
  %3152 = vdwg.mxu0
  %3153 = vrot.lane.b32.xlu0 %v2768, 96
  %v3154 = vpop.permute.xlu0 %3153
  %v3156 = vsel %vm2299, %v3008, 0
  %v3159 = vsel %vm2353, %v3154, 0
  %3161 = vmatprep.subr.bf16.mxu0 0
  %3162 = vmatpush1.bf16.msra.mxu0 0
  %3163 = vmatprep.subr.bf16.mxu0 0
  %3164 = vmatpush1.bf16.msra.mxu0 0
  %3165 = vmatprep.subr.bf16.mxu0 0
  %3166 = vmatpush1.bf16.msra.mxu0 0
  %3167 = vmatprep.subr.bf16.mxu0 0
  %3168 = vmatpush1.bf16.msra.mxu0 0
  %3169 = vmatprep.subr.bf16.mxu0 0
  %3170 = vmatpush1.bf16.msra.mxu0 0
  %3171 = vmatprep.subr.bf16.mxu0 0
  %3172 = vmatpush1.bf16.msra.mxu0 0
  %3173 = vmatprep.subr.bf16.mxu0 0
  %3174 = vmatpush1.bf16.msra.mxu0 0
  %3175 = vmatprep.subr.bf16.mxu0 0
  %3176 = vmatpush1.bf16.msra.mxu0 %v3159
  %3177 = vmatprep.subr.bf16.mxu0 0
  %3178 = vmatpush2.bf16.msra.mxu0 0
  %3179 = vmatprep.subr.bf16.mxu0 0
  %3180 = vmatpush2.bf16.msra.mxu0 0
  %3181 = vmatprep.subr.bf16.mxu0 0
  %3182 = vmatpush2.bf16.msra.mxu0 0
  %3183 = vmatprep.subr.bf16.mxu0 0
  %3184 = vmatpush2.bf16.msra.mxu0 0
  %3185 = vmatprep.subr.bf16.mxu0 0
  %3186 = vmatpush2.bf16.msra.mxu0 0
  %3187 = vmatprep.subr.bf16.mxu0 0
  %3188 = vmatpush2.bf16.msra.mxu0 0
  %3189 = vmatprep.subr.bf16.mxu0 0
  %3190 = vmatpush2.bf16.msra.mxu0 0
  %3191 = vmatprep.subr.bf16.mxu0 0
  %3192 = vmatpush2.bf16.msra.mxu0 0
  %3193 = vmatprep.mubr.bf16.mxu0 0
  %3194 = vmatmul.mubr.bf16.gmra.mxu0 %v3156
  %v3195 = vpop.f32.mrf.mxu0
  %v3196 = vadd.f32 0.0, %v3195
  %v3197 = vpop.f32.mrf.mxu0
  %v3198 = vpop.f32.mrf.mxu0
  %v3199 = vpop.f32.mrf.mxu0
  %3200 = vdwg.mxu0
  %v3201 = vpack.c.bf16 %v3052, %v3052
  %v3202 = vld [vmem:[%s12] sm:$0xf]
  %v3204 = vsel %vm370, %v3201, 0
  %v3207 = vsel %vm807, %v3202, 0
  %3209 = vmatprep.subr.bf16.mxu0 0
  %3210 = vmatpush1.bf16.msra.mxu0 0
  %3211 = vmatprep.subr.bf16.mxu0 0
  %3212 = vmatpush1.bf16.msra.mxu0 0
  %3213 = vmatprep.subr.bf16.mxu0 0
  %3214 = vmatpush1.bf16.msra.mxu0 0
  %3215 = vmatprep.subr.bf16.mxu0 0
  %3216 = vmatpush1.bf16.msra.mxu0 0
  %3217 = vmatprep.subr.bf16.mxu0 0
  %3218 = vmatpush1.bf16.msra.mxu0 0
  %3219 = vmatprep.subr.bf16.mxu0 0
  %3220 = vmatpush1.bf16.msra.mxu0 0
  %3221 = vmatprep.subr.bf16.mxu0 0
  %3222 = vmatpush1.bf16.msra.mxu0 0
  %3223 = vmatprep.subr.bf16.mxu0 0
  %3224 = vmatpush1.bf16.msra.mxu0 %v3207
  %3225 = vmatprep.subr.bf16.mxu0 0
  %3226 = vmatpush2.bf16.msra.mxu0 0
  %3227 = vmatprep.subr.bf16.mxu0 0
  %3228 = vmatpush2.bf16.msra.mxu0 0
  %3229 = vmatprep.subr.bf16.mxu0 0
  %3230 = vmatpush2.bf16.msra.mxu0 0
  %3231 = vmatprep.subr.bf16.mxu0 0
  %3232 = vmatpush2.bf16.msra.mxu0 0
  %3233 = vmatprep.subr.bf16.mxu0 0
  %3234 = vmatpush2.bf16.msra.mxu0 0
  %3235 = vmatprep.subr.bf16.mxu0 0
  %3236 = vmatpush2.bf16.msra.mxu0 0
  %3237 = vmatprep.subr.bf16.mxu0 0
  %3238 = vmatpush2.bf16.msra.mxu0 0
  %3239 = vmatprep.subr.bf16.mxu0 0
  %3240 = vmatpush2.bf16.msra.mxu0 0
  %3241 = vmatprep.mubr.bf16.mxu0 0
  %3242 = vmatmul.mubr.bf16.gmra.mxu0 %v3204
  %v3243 = vpop.f32.mrf.mxu0
  %v3244 = vadd.f32 0.0, %v3243
  %v3245 = vpop.f32.mrf.mxu0
  %v3246 = vpop.f32.mrf.mxu0
  %v3247 = vpop.f32.mrf.mxu0
  %3248 = vdwg.mxu0
  %v3249 = vadd.f32 %v2592, %v3244
  %v3250 = vpack.c.bf16 %v3100, %v3100
  %v3251 = vld [vmem:[%s2595] sm:$0xf]
  %v3253 = vsel %vm370, %v3250, 0
  %v3256 = vsel %vm807, %v3251, 0
  %3258 = vmatprep.subr.bf16.mxu0 0
  %3259 = vmatpush1.bf16.msra.mxu0 0
  %3260 = vmatprep.subr.bf16.mxu0 0
  %3261 = vmatpush1.bf16.msra.mxu0 0
  %3262 = vmatprep.subr.bf16.mxu0 0
  %3263 = vmatpush1.bf16.msra.mxu0 0
  %3264 = vmatprep.subr.bf16.mxu0 0
  %3265 = vmatpush1.bf16.msra.mxu0 0
  %3266 = vmatprep.subr.bf16.mxu0 0
  %3267 = vmatpush1.bf16.msra.mxu0 0
  %3268 = vmatprep.subr.bf16.mxu0 0
  %3269 = vmatpush1.bf16.msra.mxu0 0
  %3270 = vmatprep.subr.bf16.mxu0 0
  %3271 = vmatpush1.bf16.msra.mxu0 0
  %3272 = vmatprep.subr.bf16.mxu0 0
  %3273 = vmatpush1.bf16.msra.mxu0 %v3256
  %3274 = vmatprep.subr.bf16.mxu0 0
  %3275 = vmatpush2.bf16.msra.mxu0 0
  %3276 = vmatprep.subr.bf16.mxu0 0
  %3277 = vmatpush2.bf16.msra.mxu0 0
  %3278 = vmatprep.subr.bf16.mxu0 0
  %3279 = vmatpush2.bf16.msra.mxu0 0
  %3280 = vmatprep.subr.bf16.mxu0 0
  %3281 = vmatpush2.bf16.msra.mxu0 0
  %3282 = vmatprep.subr.bf16.mxu0 0
  %3283 = vmatpush2.bf16.msra.mxu0 0
  %3284 = vmatprep.subr.bf16.mxu0 0
  %3285 = vmatpush2.bf16.msra.mxu0 0
  %3286 = vmatprep.subr.bf16.mxu0 0
  %3287 = vmatpush2.bf16.msra.mxu0 0
  %3288 = vmatprep.subr.bf16.mxu0 0
  %3289 = vmatpush2.bf16.msra.mxu0 0
  %3290 = vmatprep.mubr.bf16.mxu0 0
  %3291 = vmatmul.mubr.bf16.gmra.mxu0 %v3253
  %v3292 = vpop.f32.mrf.mxu0
  %v3293 = vadd.f32 0.0, %v3292
  %v3294 = vpop.f32.mrf.mxu0
  %v3295 = vpop.f32.mrf.mxu0
  %v3296 = vpop.f32.mrf.mxu0
  %3297 = vdwg.mxu0
  %v3298 = vadd.f32 %v3249, %v3293
  %v3299 = vpack.c.bf16 %v3148, %v3148
  %v3300 = vld [vmem:[%s2645] sm:$0xf]
  %v3302 = vsel %vm370, %v3299, 0
  %v3305 = vsel %vm807, %v3300, 0
  %3307 = vmatprep.subr.bf16.mxu0 0
  %3308 = vmatpush1.bf16.msra.mxu0 0
  %3309 = vmatprep.subr.bf16.mxu0 0
  %3310 = vmatpush1.bf16.msra.mxu0 0
  %3311 = vmatprep.subr.bf16.mxu0 0
  %3312 = vmatpush1.bf16.msra.mxu0 0
  %3313 = vmatprep.subr.bf16.mxu0 0
  %3314 = vmatpush1.bf16.msra.mxu0 0
  %3315 = vmatprep.subr.bf16.mxu0 0
  %3316 = vmatpush1.bf16.msra.mxu0 0
  %3317 = vmatprep.subr.bf16.mxu0 0
  %3318 = vmatpush1.bf16.msra.mxu0 0
  %3319 = vmatprep.subr.bf16.mxu0 0
  %3320 = vmatpush1.bf16.msra.mxu0 0
  %3321 = vmatprep.subr.bf16.mxu0 0
  %3322 = vmatpush1.bf16.msra.mxu0 %v3305
  %3323 = vmatprep.subr.bf16.mxu0 0
  %3324 = vmatpush2.bf16.msra.mxu0 0
  %3325 = vmatprep.subr.bf16.mxu0 0
  %3326 = vmatpush2.bf16.msra.mxu0 0
  %3327 = vmatprep.subr.bf16.mxu0 0
  %3328 = vmatpush2.bf16.msra.mxu0 0
  %3329 = vmatprep.subr.bf16.mxu0 0
  %3330 = vmatpush2.bf16.msra.mxu0 0
  %3331 = vmatprep.subr.bf16.mxu0 0
  %3332 = vmatpush2.bf16.msra.mxu0 0
  %3333 = vmatprep.subr.bf16.mxu0 0
  %3334 = vmatpush2.bf16.msra.mxu0 0
  %3335 = vmatprep.subr.bf16.mxu0 0
  %3336 = vmatpush2.bf16.msra.mxu0 0
  %3337 = vmatprep.subr.bf16.mxu0 0
  %3338 = vmatpush2.bf16.msra.mxu0 0
  %3339 = vmatprep.mubr.bf16.mxu0 0
  %3340 = vmatmul.mubr.bf16.gmra.mxu0 %v3302
  %v3341 = vpop.f32.mrf.mxu0
  %v3342 = vadd.f32 0.0, %v3341
  %v3343 = vpop.f32.mrf.mxu0
  %v3344 = vpop.f32.mrf.mxu0
  %v3345 = vpop.f32.mrf.mxu0
  %3346 = vdwg.mxu0
  %v3347 = vadd.f32 %v3298, %v3342
  %v3348 = vpack.c.bf16 %v3196, %v3196
  %v3349 = vld [vmem:[%s2695] sm:$0xf]
  %v3351 = vsel %vm370, %v3348, 0
  %v3354 = vsel %vm807, %v3349, 0
  %3356 = vmatprep.subr.bf16.mxu0 0
  %3357 = vmatpush1.bf16.msra.mxu0 0
  %3358 = vmatprep.subr.bf16.mxu0 0
  %3359 = vmatpush1.bf16.msra.mxu0 0
  %3360 = vmatprep.subr.bf16.mxu0 0
  %3361 = vmatpush1.bf16.msra.mxu0 0
  %3362 = vmatprep.subr.bf16.mxu0 0
  %3363 = vmatpush1.bf16.msra.mxu0 0
  %3364 = vmatprep.subr.bf16.mxu0 0
  %3365 = vmatpush1.bf16.msra.mxu0 0
  %3366 = vmatprep.subr.bf16.mxu0 0
  %3367 = vmatpush1.bf16.msra.mxu0 0
  %3368 = vmatprep.subr.bf16.mxu0 0
  %3369 = vmatpush1.bf16.msra.mxu0 0
  %3370 = vmatprep.subr.bf16.mxu0 0
  %3371 = vmatpush1.bf16.msra.mxu0 %v3354
  %3372 = vmatprep.subr.bf16.mxu0 0
  %3373 = vmatpush2.bf16.msra.mxu0 0
  %3374 = vmatprep.subr.bf16.mxu0 0
  %3375 = vmatpush2.bf16.msra.mxu0 0
  %3376 = vmatprep.subr.bf16.mxu0 0
  %3377 = vmatpush2.bf16.msra.mxu0 0
  %3378 = vmatprep.subr.bf16.mxu0 0
  %3379 = vmatpush2.bf16.msra.mxu0 0
  %3380 = vmatprep.subr.bf16.mxu0 0
  %3381 = vmatpush2.bf16.msra.mxu0 0
  %3382 = vmatprep.subr.bf16.mxu0 0
  %3383 = vmatpush2.bf16.msra.mxu0 0
  %3384 = vmatprep.subr.bf16.mxu0 0
  %3385 = vmatpush2.bf16.msra.mxu0 0
  %3386 = vmatprep.subr.bf16.mxu0 0
  %3387 = vmatpush2.bf16.msra.mxu0 0
  %3388 = vmatprep.mubr.bf16.mxu0 0
  %3389 = vmatmul.mubr.bf16.gmra.mxu0 %v3351
  %v3390 = vpop.f32.mrf.mxu0
  %v3391 = vadd.f32 0.0, %v3390
  %v3392 = vpop.f32.mrf.mxu0
  %v3393 = vpop.f32.mrf.mxu0
  %v3394 = vpop.f32.mrf.mxu0
  %3395 = vdwg.mxu0
  %v3396 = vadd.f32 %v3347, %v3391
  %v3397 = vadd.f32 %v1897, %v2743
  %v3398 = vadd.f32 %v1898, %v3396
  %3399 = vst.msk [vmem:[%s18] sm:$0xff] %vm87, %v3397
  %s3400 = scalar_lea.vmem %s18, 8
  %3401 = vst.msk [vmem:[%s3400] sm:$0xff] %vm87, %v3398
  // Predicated region
  $region74: #{hoi_transformer_forward.2} parent=0 // pred_check
    _
  $region75: #{hoi_transformer_forward.2} parent=0 // pred_check_branch
    %3403 = sbr.rel (0) target = $region77
  $region76: #{hoi_transformer_forward.2} parent=0 // pred_region
    _
  $region77: #{hoi_transformer_forward.2} parent=0 // pred_fallthru
    _
  // Predicated region
  $region78: #{hoi_transformer_forward.2} parent=0 // pred_check
    _
  $region79: #{hoi_transformer_forward.2} parent=0 // pred_check_branch
    %3405 = sbr.rel (0) target = $region81
  $region80: #{hoi_transformer_forward.2} parent=0 // pred_region
    _
  $region81: #{hoi_transformer_forward.2} parent=0 // pred_fallthru
    _

// kernel: hoi_transformer_forward.3
$region0: #{hoi_transformer_forward.3}
  #allocation0 [shape = 'u32[]', space=smem, size = 0x4, offset = 0x4, fixed_abs, tag = 'smem constant byte address 0x4 - core index']
  #allocation1 [shape = 'u32[144,128]{1,0:T(1,128)}', space=vmem, size = 0x12000, scoped, tag = 'internal scratch']
  %s0 = inlined_call_operand.vmem [shape: f32[2,8,32], index: 0, kind: input, shape index: {}]
  %s1 = inlined_call_operand.vmem [shape: bf16[2,16,32], index: 1, kind: input, shape index: {}]
  %s2 = inlined_call_operand.vmem [shape: f32[2,1,16], index: 2, kind: input, shape index: {}]
  %s3 = inlined_call_operand.vmem [shape: f32[8,12], index: 3, kind: input, shape index: {}]
  %s4 = inlined_call_operand.vmem [shape: f32[2,4,32], index: 4, kind: input, shape index: {}]
  %s5 = inlined_call_operand.vmem [shape: f32[6,32], index: 5, kind: input, shape index: {}]
  %s6 = inlined_call_operand.vmem [shape: bf16[32,32], index: 6, kind: input, shape index: {}]
  %s7 = inlined_call_operand.vmem [shape: bf16[32,64], index: 7, kind: input, shape index: {}]
  %s8 = inlined_call_operand.vmem [shape: bf16[4,8,32], index: 8, kind: input, shape index: {}]
  %s9 = inlined_call_operand.vmem [shape: f32[4,32], index: 9, kind: input, shape index: {}]
  %s10 = inlined_call_operand.vmem [shape: bf16[32,32], index: 10, kind: input, shape index: {}]
  %s11 = inlined_call_operand.vmem [shape: bf16[32,64], index: 11, kind: input, shape index: {}]
  %s12 = inlined_call_operand.vmem [shape: bf16[4,8,32], index: 12, kind: input, shape index: {}]
  %s13 = inlined_call_operand.vmem [shape: f32[4,32], index: 13, kind: input, shape index: {}]
  %s14 = inlined_call_operand.vmem [shape: bf16[32,128], index: 14, kind: input, shape index: {}]
  %s15 = inlined_call_operand.vmem [shape: f32[1,128], index: 15, kind: input, shape index: {}]
  %s16 = inlined_call_operand.vmem [shape: bf16[128,32], index: 16, kind: input, shape index: {}]
  %s17 = inlined_call_operand.vmem [shape: f32[1,32], index: 17, kind: input, shape index: {}]
  %s18 = inlined_call_operand.vmem [shape: f32[2,8,32], index: 18, kind: output, shape index: {0}]
  %s19 = inlined_call_operand.hbm [shape: f32[2,8,16], index: 19, kind: output, shape index: {1}]
  %20 = xla_tuple %s18, %s19
  %s21 = sld [smem:[#allocation0]]
  $region90: #{hoi_transformer_forward.3} parent=0
    _
  %s23 = ssub.s32 1, %s21
  %s24 = scalar_select 0, %s23, %s21
  $region1: #{hoi_transformer_forward.3} parent=0
    #allocation2 [shape = 'u8[8192]{0}', space=vmem, size = 0x2000, scoped, tag = 'output window, operand 1, single buffered']
    #allocation3 [shape = 's32[1]{0}', space=sflag, size = 0x4, scoped, tag = 'scoped memory for hoi_transformer_forward.3']
    %25 = vsyncpa [#allocation3], 0
    // Predicated region
    $region2: #{hoi_transformer_forward.3} parent=1 // pred_check
      _
    $region3: #{hoi_transformer_forward.3} parent=1 // pred_check_branch
      %27 = sbr.rel (0) target = $region5
    $region4: #{hoi_transformer_forward.3} parent=1 // pred_region
      _
    $region5: #{hoi_transformer_forward.3} parent=1 // pred_fallthru
      _
    // Predicated region
    $region6: #{hoi_transformer_forward.3} parent=1 // pred_check
      _
    $region7: #{hoi_transformer_forward.3} parent=1 // pred_check_branch
      %29 = sbr.rel (0) target = $region9
    $region8: #{hoi_transformer_forward.3} parent=1 // pred_region
      _
    $region9: #{hoi_transformer_forward.3} parent=1 // pred_fallthru
      _
    // Predicated region
    $region10: #{hoi_transformer_forward.3} parent=1 // pred_check
      _
    $region11: #{hoi_transformer_forward.3} parent=1 // pred_check_branch
      %31 = sbr.rel (0) target = $region13
    $region12: #{hoi_transformer_forward.3} parent=1 // pred_region
      _
    $region13: #{hoi_transformer_forward.3} parent=1 // pred_fallthru
      _
    // Predicated region
    $region14: #{hoi_transformer_forward.3} parent=1 // pred_check
      _
    $region15: #{hoi_transformer_forward.3} parent=1 // pred_check_branch
      %33 = sbr.rel (0) target = $region17
    $region16: #{hoi_transformer_forward.3} parent=1 // pred_region
      _
    $region17: #{hoi_transformer_forward.3} parent=1 // pred_fallthru
      _
    // Predicated region
    $region18: #{hoi_transformer_forward.3} parent=1 // pred_check
      _
    $region19: #{hoi_transformer_forward.3} parent=1 // pred_check_branch
      %35 = sbr.rel (0) target = $region21
    $region20: #{hoi_transformer_forward.3} parent=1 // pred_region
      _
    $region21: #{hoi_transformer_forward.3} parent=1 // pred_fallthru
      _
    // Predicated region
    $region22: #{hoi_transformer_forward.3} parent=1 // pred_check
      _
    $region23: #{hoi_transformer_forward.3} parent=1 // pred_check_branch
      %37 = sbr.rel (0) target = $region25
    $region24: #{hoi_transformer_forward.3} parent=1 // pred_region
      _
    $region25: #{hoi_transformer_forward.3} parent=1 // pred_fallthru
      _
    // Predicated region
    $region26: #{hoi_transformer_forward.3} parent=1 // pred_check
      _
    $region27: #{hoi_transformer_forward.3} parent=1 // pred_check_branch
      %39 = sbr.rel (0) target = $region29
    $region28: #{hoi_transformer_forward.3} parent=1 // pred_region
      _
    $region29: #{hoi_transformer_forward.3} parent=1 // pred_fallthru
      _
    // Predicated region
    $region30: #{hoi_transformer_forward.3} parent=1 // pred_check
      _
    $region31: #{hoi_transformer_forward.3} parent=1 // pred_check_branch
      %41 = sbr.rel (0) target = $region33
    $region32: #{hoi_transformer_forward.3} parent=1 // pred_region
      _
    $region33: #{hoi_transformer_forward.3} parent=1 // pred_fallthru
      _
    // Predicated region
    $region34: #{hoi_transformer_forward.3} parent=1 // pred_check
      _
    $region35: #{hoi_transformer_forward.3} parent=1 // pred_check_branch
      %43 = sbr.rel (0) target = $region37
    $region36: #{hoi_transformer_forward.3} parent=1 // pred_region
      _
    $region37: #{hoi_transformer_forward.3} parent=1 // pred_fallthru
      _
    // Predicated region
    $region38: #{hoi_transformer_forward.3} parent=1 // pred_check
      _
    $region39: #{hoi_transformer_forward.3} parent=1 // pred_check_branch
      %45 = sbr.rel (0) target = $region41
    $region40: #{hoi_transformer_forward.3} parent=1 // pred_region
      _
    $region41: #{hoi_transformer_forward.3} parent=1 // pred_fallthru
      _
    // Predicated region
    $region42: #{hoi_transformer_forward.3} parent=1 // pred_check
      _
    $region43: #{hoi_transformer_forward.3} parent=1 // pred_check_branch
      %47 = sbr.rel (0) target = $region45
    $region44: #{hoi_transformer_forward.3} parent=1 // pred_region
      _
    $region45: #{hoi_transformer_forward.3} parent=1 // pred_fallthru
      _
    // Predicated region
    $region46: #{hoi_transformer_forward.3} parent=1 // pred_check
      _
    $region47: #{hoi_transformer_forward.3} parent=1 // pred_check_branch
      %49 = sbr.rel (0) target = $region49
    $region48: #{hoi_transformer_forward.3} parent=1 // pred_region
      _
    $region49: #{hoi_transformer_forward.3} parent=1 // pred_fallthru
      _
    // Predicated region
    $region50: #{hoi_transformer_forward.3} parent=1 // pred_check
      _
    $region51: #{hoi_transformer_forward.3} parent=1 // pred_check_branch
      %51 = sbr.rel (0) target = $region53
    $region52: #{hoi_transformer_forward.3} parent=1 // pred_region
      _
    $region53: #{hoi_transformer_forward.3} parent=1 // pred_fallthru
      _
    // Predicated region
    $region54: #{hoi_transformer_forward.3} parent=1 // pred_check
      _
    $region55: #{hoi_transformer_forward.3} parent=1 // pred_check_branch
      %53 = sbr.rel (0) target = $region57
    $region56: #{hoi_transformer_forward.3} parent=1 // pred_region
      _
    $region57: #{hoi_transformer_forward.3} parent=1 // pred_fallthru
      _
    // Predicated region
    $region58: #{hoi_transformer_forward.3} parent=1 // pred_check
      _
    $region59: #{hoi_transformer_forward.3} parent=1 // pred_check_branch
      %55 = sbr.rel (0) target = $region61
    $region60: #{hoi_transformer_forward.3} parent=1 // pred_region
      _
    $region61: #{hoi_transformer_forward.3} parent=1 // pred_fallthru
      _
    // Predicated region
    $region62: #{hoi_transformer_forward.3} parent=1 // pred_check
      _
    $region63: #{hoi_transformer_forward.3} parent=1 // pred_check_branch
      %57 = sbr.rel (0) target = $region65
    $region64: #{hoi_transformer_forward.3} parent=1 // pred_region
      _
    $region65: #{hoi_transformer_forward.3} parent=1 // pred_fallthru
      _
    // Predicated region
    $region66: #{hoi_transformer_forward.3} parent=1 // pred_check
      _
    $region67: #{hoi_transformer_forward.3} parent=1 // pred_check_branch
      %59 = sbr.rel (0) target = $region69
    $region68: #{hoi_transformer_forward.3} parent=1 // pred_region
      _
    $region69: #{hoi_transformer_forward.3} parent=1 // pred_fallthru
      _
    // Predicated region
    $region70: #{hoi_transformer_forward.3} parent=1 // pred_check
      _
    $region71: #{hoi_transformer_forward.3} parent=1 // pred_check_branch
      %61 = sbr.rel (0) target = $region73
    $region72: #{hoi_transformer_forward.3} parent=1 // pred_region
      _
    $region73: #{hoi_transformer_forward.3} parent=1 // pred_fallthru
      _
    %v63 = vld [vmem:[%s0] sm:$0xff]
    %s64 = scalar_lea.vmem %s0, 8
    %v65 = vld [vmem:[%s64] sm:$0xff]
    %v66 = vld [vmem:[%s1] sm:$0xf]
    %v67 = vld [vmem:[%s1 + $0x4] sm:$0xf]
    %s68 = scalar_lea.vmem %s1, 8
    %v69 = vld [vmem:[%s68] sm:$0xf]
    %v70 = vld [vmem:[%s68 + $0x4] sm:$0xf]
    %v73 = vunpack.c.l.b16 %v66
    %v74 = vunpack.c.l.b16 %v67
    %v75 = vpack.c.b16 %v74, %v73
    %v79 = vunpack.c.l.b16 %v69
    %v80 = vunpack.c.l.b16 %v70
    %v81 = vpack.c.b16 %v80, %v79
    %v83 = vunpack.c.l.bf16 %v75
    %v84 = vunpack.c.h.bf16 %v75
    %v85 = vunpack.c.l.bf16 %v81
    %v86 = vunpack.c.h.bf16 %v81
    %v87 = vld [vmem:[%s5] sm:$0x3f]
    %v88 = vld [vmem:[%s9] sm:$0xf]
    %v89 = vld [vmem:[%s13] sm:$0xf]
    %vm90 = vcmask 261120
    %v91 = vsel %vm90, %v63, 0.0
    %92 = vadd.xlane.f32.xlu0 %v91
    %v93 = vpop.xlane.xlu0 %92
    %v94 = vsel %vm90, %v65, 0.0
    %95 = vadd.xlane.f32.xlu0 %v94
    %v96 = vpop.xlane.xlu0 %95
    %v97 = vrcp.pop 32.0
    %v98 = vmul.f32 %v93, %v97
    %v99 = vmul.f32 %v96, %v97
    %v100 = vsub.f32 %v63, %v98
    %v101 = vsub.f32 %v65, %v99
    %v102 = vmul.f32 %v100, %v100
    %v103 = vmul.f32 %v101, %v101
    %v104 = vsel %vm90, %v102, 0.0
    %105 = vadd.xlane.f32.xlu0 %v104
    %v106 = vpop.xlane.xlu0 %105
    %v107 = vsel %vm90, %v103, 0.0
    %108 = vadd.xlane.f32.xlu0 %v107
    %v109 = vpop.xlane.xlu0 %108
    %v110 = vmul.f32 %v106, %v97
    %v111 = vmul.f32 %v109, %v97
    %v112 = vadd.f32 %v110, 1e-05
    %v113 = vadd.f32 %v111, 1e-05
    %v114 = vrsqrt.pop %v112
    %v115 = vrsqrt.pop %v113
    %v116 = vmul.f32 %v100, %v114
    %v117 = vmul.f32 %v101, %v115
    %v118 = vlaneseq
    %v119 = vshrl.u32 %v118, 7
    %v120 = vsub.s32 0, %v119
    %v121 = vrot.slane %v87, %v120
    %v122 = vmul.f32 %v116, %v121
    %v123 = vmul.f32 %v117, %v121
    %v124 = vlaneseq
    %v125 = vshrl.u32 %v124, 7
    %v126 = vsub.s32 1, %v125
    %v127 = vrot.slane %v87, %v126
    %v128 = vadd.f32 %v122, %v127
    %v129 = vadd.f32 %v123, %v127
    %v130 = vsel %vm90, %v83, 0.0
    %131 = vadd.xlane.f32.xlu0 %v130
    %v132 = vpop.xlane.xlu0 %131
    %v133 = vsel %vm90, %v84, 0.0
    %134 = vadd.xlane.f32.xlu0 %v133
    %v135 = vpop.xlane.xlu0 %134
    %v136 = vsel %vm90, %v85, 0.0
    %137 = vadd.xlane.f32.xlu0 %v136
    %v138 = vpop.xlane.xlu0 %137
    %v139 = vsel %vm90, %v86, 0.0
    %140 = vadd.xlane.f32.xlu0 %v139
    %v141 = vpop.xlane.xlu0 %140
    %v142 = vmul.f32 %v132, %v97
    %v143 = vmul.f32 %v135, %v97
    %v144 = vmul.f32 %v138, %v97
    %v145 = vmul.f32 %v141, %v97
    %v146 = vsub.f32 %v83, %v142
    %v147 = vsub.f32 %v84, %v143
    %v148 = vsub.f32 %v85, %v144
    %v149 = vsub.f32 %v86, %v145
    %v150 = vmul.f32 %v146, %v146
    %v151 = vmul.f32 %v147, %v147
    %v152 = vmul.f32 %v148, %v148
    %v153 = vmul.f32 %v149, %v149
    %v154 = vsel %vm90, %v150, 0.0
    %155 = vadd.xlane.f32.xlu0 %v154
    %v156 = vpop.xlane.xlu0 %155
    %v157 = vsel %vm90, %v151, 0.0
    %158 = vadd.xlane.f32.xlu0 %v157
    %v159 = vpop.xlane.xlu0 %158
    %v160 = vsel %vm90, %v152, 0.0
    %161 = vadd.xlane.f32.xlu0 %v160
    %v162 = vpop.xlane.xlu0 %161
    %v163 = vsel %vm90, %v153, 0.0
    %164 = vadd.xlane.f32.xlu0 %v163
    %v165 = vpop.xlane.xlu0 %164
    %v166 = vmul.f32 %v156, %v97
    %v167 = vmul.f32 %v159, %v97
    %v168 = vmul.f32 %v162, %v97
    %v169 = vmul.f32 %v165, %v97
    %v170 = vadd.f32 %v166, 1e-05
    %v171 = vadd.f32 %v167, 1e-05
    %v172 = vadd.f32 %v168, 1e-05
    %v173 = vadd.f32 %v169, 1e-05
    %v174 = vrsqrt.pop %v170
    %v175 = vrsqrt.pop %v171
    %v176 = vrsqrt.pop %v172
    %v177 = vrsqrt.pop %v173
    %v178 = vmul.f32 %v146, %v174
    %v179 = vmul.f32 %v147, %v175
    %v180 = vmul.f32 %v148, %v176
    %v181 = vmul.f32 %v149, %v177
    %v182 = vmul.f32 %v178, %v121
    %v183 = vmul.f32 %v179, %v121
    %v184 = vmul.f32 %v180, %v121
    %v185 = vmul.f32 %v181, %v121
    %v186 = vadd.f32 %v182, %v127
    %v187 = vadd.f32 %v183, %v127
    %v188 = vadd.f32 %v184, %v127
    %v189 = vadd.f32 %v185, %v127
    %v190 = vpack.c.bf16 %v129, %v128
    %v191 = vld [vmem:[%s6] sm:$0xf]
    %v192 = vld [vmem:[%s6 + $0x4] sm:$0xf]
    %v193 = vld [vmem:[%s6 + $0x8] sm:$0xf]
    %v194 = vld [vmem:[%s6 + $0xc] sm:$0xf]
    %v195 = vlaneseq
    %v196 = vshrl.u32 %v195, 7
    %v197 = vsub.s32 0, %v196
    %v198 = vrot.slane %v88, %v197
    %v203 = vunpack.c.l.b16 %v191
    %v204 = vunpack.c.l.b16 %v192
    %v205 = vunpack.c.l.b16 %v193
    %v206 = vunpack.c.l.b16 %v194
    %v207 = vpack.c.b16 %v204, %v203
    %v208 = vpack.c.b16 %v206, %v205
    %v212 = vsel %vm90, %v190, 0
    %214 = vmatprep.subr.bf16.mxu0 0
    %215 = vmatpush1.bf16.msra.mxu0 0
    %216 = vmatprep.subr.bf16.mxu0 0
    %217 = vmatpush1.bf16.msra.mxu0 0
    %218 = vmatprep.subr.bf16.mxu0 0
    %219 = vmatpush1.bf16.msra.mxu0 0
    %220 = vmatprep.subr.bf16.mxu0 0
    %221 = vmatpush1.bf16.msra.mxu0 0
    %222 = vmatprep.subr.bf16.mxu0 0
    %223 = vmatpush1.bf16.msra.mxu0 0
    %224 = vmatprep.subr.bf16.mxu0 0
    %225 = vmatpush1.bf16.msra.mxu0 0
    %226 = vmatprep.subr.bf16.mxu0 0
    %227 = vmatpush1.bf16.msra.mxu0 %v208
    %228 = vmatprep.subr.bf16.mxu0 0
    %229 = vmatpush1.bf16.msra.mxu0 %v207
    %230 = vmatprep.subr.bf16.mxu0 0
    %231 = vmatpush2.bf16.msra.mxu0 0
    %232 = vmatprep.subr.bf16.mxu0 0
    %233 = vmatpush2.bf16.msra.mxu0 0
    %234 = vmatprep.subr.bf16.mxu0 0
    %235 = vmatpush2.bf16.msra.mxu0 0
    %236 = vmatprep.subr.bf16.mxu0 0
    %237 = vmatpush2.bf16.msra.mxu0 0
    %238 = vmatprep.subr.bf16.mxu0 0
    %239 = vmatpush2.bf16.msra.mxu0 0
    %240 = vmatprep.subr.bf16.mxu0 0
    %241 = vmatpush2.bf16.msra.mxu0 0
    %242 = vmatprep.subr.bf16.mxu0 0
    %243 = vmatpush2.bf16.msra.mxu0 0
    %244 = vmatprep.subr.bf16.mxu0 0
    %245 = vmatpush2.bf16.msra.mxu0 0
    %246 = vmatprep.mubr.bf16.mxu0 0
    %247 = vmatmul.mubr.bf16.gmra.mxu0 %v212
    %v248 = vpop.f32.mrf.mxu0
    %v249 = vadd.f32 %v198, %v248
    %v250 = vpop.f32.mrf.mxu0
    %v251 = vpop.f32.mrf.mxu0
    %v252 = vadd.f32 %v198, %v251
    %v253 = vpop.f32.mrf.mxu0
    %254 = vdwg.mxu0
    %v255 = vpack.c.bf16 %v187, %v186
    %v256 = vpack.c.bf16 %v189, %v188
    %v257 = vld [vmem:[%s7] sm:$0xf]
    %v258 = vld [vmem:[%s7 + $0x4] sm:$0xf]
    %v259 = vld [vmem:[%s7 + $0x8] sm:$0xf]
    %v260 = vld [vmem:[%s7 + $0xc] sm:$0xf]
    %v265 = vunpack.c.l.b16 %v257
    %v266 = vunpack.c.l.b16 %v258
    %v267 = vunpack.c.l.b16 %v259
    %v268 = vunpack.c.l.b16 %v260
    %v269 = vpack.c.b16 %v266, %v265
    %v270 = vpack.c.b16 %v268, %v267
    %v274 = vsel %vm90, %v255, 0
    %v277 = vsel %vm90, %v256, 0
    %279 = vmatprep.subr.bf16.mxu0 0
    %280 = vmatpush1.bf16.msra.mxu0 0
    %281 = vmatprep.subr.bf16.mxu0 0
    %282 = vmatpush1.bf16.msra.mxu0 0
    %283 = vmatprep.subr.bf16.mxu0 0
    %284 = vmatpush1.bf16.msra.mxu0 0
    %285 = vmatprep.subr.bf16.mxu0 0
    %286 = vmatpush1.bf16.msra.mxu0 0
    %287 = vmatprep.subr.bf16.mxu0 0
    %288 = vmatpush1.bf16.msra.mxu0 0
    %289 = vmatprep.subr.bf16.mxu0 0
    %290 = vmatpush1.bf16.msra.mxu0 0
    %291 = vmatprep.subr.bf16.mxu0 0
    %292 = vmatpush1.bf16.msra.mxu0 %v270
    %293 = vmatprep.subr.bf16.mxu0 0
    %294 = vmatpush1.bf16.msra.mxu0 %v269
    %295 = vmatprep.subr.bf16.mxu0 0
    %296 = vmatpush2.bf16.msra.mxu0 0
    %297 = vmatprep.subr.bf16.mxu0 0
    %298 = vmatpush2.bf16.msra.mxu0 0
    %299 = vmatprep.subr.bf16.mxu0 0
    %300 = vmatpush2.bf16.msra.mxu0 0
    %301 = vmatprep.subr.bf16.mxu0 0
    %302 = vmatpush2.bf16.msra.mxu0 0
    %303 = vmatprep.subr.bf16.mxu0 0
    %304 = vmatpush2.bf16.msra.mxu0 0
    %305 = vmatprep.subr.bf16.mxu0 0
    %306 = vmatpush2.bf16.msra.mxu0 0
    %307 = vmatprep.subr.bf16.mxu0 0
    %308 = vmatpush2.bf16.msra.mxu0 0
    %309 = vmatprep.subr.bf16.mxu0 0
    %310 = vmatpush2.bf16.msra.mxu0 0
    %311 = vmatprep.mubr.bf16.mxu0 0
    %312 = vmatmul.mubr.bf16.gmra.mxu0 %v274
    %v313 = vpop.f32.mrf.mxu0
    %v314 = vadd.f32 0.0, %v313
    %v315 = vpop.f32.mrf.mxu0
    %v316 = vpop.f32.mrf.mxu0
    %v317 = vadd.f32 0.0, %v316
    %v318 = vpop.f32.mrf.mxu0
    %319 = vmatprep.mubr.bf16.mxu0 0
    %320 = vmatmul.mubr.bf16.gmra.mxu0 %v277
    %v321 = vpop.f32.mrf.mxu0
    %v322 = vadd.f32 0.0, %v321
    %v323 = vpop.f32.mrf.mxu0
    %v324 = vpop.f32.mrf.mxu0
    %v325 = vadd.f32 0.0, %v324
    %v326 = vpop.f32.mrf.mxu0
    %327 = vdwg.mxu0
    %v328 = vlaneseq
    %v329 = vshrl.u32 %v328, 7
    %v330 = vsub.s32 1, %v329
    %v331 = vrot.slane %v88, %v330
    %v332 = vadd.f32 %v314, %v331
    %v333 = vadd.f32 %v317, %v331
    %v334 = vadd.f32 %v322, %v331
    %v335 = vadd.f32 %v325, %v331
    %v336 = vlaneseq
    %v337 = vshrl.u32 %v336, 7
    %v338 = vsub.s32 2, %v337
    %v339 = vrot.slane %v88, %v338
    %341 = vrot.lane.b32.xlu0 %v339, 32
    %v342 = vpop.permute.xlu0 %341
    %v344 = vadd.f32 %v314, %v342
    %v345 = vadd.f32 %v317, %v342
    %v346 = vadd.f32 %v322, %v342
    %v347 = vadd.f32 %v325, %v342
    %v348 = vld [vmem:[%s2] sm:$0x1]
    %v349 = vpack.c.bf16 %v249, %v249
    %351 = vrot.lane.b32.xlu0 %v349, 120
    %v352 = vpop.permute.xlu0 %351
    %353 = vrot.lane.b32.xlu0 %v349, 112
    %v354 = vpop.permute.xlu0 %353
    %355 = vrot.lane.b32.xlu0 %v349, 104
    %v356 = vpop.permute.xlu0 %355
    %v357 = vpack.c.bf16 %v333, %v332
    %359 = vrot.lane.b32.xlu0 %v357, 120
    %v360 = vpop.permute.xlu0 %359
    %361 = vrot.lane.b32.xlu0 %v357, 112
    %v362 = vpop.permute.xlu0 %361
    %363 = vrot.lane.b32.xlu0 %v357, 104
    %v364 = vpop.permute.xlu0 %363
    %v365 = vpack.c.bf16 %v345, %v344
    %367 = vrot.lane.b32.xlu0 %v365, 120
    %v368 = vpop.permute.xlu0 %367
    %369 = vrot.lane.b32.xlu0 %v365, 112
    %v370 = vpop.permute.xlu0 %369
    %371 = vrot.lane.b32.xlu0 %v365, 104
    %v372 = vpop.permute.xlu0 %371
    %vm373 = vcmask 64512
    %v375 = vsel %vm373, %v349, 0
    %v378 = vsel %vm373, %v357, 0
    %380 = vmatprep.subr.bf16.mxu0 0
    %381 = vmatpush1.bf16.xpose.msra.mxu0 0
    %382 = vmatprep.subr.bf16.mxu0 0
    %383 = vmatpush1.bf16.xpose.msra.mxu0 0
    %384 = vmatprep.subr.bf16.mxu0 0
    %385 = vmatpush1.bf16.xpose.msra.mxu0 0
    %386 = vmatprep.subr.bf16.mxu0 0
    %387 = vmatpush1.bf16.xpose.msra.mxu0 0
    %388 = vmatprep.subr.bf16.mxu0 0
    %389 = vmatpush1.bf16.xpose.msra.mxu0 0
    %390 = vmatprep.subr.bf16.mxu0 0
    %391 = vmatpush1.bf16.xpose.msra.mxu0 0
    %392 = vmatprep.subr.bf16.mxu0 0
    %393 = vmatpush1.bf16.xpose.msra.mxu0 0
    %394 = vmatprep.subr.bf16.mxu0 0
    %395 = vmatpush1.bf16.xpose.msra.mxu0 %v378
    %396 = vmatprep.subr.bf16.mxu0 0
    %397 = vmatpush2.bf16.xpose.msra.mxu0 0
    %398 = vmatprep.subr.bf16.mxu0 0
    %399 = vmatpush2.bf16.xpose.msra.mxu0 0
    %400 = vmatprep.subr.bf16.mxu0 0
    %401 = vmatpush2.bf16.xpose.msra.mxu0 0
    %402 = vmatprep.subr.bf16.mxu0 0
    %403 = vmatpush2.bf16.xpose.msra.mxu0 0
    %404 = vmatprep.subr.bf16.mxu0 0
    %405 = vmatpush2.bf16.xpose.msra.mxu0 0
    %406 = vmatprep.subr.bf16.mxu0 0
    %407 = vmatpush2.bf16.xpose.msra.mxu0 0
    %408 = vmatprep.subr.bf16.mxu0 0
    %409 = vmatpush2.bf16.xpose.msra.mxu0 0
    %410 = vmatprep.subr.bf16.mxu0 0
    %411 = vmatpush2.bf16.xpose.msra.mxu0 0
    %412 = vmatprep.mubr.bf16.mxu0 0
    %413 = vmatmul.mubr.bf16.gmra.mxu0 %v375
    %v414 = vpop.f32.mrf.mxu0
    %v415 = vadd.f32 0.0, %v414
    %v416 = vpop.f32.mrf.mxu0
    %v417 = vpop.f32.mrf.mxu0
    %v418 = vpop.f32.mrf.mxu0
    %419 = vdwg.mxu0
    %v421 = vsel %vm373, %v352, 0
    %v424 = vsel %vm373, %v360, 0
    %426 = vmatprep.subr.bf16.mxu0 0
    %427 = vmatpush1.bf16.xpose.msra.mxu0 0
    %428 = vmatprep.subr.bf16.mxu0 0
    %429 = vmatpush1.bf16.xpose.msra.mxu0 0
    %430 = vmatprep.subr.bf16.mxu0 0
    %431 = vmatpush1.bf16.xpose.msra.mxu0 0
    %432 = vmatprep.subr.bf16.mxu0 0
    %433 = vmatpush1.bf16.xpose.msra.mxu0 0
    %434 = vmatprep.subr.bf16.mxu0 0
    %435 = vmatpush1.bf16.xpose.msra.mxu0 0
    %436 = vmatprep.subr.bf16.mxu0 0
    %437 = vmatpush1.bf16.xpose.msra.mxu0 0
    %438 = vmatprep.subr.bf16.mxu0 0
    %439 = vmatpush1.bf16.xpose.msra.mxu0 0
    %440 = vmatprep.subr.bf16.mxu0 0
    %441 = vmatpush1.bf16.xpose.msra.mxu0 %v424
    %442 = vmatprep.subr.bf16.mxu0 0
    %443 = vmatpush2.bf16.xpose.msra.mxu0 0
    %444 = vmatprep.subr.bf16.mxu0 0
    %445 = vmatpush2.bf16.xpose.msra.mxu0 0
    %446 = vmatprep.subr.bf16.mxu0 0
    %447 = vmatpush2.bf16.xpose.msra.mxu0 0
    %448 = vmatprep.subr.bf16.mxu0 0
    %449 = vmatpush2.bf16.xpose.msra.mxu0 0
    %450 = vmatprep.subr.bf16.mxu0 0
    %451 = vmatpush2.bf16.xpose.msra.mxu0 0
    %452 = vmatprep.subr.bf16.mxu0 0
    %453 = vmatpush2.bf16.xpose.msra.mxu0 0
    %454 = vmatprep.subr.bf16.mxu0 0
    %455 = vmatpush2.bf16.xpose.msra.mxu0 0
    %456 = vmatprep.subr.bf16.mxu0 0
    %457 = vmatpush2.bf16.xpose.msra.mxu0 0
    %458 = vmatprep.mubr.bf16.mxu0 0
    %459 = vmatmul.mubr.bf16.gmra.mxu0 %v421
    %v460 = vpop.f32.mrf.mxu0
    %v461 = vadd.f32 0.0, %v460
    %v462 = vpop.f32.mrf.mxu0
    %v463 = vpop.f32.mrf.mxu0
    %v464 = vpop.f32.mrf.mxu0
    %465 = vdwg.mxu0
    %v467 = vsel %vm373, %v354, 0
    %v470 = vsel %vm373, %v362, 0
    %472 = vmatprep.subr.bf16.mxu0 0
    %473 = vmatpush1.bf16.xpose.msra.mxu0 0
    %474 = vmatprep.subr.bf16.mxu0 0
    %475 = vmatpush1.bf16.xpose.msra.mxu0 0
    %476 = vmatprep.subr.bf16.mxu0 0
    %477 = vmatpush1.bf16.xpose.msra.mxu0 0
    %478 = vmatprep.subr.bf16.mxu0 0
    %479 = vmatpush1.bf16.xpose.msra.mxu0 0
    %480 = vmatprep.subr.bf16.mxu0 0
    %481 = vmatpush1.bf16.xpose.msra.mxu0 0
    %482 = vmatprep.subr.bf16.mxu0 0
    %483 = vmatpush1.bf16.xpose.msra.mxu0 0
    %484 = vmatprep.subr.bf16.mxu0 0
    %485 = vmatpush1.bf16.xpose.msra.mxu0 0
    %486 = vmatprep.subr.bf16.mxu0 0
    %487 = vmatpush1.bf16.xpose.msra.mxu0 %v470
    %488 = vmatprep.subr.bf16.mxu0 0
    %489 = vmatpush2.bf16.xpose.msra.mxu0 0
    %490 = vmatprep.subr.bf16.mxu0 0
    %491 = vmatpush2.bf16.xpose.msra.mxu0 0
    %492 = vmatprep.subr.bf16.mxu0 0
    %493 = vmatpush2.bf16.xpose.msra.mxu0 0
    %494 = vmatprep.subr.bf16.mxu0 0
    %495 = vmatpush2.bf16.xpose.msra.mxu0 0
    %496 = vmatprep.subr.bf16.mxu0 0
    %497 = vmatpush2.bf16.xpose.msra.mxu0 0
    %498 = vmatprep.subr.bf16.mxu0 0
    %499 = vmatpush2.bf16.xpose.msra.mxu0 0
    %500 = vmatprep.subr.bf16.mxu0 0
    %501 = vmatpush2.bf16.xpose.msra.mxu0 0
    %502 = vmatprep.subr.bf16.mxu0 0
    %503 = vmatpush2.bf16.xpose.msra.mxu0 0
    %504 = vmatprep.mubr.bf16.mxu0 0
    %505 = vmatmul.mubr.bf16.gmra.mxu0 %v467
    %v506 = vpop.f32.mrf.mxu0
    %v507 = vadd.f32 0.0, %v506
    %v508 = vpop.f32.mrf.mxu0
    %v509 = vpop.f32.mrf.mxu0
    %v510 = vpop.f32.mrf.mxu0
    %511 = vdwg.mxu0
    %v513 = vsel %vm373, %v356, 0
    %v516 = vsel %vm373, %v364, 0
    %518 = vmatprep.subr.bf16.mxu0 0
    %519 = vmatpush1.bf16.xpose.msra.mxu0 0
    %520 = vmatprep.subr.bf16.mxu0 0
    %521 = vmatpush1.bf16.xpose.msra.mxu0 0
    %522 = vmatprep.subr.bf16.mxu0 0
    %523 = vmatpush1.bf16.xpose.msra.mxu0 0
    %524 = vmatprep.subr.bf16.mxu0 0
    %525 = vmatpush1.bf16.xpose.msra.mxu0 0
    %526 = vmatprep.subr.bf16.mxu0 0
    %527 = vmatpush1.bf16.xpose.msra.mxu0 0
    %528 = vmatprep.subr.bf16.mxu0 0
    %529 = vmatpush1.bf16.xpose.msra.mxu0 0
    %530 = vmatprep.subr.bf16.mxu0 0
    %531 = vmatpush1.bf16.xpose.msra.mxu0 0
    %532 = vmatprep.subr.bf16.mxu0 0
    %533 = vmatpush1.bf16.xpose.msra.mxu0 %v516
    %534 = vmatprep.subr.bf16.mxu0 0
    %535 = vmatpush2.bf16.xpose.msra.mxu0 0
    %536 = vmatprep.subr.bf16.mxu0 0
    %537 = vmatpush2.bf16.xpose.msra.mxu0 0
    %538 = vmatprep.subr.bf16.mxu0 0
    %539 = vmatpush2.bf16.xpose.msra.mxu0 0
    %540 = vmatprep.subr.bf16.mxu0 0
    %541 = vmatpush2.bf16.xpose.msra.mxu0 0
    %542 = vmatprep.subr.bf16.mxu0 0
    %543 = vmatpush2.bf16.xpose.msra.mxu0 0
    %544 = vmatprep.subr.bf16.mxu0 0
    %545 = vmatpush2.bf16.xpose.msra.mxu0 0
    %546 = vmatprep.subr.bf16.mxu0 0
    %547 = vmatpush2.bf16.xpose.msra.mxu0 0
    %548 = vmatprep.subr.bf16.mxu0 0
    %549 = vmatpush2.bf16.xpose.msra.mxu0 0
    %550 = vmatprep.mubr.bf16.mxu0 0
    %551 = vmatmul.mubr.bf16.gmra.mxu0 %v513
    %v552 = vpop.f32.mrf.mxu0
    %v553 = vadd.f32 0.0, %v552
    %v554 = vpop.f32.mrf.mxu0
    %v555 = vpop.f32.mrf.mxu0
    %v556 = vpop.f32.mrf.mxu0
    %557 = vdwg.mxu0
    %v558 = vmul.f32 %v415, 0.35355338
    %v559 = vmul.f32 %v461, 0.35355338
    %v560 = vmul.f32 %v507, 0.35355338
    %v561 = vmul.f32 %v553, 0.35355338
    %v563 = vlaneseq
    %v564 = vshrl.u32 %v563, 7
    %v565 = vsub.s32 0, %v564
    %v566 = vrot.slane %v348, %v565
    %v568 = vadd.f32 %v558, %v566
    %v569 = vadd.f32 %v559, %v566
    %v570 = vadd.f32 %v560, %v566
    %v571 = vadd.f32 %v561, %v566
    %vm572 = vcmask 130048
    %v573 = vsel %vm572, %v568, -inf
    %574 = vmax.xlane.f32.xlu0 %v573
    %v575 = vpop.xlane.xlu0 %574
    %v576 = vsel %vm572, %v569, -inf
    %577 = vmax.xlane.f32.xlu0 %v576
    %v578 = vpop.xlane.xlu0 %577
    %v579 = vsel %vm572, %v570, -inf
    %580 = vmax.xlane.f32.xlu0 %v579
    %v581 = vpop.xlane.xlu0 %580
    %v582 = vsel %vm572, %v571, -inf
    %583 = vmax.xlane.f32.xlu0 %v582
    %v584 = vpop.xlane.xlu0 %583
    %v585 = vsub.f32 %v568, %v575
    %v586 = vsub.f32 %v569, %v578
    %v587 = vsub.f32 %v570, %v581
    %v588 = vsub.f32 %v571, %v584
    %v589 = vmul.f32 %v585, 1.442695
    %v590 = vpow.pop %v589
    %v591 = vmul.f32 %v586, 1.442695
    %v592 = vpow.pop %v591
    %v593 = vmul.f32 %v587, 1.442695
    %v594 = vpow.pop %v593
    %v595 = vmul.f32 %v588, 1.442695
    %v596 = vpow.pop %v595
    %v597 = vsel %vm572, %v590, 0.0
    %598 = vadd.xlane.f32.xlu0 %v597
    %v599 = vpop.xlane.xlu0 %598
    %v600 = vsel %vm572, %v592, 0.0
    %601 = vadd.xlane.f32.xlu0 %v600
    %v602 = vpop.xlane.xlu0 %601
    %v603 = vsel %vm572, %v594, 0.0
    %604 = vadd.xlane.f32.xlu0 %v603
    %v605 = vpop.xlane.xlu0 %604
    %v606 = vsel %vm572, %v596, 0.0
    %607 = vadd.xlane.f32.xlu0 %v606
    %v608 = vpop.xlane.xlu0 %607
    %v609 = vrcp.pop %v599
    %v610 = vmul.f32 %v590, %v609
    %v611 = vrcp.pop %v602
    %v612 = vmul.f32 %v592, %v611
    %v613 = vrcp.pop %v605
    %v614 = vmul.f32 %v594, %v613
    %v615 = vrcp.pop %v608
    %v616 = vmul.f32 %v596, %v615
    %v617 = vpack.c.bf16 %v610, %v610
    %v618 = vpack.c.bf16 %v612, %v612
    %v619 = vpack.c.bf16 %v614, %v614
    %v620 = vpack.c.bf16 %v616, %v616
    %621 = vrot.lane.b32.xlu0 %v365, 96
    %v622 = vpop.permute.xlu0 %621
    %v625 = vsel %vm572, %v617, 0
    %627 = vmatprep.subr.bf16.mxu0 0
    %628 = vmatpush1.bf16.msra.mxu0 0
    %629 = vmatprep.subr.bf16.mxu0 0
    %630 = vmatpush1.bf16.msra.mxu0 0
    %631 = vmatprep.subr.bf16.mxu0 0
    %632 = vmatpush1.bf16.msra.mxu0 0
    %633 = vmatprep.subr.bf16.mxu0 0
    %634 = vmatpush1.bf16.msra.mxu0 0
    %635 = vmatprep.subr.bf16.mxu0 0
    %636 = vmatpush1.bf16.msra.mxu0 0
    %637 = vmatprep.subr.bf16.mxu0 0
    %638 = vmatpush1.bf16.msra.mxu0 0
    %639 = vmatprep.subr.bf16.mxu0 0
    %640 = vmatpush1.bf16.msra.mxu0 0
    %641 = vmatprep.subr.bf16.mxu0 0
    %642 = vmatpush1.bf16.msra.mxu0 %v622
    %643 = vmatprep.subr.bf16.mxu0 0
    %644 = vmatpush2.bf16.msra.mxu0 0
    %645 = vmatprep.subr.bf16.mxu0 0
    %646 = vmatpush2.bf16.msra.mxu0 0
    %647 = vmatprep.subr.bf16.mxu0 0
    %648 = vmatpush2.bf16.msra.mxu0 0
    %649 = vmatprep.subr.bf16.mxu0 0
    %650 = vmatpush2.bf16.msra.mxu0 0
    %651 = vmatprep.subr.bf16.mxu0 0
    %652 = vmatpush2.bf16.msra.mxu0 0
    %653 = vmatprep.subr.bf16.mxu0 0
    %654 = vmatpush2.bf16.msra.mxu0 0
    %655 = vmatprep.subr.bf16.mxu0 0
    %656 = vmatpush2.bf16.msra.mxu0 0
    %657 = vmatprep.subr.bf16.mxu0 0
    %658 = vmatpush2.bf16.msra.mxu0 0
    %659 = vmatprep.mubr.bf16.mxu0 0
    %660 = vmatmul.mubr.bf16.gmra.mxu0 %v625
    %v661 = vpop.f32.mrf.mxu0
    %v662 = vadd.f32 0.0, %v661
    %v663 = vpop.f32.mrf.mxu0
    %v664 = vpop.f32.mrf.mxu0
    %v665 = vpop.f32.mrf.mxu0
    %666 = vdwg.mxu0
    %667 = vrot.lane.b32.xlu0 %v368, 96
    %v668 = vpop.permute.xlu0 %667
    %v671 = vsel %vm572, %v618, 0
    %673 = vmatprep.subr.bf16.mxu0 0
    %674 = vmatpush1.bf16.msra.mxu0 0
    %675 = vmatprep.subr.bf16.mxu0 0
    %676 = vmatpush1.bf16.msra.mxu0 0
    %677 = vmatprep.subr.bf16.mxu0 0
    %678 = vmatpush1.bf16.msra.mxu0 0
    %679 = vmatprep.subr.bf16.mxu0 0
    %680 = vmatpush1.bf16.msra.mxu0 0
    %681 = vmatprep.subr.bf16.mxu0 0
    %682 = vmatpush1.bf16.msra.mxu0 0
    %683 = vmatprep.subr.bf16.mxu0 0
    %684 = vmatpush1.bf16.msra.mxu0 0
    %685 = vmatprep.subr.bf16.mxu0 0
    %686 = vmatpush1.bf16.msra.mxu0 0
    %687 = vmatprep.subr.bf16.mxu0 0
    %688 = vmatpush1.bf16.msra.mxu0 %v668
    %689 = vmatprep.subr.bf16.mxu0 0
    %690 = vmatpush2.bf16.msra.mxu0 0
    %691 = vmatprep.subr.bf16.mxu0 0
    %692 = vmatpush2.bf16.msra.mxu0 0
    %693 = vmatprep.subr.bf16.mxu0 0
    %694 = vmatpush2.bf16.msra.mxu0 0
    %695 = vmatprep.subr.bf16.mxu0 0
    %696 = vmatpush2.bf16.msra.mxu0 0
    %697 = vmatprep.subr.bf16.mxu0 0
    %698 = vmatpush2.bf16.msra.mxu0 0
    %699 = vmatprep.subr.bf16.mxu0 0
    %700 = vmatpush2.bf16.msra.mxu0 0
    %701 = vmatprep.subr.bf16.mxu0 0
    %702 = vmatpush2.bf16.msra.mxu0 0
    %703 = vmatprep.subr.bf16.mxu0 0
    %704 = vmatpush2.bf16.msra.mxu0 0
    %705 = vmatprep.mubr.bf16.mxu0 0
    %706 = vmatmul.mubr.bf16.gmra.mxu0 %v671
    %v707 = vpop.f32.mrf.mxu0
    %v708 = vadd.f32 0.0, %v707
    %v709 = vpop.f32.mrf.mxu0
    %v710 = vpop.f32.mrf.mxu0
    %v711 = vpop.f32.mrf.mxu0
    %712 = vdwg.mxu0
    %713 = vrot.lane.b32.xlu0 %v370, 96
    %v714 = vpop.permute.xlu0 %713
    %v717 = vsel %vm572, %v619, 0
    %719 = vmatprep.subr.bf16.mxu0 0
    %720 = vmatpush1.bf16.msra.mxu0 0
    %721 = vmatprep.subr.bf16.mxu0 0
    %722 = vmatpush1.bf16.msra.mxu0 0
    %723 = vmatprep.subr.bf16.mxu0 0
    %724 = vmatpush1.bf16.msra.mxu0 0
    %725 = vmatprep.subr.bf16.mxu0 0
    %726 = vmatpush1.bf16.msra.mxu0 0
    %727 = vmatprep.subr.bf16.mxu0 0
    %728 = vmatpush1.bf16.msra.mxu0 0
    %729 = vmatprep.subr.bf16.mxu0 0
    %730 = vmatpush1.bf16.msra.mxu0 0
    %731 = vmatprep.subr.bf16.mxu0 0
    %732 = vmatpush1.bf16.msra.mxu0 0
    %733 = vmatprep.subr.bf16.mxu0 0
    %734 = vmatpush1.bf16.msra.mxu0 %v714
    %735 = vmatprep.subr.bf16.mxu0 0
    %736 = vmatpush2.bf16.msra.mxu0 0
    %737 = vmatprep.subr.bf16.mxu0 0
    %738 = vmatpush2.bf16.msra.mxu0 0
    %739 = vmatprep.subr.bf16.mxu0 0
    %740 = vmatpush2.bf16.msra.mxu0 0
    %741 = vmatprep.subr.bf16.mxu0 0
    %742 = vmatpush2.bf16.msra.mxu0 0
    %743 = vmatprep.subr.bf16.mxu0 0
    %744 = vmatpush2.bf16.msra.mxu0 0
    %745 = vmatprep.subr.bf16.mxu0 0
    %746 = vmatpush2.bf16.msra.mxu0 0
    %747 = vmatprep.subr.bf16.mxu0 0
    %748 = vmatpush2.bf16.msra.mxu0 0
    %749 = vmatprep.subr.bf16.mxu0 0
    %750 = vmatpush2.bf16.msra.mxu0 0
    %751 = vmatprep.mubr.bf16.mxu0 0
    %752 = vmatmul.mubr.bf16.gmra.mxu0 %v717
    %v753 = vpop.f32.mrf.mxu0
    %v754 = vadd.f32 0.0, %v753
    %v755 = vpop.f32.mrf.mxu0
    %v756 = vpop.f32.mrf.mxu0
    %v757 = vpop.f32.mrf.mxu0
    %758 = vdwg.mxu0
    %759 = vrot.lane.b32.xlu0 %v372, 96
    %v760 = vpop.permute.xlu0 %759
    %v763 = vsel %vm572, %v620, 0
    %765 = vmatprep.subr.bf16.mxu0 0
    %766 = vmatpush1.bf16.msra.mxu0 0
    %767 = vmatprep.subr.bf16.mxu0 0
    %768 = vmatpush1.bf16.msra.mxu0 0
    %769 = vmatprep.subr.bf16.mxu0 0
    %770 = vmatpush1.bf16.msra.mxu0 0
    %771 = vmatprep.subr.bf16.mxu0 0
    %772 = vmatpush1.bf16.msra.mxu0 0
    %773 = vmatprep.subr.bf16.mxu0 0
    %774 = vmatpush1.bf16.msra.mxu0 0
    %775 = vmatprep.subr.bf16.mxu0 0
    %776 = vmatpush1.bf16.msra.mxu0 0
    %777 = vmatprep.subr.bf16.mxu0 0
    %778 = vmatpush1.bf16.msra.mxu0 0
    %779 = vmatprep.subr.bf16.mxu0 0
    %780 = vmatpush1.bf16.msra.mxu0 %v760
    %781 = vmatprep.subr.bf16.mxu0 0
    %782 = vmatpush2.bf16.msra.mxu0 0
    %783 = vmatprep.subr.bf16.mxu0 0
    %784 = vmatpush2.bf16.msra.mxu0 0
    %785 = vmatprep.subr.bf16.mxu0 0
    %786 = vmatpush2.bf16.msra.mxu0 0
    %787 = vmatprep.subr.bf16.mxu0 0
    %788 = vmatpush2.bf16.msra.mxu0 0
    %789 = vmatprep.subr.bf16.mxu0 0
    %790 = vmatpush2.bf16.msra.mxu0 0
    %791 = vmatprep.subr.bf16.mxu0 0
    %792 = vmatpush2.bf16.msra.mxu0 0
    %793 = vmatprep.subr.bf16.mxu0 0
    %794 = vmatpush2.bf16.msra.mxu0 0
    %795 = vmatprep.subr.bf16.mxu0 0
    %796 = vmatpush2.bf16.msra.mxu0 0
    %797 = vmatprep.mubr.bf16.mxu0 0
    %798 = vmatmul.mubr.bf16.gmra.mxu0 %v763
    %v799 = vpop.f32.mrf.mxu0
    %v800 = vadd.f32 0.0, %v799
    %v801 = vpop.f32.mrf.mxu0
    %v802 = vpop.f32.mrf.mxu0
    %v803 = vpop.f32.mrf.mxu0
    %804 = vdwg.mxu0
    %v805 = vpack.c.bf16 %v662, %v662
    %v806 = vld [vmem:[%s8] sm:$0xf]
    %v808 = vsel %vm373, %v805, 0
    %vm810 = vcmask 1043456
    %v812 = vsel %vm810, %v806, 0
    %814 = vmatprep.subr.bf16.mxu0 0
    %815 = vmatpush1.bf16.msra.mxu0 0
    %816 = vmatprep.subr.bf16.mxu0 0
    %817 = vmatpush1.bf16.msra.mxu0 0
    %818 = vmatprep.subr.bf16.mxu0 0
    %819 = vmatpush1.bf16.msra.mxu0 0
    %820 = vmatprep.subr.bf16.mxu0 0
    %821 = vmatpush1.bf16.msra.mxu0 0
    %822 = vmatprep.subr.bf16.mxu0 0
    %823 = vmatpush1.bf16.msra.mxu0 0
    %824 = vmatprep.subr.bf16.mxu0 0
    %825 = vmatpush1.bf16.msra.mxu0 0
    %826 = vmatprep.subr.bf16.mxu0 0
    %827 = vmatpush1.bf16.msra.mxu0 0
    %828 = vmatprep.subr.bf16.mxu0 0
    %829 = vmatpush1.bf16.msra.mxu0 %v812
    %830 = vmatprep.subr.bf16.mxu0 0
    %831 = vmatpush2.bf16.msra.mxu0 0
    %832 = vmatprep.subr.bf16.mxu0 0
    %833 = vmatpush2.bf16.msra.mxu0 0
    %834 = vmatprep.subr.bf16.mxu0 0
    %835 = vmatpush2.bf16.msra.mxu0 0
    %836 = vmatprep.subr.bf16.mxu0 0
    %837 = vmatpush2.bf16.msra.mxu0 0
    %838 = vmatprep.subr.bf16.mxu0 0
    %839 = vmatpush2.bf16.msra.mxu0 0
    %840 = vmatprep.subr.bf16.mxu0 0
    %841 = vmatpush2.bf16.msra.mxu0 0
    %842 = vmatprep.subr.bf16.mxu0 0
    %843 = vmatpush2.bf16.msra.mxu0 0
    %844 = vmatprep.subr.bf16.mxu0 0
    %845 = vmatpush2.bf16.msra.mxu0 0
    %846 = vmatprep.mubr.bf16.mxu0 0
    %847 = vmatmul.mubr.bf16.gmra.mxu0 %v808
    %v848 = vpop.f32.mrf.mxu0
    %v849 = vadd.f32 0.0, %v848
    %v850 = vpop.f32.mrf.mxu0
    %v851 = vpop.f32.mrf.mxu0
    %v852 = vpop.f32.mrf.mxu0
    %853 = vdwg.mxu0
    %v854 = vlaneseq
    %v855 = vshrl.u32 %v854, 7
    %v856 = vsub.s32 3, %v855
    %v857 = vrot.slane %v88, %v856
    %v858 = vadd.f32 %v857, %v849
    %v859 = vpack.c.bf16 %v708, %v708
    %s860 = scalar_lea.vmem %s8, 4
    %v861 = vld [vmem:[%s860] sm:$0xf]
    %v863 = vsel %vm373, %v859, 0
    %v866 = vsel %vm810, %v861, 0
    %868 = vmatprep.subr.bf16.mxu0 0
    %869 = vmatpush1.bf16.msra.mxu0 0
    %870 = vmatprep.subr.bf16.mxu0 0
    %871 = vmatpush1.bf16.msra.mxu0 0
    %872 = vmatprep.subr.bf16.mxu0 0
    %873 = vmatpush1.bf16.msra.mxu0 0
    %874 = vmatprep.subr.bf16.mxu0 0
    %875 = vmatpush1.bf16.msra.mxu0 0
    %876 = vmatprep.subr.bf16.mxu0 0
    %877 = vmatpush1.bf16.msra.mxu0 0
    %878 = vmatprep.subr.bf16.mxu0 0
    %879 = vmatpush1.bf16.msra.mxu0 0
    %880 = vmatprep.subr.bf16.mxu0 0
    %881 = vmatpush1.bf16.msra.mxu0 0
    %882 = vmatprep.subr.bf16.mxu0 0
    %883 = vmatpush1.bf16.msra.mxu0 %v866
    %884 = vmatprep.subr.bf16.mxu0 0
    %885 = vmatpush2.bf16.msra.mxu0 0
    %886 = vmatprep.subr.bf16.mxu0 0
    %887 = vmatpush2.bf16.msra.mxu0 0
    %888 = vmatprep.subr.bf16.mxu0 0
    %889 = vmatpush2.bf16.msra.mxu0 0
    %890 = vmatprep.subr.bf16.mxu0 0
    %891 = vmatpush2.bf16.msra.mxu0 0
    %892 = vmatprep.subr.bf16.mxu0 0
    %893 = vmatpush2.bf16.msra.mxu0 0
    %894 = vmatprep.subr.bf16.mxu0 0
    %895 = vmatpush2.bf16.msra.mxu0 0
    %896 = vmatprep.subr.bf16.mxu0 0
    %897 = vmatpush2.bf16.msra.mxu0 0
    %898 = vmatprep.subr.bf16.mxu0 0
    %899 = vmatpush2.bf16.msra.mxu0 0
    %900 = vmatprep.mubr.bf16.mxu0 0
    %901 = vmatmul.mubr.bf16.gmra.mxu0 %v863
    %v902 = vpop.f32.mrf.mxu0
    %v903 = vadd.f32 0.0, %v902
    %v904 = vpop.f32.mrf.mxu0
    %v905 = vpop.f32.mrf.mxu0
    %v906 = vpop.f32.mrf.mxu0
    %907 = vdwg.mxu0
    %v908 = vadd.f32 %v858, %v903
    %v909 = vpack.c.bf16 %v754, %v754
    %s910 = scalar_lea.vmem %s8, 8
    %v911 = vld [vmem:[%s910] sm:$0xf]
    %v913 = vsel %vm373, %v909, 0
    %v916 = vsel %vm810, %v911, 0
    %918 = vmatprep.subr.bf16.mxu0 0
    %919 = vmatpush1.bf16.msra.mxu0 0
    %920 = vmatprep.subr.bf16.mxu0 0
    %921 = vmatpush1.bf16.msra.mxu0 0
    %922 = vmatprep.subr.bf16.mxu0 0
    %923 = vmatpush1.bf16.msra.mxu0 0
    %924 = vmatprep.subr.bf16.mxu0 0
    %925 = vmatpush1.bf16.msra.mxu0 0
    %926 = vmatprep.subr.bf16.mxu0 0
    %927 = vmatpush1.bf16.msra.mxu0 0
    %928 = vmatprep.subr.bf16.mxu0 0
    %929 = vmatpush1.bf16.msra.mxu0 0
    %930 = vmatprep.subr.bf16.mxu0 0
    %931 = vmatpush1.bf16.msra.mxu0 0
    %932 = vmatprep.subr.bf16.mxu0 0
    %933 = vmatpush1.bf16.msra.mxu0 %v916
    %934 = vmatprep.subr.bf16.mxu0 0
    %935 = vmatpush2.bf16.msra.mxu0 0
    %936 = vmatprep.subr.bf16.mxu0 0
    %937 = vmatpush2.bf16.msra.mxu0 0
    %938 = vmatprep.subr.bf16.mxu0 0
    %939 = vmatpush2.bf16.msra.mxu0 0
    %940 = vmatprep.subr.bf16.mxu0 0
    %941 = vmatpush2.bf16.msra.mxu0 0
    %942 = vmatprep.subr.bf16.mxu0 0
    %943 = vmatpush2.bf16.msra.mxu0 0
    %944 = vmatprep.subr.bf16.mxu0 0
    %945 = vmatpush2.bf16.msra.mxu0 0
    %946 = vmatprep.subr.bf16.mxu0 0
    %947 = vmatpush2.bf16.msra.mxu0 0
    %948 = vmatprep.subr.bf16.mxu0 0
    %949 = vmatpush2.bf16.msra.mxu0 0
    %950 = vmatprep.mubr.bf16.mxu0 0
    %951 = vmatmul.mubr.bf16.gmra.mxu0 %v913
    %v952 = vpop.f32.mrf.mxu0
    %v953 = vadd.f32 0.0, %v952
    %v954 = vpop.f32.mrf.mxu0
    %v955 = vpop.f32.mrf.mxu0
    %v956 = vpop.f32.mrf.mxu0
    %957 = vdwg.mxu0
    %v958 = vadd.f32 %v908, %v953
    %v959 = vpack.c.bf16 %v800, %v800
    %s960 = scalar_lea.vmem %s8, 12
    %v961 = vld [vmem:[%s960] sm:$0xf]
    %v963 = vsel %vm373, %v959, 0
    %v966 = vsel %vm810, %v961, 0
    %968 = vmatprep.subr.bf16.mxu0 0
    %969 = vmatpush1.bf16.msra.mxu0 0
    %970 = vmatprep.subr.bf16.mxu0 0
    %971 = vmatpush1.bf16.msra.mxu0 0
    %972 = vmatprep.subr.bf16.mxu0 0
    %973 = vmatpush1.bf16.msra.mxu0 0
    %974 = vmatprep.subr.bf16.mxu0 0
    %975 = vmatpush1.bf16.msra.mxu0 0
    %976 = vmatprep.subr.bf16.mxu0 0
    %977 = vmatpush1.bf16.msra.mxu0 0
    %978 = vmatprep.subr.bf16.mxu0 0
    %979 = vmatpush1.bf16.msra.mxu0 0
    %980 = vmatprep.subr.bf16.mxu0 0
    %981 = vmatpush1.bf16.msra.mxu0 0
    %982 = vmatprep.subr.bf16.mxu0 0
    %983 = vmatpush1.bf16.msra.mxu0 %v966
    %984 = vmatprep.subr.bf16.mxu0 0
    %985 = vmatpush2.bf16.msra.mxu0 0
    %986 = vmatprep.subr.bf16.mxu0 0
    %987 = vmatpush2.bf16.msra.mxu0 0
    %988 = vmatprep.subr.bf16.mxu0 0
    %989 = vmatpush2.bf16.msra.mxu0 0
    %990 = vmatprep.subr.bf16.mxu0 0
    %991 = vmatpush2.bf16.msra.mxu0 0
    %992 = vmatprep.subr.bf16.mxu0 0
    %993 = vmatpush2.bf16.msra.mxu0 0
    %994 = vmatprep.subr.bf16.mxu0 0
    %995 = vmatpush2.bf16.msra.mxu0 0
    %996 = vmatprep.subr.bf16.mxu0 0
    %997 = vmatpush2.bf16.msra.mxu0 0
    %998 = vmatprep.subr.bf16.mxu0 0
    %999 = vmatpush2.bf16.msra.mxu0 0
    %1000 = vmatprep.mubr.bf16.mxu0 0
    %1001 = vmatmul.mubr.bf16.gmra.mxu0 %v963
    %v1002 = vpop.f32.mrf.mxu0
    %v1003 = vadd.f32 0.0, %v1002
    %v1004 = vpop.f32.mrf.mxu0
    %v1005 = vpop.f32.mrf.mxu0
    %v1006 = vpop.f32.mrf.mxu0
    %1007 = vdwg.mxu0
    %v1008 = vadd.f32 %v958, %v1003
    %v1009 = vsel %vm572, %v610, 0.0
    %v1010 = vsel %vm572, %v612, 0.0
    %v1011 = vadd.f32 %v1009, %v1010
    %v1012 = vsel %vm572, %v614, 0.0
    %v1013 = vadd.f32 %v1011, %v1012
    %v1014 = vsel %vm572, %v616, 0.0
    %v1015 = vadd.f32 %v1013, %v1014
    %v1016 = vrcp.pop 4.0
    %v1017 = vmul.f32 %v1015, %v1016
    %1018 = vst.msk [vmem:[#allocation2] sm:$0xff] %vm572, %v1017
    %s1019 = scalar_lea.vmem %s2, 1
    %v1020 = vld [vmem:[%s1019] sm:$0x1]
    %v1021 = vpack.c.bf16 %v252, %v252
    %1023 = vrot.lane.b32.xlu0 %v1021, 120
    %v1024 = vpop.permute.xlu0 %1023
    %1025 = vrot.lane.b32.xlu0 %v1021, 112
    %v1026 = vpop.permute.xlu0 %1025
    %1027 = vrot.lane.b32.xlu0 %v1021, 104
    %v1028 = vpop.permute.xlu0 %1027
    %v1029 = vpack.c.bf16 %v335, %v334
    %1031 = vrot.lane.b32.xlu0 %v1029, 120
    %v1032 = vpop.permute.xlu0 %1031
    %1033 = vrot.lane.b32.xlu0 %v1029, 112
    %v1034 = vpop.permute.xlu0 %1033
    %1035 = vrot.lane.b32.xlu0 %v1029, 104
    %v1036 = vpop.permute.xlu0 %1035
    %v1037 = vpack.c.bf16 %v347, %v346
    %1039 = vrot.lane.b32.xlu0 %v1037, 120
    %v1040 = vpop.permute.xlu0 %1039
    %1041 = vrot.lane.b32.xlu0 %v1037, 112
    %v1042 = vpop.permute.xlu0 %1041
    %1043 = vrot.lane.b32.xlu0 %v1037, 104
    %v1044 = vpop.permute.xlu0 %1043
    %v1046 = vsel %vm373, %v1021, 0
    %v1049 = vsel %vm373, %v1029, 0
    %1051 = vmatprep.subr.bf16.mxu0 0
    %1052 = vmatpush1.bf16.xpose.msra.mxu0 0
    %1053 = vmatprep.subr.bf16.mxu0 0
    %1054 = vmatpush1.bf16.xpose.msra.mxu0 0
    %1055 = vmatprep.subr.bf16.mxu0 0
    %1056 = vmatpush1.bf16.xpose.msra.mxu0 0
    %1057 = vmatprep.subr.bf16.mxu0 0
    %1058 = vmatpush1.bf16.xpose.msra.mxu0 0
    %1059 = vmatprep.subr.bf16.mxu0 0
    %1060 = vmatpush1.bf16.xpose.msra.mxu0 0
    %1061 = vmatprep.subr.bf16.mxu0 0
    %1062 = vmatpush1.bf16.xpose.msra.mxu0 0
    %1063 = vmatprep.subr.bf16.mxu0 0
    %1064 = vmatpush1.bf16.xpose.msra.mxu0 0
    %1065 = vmatprep.subr.bf16.mxu0 0
    %1066 = vmatpush1.bf16.xpose.msra.mxu0 %v1049
    %1067 = vmatprep.subr.bf16.mxu0 0
    %1068 = vmatpush2.bf16.xpose.msra.mxu0 0
    %1069 = vmatprep.subr.bf16.mxu0 0
    %1070 = vmatpush2.bf16.xpose.msra.mxu0 0
    %1071 = vmatprep.subr.bf16.mxu0 0
    %1072 = vmatpush2.bf16.xpose.msra.mxu0 0
    %1073 = vmatprep.subr.bf16.mxu0 0
    %1074 = vmatpush2.bf16.xpose.msra.mxu0 0
    %1075 = vmatprep.subr.bf16.mxu0 0
    %1076 = vmatpush2.bf16.xpose.msra.mxu0 0
    %1077 = vmatprep.subr.bf16.mxu0 0
    %1078 = vmatpush2.bf16.xpose.msra.mxu0 0
    %1079 = vmatprep.subr.bf16.mxu0 0
    %1080 = vmatpush2.bf16.xpose.msra.mxu0 0
    %1081 = vmatprep.subr.bf16.mxu0 0
    %1082 = vmatpush2.bf16.xpose.msra.mxu0 0
    %1083 = vmatprep.mubr.bf16.mxu0 0
    %1084 = vmatmul.mubr.bf16.gmra.mxu0 %v1046
    %v1085 = vpop.f32.mrf.mxu0
    %v1086 = vadd.f32 0.0, %v1085
    %v1087 = vpop.f32.mrf.mxu0
    %v1088 = vpop.f32.mrf.mxu0
    %v1089 = vpop.f32.mrf.mxu0
    %1090 = vdwg.mxu0
    %v1092 = vsel %vm373, %v1024, 0
    %v1095 = vsel %vm373, %v1032, 0
    %1097 = vmatprep.subr.bf16.mxu0 0
    %1098 = vmatpush1.bf16.xpose.msra.mxu0 0
    %1099 = vmatprep.subr.bf16.mxu0 0
    %1100 = vmatpush1.bf16.xpose.msra.mxu0 0
    %1101 = vmatprep.subr.bf16.mxu0 0
    %1102 = vmatpush1.bf16.xpose.msra.mxu0 0
    %1103 = vmatprep.subr.bf16.mxu0 0
    %1104 = vmatpush1.bf16.xpose.msra.mxu0 0
    %1105 = vmatprep.subr.bf16.mxu0 0
    %1106 = vmatpush1.bf16.xpose.msra.mxu0 0
    %1107 = vmatprep.subr.bf16.mxu0 0
    %1108 = vmatpush1.bf16.xpose.msra.mxu0 0
    %1109 = vmatprep.subr.bf16.mxu0 0
    %1110 = vmatpush1.bf16.xpose.msra.mxu0 0
    %1111 = vmatprep.subr.bf16.mxu0 0
    %1112 = vmatpush1.bf16.xpose.msra.mxu0 %v1095
    %1113 = vmatprep.subr.bf16.mxu0 0
    %1114 = vmatpush2.bf16.xpose.msra.mxu0 0
    %1115 = vmatprep.subr.bf16.mxu0 0
    %1116 = vmatpush2.bf16.xpose.msra.mxu0 0
    %1117 = vmatprep.subr.bf16.mxu0 0
    %1118 = vmatpush2.bf16.xpose.msra.mxu0 0
    %1119 = vmatprep.subr.bf16.mxu0 0
    %1120 = vmatpush2.bf16.xpose.msra.mxu0 0
    %1121 = vmatprep.subr.bf16.mxu0 0
    %1122 = vmatpush2.bf16.xpose.msra.mxu0 0
    %1123 = vmatprep.subr.bf16.mxu0 0
    %1124 = vmatpush2.bf16.xpose.msra.mxu0 0
    %1125 = vmatprep.subr.bf16.mxu0 0
    %1126 = vmatpush2.bf16.xpose.msra.mxu0 0
    %1127 = vmatprep.subr.bf16.mxu0 0
    %1128 = vmatpush2.bf16.xpose.msra.mxu0 0
    %1129 = vmatprep.mubr.bf16.mxu0 0
    %1130 = vmatmul.mubr.bf16.gmra.mxu0 %v1092
    %v1131 = vpop.f32.mrf.mxu0
    %v1132 = vadd.f32 0.0, %v1131
    %v1133 = vpop.f32.mrf.mxu0
    %v1134 = vpop.f32.mrf.mxu0
    %v1135 = vpop.f32.mrf.mxu0
    %1136 = vdwg.mxu0
    %v1138 = vsel %vm373, %v1026, 0
    %v1141 = vsel %vm373, %v1034, 0
    %1143 = vmatprep.subr.bf16.mxu0 0
    %1144 = vmatpush1.bf16.xpose.msra.mxu0 0
    %1145 = vmatprep.subr.bf16.mxu0 0
    %1146 = vmatpush1.bf16.xpose.msra.mxu0 0
    %1147 = vmatprep.subr.bf16.mxu0 0
    %1148 = vmatpush1.bf16.xpose.msra.mxu0 0
    %1149 = vmatprep.subr.bf16.mxu0 0
    %1150 = vmatpush1.bf16.xpose.msra.mxu0 0
    %1151 = vmatprep.subr.bf16.mxu0 0
    %1152 = vmatpush1.bf16.xpose.msra.mxu0 0
    %1153 = vmatprep.subr.bf16.mxu0 0
    %1154 = vmatpush1.bf16.xpose.msra.mxu0 0
    %1155 = vmatprep.subr.bf16.mxu0 0
    %1156 = vmatpush1.bf16.xpose.msra.mxu0 0
    %1157 = vmatprep.subr.bf16.mxu0 0
    %1158 = vmatpush1.bf16.xpose.msra.mxu0 %v1141
    %1159 = vmatprep.subr.bf16.mxu0 0
    %1160 = vmatpush2.bf16.xpose.msra.mxu0 0
    %1161 = vmatprep.subr.bf16.mxu0 0
    %1162 = vmatpush2.bf16.xpose.msra.mxu0 0
    %1163 = vmatprep.subr.bf16.mxu0 0
    %1164 = vmatpush2.bf16.xpose.msra.mxu0 0
    %1165 = vmatprep.subr.bf16.mxu0 0
    %1166 = vmatpush2.bf16.xpose.msra.mxu0 0
    %1167 = vmatprep.subr.bf16.mxu0 0
    %1168 = vmatpush2.bf16.xpose.msra.mxu0 0
    %1169 = vmatprep.subr.bf16.mxu0 0
    %1170 = vmatpush2.bf16.xpose.msra.mxu0 0
    %1171 = vmatprep.subr.bf16.mxu0 0
    %1172 = vmatpush2.bf16.xpose.msra.mxu0 0
    %1173 = vmatprep.subr.bf16.mxu0 0
    %1174 = vmatpush2.bf16.xpose.msra.mxu0 0
    %1175 = vmatprep.mubr.bf16.mxu0 0
    %1176 = vmatmul.mubr.bf16.gmra.mxu0 %v1138
    %v1177 = vpop.f32.mrf.mxu0
    %v1178 = vadd.f32 0.0, %v1177
    %v1179 = vpop.f32.mrf.mxu0
    %v1180 = vpop.f32.mrf.mxu0
    %v1181 = vpop.f32.mrf.mxu0
    %1182 = vdwg.mxu0
    %v1184 = vsel %vm373, %v1028, 0
    %v1187 = vsel %vm373, %v1036, 0
    %1189 = vmatprep.subr.bf16.mxu0 0
    %1190 = vmatpush1.bf16.xpose.msra.mxu0 0
    %1191 = vmatprep.subr.bf16.mxu0 0
    %1192 = vmatpush1.bf16.xpose.msra.mxu0 0
    %1193 = vmatprep.subr.bf16.mxu0 0
    %1194 = vmatpush1.bf16.xpose.msra.mxu0 0
    %1195 = vmatprep.subr.bf16.mxu0 0
    %1196 = vmatpush1.bf16.xpose.msra.mxu0 0
    %1197 = vmatprep.subr.bf16.mxu0 0
    %1198 = vmatpush1.bf16.xpose.msra.mxu0 0
    %1199 = vmatprep.subr.bf16.mxu0 0
    %1200 = vmatpush1.bf16.xpose.msra.mxu0 0
    %1201 = vmatprep.subr.bf16.mxu0 0
    %1202 = vmatpush1.bf16.xpose.msra.mxu0 0
    %1203 = vmatprep.subr.bf16.mxu0 0
    %1204 = vmatpush1.bf16.xpose.msra.mxu0 %v1187
    %1205 = vmatprep.subr.bf16.mxu0 0
    %1206 = vmatpush2.bf16.xpose.msra.mxu0 0
    %1207 = vmatprep.subr.bf16.mxu0 0
    %1208 = vmatpush2.bf16.xpose.msra.mxu0 0
    %1209 = vmatprep.subr.bf16.mxu0 0
    %1210 = vmatpush2.bf16.xpose.msra.mxu0 0
    %1211 = vmatprep.subr.bf16.mxu0 0
    %1212 = vmatpush2.bf16.xpose.msra.mxu0 0
    %1213 = vmatprep.subr.bf16.mxu0 0
    %1214 = vmatpush2.bf16.xpose.msra.mxu0 0
    %1215 = vmatprep.subr.bf16.mxu0 0
    %1216 = vmatpush2.bf16.xpose.msra.mxu0 0
    %1217 = vmatprep.subr.bf16.mxu0 0
    %1218 = vmatpush2.bf16.xpose.msra.mxu0 0
    %1219 = vmatprep.subr.bf16.mxu0 0
    %1220 = vmatpush2.bf16.xpose.msra.mxu0 0
    %1221 = vmatprep.mubr.bf16.mxu0 0
    %1222 = vmatmul.mubr.bf16.gmra.mxu0 %v1184
    %v1223 = vpop.f32.mrf.mxu0
    %v1224 = vadd.f32 0.0, %v1223
    %v1225 = vpop.f32.mrf.mxu0
    %v1226 = vpop.f32.mrf.mxu0
    %v1227 = vpop.f32.mrf.mxu0
    %1228 = vdwg.mxu0
    %v1229 = vmul.f32 %v1086, 0.35355338
    %v1230 = vmul.f32 %v1132, 0.35355338
    %v1231 = vmul.f32 %v1178, 0.35355338
    %v1232 = vmul.f32 %v1224, 0.35355338
    %v1234 = vlaneseq
    %v1235 = vshrl.u32 %v1234, 7
    %v1236 = vsub.s32 0, %v1235
    %v1237 = vrot.slane %v1020, %v1236
    %v1239 = vadd.f32 %v1229, %v1237
    %v1240 = vadd.f32 %v1230, %v1237
    %v1241 = vadd.f32 %v1231, %v1237
    %v1242 = vadd.f32 %v1232, %v1237
    %v1243 = vsel %vm572, %v1239, -inf
    %1244 = vmax.xlane.f32.xlu0 %v1243
    %v1245 = vpop.xlane.xlu0 %1244
    %v1246 = vsel %vm572, %v1240, -inf
    %1247 = vmax.xlane.f32.xlu0 %v1246
    %v1248 = vpop.xlane.xlu0 %1247
    %v1249 = vsel %vm572, %v1241, -inf
    %1250 = vmax.xlane.f32.xlu0 %v1249
    %v1251 = vpop.xlane.xlu0 %1250
    %v1252 = vsel %vm572, %v1242, -inf
    %1253 = vmax.xlane.f32.xlu0 %v1252
    %v1254 = vpop.xlane.xlu0 %1253
    %v1255 = vsub.f32 %v1239, %v1245
    %v1256 = vsub.f32 %v1240, %v1248
    %v1257 = vsub.f32 %v1241, %v1251
    %v1258 = vsub.f32 %v1242, %v1254
    %v1259 = vmul.f32 %v1255, 1.442695
    %v1260 = vpow.pop %v1259
    %v1261 = vmul.f32 %v1256, 1.442695
    %v1262 = vpow.pop %v1261
    %v1263 = vmul.f32 %v1257, 1.442695
    %v1264 = vpow.pop %v1263
    %v1265 = vmul.f32 %v1258, 1.442695
    %v1266 = vpow.pop %v1265
    %v1267 = vsel %vm572, %v1260, 0.0
    %1268 = vadd.xlane.f32.xlu0 %v1267
    %v1269 = vpop.xlane.xlu0 %1268
    %v1270 = vsel %vm572, %v1262, 0.0
    %1271 = vadd.xlane.f32.xlu0 %v1270
    %v1272 = vpop.xlane.xlu0 %1271
    %v1273 = vsel %vm572, %v1264, 0.0
    %1274 = vadd.xlane.f32.xlu0 %v1273
    %v1275 = vpop.xlane.xlu0 %1274
    %v1276 = vsel %vm572, %v1266, 0.0
    %1277 = vadd.xlane.f32.xlu0 %v1276
    %v1278 = vpop.xlane.xlu0 %1277
    %v1279 = vrcp.pop %v1269
    %v1280 = vmul.f32 %v1260, %v1279
    %v1281 = vrcp.pop %v1272
    %v1282 = vmul.f32 %v1262, %v1281
    %v1283 = vrcp.pop %v1275
    %v1284 = vmul.f32 %v1264, %v1283
    %v1285 = vrcp.pop %v1278
    %v1286 = vmul.f32 %v1266, %v1285
    %v1287 = vpack.c.bf16 %v1280, %v1280
    %v1288 = vpack.c.bf16 %v1282, %v1282
    %v1289 = vpack.c.bf16 %v1284, %v1284
    %v1290 = vpack.c.bf16 %v1286, %v1286
    %1291 = vrot.lane.b32.xlu0 %v1037, 96
    %v1292 = vpop.permute.xlu0 %1291
    %v1295 = vsel %vm572, %v1287, 0
    %1297 = vmatprep.subr.bf16.mxu0 0
    %1298 = vmatpush1.bf16.msra.mxu0 0
    %1299 = vmatprep.subr.bf16.mxu0 0
    %1300 = vmatpush1.bf16.msra.mxu0 0
    %1301 = vmatprep.subr.bf16.mxu0 0
    %1302 = vmatpush1.bf16.msra.mxu0 0
    %1303 = vmatprep.subr.bf16.mxu0 0
    %1304 = vmatpush1.bf16.msra.mxu0 0
    %1305 = vmatprep.subr.bf16.mxu0 0
    %1306 = vmatpush1.bf16.msra.mxu0 0
    %1307 = vmatprep.subr.bf16.mxu0 0
    %1308 = vmatpush1.bf16.msra.mxu0 0
    %1309 = vmatprep.subr.bf16.mxu0 0
    %1310 = vmatpush1.bf16.msra.mxu0 0
    %1311 = vmatprep.subr.bf16.mxu0 0
    %1312 = vmatpush1.bf16.msra.mxu0 %v1292
    %1313 = vmatprep.subr.bf16.mxu0 0
    %1314 = vmatpush2.bf16.msra.mxu0 0
    %1315 = vmatprep.subr.bf16.mxu0 0
    %1316 = vmatpush2.bf16.msra.mxu0 0
    %1317 = vmatprep.subr.bf16.mxu0 0
    %1318 = vmatpush2.bf16.msra.mxu0 0
    %1319 = vmatprep.subr.bf16.mxu0 0
    %1320 = vmatpush2.bf16.msra.mxu0 0
    %1321 = vmatprep.subr.bf16.mxu0 0
    %1322 = vmatpush2.bf16.msra.mxu0 0
    %1323 = vmatprep.subr.bf16.mxu0 0
    %1324 = vmatpush2.bf16.msra.mxu0 0
    %1325 = vmatprep.subr.bf16.mxu0 0
    %1326 = vmatpush2.bf16.msra.mxu0 0
    %1327 = vmatprep.subr.bf16.mxu0 0
    %1328 = vmatpush2.bf16.msra.mxu0 0
    %1329 = vmatprep.mubr.bf16.mxu0 0
    %1330 = vmatmul.mubr.bf16.gmra.mxu0 %v1295
    %v1331 = vpop.f32.mrf.mxu0
    %v1332 = vadd.f32 0.0, %v1331
    %v1333 = vpop.f32.mrf.mxu0
    %v1334 = vpop.f32.mrf.mxu0
    %v1335 = vpop.f32.mrf.mxu0
    %1336 = vdwg.mxu0
    %1337 = vrot.lane.b32.xlu0 %v1040, 96
    %v1338 = vpop.permute.xlu0 %1337
    %v1341 = vsel %vm572, %v1288, 0
    %1343 = vmatprep.subr.bf16.mxu0 0
    %1344 = vmatpush1.bf16.msra.mxu0 0
    %1345 = vmatprep.subr.bf16.mxu0 0
    %1346 = vmatpush1.bf16.msra.mxu0 0
    %1347 = vmatprep.subr.bf16.mxu0 0
    %1348 = vmatpush1.bf16.msra.mxu0 0
    %1349 = vmatprep.subr.bf16.mxu0 0
    %1350 = vmatpush1.bf16.msra.mxu0 0
    %1351 = vmatprep.subr.bf16.mxu0 0
    %1352 = vmatpush1.bf16.msra.mxu0 0
    %1353 = vmatprep.subr.bf16.mxu0 0
    %1354 = vmatpush1.bf16.msra.mxu0 0
    %1355 = vmatprep.subr.bf16.mxu0 0
    %1356 = vmatpush1.bf16.msra.mxu0 0
    %1357 = vmatprep.subr.bf16.mxu0 0
    %1358 = vmatpush1.bf16.msra.mxu0 %v1338
    %1359 = vmatprep.subr.bf16.mxu0 0
    %1360 = vmatpush2.bf16.msra.mxu0 0
    %1361 = vmatprep.subr.bf16.mxu0 0
    %1362 = vmatpush2.bf16.msra.mxu0 0
    %1363 = vmatprep.subr.bf16.mxu0 0
    %1364 = vmatpush2.bf16.msra.mxu0 0
    %1365 = vmatprep.subr.bf16.mxu0 0
    %1366 = vmatpush2.bf16.msra.mxu0 0
    %1367 = vmatprep.subr.bf16.mxu0 0
    %1368 = vmatpush2.bf16.msra.mxu0 0
    %1369 = vmatprep.subr.bf16.mxu0 0
    %1370 = vmatpush2.bf16.msra.mxu0 0
    %1371 = vmatprep.subr.bf16.mxu0 0
    %1372 = vmatpush2.bf16.msra.mxu0 0
    %1373 = vmatprep.subr.bf16.mxu0 0
    %1374 = vmatpush2.bf16.msra.mxu0 0
    %1375 = vmatprep.mubr.bf16.mxu0 0
    %1376 = vmatmul.mubr.bf16.gmra.mxu0 %v1341
    %v1377 = vpop.f32.mrf.mxu0
    %v1378 = vadd.f32 0.0, %v1377
    %v1379 = vpop.f32.mrf.mxu0
    %v1380 = vpop.f32.mrf.mxu0
    %v1381 = vpop.f32.mrf.mxu0
    %1382 = vdwg.mxu0
    %1383 = vrot.lane.b32.xlu0 %v1042, 96
    %v1384 = vpop.permute.xlu0 %1383
    %v1387 = vsel %vm572, %v1289, 0
    %1389 = vmatprep.subr.bf16.mxu0 0
    %1390 = vmatpush1.bf16.msra.mxu0 0
    %1391 = vmatprep.subr.bf16.mxu0 0
    %1392 = vmatpush1.bf16.msra.mxu0 0
    %1393 = vmatprep.subr.bf16.mxu0 0
    %1394 = vmatpush1.bf16.msra.mxu0 0
    %1395 = vmatprep.subr.bf16.mxu0 0
    %1396 = vmatpush1.bf16.msra.mxu0 0
    %1397 = vmatprep.subr.bf16.mxu0 0
    %1398 = vmatpush1.bf16.msra.mxu0 0
    %1399 = vmatprep.subr.bf16.mxu0 0
    %1400 = vmatpush1.bf16.msra.mxu0 0
    %1401 = vmatprep.subr.bf16.mxu0 0
    %1402 = vmatpush1.bf16.msra.mxu0 0
    %1403 = vmatprep.subr.bf16.mxu0 0
    %1404 = vmatpush1.bf16.msra.mxu0 %v1384
    %1405 = vmatprep.subr.bf16.mxu0 0
    %1406 = vmatpush2.bf16.msra.mxu0 0
    %1407 = vmatprep.subr.bf16.mxu0 0
    %1408 = vmatpush2.bf16.msra.mxu0 0
    %1409 = vmatprep.subr.bf16.mxu0 0
    %1410 = vmatpush2.bf16.msra.mxu0 0
    %1411 = vmatprep.subr.bf16.mxu0 0
    %1412 = vmatpush2.bf16.msra.mxu0 0
    %1413 = vmatprep.subr.bf16.mxu0 0
    %1414 = vmatpush2.bf16.msra.mxu0 0
    %1415 = vmatprep.subr.bf16.mxu0 0
    %1416 = vmatpush2.bf16.msra.mxu0 0
    %1417 = vmatprep.subr.bf16.mxu0 0
    %1418 = vmatpush2.bf16.msra.mxu0 0
    %1419 = vmatprep.subr.bf16.mxu0 0
    %1420 = vmatpush2.bf16.msra.mxu0 0
    %1421 = vmatprep.mubr.bf16.mxu0 0
    %1422 = vmatmul.mubr.bf16.gmra.mxu0 %v1387
    %v1423 = vpop.f32.mrf.mxu0
    %v1424 = vadd.f32 0.0, %v1423
    %v1425 = vpop.f32.mrf.mxu0
    %v1426 = vpop.f32.mrf.mxu0
    %v1427 = vpop.f32.mrf.mxu0
    %1428 = vdwg.mxu0
    %1429 = vrot.lane.b32.xlu0 %v1044, 96
    %v1430 = vpop.permute.xlu0 %1429
    %v1433 = vsel %vm572, %v1290, 0
    %1435 = vmatprep.subr.bf16.mxu0 0
    %1436 = vmatpush1.bf16.msra.mxu0 0
    %1437 = vmatprep.subr.bf16.mxu0 0
    %1438 = vmatpush1.bf16.msra.mxu0 0
    %1439 = vmatprep.subr.bf16.mxu0 0
    %1440 = vmatpush1.bf16.msra.mxu0 0
    %1441 = vmatprep.subr.bf16.mxu0 0
    %1442 = vmatpush1.bf16.msra.mxu0 0
    %1443 = vmatprep.subr.bf16.mxu0 0
    %1444 = vmatpush1.bf16.msra.mxu0 0
    %1445 = vmatprep.subr.bf16.mxu0 0
    %1446 = vmatpush1.bf16.msra.mxu0 0
    %1447 = vmatprep.subr.bf16.mxu0 0
    %1448 = vmatpush1.bf16.msra.mxu0 0
    %1449 = vmatprep.subr.bf16.mxu0 0
    %1450 = vmatpush1.bf16.msra.mxu0 %v1430
    %1451 = vmatprep.subr.bf16.mxu0 0
    %1452 = vmatpush2.bf16.msra.mxu0 0
    %1453 = vmatprep.subr.bf16.mxu0 0
    %1454 = vmatpush2.bf16.msra.mxu0 0
    %1455 = vmatprep.subr.bf16.mxu0 0
    %1456 = vmatpush2.bf16.msra.mxu0 0
    %1457 = vmatprep.subr.bf16.mxu0 0
    %1458 = vmatpush2.bf16.msra.mxu0 0
    %1459 = vmatprep.subr.bf16.mxu0 0
    %1460 = vmatpush2.bf16.msra.mxu0 0
    %1461 = vmatprep.subr.bf16.mxu0 0
    %1462 = vmatpush2.bf16.msra.mxu0 0
    %1463 = vmatprep.subr.bf16.mxu0 0
    %1464 = vmatpush2.bf16.msra.mxu0 0
    %1465 = vmatprep.subr.bf16.mxu0 0
    %1466 = vmatpush2.bf16.msra.mxu0 0
    %1467 = vmatprep.mubr.bf16.mxu0 0
    %1468 = vmatmul.mubr.bf16.gmra.mxu0 %v1433
    %v1469 = vpop.f32.mrf.mxu0
    %v1470 = vadd.f32 0.0, %v1469
    %v1471 = vpop.f32.mrf.mxu0
    %v1472 = vpop.f32.mrf.mxu0
    %v1473 = vpop.f32.mrf.mxu0
    %1474 = vdwg.mxu0
    %v1475 = vpack.c.bf16 %v1332, %v1332
    %v1476 = vld [vmem:[%s8] sm:$0xf]
    %v1478 = vsel %vm373, %v1475, 0
    %v1481 = vsel %vm810, %v1476, 0
    %1483 = vmatprep.subr.bf16.mxu0 0
    %1484 = vmatpush1.bf16.msra.mxu0 0
    %1485 = vmatprep.subr.bf16.mxu0 0
    %1486 = vmatpush1.bf16.msra.mxu0 0
    %1487 = vmatprep.subr.bf16.mxu0 0
    %1488 = vmatpush1.bf16.msra.mxu0 0
    %1489 = vmatprep.subr.bf16.mxu0 0
    %1490 = vmatpush1.bf16.msra.mxu0 0
    %1491 = vmatprep.subr.bf16.mxu0 0
    %1492 = vmatpush1.bf16.msra.mxu0 0
    %1493 = vmatprep.subr.bf16.mxu0 0
    %1494 = vmatpush1.bf16.msra.mxu0 0
    %1495 = vmatprep.subr.bf16.mxu0 0
    %1496 = vmatpush1.bf16.msra.mxu0 0
    %1497 = vmatprep.subr.bf16.mxu0 0
    %1498 = vmatpush1.bf16.msra.mxu0 %v1481
    %1499 = vmatprep.subr.bf16.mxu0 0
    %1500 = vmatpush2.bf16.msra.mxu0 0
    %1501 = vmatprep.subr.bf16.mxu0 0
    %1502 = vmatpush2.bf16.msra.mxu0 0
    %1503 = vmatprep.subr.bf16.mxu0 0
    %1504 = vmatpush2.bf16.msra.mxu0 0
    %1505 = vmatprep.subr.bf16.mxu0 0
    %1506 = vmatpush2.bf16.msra.mxu0 0
    %1507 = vmatprep.subr.bf16.mxu0 0
    %1508 = vmatpush2.bf16.msra.mxu0 0
    %1509 = vmatprep.subr.bf16.mxu0 0
    %1510 = vmatpush2.bf16.msra.mxu0 0
    %1511 = vmatprep.subr.bf16.mxu0 0
    %1512 = vmatpush2.bf16.msra.mxu0 0
    %1513 = vmatprep.subr.bf16.mxu0 0
    %1514 = vmatpush2.bf16.msra.mxu0 0
    %1515 = vmatprep.mubr.bf16.mxu0 0
    %1516 = vmatmul.mubr.bf16.gmra.mxu0 %v1478
    %v1517 = vpop.f32.mrf.mxu0
    %v1518 = vadd.f32 0.0, %v1517
    %v1519 = vpop.f32.mrf.mxu0
    %v1520 = vpop.f32.mrf.mxu0
    %v1521 = vpop.f32.mrf.mxu0
    %1522 = vdwg.mxu0
    %v1523 = vadd.f32 %v857, %v1518
    %v1524 = vpack.c.bf16 %v1378, %v1378
    %v1525 = vld [vmem:[%s860] sm:$0xf]
    %v1527 = vsel %vm373, %v1524, 0
    %v1530 = vsel %vm810, %v1525, 0
    %1532 = vmatprep.subr.bf16.mxu0 0
    %1533 = vmatpush1.bf16.msra.mxu0 0
    %1534 = vmatprep.subr.bf16.mxu0 0
    %1535 = vmatpush1.bf16.msra.mxu0 0
    %1536 = vmatprep.subr.bf16.mxu0 0
    %1537 = vmatpush1.bf16.msra.mxu0 0
    %1538 = vmatprep.subr.bf16.mxu0 0
    %1539 = vmatpush1.bf16.msra.mxu0 0
    %1540 = vmatprep.subr.bf16.mxu0 0
    %1541 = vmatpush1.bf16.msra.mxu0 0
    %1542 = vmatprep.subr.bf16.mxu0 0
    %1543 = vmatpush1.bf16.msra.mxu0 0
    %1544 = vmatprep.subr.bf16.mxu0 0
    %1545 = vmatpush1.bf16.msra.mxu0 0
    %1546 = vmatprep.subr.bf16.mxu0 0
    %1547 = vmatpush1.bf16.msra.mxu0 %v1530
    %1548 = vmatprep.subr.bf16.mxu0 0
    %1549 = vmatpush2.bf16.msra.mxu0 0
    %1550 = vmatprep.subr.bf16.mxu0 0
    %1551 = vmatpush2.bf16.msra.mxu0 0
    %1552 = vmatprep.subr.bf16.mxu0 0
    %1553 = vmatpush2.bf16.msra.mxu0 0
    %1554 = vmatprep.subr.bf16.mxu0 0
    %1555 = vmatpush2.bf16.msra.mxu0 0
    %1556 = vmatprep.subr.bf16.mxu0 0
    %1557 = vmatpush2.bf16.msra.mxu0 0
    %1558 = vmatprep.subr.bf16.mxu0 0
    %1559 = vmatpush2.bf16.msra.mxu0 0
    %1560 = vmatprep.subr.bf16.mxu0 0
    %1561 = vmatpush2.bf16.msra.mxu0 0
    %1562 = vmatprep.subr.bf16.mxu0 0
    %1563 = vmatpush2.bf16.msra.mxu0 0
    %1564 = vmatprep.mubr.bf16.mxu0 0
    %1565 = vmatmul.mubr.bf16.gmra.mxu0 %v1527
    %v1566 = vpop.f32.mrf.mxu0
    %v1567 = vadd.f32 0.0, %v1566
    %v1568 = vpop.f32.mrf.mxu0
    %v1569 = vpop.f32.mrf.mxu0
    %v1570 = vpop.f32.mrf.mxu0
    %1571 = vdwg.mxu0
    %v1572 = vadd.f32 %v1523, %v1567
    %v1573 = vpack.c.bf16 %v1424, %v1424
    %v1574 = vld [vmem:[%s910] sm:$0xf]
    %v1576 = vsel %vm373, %v1573, 0
    %v1579 = vsel %vm810, %v1574, 0
    %1581 = vmatprep.subr.bf16.mxu0 0
    %1582 = vmatpush1.bf16.msra.mxu0 0
    %1583 = vmatprep.subr.bf16.mxu0 0
    %1584 = vmatpush1.bf16.msra.mxu0 0
    %1585 = vmatprep.subr.bf16.mxu0 0
    %1586 = vmatpush1.bf16.msra.mxu0 0
    %1587 = vmatprep.subr.bf16.mxu0 0
    %1588 = vmatpush1.bf16.msra.mxu0 0
    %1589 = vmatprep.subr.bf16.mxu0 0
    %1590 = vmatpush1.bf16.msra.mxu0 0
    %1591 = vmatprep.subr.bf16.mxu0 0
    %1592 = vmatpush1.bf16.msra.mxu0 0
    %1593 = vmatprep.subr.bf16.mxu0 0
    %1594 = vmatpush1.bf16.msra.mxu0 0
    %1595 = vmatprep.subr.bf16.mxu0 0
    %1596 = vmatpush1.bf16.msra.mxu0 %v1579
    %1597 = vmatprep.subr.bf16.mxu0 0
    %1598 = vmatpush2.bf16.msra.mxu0 0
    %1599 = vmatprep.subr.bf16.mxu0 0
    %1600 = vmatpush2.bf16.msra.mxu0 0
    %1601 = vmatprep.subr.bf16.mxu0 0
    %1602 = vmatpush2.bf16.msra.mxu0 0
    %1603 = vmatprep.subr.bf16.mxu0 0
    %1604 = vmatpush2.bf16.msra.mxu0 0
    %1605 = vmatprep.subr.bf16.mxu0 0
    %1606 = vmatpush2.bf16.msra.mxu0 0
    %1607 = vmatprep.subr.bf16.mxu0 0
    %1608 = vmatpush2.bf16.msra.mxu0 0
    %1609 = vmatprep.subr.bf16.mxu0 0
    %1610 = vmatpush2.bf16.msra.mxu0 0
    %1611 = vmatprep.subr.bf16.mxu0 0
    %1612 = vmatpush2.bf16.msra.mxu0 0
    %1613 = vmatprep.mubr.bf16.mxu0 0
    %1614 = vmatmul.mubr.bf16.gmra.mxu0 %v1576
    %v1615 = vpop.f32.mrf.mxu0
    %v1616 = vadd.f32 0.0, %v1615
    %v1617 = vpop.f32.mrf.mxu0
    %v1618 = vpop.f32.mrf.mxu0
    %v1619 = vpop.f32.mrf.mxu0
    %1620 = vdwg.mxu0
    %v1621 = vadd.f32 %v1572, %v1616
    %v1622 = vpack.c.bf16 %v1470, %v1470
    %v1623 = vld [vmem:[%s960] sm:$0xf]
    %v1625 = vsel %vm373, %v1622, 0
    %v1628 = vsel %vm810, %v1623, 0
    %1630 = vmatprep.subr.bf16.mxu0 0
    %1631 = vmatpush1.bf16.msra.mxu0 0
    %1632 = vmatprep.subr.bf16.mxu0 0
    %1633 = vmatpush1.bf16.msra.mxu0 0
    %1634 = vmatprep.subr.bf16.mxu0 0
    %1635 = vmatpush1.bf16.msra.mxu0 0
    %1636 = vmatprep.subr.bf16.mxu0 0
    %1637 = vmatpush1.bf16.msra.mxu0 0
    %1638 = vmatprep.subr.bf16.mxu0 0
    %1639 = vmatpush1.bf16.msra.mxu0 0
    %1640 = vmatprep.subr.bf16.mxu0 0
    %1641 = vmatpush1.bf16.msra.mxu0 0
    %1642 = vmatprep.subr.bf16.mxu0 0
    %1643 = vmatpush1.bf16.msra.mxu0 0
    %1644 = vmatprep.subr.bf16.mxu0 0
    %1645 = vmatpush1.bf16.msra.mxu0 %v1628
    %1646 = vmatprep.subr.bf16.mxu0 0
    %1647 = vmatpush2.bf16.msra.mxu0 0
    %1648 = vmatprep.subr.bf16.mxu0 0
    %1649 = vmatpush2.bf16.msra.mxu0 0
    %1650 = vmatprep.subr.bf16.mxu0 0
    %1651 = vmatpush2.bf16.msra.mxu0 0
    %1652 = vmatprep.subr.bf16.mxu0 0
    %1653 = vmatpush2.bf16.msra.mxu0 0
    %1654 = vmatprep.subr.bf16.mxu0 0
    %1655 = vmatpush2.bf16.msra.mxu0 0
    %1656 = vmatprep.subr.bf16.mxu0 0
    %1657 = vmatpush2.bf16.msra.mxu0 0
    %1658 = vmatprep.subr.bf16.mxu0 0
    %1659 = vmatpush2.bf16.msra.mxu0 0
    %1660 = vmatprep.subr.bf16.mxu0 0
    %1661 = vmatpush2.bf16.msra.mxu0 0
    %1662 = vmatprep.mubr.bf16.mxu0 0
    %1663 = vmatmul.mubr.bf16.gmra.mxu0 %v1625
    %v1664 = vpop.f32.mrf.mxu0
    %v1665 = vadd.f32 0.0, %v1664
    %v1666 = vpop.f32.mrf.mxu0
    %v1667 = vpop.f32.mrf.mxu0
    %v1668 = vpop.f32.mrf.mxu0
    %1669 = vdwg.mxu0
    %v1670 = vadd.f32 %v1621, %v1665
    %v1671 = vsel %vm572, %v1280, 0.0
    %v1672 = vsel %vm572, %v1282, 0.0
    %v1673 = vadd.f32 %v1671, %v1672
    %v1674 = vsel %vm572, %v1284, 0.0
    %v1675 = vadd.f32 %v1673, %v1674
    %v1676 = vsel %vm572, %v1286, 0.0
    %v1677 = vadd.f32 %v1675, %v1676
    %v1678 = vmul.f32 %v1677, %v1016
    %s1679 = scalar_lea.vmem [#allocation2], 8
    %1680 = vst.msk [vmem:[%s1679] sm:$0xff] %vm572, %v1678
    %v1681 = vadd.f32 %v63, %v1008
    %v1682 = vadd.f32 %v65, %v1670
    %v1683 = vsel %vm90, %v1681, 0.0
    %1684 = vadd.xlane.f32.xlu0 %v1683
    %v1685 = vpop.xlane.xlu0 %1684
    %v1686 = vsel %vm90, %v1682, 0.0
    %1687 = vadd.xlane.f32.xlu0 %v1686
    %v1688 = vpop.xlane.xlu0 %1687
    %v1689 = vmul.f32 %v1685, %v97
    %v1690 = vmul.f32 %v1688, %v97
    %v1691 = vsub.f32 %v1681, %v1689
    %v1692 = vsub.f32 %v1682, %v1690
    %v1693 = vmul.f32 %v1691, %v1691
    %v1694 = vmul.f32 %v1692, %v1692
    %v1695 = vsel %vm90, %v1693, 0.0
    %1696 = vadd.xlane.f32.xlu0 %v1695
    %v1697 = vpop.xlane.xlu0 %1696
    %v1698 = vsel %vm90, %v1694, 0.0
    %1699 = vadd.xlane.f32.xlu0 %v1698
    %v1700 = vpop.xlane.xlu0 %1699
    %v1701 = vmul.f32 %v1697, %v97
    %v1702 = vmul.f32 %v1700, %v97
    %v1703 = vadd.f32 %v1701, 1e-05
    %v1704 = vadd.f32 %v1702, 1e-05
    %v1705 = vrsqrt.pop %v1703
    %v1706 = vrsqrt.pop %v1704
    %v1707 = vmul.f32 %v1691, %v1705
    %v1708 = vmul.f32 %v1692, %v1706
    %v1709 = vlaneseq
    %v1710 = vshrl.u32 %v1709, 7
    %v1711 = vsub.s32 2, %v1710
    %v1712 = vrot.slane %v87, %v1711
    %v1713 = vmul.f32 %v1707, %v1712
    %v1714 = vmul.f32 %v1708, %v1712
    %v1715 = vlaneseq
    %v1716 = vshrl.u32 %v1715, 7
    %v1717 = vsub.s32 3, %v1716
    %v1718 = vrot.slane %v87, %v1717
    %v1719 = vadd.f32 %v1713, %v1718
    %v1720 = vadd.f32 %v1714, %v1718
    %v1721 = vpack.c.bf16 %v1720, %v1719
    %v1722 = vld [vmem:[%s14] sm:$0xf]
    %v1723 = vld [vmem:[%s14 + $0x4] sm:$0xf]
    %v1724 = vld [vmem:[%s14 + $0x8] sm:$0xf]
    %v1725 = vld [vmem:[%s14 + $0xc] sm:$0xf]
    %v1726 = vld [vmem:[%s15] sm:$0x1]
    %v1728 = vlaneseq
    %v1729 = vshrl.u32 %v1728, 7
    %v1730 = vsub.s32 0, %v1729
    %v1731 = vrot.slane %v1726, %v1730
    %v1737 = vunpack.c.l.b16 %v1722
    %v1738 = vunpack.c.l.b16 %v1723
    %v1739 = vunpack.c.l.b16 %v1724
    %v1740 = vunpack.c.l.b16 %v1725
    %v1741 = vpack.c.b16 %v1738, %v1737
    %v1742 = vpack.c.b16 %v1740, %v1739
    %v1746 = vsel %vm90, %v1721, 0
    %1748 = vmatprep.subr.bf16.mxu0 0
    %1749 = vmatpush1.bf16.msra.mxu0 0
    %1750 = vmatprep.subr.bf16.mxu0 0
    %1751 = vmatpush1.bf16.msra.mxu0 0
    %1752 = vmatprep.subr.bf16.mxu0 0
    %1753 = vmatpush1.bf16.msra.mxu0 0
    %1754 = vmatprep.subr.bf16.mxu0 0
    %1755 = vmatpush1.bf16.msra.mxu0 0
    %1756 = vmatprep.subr.bf16.mxu0 0
    %1757 = vmatpush1.bf16.msra.mxu0 0
    %1758 = vmatprep.subr.bf16.mxu0 0
    %1759 = vmatpush1.bf16.msra.mxu0 0
    %1760 = vmatprep.subr.bf16.mxu0 0
    %1761 = vmatpush1.bf16.msra.mxu0 %v1742
    %1762 = vmatprep.subr.bf16.mxu0 0
    %1763 = vmatpush1.bf16.msra.mxu0 %v1741
    %1764 = vmatprep.subr.bf16.mxu0 0
    %1765 = vmatpush2.bf16.msra.mxu0 0
    %1766 = vmatprep.subr.bf16.mxu0 0
    %1767 = vmatpush2.bf16.msra.mxu0 0
    %1768 = vmatprep.subr.bf16.mxu0 0
    %1769 = vmatpush2.bf16.msra.mxu0 0
    %1770 = vmatprep.subr.bf16.mxu0 0
    %1771 = vmatpush2.bf16.msra.mxu0 0
    %1772 = vmatprep.subr.bf16.mxu0 0
    %1773 = vmatpush2.bf16.msra.mxu0 0
    %1774 = vmatprep.subr.bf16.mxu0 0
    %1775 = vmatpush2.bf16.msra.mxu0 0
    %1776 = vmatprep.subr.bf16.mxu0 0
    %1777 = vmatpush2.bf16.msra.mxu0 0
    %1778 = vmatprep.subr.bf16.mxu0 0
    %1779 = vmatpush2.bf16.msra.mxu0 0
    %1780 = vmatprep.mubr.bf16.mxu0 0
    %1781 = vmatmul.mubr.bf16.gmra.mxu0 %v1746
    %v1782 = vpop.f32.mrf.mxu0
    %v1783 = vadd.f32 %v1731, %v1782
    %v1784 = vpop.f32.mrf.mxu0
    %v1785 = vpop.f32.mrf.mxu0
    %v1786 = vadd.f32 %v1731, %v1785
    %v1787 = vpop.f32.mrf.mxu0
    %1788 = vdwg.mxu0
    %v1789 = vmul.f32 %v1783, 1.702
    %v1790 = vmul.f32 %v1786, 1.702
    %v1791 = vxor.u32 %v1789, 2147483648
    %v1792 = vxor.u32 %v1790, 2147483648
    %v1793 = vmul.f32 %v1791, 1.442695
    %v1794 = vpow.pop %v1793
    %v1795 = vmul.f32 %v1792, 1.442695
    %v1796 = vpow.pop %v1795
    %v1797 = vadd.f32 %v1794, 1.0
    %v1798 = vadd.f32 %v1796, 1.0
    %v1799 = vrcp.pop %v1797
    %v1800 = vmul.f32 1.0, %v1799
    %v1801 = vrcp.pop %v1798
    %v1802 = vmul.f32 1.0, %v1801
    %v1803 = vmul.f32 %v1783, %v1800
    %v1804 = vmul.f32 %v1786, %v1802
    %v1805 = vpack.c.bf16 %v1804, %v1803
    %v1806 = vld [vmem:[%s16] sm:$0xf]
    %v1807 = vld [vmem:[%s16 + $0x4] sm:$0xf]
    %v1808 = vld [vmem:[%s16 + $0x8] sm:$0xf]
    %v1809 = vld [vmem:[%s16 + $0xc] sm:$0xf]
    %v1810 = vld [vmem:[%s16 + $0x10] sm:$0xf]
    %v1811 = vld [vmem:[%s16 + $0x14] sm:$0xf]
    %v1812 = vld [vmem:[%s16 + $0x18] sm:$0xf]
    %v1813 = vld [vmem:[%s16 + $0x1c] sm:$0xf]
    %v1814 = vld [vmem:[%s16 + $0x20] sm:$0xf]
    %v1815 = vld [vmem:[%s16 + $0x24] sm:$0xf]
    %v1816 = vld [vmem:[%s16 + $0x28] sm:$0xf]
    %v1817 = vld [vmem:[%s16 + $0x2c] sm:$0xf]
    %v1818 = vld [vmem:[%s16 + $0x30] sm:$0xf]
    %v1819 = vld [vmem:[%s16 + $0x34] sm:$0xf]
    %v1820 = vld [vmem:[%s16 + $0x38] sm:$0xf]
    %v1821 = vld [vmem:[%s16 + $0x3c] sm:$0xf]
    %v1838 = vunpack.c.l.b16 %v1806
    %v1839 = vunpack.c.l.b16 %v1807
    %v1840 = vunpack.c.l.b16 %v1808
    %v1841 = vunpack.c.l.b16 %v1809
    %v1842 = vunpack.c.l.b16 %v1810
    %v1843 = vunpack.c.l.b16 %v1811
    %v1844 = vunpack.c.l.b16 %v1812
    %v1845 = vunpack.c.l.b16 %v1813
    %v1846 = vunpack.c.l.b16 %v1814
    %v1847 = vunpack.c.l.b16 %v1815
    %v1848 = vunpack.c.l.b16 %v1816
    %v1849 = vunpack.c.l.b16 %v1817
    %v1850 = vunpack.c.l.b16 %v1818
    %v1851 = vunpack.c.l.b16 %v1819
    %v1852 = vunpack.c.l.b16 %v1820
    %v1853 = vunpack.c.l.b16 %v1821
    %v1854 = vpack.c.b16 %v1839, %v1838
    %v1855 = vpack.c.b16 %v1841, %v1840
    %v1856 = vpack.c.b16 %v1843, %v1842
    %v1857 = vpack.c.b16 %v1845, %v1844
    %v1858 = vpack.c.b16 %v1847, %v1846
    %v1859 = vpack.c.b16 %v1849, %v1848
    %v1860 = vpack.c.b16 %v1851, %v1850
    %v1861 = vpack.c.b16 %v1853, %v1852
    %1870 = vmatprep.subr.bf16.mxu0 0
    %1871 = vmatpush1.bf16.msra.mxu0 %v1861
    %1872 = vmatprep.subr.bf16.mxu0 0
    %1873 = vmatpush1.bf16.msra.mxu0 %v1860
    %1874 = vmatprep.subr.bf16.mxu0 0
    %1875 = vmatpush1.bf16.msra.mxu0 %v1859
    %1876 = vmatprep.subr.bf16.mxu0 0
    %1877 = vmatpush1.bf16.msra.mxu0 %v1858
    %1878 = vmatprep.subr.bf16.mxu0 0
    %1879 = vmatpush1.bf16.msra.mxu0 %v1857
    %1880 = vmatprep.subr.bf16.mxu0 0
    %1881 = vmatpush1.bf16.msra.mxu0 %v1856
    %1882 = vmatprep.subr.bf16.mxu0 0
    %1883 = vmatpush1.bf16.msra.mxu0 %v1855
    %1884 = vmatprep.subr.bf16.mxu0 0
    %1885 = vmatpush1.bf16.msra.mxu0 %v1854
    %1886 = vmatprep.subr.bf16.mxu0 0
    %1887 = vmatpush2.bf16.msra.mxu0 0
    %1888 = vmatprep.subr.bf16.mxu0 0
    %1889 = vmatpush2.bf16.msra.mxu0 0
    %1890 = vmatprep.subr.bf16.mxu0 0
    %1891 = vmatpush2.bf16.msra.mxu0 0
    %1892 = vmatprep.subr.bf16.mxu0 0
    %1893 = vmatpush2.bf16.msra.mxu0 0
    %1894 = vmatprep.subr.bf16.mxu0 0
    %1895 = vmatpush2.bf16.msra.mxu0 0
    %1896 = vmatprep.subr.bf16.mxu0 0
    %1897 = vmatpush2.bf16.msra.mxu0 0
    %1898 = vmatprep.subr.bf16.mxu0 0
    %1899 = vmatpush2.bf16.msra.mxu0 0
    %1900 = vmatprep.subr.bf16.mxu0 0
    %1901 = vmatpush2.bf16.msra.mxu0 0
    %1902 = vmatprep.mubr.bf16.mxu0 0
    %1903 = vmatmul.mubr.bf16.gmra.mxu0 %v1805
    %v1904 = vpop.f32.mrf.mxu0
    %v1905 = vadd.f32 0.0, %v1904
    %v1906 = vpop.f32.mrf.mxu0
    %v1907 = vpop.f32.mrf.mxu0
    %v1908 = vadd.f32 0.0, %v1907
    %v1909 = vpop.f32.mrf.mxu0
    %1910 = vdwg.mxu0
    %v1911 = vadd.f32 %v1681, %v1905
    %v1912 = vadd.f32 %v1682, %v1908
    %v1913 = vld [vmem:[%s17] sm:$0x1]
    %v1915 = vlaneseq
    %v1916 = vshrl.u32 %v1915, 7
    %v1917 = vsub.s32 0, %v1916
    %v1918 = vrot.slane %v1913, %v1917
    %v1920 = vadd.f32 %v1911, %v1918
    %v1921 = vadd.f32 %v1912, %v1918
    %v1922 = vsel %vm90, %v1920, 0.0
    %1923 = vadd.xlane.f32.xlu0 %v1922
    %v1924 = vpop.xlane.xlu0 %1923
    %v1925 = vsel %vm90, %v1921, 0.0
    %1926 = vadd.xlane.f32.xlu0 %v1925
    %v1927 = vpop.xlane.xlu0 %1926
    %v1928 = vmul.f32 %v1924, %v97
    %v1929 = vmul.f32 %v1927, %v97
    %v1930 = vsub.f32 %v1920, %v1928
    %v1931 = vsub.f32 %v1921, %v1929
    %v1932 = vmul.f32 %v1930, %v1930
    %v1933 = vmul.f32 %v1931, %v1931
    %v1934 = vsel %vm90, %v1932, 0.0
    %1935 = vadd.xlane.f32.xlu0 %v1934
    %v1936 = vpop.xlane.xlu0 %1935
    %v1937 = vsel %vm90, %v1933, 0.0
    %1938 = vadd.xlane.f32.xlu0 %v1937
    %v1939 = vpop.xlane.xlu0 %1938
    %v1940 = vmul.f32 %v1936, %v97
    %v1941 = vmul.f32 %v1939, %v97
    %v1942 = vadd.f32 %v1940, 1e-05
    %v1943 = vadd.f32 %v1941, 1e-05
    %v1944 = vrsqrt.pop %v1942
    %v1945 = vrsqrt.pop %v1943
    %v1946 = vmul.f32 %v1930, %v1944
    %v1947 = vmul.f32 %v1931, %v1945
    %v1948 = vlaneseq
    %v1949 = vshrl.u32 %v1948, 7
    %v1950 = vsub.s32 4, %v1949
    %v1951 = vrot.slane %v87, %v1950
    %v1952 = vmul.f32 %v1946, %v1951
    %v1953 = vmul.f32 %v1947, %v1951
    %v1954 = vlaneseq
    %v1955 = vshrl.u32 %v1954, 7
    %v1956 = vsub.s32 5, %v1955
    %v1957 = vrot.slane %v87, %v1956
    %v1958 = vadd.f32 %v1952, %v1957
    %v1959 = vadd.f32 %v1953, %v1957
    %v1960 = vpack.c.bf16 %v1959, %v1958
    %v1961 = vld [vmem:[%s10] sm:$0xf]
    %v1962 = vld [vmem:[%s10 + $0x4] sm:$0xf]
    %v1963 = vld [vmem:[%s10 + $0x8] sm:$0xf]
    %v1964 = vld [vmem:[%s10 + $0xc] sm:$0xf]
    %v1965 = vlaneseq
    %v1966 = vshrl.u32 %v1965, 7
    %v1967 = vsub.s32 0, %v1966
    %v1968 = vrot.slane %v89, %v1967
    %v1973 = vunpack.c.l.b16 %v1961
    %v1974 = vunpack.c.l.b16 %v1962
    %v1975 = vunpack.c.l.b16 %v1963
    %v1976 = vunpack.c.l.b16 %v1964
    %v1977 = vpack.c.b16 %v1974, %v1973
    %v1978 = vpack.c.b16 %v1976, %v1975
    %v1982 = vsel %vm90, %v1960, 0
    %1984 = vmatprep.subr.bf16.mxu0 0
    %1985 = vmatpush1.bf16.msra.mxu0 0
    %1986 = vmatprep.subr.bf16.mxu0 0
    %1987 = vmatpush1.bf16.msra.mxu0 0
    %1988 = vmatprep.subr.bf16.mxu0 0
    %1989 = vmatpush1.bf16.msra.mxu0 0
    %1990 = vmatprep.subr.bf16.mxu0 0
    %1991 = vmatpush1.bf16.msra.mxu0 0
    %1992 = vmatprep.subr.bf16.mxu0 0
    %1993 = vmatpush1.bf16.msra.mxu0 0
    %1994 = vmatprep.subr.bf16.mxu0 0
    %1995 = vmatpush1.bf16.msra.mxu0 0
    %1996 = vmatprep.subr.bf16.mxu0 0
    %1997 = vmatpush1.bf16.msra.mxu0 %v1978
    %1998 = vmatprep.subr.bf16.mxu0 0
    %1999 = vmatpush1.bf16.msra.mxu0 %v1977
    %2000 = vmatprep.subr.bf16.mxu0 0
    %2001 = vmatpush2.bf16.msra.mxu0 0
    %2002 = vmatprep.subr.bf16.mxu0 0
    %2003 = vmatpush2.bf16.msra.mxu0 0
    %2004 = vmatprep.subr.bf16.mxu0 0
    %2005 = vmatpush2.bf16.msra.mxu0 0
    %2006 = vmatprep.subr.bf16.mxu0 0
    %2007 = vmatpush2.bf16.msra.mxu0 0
    %2008 = vmatprep.subr.bf16.mxu0 0
    %2009 = vmatpush2.bf16.msra.mxu0 0
    %2010 = vmatprep.subr.bf16.mxu0 0
    %2011 = vmatpush2.bf16.msra.mxu0 0
    %2012 = vmatprep.subr.bf16.mxu0 0
    %2013 = vmatpush2.bf16.msra.mxu0 0
    %2014 = vmatprep.subr.bf16.mxu0 0
    %2015 = vmatpush2.bf16.msra.mxu0 0
    %2016 = vmatprep.mubr.bf16.mxu0 0
    %2017 = vmatmul.mubr.bf16.gmra.mxu0 %v1982
    %v2018 = vpop.f32.mrf.mxu0
    %v2019 = vadd.f32 %v1968, %v2018
    %v2020 = vpop.f32.mrf.mxu0
    %v2021 = vpop.f32.mrf.mxu0
    %v2022 = vadd.f32 %v1968, %v2021
    %v2023 = vpop.f32.mrf.mxu0
    %2024 = vdwg.mxu0
    %v2025 = vld [vmem:[%s11] sm:$0xf]
    %v2026 = vld [vmem:[%s11 + $0x4] sm:$0xf]
    %v2027 = vld [vmem:[%s11 + $0x8] sm:$0xf]
    %v2028 = vld [vmem:[%s11 + $0xc] sm:$0xf]
    %v2033 = vunpack.c.l.b16 %v2025
    %v2034 = vunpack.c.l.b16 %v2026
    %v2035 = vunpack.c.l.b16 %v2027
    %v2036 = vunpack.c.l.b16 %v2028
    %v2037 = vpack.c.b16 %v2034, %v2033
    %v2038 = vpack.c.b16 %v2036, %v2035
    %2041 = vmatprep.subr.bf16.mxu0 0
    %2042 = vmatpush1.bf16.msra.mxu0 0
    %2043 = vmatprep.subr.bf16.mxu0 0
    %2044 = vmatpush1.bf16.msra.mxu0 0
    %2045 = vmatprep.subr.bf16.mxu0 0
    %2046 = vmatpush1.bf16.msra.mxu0 0
    %2047 = vmatprep.subr.bf16.mxu0 0
    %2048 = vmatpush1.bf16.msra.mxu0 0
    %2049 = vmatprep.subr.bf16.mxu0 0
    %2050 = vmatpush1.bf16.msra.mxu0 0
    %2051 = vmatprep.subr.bf16.mxu0 0
    %2052 = vmatpush1.bf16.msra.mxu0 0
    %2053 = vmatprep.subr.bf16.mxu0 0
    %2054 = vmatpush1.bf16.msra.mxu0 %v2038
    %2055 = vmatprep.subr.bf16.mxu0 0
    %2056 = vmatpush1.bf16.msra.mxu0 %v2037
    %2057 = vmatprep.subr.bf16.mxu0 0
    %2058 = vmatpush2.bf16.msra.mxu0 0
    %2059 = vmatprep.subr.bf16.mxu0 0
    %2060 = vmatpush2.bf16.msra.mxu0 0
    %2061 = vmatprep.subr.bf16.mxu0 0
    %2062 = vmatpush2.bf16.msra.mxu0 0
    %2063 = vmatprep.subr.bf16.mxu0 0
    %2064 = vmatpush2.bf16.msra.mxu0 0
    %2065 = vmatprep.subr.bf16.mxu0 0
    %2066 = vmatpush2.bf16.msra.mxu0 0
    %2067 = vmatprep.subr.bf16.mxu0 0
    %2068 = vmatpush2.bf16.msra.mxu0 0
    %2069 = vmatprep.subr.bf16.mxu0 0
    %2070 = vmatpush2.bf16.msra.mxu0 0
    %2071 = vmatprep.subr.bf16.mxu0 0
    %2072 = vmatpush2.bf16.msra.mxu0 0
    %2073 = vmatprep.mubr.bf16.mxu0 0
    %2074 = vmatmul.mubr.bf16.gmra.mxu0 %v1982
    %v2075 = vpop.f32.mrf.mxu0
    %v2076 = vadd.f32 0.0, %v2075
    %v2077 = vpop.f32.mrf.mxu0
    %v2078 = vpop.f32.mrf.mxu0
    %v2079 = vadd.f32 0.0, %v2078
    %v2080 = vpop.f32.mrf.mxu0
    %2081 = vdwg.mxu0
    %v2082 = vlaneseq
    %v2083 = vshrl.u32 %v2082, 7
    %v2084 = vsub.s32 1, %v2083
    %v2085 = vrot.slane %v89, %v2084
    %v2086 = vadd.f32 %v2076, %v2085
    %v2087 = vadd.f32 %v2079, %v2085
    %v2088 = vlaneseq
    %v2089 = vshrl.u32 %v2088, 7
    %v2090 = vsub.s32 2, %v2089
    %v2091 = vrot.slane %v89, %v2090
    %2093 = vrot.lane.b32.xlu0 %v2091, 32
    %v2094 = vpop.permute.xlu0 %2093
    %v2096 = vadd.f32 %v2076, %v2094
    %v2097 = vadd.f32 %v2079, %v2094
    %v2098 = vld [vmem:[%s4] sm:$0xf]
    %s2099 = scalar_lea.vmem %s4, 4
    %v2100 = vld [vmem:[%s2099] sm:$0xf]
    %2102 = vrot.lane.b32.xlu0 %v2100, 32
    %v2103 = vpop.permute.xlu0 %2102
    %v2105 = vld [vmem:[%s3] sm:$0xff]
    %v2106 = vpack.c.bf16 %v2019, %v2019
    %2108 = vrot.lane.b32.xlu0 %v2106, 120
    %v2109 = vpop.permute.xlu0 %2108
    %2110 = vrot.lane.b32.xlu0 %v2106, 112
    %v2111 = vpop.permute.xlu0 %2110
    %2112 = vrot.lane.b32.xlu0 %v2106, 104
    %v2113 = vpop.permute.xlu0 %2112
    %v2114 = vpack.c.bf16 %v2098, %v2086
    %2116 = vrot.lane.b32.xlu0 %v2114, 120
    %v2117 = vpop.permute.xlu0 %2116
    %2118 = vrot.lane.b32.xlu0 %v2114, 112
    %v2119 = vpop.permute.xlu0 %2118
    %2120 = vrot.lane.b32.xlu0 %v2114, 104
    %v2121 = vpop.permute.xlu0 %2120
    %v2122 = vpack.c.bf16 %v2103, %v2096
    %2124 = vrot.lane.b32.xlu0 %v2122, 120
    %v2125 = vpop.permute.xlu0 %2124
    %2126 = vrot.lane.b32.xlu0 %v2122, 112
    %v2127 = vpop.permute.xlu0 %2126
    %2128 = vrot.lane.b32.xlu0 %v2122, 104
    %v2129 = vpop.permute.xlu0 %2128
    %v2131 = vsel %vm373, %v2106, 0
    %v2134 = vsel %vm373, %v2114, 0
    %2136 = vmatprep.subr.bf16.mxu0 0
    %2137 = vmatpush1.bf16.xpose.msra.mxu0 0
    %2138 = vmatprep.subr.bf16.mxu0 0
    %2139 = vmatpush1.bf16.xpose.msra.mxu0 0
    %2140 = vmatprep.subr.bf16.mxu0 0
    %2141 = vmatpush1.bf16.xpose.msra.mxu0 0
    %2142 = vmatprep.subr.bf16.mxu0 0
    %2143 = vmatpush1.bf16.xpose.msra.mxu0 0
    %2144 = vmatprep.subr.bf16.mxu0 0
    %2145 = vmatpush1.bf16.xpose.msra.mxu0 0
    %2146 = vmatprep.subr.bf16.mxu0 0
    %2147 = vmatpush1.bf16.xpose.msra.mxu0 0
    %2148 = vmatprep.subr.bf16.mxu0 0
    %2149 = vmatpush1.bf16.xpose.msra.mxu0 0
    %2150 = vmatprep.subr.bf16.mxu0 0
    %2151 = vmatpush1.bf16.xpose.msra.mxu0 %v2134
    %2152 = vmatprep.subr.bf16.mxu0 0
    %2153 = vmatpush2.bf16.xpose.msra.mxu0 0
    %2154 = vmatprep.subr.bf16.mxu0 0
    %2155 = vmatpush2.bf16.xpose.msra.mxu0 0
    %2156 = vmatprep.subr.bf16.mxu0 0
    %2157 = vmatpush2.bf16.xpose.msra.mxu0 0
    %2158 = vmatprep.subr.bf16.mxu0 0
    %2159 = vmatpush2.bf16.xpose.msra.mxu0 0
    %2160 = vmatprep.subr.bf16.mxu0 0
    %2161 = vmatpush2.bf16.xpose.msra.mxu0 0
    %2162 = vmatprep.subr.bf16.mxu0 0
    %2163 = vmatpush2.bf16.xpose.msra.mxu0 0
    %2164 = vmatprep.subr.bf16.mxu0 0
    %2165 = vmatpush2.bf16.xpose.msra.mxu0 0
    %2166 = vmatprep.subr.bf16.mxu0 0
    %2167 = vmatpush2.bf16.xpose.msra.mxu0 0
    %2168 = vmatprep.mubr.bf16.mxu0 0
    %2169 = vmatmul.mubr.bf16.gmra.mxu0 %v2131
    %v2170 = vpop.f32.mrf.mxu0
    %v2171 = vadd.f32 0.0, %v2170
    %v2172 = vpop.f32.mrf.mxu0
    %v2173 = vpop.f32.mrf.mxu0
    %v2174 = vpop.f32.mrf.mxu0
    %2175 = vdwg.mxu0
    %v2177 = vsel %vm373, %v2109, 0
    %v2180 = vsel %vm373, %v2117, 0
    %2182 = vmatprep.subr.bf16.mxu0 0
    %2183 = vmatpush1.bf16.xpose.msra.mxu0 0
    %2184 = vmatprep.subr.bf16.mxu0 0
    %2185 = vmatpush1.bf16.xpose.msra.mxu0 0
    %2186 = vmatprep.subr.bf16.mxu0 0
    %2187 = vmatpush1.bf16.xpose.msra.mxu0 0
    %2188 = vmatprep.subr.bf16.mxu0 0
    %2189 = vmatpush1.bf16.xpose.msra.mxu0 0
    %2190 = vmatprep.subr.bf16.mxu0 0
    %2191 = vmatpush1.bf16.xpose.msra.mxu0 0
    %2192 = vmatprep.subr.bf16.mxu0 0
    %2193 = vmatpush1.bf16.xpose.msra.mxu0 0
    %2194 = vmatprep.subr.bf16.mxu0 0
    %2195 = vmatpush1.bf16.xpose.msra.mxu0 0
    %2196 = vmatprep.subr.bf16.mxu0 0
    %2197 = vmatpush1.bf16.xpose.msra.mxu0 %v2180
    %2198 = vmatprep.subr.bf16.mxu0 0
    %2199 = vmatpush2.bf16.xpose.msra.mxu0 0
    %2200 = vmatprep.subr.bf16.mxu0 0
    %2201 = vmatpush2.bf16.xpose.msra.mxu0 0
    %2202 = vmatprep.subr.bf16.mxu0 0
    %2203 = vmatpush2.bf16.xpose.msra.mxu0 0
    %2204 = vmatprep.subr.bf16.mxu0 0
    %2205 = vmatpush2.bf16.xpose.msra.mxu0 0
    %2206 = vmatprep.subr.bf16.mxu0 0
    %2207 = vmatpush2.bf16.xpose.msra.mxu0 0
    %2208 = vmatprep.subr.bf16.mxu0 0
    %2209 = vmatpush2.bf16.xpose.msra.mxu0 0
    %2210 = vmatprep.subr.bf16.mxu0 0
    %2211 = vmatpush2.bf16.xpose.msra.mxu0 0
    %2212 = vmatprep.subr.bf16.mxu0 0
    %2213 = vmatpush2.bf16.xpose.msra.mxu0 0
    %2214 = vmatprep.mubr.bf16.mxu0 0
    %2215 = vmatmul.mubr.bf16.gmra.mxu0 %v2177
    %v2216 = vpop.f32.mrf.mxu0
    %v2217 = vadd.f32 0.0, %v2216
    %v2218 = vpop.f32.mrf.mxu0
    %v2219 = vpop.f32.mrf.mxu0
    %v2220 = vpop.f32.mrf.mxu0
    %2221 = vdwg.mxu0
    %v2223 = vsel %vm373, %v2111, 0
    %v2226 = vsel %vm373, %v2119, 0
    %2228 = vmatprep.subr.bf16.mxu0 0
    %2229 = vmatpush1.bf16.xpose.msra.mxu0 0
    %2230 = vmatprep.subr.bf16.mxu0 0
    %2231 = vmatpush1.bf16.xpose.msra.mxu0 0
    %2232 = vmatprep.subr.bf16.mxu0 0
    %2233 = vmatpush1.bf16.xpose.msra.mxu0 0
    %2234 = vmatprep.subr.bf16.mxu0 0
    %2235 = vmatpush1.bf16.xpose.msra.mxu0 0
    %2236 = vmatprep.subr.bf16.mxu0 0
    %2237 = vmatpush1.bf16.xpose.msra.mxu0 0
    %2238 = vmatprep.subr.bf16.mxu0 0
    %2239 = vmatpush1.bf16.xpose.msra.mxu0 0
    %2240 = vmatprep.subr.bf16.mxu0 0
    %2241 = vmatpush1.bf16.xpose.msra.mxu0 0
    %2242 = vmatprep.subr.bf16.mxu0 0
    %2243 = vmatpush1.bf16.xpose.msra.mxu0 %v2226
    %2244 = vmatprep.subr.bf16.mxu0 0
    %2245 = vmatpush2.bf16.xpose.msra.mxu0 0
    %2246 = vmatprep.subr.bf16.mxu0 0
    %2247 = vmatpush2.bf16.xpose.msra.mxu0 0
    %2248 = vmatprep.subr.bf16.mxu0 0
    %2249 = vmatpush2.bf16.xpose.msra.mxu0 0
    %2250 = vmatprep.subr.bf16.mxu0 0
    %2251 = vmatpush2.bf16.xpose.msra.mxu0 0
    %2252 = vmatprep.subr.bf16.mxu0 0
    %2253 = vmatpush2.bf16.xpose.msra.mxu0 0
    %2254 = vmatprep.subr.bf16.mxu0 0
    %2255 = vmatpush2.bf16.xpose.msra.mxu0 0
    %2256 = vmatprep.subr.bf16.mxu0 0
    %2257 = vmatpush2.bf16.xpose.msra.mxu0 0
    %2258 = vmatprep.subr.bf16.mxu0 0
    %2259 = vmatpush2.bf16.xpose.msra.mxu0 0
    %2260 = vmatprep.mubr.bf16.mxu0 0
    %2261 = vmatmul.mubr.bf16.gmra.mxu0 %v2223
    %v2262 = vpop.f32.mrf.mxu0
    %v2263 = vadd.f32 0.0, %v2262
    %v2264 = vpop.f32.mrf.mxu0
    %v2265 = vpop.f32.mrf.mxu0
    %v2266 = vpop.f32.mrf.mxu0
    %2267 = vdwg.mxu0
    %v2269 = vsel %vm373, %v2113, 0
    %v2272 = vsel %vm373, %v2121, 0
    %2274 = vmatprep.subr.bf16.mxu0 0
    %2275 = vmatpush1.bf16.xpose.msra.mxu0 0
    %2276 = vmatprep.subr.bf16.mxu0 0
    %2277 = vmatpush1.bf16.xpose.msra.mxu0 0
    %2278 = vmatprep.subr.bf16.mxu0 0
    %2279 = vmatpush1.bf16.xpose.msra.mxu0 0
    %2280 = vmatprep.subr.bf16.mxu0 0
    %2281 = vmatpush1.bf16.xpose.msra.mxu0 0
    %2282 = vmatprep.subr.bf16.mxu0 0
    %2283 = vmatpush1.bf16.xpose.msra.mxu0 0
    %2284 = vmatprep.subr.bf16.mxu0 0
    %2285 = vmatpush1.bf16.xpose.msra.mxu0 0
    %2286 = vmatprep.subr.bf16.mxu0 0
    %2287 = vmatpush1.bf16.xpose.msra.mxu0 0
    %2288 = vmatprep.subr.bf16.mxu0 0
    %2289 = vmatpush1.bf16.xpose.msra.mxu0 %v2272
    %2290 = vmatprep.subr.bf16.mxu0 0
    %2291 = vmatpush2.bf16.xpose.msra.mxu0 0
    %2292 = vmatprep.subr.bf16.mxu0 0
    %2293 = vmatpush2.bf16.xpose.msra.mxu0 0
    %2294 = vmatprep.subr.bf16.mxu0 0
    %2295 = vmatpush2.bf16.xpose.msra.mxu0 0
    %2296 = vmatprep.subr.bf16.mxu0 0
    %2297 = vmatpush2.bf16.xpose.msra.mxu0 0
    %2298 = vmatprep.subr.bf16.mxu0 0
    %2299 = vmatpush2.bf16.xpose.msra.mxu0 0
    %2300 = vmatprep.subr.bf16.mxu0 0
    %2301 = vmatpush2.bf16.xpose.msra.mxu0 0
    %2302 = vmatprep.subr.bf16.mxu0 0
    %2303 = vmatpush2.bf16.xpose.msra.mxu0 0
    %2304 = vmatprep.subr.bf16.mxu0 0
    %2305 = vmatpush2.bf16.xpose.msra.mxu0 0
    %2306 = vmatprep.mubr.bf16.mxu0 0
    %2307 = vmatmul.mubr.bf16.gmra.mxu0 %v2269
    %v2308 = vpop.f32.mrf.mxu0
    %v2309 = vadd.f32 0.0, %v2308
    %v2310 = vpop.f32.mrf.mxu0
    %v2311 = vpop.f32.mrf.mxu0
    %v2312 = vpop.f32.mrf.mxu0
    %2313 = vdwg.mxu0
    %v2314 = vmul.f32 %v2171, 0.35355338
    %v2315 = vmul.f32 %v2217, 0.35355338
    %v2316 = vmul.f32 %v2263, 0.35355338
    %v2317 = vmul.f32 %v2309, 0.35355338
    %v2318 = vadd.f32 %v2314, %v2105
    %v2319 = vadd.f32 %v2315, %v2105
    %v2320 = vadd.f32 %v2316, %v2105
    %v2321 = vadd.f32 %v2317, %v2105
    %vm2322 = vcmask 97280
    %v2323 = vsel %vm2322, %v2318, -inf
    %2324 = vmax.xlane.f32.xlu0 %v2323
    %v2325 = vpop.xlane.xlu0 %2324
    %v2326 = vsel %vm2322, %v2319, -inf
    %2327 = vmax.xlane.f32.xlu0 %v2326
    %v2328 = vpop.xlane.xlu0 %2327
    %v2329 = vsel %vm2322, %v2320, -inf
    %2330 = vmax.xlane.f32.xlu0 %v2329
    %v2331 = vpop.xlane.xlu0 %2330
    %v2332 = vsel %vm2322, %v2321, -inf
    %2333 = vmax.xlane.f32.xlu0 %v2332
    %v2334 = vpop.xlane.xlu0 %2333
    %v2335 = vsub.f32 %v2318, %v2325
    %v2336 = vsub.f32 %v2319, %v2328
    %v2337 = vsub.f32 %v2320, %v2331
    %v2338 = vsub.f32 %v2321, %v2334
    %v2339 = vmul.f32 %v2335, 1.442695
    %v2340 = vpow.pop %v2339
    %v2341 = vmul.f32 %v2336, 1.442695
    %v2342 = vpow.pop %v2341
    %v2343 = vmul.f32 %v2337, 1.442695
    %v2344 = vpow.pop %v2343
    %v2345 = vmul.f32 %v2338, 1.442695
    %v2346 = vpow.pop %v2345
    %v2347 = vsel %vm2322, %v2340, 0.0
    %2348 = vadd.xlane.f32.xlu0 %v2347
    %v2349 = vpop.xlane.xlu0 %2348
    %v2350 = vsel %vm2322, %v2342, 0.0
    %2351 = vadd.xlane.f32.xlu0 %v2350
    %v2352 = vpop.xlane.xlu0 %2351
    %v2353 = vsel %vm2322, %v2344, 0.0
    %2354 = vadd.xlane.f32.xlu0 %v2353
    %v2355 = vpop.xlane.xlu0 %2354
    %v2356 = vsel %vm2322, %v2346, 0.0
    %2357 = vadd.xlane.f32.xlu0 %v2356
    %v2358 = vpop.xlane.xlu0 %2357
    %v2359 = vrcp.pop %v2349
    %v2360 = vmul.f32 %v2340, %v2359
    %v2361 = vrcp.pop %v2352
    %v2362 = vmul.f32 %v2342, %v2361
    %v2363 = vrcp.pop %v2355
    %v2364 = vmul.f32 %v2344, %v2363
    %v2365 = vrcp.pop %v2358
    %v2366 = vmul.f32 %v2346, %v2365
    %v2367 = vpack.c.bf16 %v2360, %v2360
    %v2368 = vpack.c.bf16 %v2362, %v2362
    %v2369 = vpack.c.bf16 %v2364, %v2364
    %v2370 = vpack.c.bf16 %v2366, %v2366
    %2371 = vrot.lane.b32.xlu0 %v2122, 96
    %v2372 = vpop.permute.xlu0 %2371
    %v2374 = vsel %vm2322, %v2367, 0
    %vm2376 = vcmask 1045504
    %v2378 = vsel %vm2376, %v2372, 0
    %2380 = vmatprep.subr.bf16.mxu0 0
    %2381 = vmatpush1.bf16.msra.mxu0 0
    %2382 = vmatprep.subr.bf16.mxu0 0
    %2383 = vmatpush1.bf16.msra.mxu0 0
    %2384 = vmatprep.subr.bf16.mxu0 0
    %2385 = vmatpush1.bf16.msra.mxu0 0
    %2386 = vmatprep.subr.bf16.mxu0 0
    %2387 = vmatpush1.bf16.msra.mxu0 0
    %2388 = vmatprep.subr.bf16.mxu0 0
    %2389 = vmatpush1.bf16.msra.mxu0 0
    %2390 = vmatprep.subr.bf16.mxu0 0
    %2391 = vmatpush1.bf16.msra.mxu0 0
    %2392 = vmatprep.subr.bf16.mxu0 0
    %2393 = vmatpush1.bf16.msra.mxu0 0
    %2394 = vmatprep.subr.bf16.mxu0 0
    %2395 = vmatpush1.bf16.msra.mxu0 %v2378
    %2396 = vmatprep.subr.bf16.mxu0 0
    %2397 = vmatpush2.bf16.msra.mxu0 0
    %2398 = vmatprep.subr.bf16.mxu0 0
    %2399 = vmatpush2.bf16.msra.mxu0 0
    %2400 = vmatprep.subr.bf16.mxu0 0
    %2401 = vmatpush2.bf16.msra.mxu0 0
    %2402 = vmatprep.subr.bf16.mxu0 0
    %2403 = vmatpush2.bf16.msra.mxu0 0
    %2404 = vmatprep.subr.bf16.mxu0 0
    %2405 = vmatpush2.bf16.msra.mxu0 0
    %2406 = vmatprep.subr.bf16.mxu0 0
    %2407 = vmatpush2.bf16.msra.mxu0 0
    %2408 = vmatprep.subr.bf16.mxu0 0
    %2409 = vmatpush2.bf16.msra.mxu0 0
    %2410 = vmatprep.subr.bf16.mxu0 0
    %2411 = vmatpush2.bf16.msra.mxu0 0
    %2412 = vmatprep.mubr.bf16.mxu0 0
    %2413 = vmatmul.mubr.bf16.gmra.mxu0 %v2374
    %v2414 = vpop.f32.mrf.mxu0
    %v2415 = vadd.f32 0.0, %v2414
    %v2416 = vpop.f32.mrf.mxu0
    %v2417 = vpop.f32.mrf.mxu0
    %v2418 = vpop.f32.mrf.mxu0
    %2419 = vdwg.mxu0
    %2420 = vrot.lane.b32.xlu0 %v2125, 96
    %v2421 = vpop.permute.xlu0 %2420
    %v2423 = vsel %vm2322, %v2368, 0
    %v2426 = vsel %vm2376, %v2421, 0
    %2428 = vmatprep.subr.bf16.mxu0 0
    %2429 = vmatpush1.bf16.msra.mxu0 0
    %2430 = vmatprep.subr.bf16.mxu0 0
    %2431 = vmatpush1.bf16.msra.mxu0 0
    %2432 = vmatprep.subr.bf16.mxu0 0
    %2433 = vmatpush1.bf16.msra.mxu0 0
    %2434 = vmatprep.subr.bf16.mxu0 0
    %2435 = vmatpush1.bf16.msra.mxu0 0
    %2436 = vmatprep.subr.bf16.mxu0 0
    %2437 = vmatpush1.bf16.msra.mxu0 0
    %2438 = vmatprep.subr.bf16.mxu0 0
    %2439 = vmatpush1.bf16.msra.mxu0 0
    %2440 = vmatprep.subr.bf16.mxu0 0
    %2441 = vmatpush1.bf16.msra.mxu0 0
    %2442 = vmatprep.subr.bf16.mxu0 0
    %2443 = vmatpush1.bf16.msra.mxu0 %v2426
    %2444 = vmatprep.subr.bf16.mxu0 0
    %2445 = vmatpush2.bf16.msra.mxu0 0
    %2446 = vmatprep.subr.bf16.mxu0 0
    %2447 = vmatpush2.bf16.msra.mxu0 0
    %2448 = vmatprep.subr.bf16.mxu0 0
    %2449 = vmatpush2.bf16.msra.mxu0 0
    %2450 = vmatprep.subr.bf16.mxu0 0
    %2451 = vmatpush2.bf16.msra.mxu0 0
    %2452 = vmatprep.subr.bf16.mxu0 0
    %2453 = vmatpush2.bf16.msra.mxu0 0
    %2454 = vmatprep.subr.bf16.mxu0 0
    %2455 = vmatpush2.bf16.msra.mxu0 0
    %2456 = vmatprep.subr.bf16.mxu0 0
    %2457 = vmatpush2.bf16.msra.mxu0 0
    %2458 = vmatprep.subr.bf16.mxu0 0
    %2459 = vmatpush2.bf16.msra.mxu0 0
    %2460 = vmatprep.mubr.bf16.mxu0 0
    %2461 = vmatmul.mubr.bf16.gmra.mxu0 %v2423
    %v2462 = vpop.f32.mrf.mxu0
    %v2463 = vadd.f32 0.0, %v2462
    %v2464 = vpop.f32.mrf.mxu0
    %v2465 = vpop.f32.mrf.mxu0
    %v2466 = vpop.f32.mrf.mxu0
    %2467 = vdwg.mxu0
    %2468 = vrot.lane.b32.xlu0 %v2127, 96
    %v2469 = vpop.permute.xlu0 %2468
    %v2471 = vsel %vm2322, %v2369, 0
    %v2474 = vsel %vm2376, %v2469, 0
    %2476 = vmatprep.subr.bf16.mxu0 0
    %2477 = vmatpush1.bf16.msra.mxu0 0
    %2478 = vmatprep.subr.bf16.mxu0 0
    %2479 = vmatpush1.bf16.msra.mxu0 0
    %2480 = vmatprep.subr.bf16.mxu0 0
    %2481 = vmatpush1.bf16.msra.mxu0 0
    %2482 = vmatprep.subr.bf16.mxu0 0
    %2483 = vmatpush1.bf16.msra.mxu0 0
    %2484 = vmatprep.subr.bf16.mxu0 0
    %2485 = vmatpush1.bf16.msra.mxu0 0
    %2486 = vmatprep.subr.bf16.mxu0 0
    %2487 = vmatpush1.bf16.msra.mxu0 0
    %2488 = vmatprep.subr.bf16.mxu0 0
    %2489 = vmatpush1.bf16.msra.mxu0 0
    %2490 = vmatprep.subr.bf16.mxu0 0
    %2491 = vmatpush1.bf16.msra.mxu0 %v2474
    %2492 = vmatprep.subr.bf16.mxu0 0
    %2493 = vmatpush2.bf16.msra.mxu0 0
    %2494 = vmatprep.subr.bf16.mxu0 0
    %2495 = vmatpush2.bf16.msra.mxu0 0
    %2496 = vmatprep.subr.bf16.mxu0 0
    %2497 = vmatpush2.bf16.msra.mxu0 0
    %2498 = vmatprep.subr.bf16.mxu0 0
    %2499 = vmatpush2.bf16.msra.mxu0 0
    %2500 = vmatprep.subr.bf16.mxu0 0
    %2501 = vmatpush2.bf16.msra.mxu0 0
    %2502 = vmatprep.subr.bf16.mxu0 0
    %2503 = vmatpush2.bf16.msra.mxu0 0
    %2504 = vmatprep.subr.bf16.mxu0 0
    %2505 = vmatpush2.bf16.msra.mxu0 0
    %2506 = vmatprep.subr.bf16.mxu0 0
    %2507 = vmatpush2.bf16.msra.mxu0 0
    %2508 = vmatprep.mubr.bf16.mxu0 0
    %2509 = vmatmul.mubr.bf16.gmra.mxu0 %v2471
    %v2510 = vpop.f32.mrf.mxu0
    %v2511 = vadd.f32 0.0, %v2510
    %v2512 = vpop.f32.mrf.mxu0
    %v2513 = vpop.f32.mrf.mxu0
    %v2514 = vpop.f32.mrf.mxu0
    %2515 = vdwg.mxu0
    %2516 = vrot.lane.b32.xlu0 %v2129, 96
    %v2517 = vpop.permute.xlu0 %2516
    %v2519 = vsel %vm2322, %v2370, 0
    %v2522 = vsel %vm2376, %v2517, 0
    %2524 = vmatprep.subr.bf16.mxu0 0
    %2525 = vmatpush1.bf16.msra.mxu0 0
    %2526 = vmatprep.subr.bf16.mxu0 0
    %2527 = vmatpush1.bf16.msra.mxu0 0
    %2528 = vmatprep.subr.bf16.mxu0 0
    %2529 = vmatpush1.bf16.msra.mxu0 0
    %2530 = vmatprep.subr.bf16.mxu0 0
    %2531 = vmatpush1.bf16.msra.mxu0 0
    %2532 = vmatprep.subr.bf16.mxu0 0
    %2533 = vmatpush1.bf16.msra.mxu0 0
    %2534 = vmatprep.subr.bf16.mxu0 0
    %2535 = vmatpush1.bf16.msra.mxu0 0
    %2536 = vmatprep.subr.bf16.mxu0 0
    %2537 = vmatpush1.bf16.msra.mxu0 0
    %2538 = vmatprep.subr.bf16.mxu0 0
    %2539 = vmatpush1.bf16.msra.mxu0 %v2522
    %2540 = vmatprep.subr.bf16.mxu0 0
    %2541 = vmatpush2.bf16.msra.mxu0 0
    %2542 = vmatprep.subr.bf16.mxu0 0
    %2543 = vmatpush2.bf16.msra.mxu0 0
    %2544 = vmatprep.subr.bf16.mxu0 0
    %2545 = vmatpush2.bf16.msra.mxu0 0
    %2546 = vmatprep.subr.bf16.mxu0 0
    %2547 = vmatpush2.bf16.msra.mxu0 0
    %2548 = vmatprep.subr.bf16.mxu0 0
    %2549 = vmatpush2.bf16.msra.mxu0 0
    %2550 = vmatprep.subr.bf16.mxu0 0
    %2551 = vmatpush2.bf16.msra.mxu0 0
    %2552 = vmatprep.subr.bf16.mxu0 0
    %2553 = vmatpush2.bf16.msra.mxu0 0
    %2554 = vmatprep.subr.bf16.mxu0 0
    %2555 = vmatpush2.bf16.msra.mxu0 0
    %2556 = vmatprep.mubr.bf16.mxu0 0
    %2557 = vmatmul.mubr.bf16.gmra.mxu0 %v2519
    %v2558 = vpop.f32.mrf.mxu0
    %v2559 = vadd.f32 0.0, %v2558
    %v2560 = vpop.f32.mrf.mxu0
    %v2561 = vpop.f32.mrf.mxu0
    %v2562 = vpop.f32.mrf.mxu0
    %2563 = vdwg.mxu0
    %v2564 = vpack.c.bf16 %v2415, %v2415
    %v2565 = vld [vmem:[%s12] sm:$0xf]
    %v2567 = vsel %vm373, %v2564, 0
    %v2570 = vsel %vm810, %v2565, 0
    %2572 = vmatprep.subr.bf16.mxu0 0
    %2573 = vmatpush1.bf16.msra.mxu0 0
    %2574 = vmatprep.subr.bf16.mxu0 0
    %2575 = vmatpush1.bf16.msra.mxu0 0
    %2576 = vmatprep.subr.bf16.mxu0 0
    %2577 = vmatpush1.bf16.msra.mxu0 0
    %2578 = vmatprep.subr.bf16.mxu0 0
    %2579 = vmatpush1.bf16.msra.mxu0 0
    %2580 = vmatprep.subr.bf16.mxu0 0
    %2581 = vmatpush1.bf16.msra.mxu0 0
    %2582 = vmatprep.subr.bf16.mxu0 0
    %2583 = vmatpush1.bf16.msra.mxu0 0
    %2584 = vmatprep.subr.bf16.mxu0 0
    %2585 = vmatpush1.bf16.msra.mxu0 0
    %2586 = vmatprep.subr.bf16.mxu0 0
    %2587 = vmatpush1.bf16.msra.mxu0 %v2570
    %2588 = vmatprep.subr.bf16.mxu0 0
    %2589 = vmatpush2.bf16.msra.mxu0 0
    %2590 = vmatprep.subr.bf16.mxu0 0
    %2591 = vmatpush2.bf16.msra.mxu0 0
    %2592 = vmatprep.subr.bf16.mxu0 0
    %2593 = vmatpush2.bf16.msra.mxu0 0
    %2594 = vmatprep.subr.bf16.mxu0 0
    %2595 = vmatpush2.bf16.msra.mxu0 0
    %2596 = vmatprep.subr.bf16.mxu0 0
    %2597 = vmatpush2.bf16.msra.mxu0 0
    %2598 = vmatprep.subr.bf16.mxu0 0
    %2599 = vmatpush2.bf16.msra.mxu0 0
    %2600 = vmatprep.subr.bf16.mxu0 0
    %2601 = vmatpush2.bf16.msra.mxu0 0
    %2602 = vmatprep.subr.bf16.mxu0 0
    %2603 = vmatpush2.bf16.msra.mxu0 0
    %2604 = vmatprep.mubr.bf16.mxu0 0
    %2605 = vmatmul.mubr.bf16.gmra.mxu0 %v2567
    %v2606 = vpop.f32.mrf.mxu0
    %v2607 = vadd.f32 0.0, %v2606
    %v2608 = vpop.f32.mrf.mxu0
    %v2609 = vpop.f32.mrf.mxu0
    %v2610 = vpop.f32.mrf.mxu0
    %2611 = vdwg.mxu0
    %v2612 = vlaneseq
    %v2613 = vshrl.u32 %v2612, 7
    %v2614 = vsub.s32 3, %v2613
    %v2615 = vrot.slane %v89, %v2614
    %v2616 = vadd.f32 %v2615, %v2607
    %v2617 = vpack.c.bf16 %v2463, %v2463
    %s2618 = scalar_lea.vmem %s12, 4
    %v2619 = vld [vmem:[%s2618] sm:$0xf]
    %v2621 = vsel %vm373, %v2617, 0
    %v2624 = vsel %vm810, %v2619, 0
    %2626 = vmatprep.subr.bf16.mxu0 0
    %2627 = vmatpush1.bf16.msra.mxu0 0
    %2628 = vmatprep.subr.bf16.mxu0 0
    %2629 = vmatpush1.bf16.msra.mxu0 0
    %2630 = vmatprep.subr.bf16.mxu0 0
    %2631 = vmatpush1.bf16.msra.mxu0 0
    %2632 = vmatprep.subr.bf16.mxu0 0
    %2633 = vmatpush1.bf16.msra.mxu0 0
    %2634 = vmatprep.subr.bf16.mxu0 0
    %2635 = vmatpush1.bf16.msra.mxu0 0
    %2636 = vmatprep.subr.bf16.mxu0 0
    %2637 = vmatpush1.bf16.msra.mxu0 0
    %2638 = vmatprep.subr.bf16.mxu0 0
    %2639 = vmatpush1.bf16.msra.mxu0 0
    %2640 = vmatprep.subr.bf16.mxu0 0
    %2641 = vmatpush1.bf16.msra.mxu0 %v2624
    %2642 = vmatprep.subr.bf16.mxu0 0
    %2643 = vmatpush2.bf16.msra.mxu0 0
    %2644 = vmatprep.subr.bf16.mxu0 0
    %2645 = vmatpush2.bf16.msra.mxu0 0
    %2646 = vmatprep.subr.bf16.mxu0 0
    %2647 = vmatpush2.bf16.msra.mxu0 0
    %2648 = vmatprep.subr.bf16.mxu0 0
    %2649 = vmatpush2.bf16.msra.mxu0 0
    %2650 = vmatprep.subr.bf16.mxu0 0
    %2651 = vmatpush2.bf16.msra.mxu0 0
    %2652 = vmatprep.subr.bf16.mxu0 0
    %2653 = vmatpush2.bf16.msra.mxu0 0
    %2654 = vmatprep.subr.bf16.mxu0 0
    %2655 = vmatpush2.bf16.msra.mxu0 0
    %2656 = vmatprep.subr.bf16.mxu0 0
    %2657 = vmatpush2.bf16.msra.mxu0 0
    %2658 = vmatprep.mubr.bf16.mxu0 0
    %2659 = vmatmul.mubr.bf16.gmra.mxu0 %v2621
    %v2660 = vpop.f32.mrf.mxu0
    %v2661 = vadd.f32 0.0, %v2660
    %v2662 = vpop.f32.mrf.mxu0
    %v2663 = vpop.f32.mrf.mxu0
    %v2664 = vpop.f32.mrf.mxu0
    %2665 = vdwg.mxu0
    %v2666 = vadd.f32 %v2616, %v2661
    %v2667 = vpack.c.bf16 %v2511, %v2511
    %s2668 = scalar_lea.vmem %s12, 8
    %v2669 = vld [vmem:[%s2668] sm:$0xf]
    %v2671 = vsel %vm373, %v2667, 0
    %v2674 = vsel %vm810, %v2669, 0
    %2676 = vmatprep.subr.bf16.mxu0 0
    %2677 = vmatpush1.bf16.msra.mxu0 0
    %2678 = vmatprep.subr.bf16.mxu0 0
    %2679 = vmatpush1.bf16.msra.mxu0 0
    %2680 = vmatprep.subr.bf16.mxu0 0
    %2681 = vmatpush1.bf16.msra.mxu0 0
    %2682 = vmatprep.subr.bf16.mxu0 0
    %2683 = vmatpush1.bf16.msra.mxu0 0
    %2684 = vmatprep.subr.bf16.mxu0 0
    %2685 = vmatpush1.bf16.msra.mxu0 0
    %2686 = vmatprep.subr.bf16.mxu0 0
    %2687 = vmatpush1.bf16.msra.mxu0 0
    %2688 = vmatprep.subr.bf16.mxu0 0
    %2689 = vmatpush1.bf16.msra.mxu0 0
    %2690 = vmatprep.subr.bf16.mxu0 0
    %2691 = vmatpush1.bf16.msra.mxu0 %v2674
    %2692 = vmatprep.subr.bf16.mxu0 0
    %2693 = vmatpush2.bf16.msra.mxu0 0
    %2694 = vmatprep.subr.bf16.mxu0 0
    %2695 = vmatpush2.bf16.msra.mxu0 0
    %2696 = vmatprep.subr.bf16.mxu0 0
    %2697 = vmatpush2.bf16.msra.mxu0 0
    %2698 = vmatprep.subr.bf16.mxu0 0
    %2699 = vmatpush2.bf16.msra.mxu0 0
    %2700 = vmatprep.subr.bf16.mxu0 0
    %2701 = vmatpush2.bf16.msra.mxu0 0
    %2702 = vmatprep.subr.bf16.mxu0 0
    %2703 = vmatpush2.bf16.msra.mxu0 0
    %2704 = vmatprep.subr.bf16.mxu0 0
    %2705 = vmatpush2.bf16.msra.mxu0 0
    %2706 = vmatprep.subr.bf16.mxu0 0
    %2707 = vmatpush2.bf16.msra.mxu0 0
    %2708 = vmatprep.mubr.bf16.mxu0 0
    %2709 = vmatmul.mubr.bf16.gmra.mxu0 %v2671
    %v2710 = vpop.f32.mrf.mxu0
    %v2711 = vadd.f32 0.0, %v2710
    %v2712 = vpop.f32.mrf.mxu0
    %v2713 = vpop.f32.mrf.mxu0
    %v2714 = vpop.f32.mrf.mxu0
    %2715 = vdwg.mxu0
    %v2716 = vadd.f32 %v2666, %v2711
    %v2717 = vpack.c.bf16 %v2559, %v2559
    %s2718 = scalar_lea.vmem %s12, 12
    %v2719 = vld [vmem:[%s2718] sm:$0xf]
    %v2721 = vsel %vm373, %v2717, 0
    %v2724 = vsel %vm810, %v2719, 0
    %2726 = vmatprep.subr.bf16.mxu0 0
    %2727 = vmatpush1.bf16.msra.mxu0 0
    %2728 = vmatprep.subr.bf16.mxu0 0
    %2729 = vmatpush1.bf16.msra.mxu0 0
    %2730 = vmatprep.subr.bf16.mxu0 0
    %2731 = vmatpush1.bf16.msra.mxu0 0
    %2732 = vmatprep.subr.bf16.mxu0 0
    %2733 = vmatpush1.bf16.msra.mxu0 0
    %2734 = vmatprep.subr.bf16.mxu0 0
    %2735 = vmatpush1.bf16.msra.mxu0 0
    %2736 = vmatprep.subr.bf16.mxu0 0
    %2737 = vmatpush1.bf16.msra.mxu0 0
    %2738 = vmatprep.subr.bf16.mxu0 0
    %2739 = vmatpush1.bf16.msra.mxu0 0
    %2740 = vmatprep.subr.bf16.mxu0 0
    %2741 = vmatpush1.bf16.msra.mxu0 %v2724
    %2742 = vmatprep.subr.bf16.mxu0 0
    %2743 = vmatpush2.bf16.msra.mxu0 0
    %2744 = vmatprep.subr.bf16.mxu0 0
    %2745 = vmatpush2.bf16.msra.mxu0 0
    %2746 = vmatprep.subr.bf16.mxu0 0
    %2747 = vmatpush2.bf16.msra.mxu0 0
    %2748 = vmatprep.subr.bf16.mxu0 0
    %2749 = vmatpush2.bf16.msra.mxu0 0
    %2750 = vmatprep.subr.bf16.mxu0 0
    %2751 = vmatpush2.bf16.msra.mxu0 0
    %2752 = vmatprep.subr.bf16.mxu0 0
    %2753 = vmatpush2.bf16.msra.mxu0 0
    %2754 = vmatprep.subr.bf16.mxu0 0
    %2755 = vmatpush2.bf16.msra.mxu0 0
    %2756 = vmatprep.subr.bf16.mxu0 0
    %2757 = vmatpush2.bf16.msra.mxu0 0
    %2758 = vmatprep.mubr.bf16.mxu0 0
    %2759 = vmatmul.mubr.bf16.gmra.mxu0 %v2721
    %v2760 = vpop.f32.mrf.mxu0
    %v2761 = vadd.f32 0.0, %v2760
    %v2762 = vpop.f32.mrf.mxu0
    %v2763 = vpop.f32.mrf.mxu0
    %v2764 = vpop.f32.mrf.mxu0
    %2765 = vdwg.mxu0
    %v2766 = vadd.f32 %v2716, %v2761
    %v2767 = vld [vmem:[%s3] sm:$0xff]
    %v2768 = vpack.c.bf16 %v2022, %v2022
    %2770 = vrot.lane.b32.xlu0 %v2768, 120
    %v2771 = vpop.permute.xlu0 %2770
    %2772 = vrot.lane.b32.xlu0 %v2768, 112
    %v2773 = vpop.permute.xlu0 %2772
    %2774 = vrot.lane.b32.xlu0 %v2768, 104
    %v2775 = vpop.permute.xlu0 %2774
    %v2776 = vpack.c.bf16 %v2098, %v2087
    %2778 = vrot.lane.b32.xlu0 %v2776, 120
    %v2779 = vpop.permute.xlu0 %2778
    %2780 = vrot.lane.b32.xlu0 %v2776, 112
    %v2781 = vpop.permute.xlu0 %2780
    %2782 = vrot.lane.b32.xlu0 %v2776, 104
    %v2783 = vpop.permute.xlu0 %2782
    %v2784 = vpack.c.bf16 %v2103, %v2097
    %2786 = vrot.lane.b32.xlu0 %v2784, 120
    %v2787 = vpop.permute.xlu0 %2786
    %2788 = vrot.lane.b32.xlu0 %v2784, 112
    %v2789 = vpop.permute.xlu0 %2788
    %2790 = vrot.lane.b32.xlu0 %v2784, 104
    %v2791 = vpop.permute.xlu0 %2790
    %v2793 = vsel %vm373, %v2768, 0
    %v2796 = vsel %vm373, %v2776, 0
    %2798 = vmatprep.subr.bf16.mxu0 0
    %2799 = vmatpush1.bf16.xpose.msra.mxu0 0
    %2800 = vmatprep.subr.bf16.mxu0 0
    %2801 = vmatpush1.bf16.xpose.msra.mxu0 0
    %2802 = vmatprep.subr.bf16.mxu0 0
    %2803 = vmatpush1.bf16.xpose.msra.mxu0 0
    %2804 = vmatprep.subr.bf16.mxu0 0
    %2805 = vmatpush1.bf16.xpose.msra.mxu0 0
    %2806 = vmatprep.subr.bf16.mxu0 0
    %2807 = vmatpush1.bf16.xpose.msra.mxu0 0
    %2808 = vmatprep.subr.bf16.mxu0 0
    %2809 = vmatpush1.bf16.xpose.msra.mxu0 0
    %2810 = vmatprep.subr.bf16.mxu0 0
    %2811 = vmatpush1.bf16.xpose.msra.mxu0 0
    %2812 = vmatprep.subr.bf16.mxu0 0
    %2813 = vmatpush1.bf16.xpose.msra.mxu0 %v2796
    %2814 = vmatprep.subr.bf16.mxu0 0
    %2815 = vmatpush2.bf16.xpose.msra.mxu0 0
    %2816 = vmatprep.subr.bf16.mxu0 0
    %2817 = vmatpush2.bf16.xpose.msra.mxu0 0
    %2818 = vmatprep.subr.bf16.mxu0 0
    %2819 = vmatpush2.bf16.xpose.msra.mxu0 0
    %2820 = vmatprep.subr.bf16.mxu0 0
    %2821 = vmatpush2.bf16.xpose.msra.mxu0 0
    %2822 = vmatprep.subr.bf16.mxu0 0
    %2823 = vmatpush2.bf16.xpose.msra.mxu0 0
    %2824 = vmatprep.subr.bf16.mxu0 0
    %2825 = vmatpush2.bf16.xpose.msra.mxu0 0
    %2826 = vmatprep.subr.bf16.mxu0 0
    %2827 = vmatpush2.bf16.xpose.msra.mxu0 0
    %2828 = vmatprep.subr.bf16.mxu0 0
    %2829 = vmatpush2.bf16.xpose.msra.mxu0 0
    %2830 = vmatprep.mubr.bf16.mxu0 0
    %2831 = vmatmul.mubr.bf16.gmra.mxu0 %v2793
    %v2832 = vpop.f32.mrf.mxu0
    %v2833 = vadd.f32 0.0, %v2832
    %v2834 = vpop.f32.mrf.mxu0
    %v2835 = vpop.f32.mrf.mxu0
    %v2836 = vpop.f32.mrf.mxu0
    %2837 = vdwg.mxu0
    %v2839 = vsel %vm373, %v2771, 0
    %v2842 = vsel %vm373, %v2779, 0
    %2844 = vmatprep.subr.bf16.mxu0 0
    %2845 = vmatpush1.bf16.xpose.msra.mxu0 0
    %2846 = vmatprep.subr.bf16.mxu0 0
    %2847 = vmatpush1.bf16.xpose.msra.mxu0 0
    %2848 = vmatprep.subr.bf16.mxu0 0
    %2849 = vmatpush1.bf16.xpose.msra.mxu0 0
    %2850 = vmatprep.subr.bf16.mxu0 0
    %2851 = vmatpush1.bf16.xpose.msra.mxu0 0
    %2852 = vmatprep.subr.bf16.mxu0 0
    %2853 = vmatpush1.bf16.xpose.msra.mxu0 0
    %2854 = vmatprep.subr.bf16.mxu0 0
    %2855 = vmatpush1.bf16.xpose.msra.mxu0 0
    %2856 = vmatprep.subr.bf16.mxu0 0
    %2857 = vmatpush1.bf16.xpose.msra.mxu0 0
    %2858 = vmatprep.subr.bf16.mxu0 0
    %2859 = vmatpush1.bf16.xpose.msra.mxu0 %v2842
    %2860 = vmatprep.subr.bf16.mxu0 0
    %2861 = vmatpush2.bf16.xpose.msra.mxu0 0
    %2862 = vmatprep.subr.bf16.mxu0 0
    %2863 = vmatpush2.bf16.xpose.msra.mxu0 0
    %2864 = vmatprep.subr.bf16.mxu0 0
    %2865 = vmatpush2.bf16.xpose.msra.mxu0 0
    %2866 = vmatprep.subr.bf16.mxu0 0
    %2867 = vmatpush2.bf16.xpose.msra.mxu0 0
    %2868 = vmatprep.subr.bf16.mxu0 0
    %2869 = vmatpush2.bf16.xpose.msra.mxu0 0
    %2870 = vmatprep.subr.bf16.mxu0 0
    %2871 = vmatpush2.bf16.xpose.msra.mxu0 0
    %2872 = vmatprep.subr.bf16.mxu0 0
    %2873 = vmatpush2.bf16.xpose.msra.mxu0 0
    %2874 = vmatprep.subr.bf16.mxu0 0
    %2875 = vmatpush2.bf16.xpose.msra.mxu0 0
    %2876 = vmatprep.mubr.bf16.mxu0 0
    %2877 = vmatmul.mubr.bf16.gmra.mxu0 %v2839
    %v2878 = vpop.f32.mrf.mxu0
    %v2879 = vadd.f32 0.0, %v2878
    %v2880 = vpop.f32.mrf.mxu0
    %v2881 = vpop.f32.mrf.mxu0
    %v2882 = vpop.f32.mrf.mxu0
    %2883 = vdwg.mxu0
    %v2885 = vsel %vm373, %v2773, 0
    %v2888 = vsel %vm373, %v2781, 0
    %2890 = vmatprep.subr.bf16.mxu0 0
    %2891 = vmatpush1.bf16.xpose.msra.mxu0 0
    %2892 = vmatprep.subr.bf16.mxu0 0
    %2893 = vmatpush1.bf16.xpose.msra.mxu0 0
    %2894 = vmatprep.subr.bf16.mxu0 0
    %2895 = vmatpush1.bf16.xpose.msra.mxu0 0
    %2896 = vmatprep.subr.bf16.mxu0 0
    %2897 = vmatpush1.bf16.xpose.msra.mxu0 0
    %2898 = vmatprep.subr.bf16.mxu0 0
    %2899 = vmatpush1.bf16.xpose.msra.mxu0 0
    %2900 = vmatprep.subr.bf16.mxu0 0
    %2901 = vmatpush1.bf16.xpose.msra.mxu0 0
    %2902 = vmatprep.subr.bf16.mxu0 0
    %2903 = vmatpush1.bf16.xpose.msra.mxu0 0
    %2904 = vmatprep.subr.bf16.mxu0 0
    %2905 = vmatpush1.bf16.xpose.msra.mxu0 %v2888
    %2906 = vmatprep.subr.bf16.mxu0 0
    %2907 = vmatpush2.bf16.xpose.msra.mxu0 0
    %2908 = vmatprep.subr.bf16.mxu0 0
    %2909 = vmatpush2.bf16.xpose.msra.mxu0 0
    %2910 = vmatprep.subr.bf16.mxu0 0
    %2911 = vmatpush2.bf16.xpose.msra.mxu0 0
    %2912 = vmatprep.subr.bf16.mxu0 0
    %2913 = vmatpush2.bf16.xpose.msra.mxu0 0
    %2914 = vmatprep.subr.bf16.mxu0 0
    %2915 = vmatpush2.bf16.xpose.msra.mxu0 0
    %2916 = vmatprep.subr.bf16.mxu0 0
    %2917 = vmatpush2.bf16.xpose.msra.mxu0 0
    %2918 = vmatprep.subr.bf16.mxu0 0
    %2919 = vmatpush2.bf16.xpose.msra.mxu0 0
    %2920 = vmatprep.subr.bf16.mxu0 0
    %2921 = vmatpush2.bf16.xpose.msra.mxu0 0
    %2922 = vmatprep.mubr.bf16.mxu0 0
    %2923 = vmatmul.mubr.bf16.gmra.mxu0 %v2885
    %v2924 = vpop.f32.mrf.mxu0
    %v2925 = vadd.f32 0.0, %v2924
    %v2926 = vpop.f32.mrf.mxu0
    %v2927 = vpop.f32.mrf.mxu0
    %v2928 = vpop.f32.mrf.mxu0
    %2929 = vdwg.mxu0
    %v2931 = vsel %vm373, %v2775, 0
    %v2934 = vsel %vm373, %v2783, 0
    %2936 = vmatprep.subr.bf16.mxu0 0
    %2937 = vmatpush1.bf16.xpose.msra.mxu0 0
    %2938 = vmatprep.subr.bf16.mxu0 0
    %2939 = vmatpush1.bf16.xpose.msra.mxu0 0
    %2940 = vmatprep.subr.bf16.mxu0 0
    %2941 = vmatpush1.bf16.xpose.msra.mxu0 0
    %2942 = vmatprep.subr.bf16.mxu0 0
    %2943 = vmatpush1.bf16.xpose.msra.mxu0 0
    %2944 = vmatprep.subr.bf16.mxu0 0
    %2945 = vmatpush1.bf16.xpose.msra.mxu0 0
    %2946 = vmatprep.subr.bf16.mxu0 0
    %2947 = vmatpush1.bf16.xpose.msra.mxu0 0
    %2948 = vmatprep.subr.bf16.mxu0 0
    %2949 = vmatpush1.bf16.xpose.msra.mxu0 0
    %2950 = vmatprep.subr.bf16.mxu0 0
    %2951 = vmatpush1.bf16.xpose.msra.mxu0 %v2934
    %2952 = vmatprep.subr.bf16.mxu0 0
    %2953 = vmatpush2.bf16.xpose.msra.mxu0 0
    %2954 = vmatprep.subr.bf16.mxu0 0
    %2955 = vmatpush2.bf16.xpose.msra.mxu0 0
    %2956 = vmatprep.subr.bf16.mxu0 0
    %2957 = vmatpush2.bf16.xpose.msra.mxu0 0
    %2958 = vmatprep.subr.bf16.mxu0 0
    %2959 = vmatpush2.bf16.xpose.msra.mxu0 0
    %2960 = vmatprep.subr.bf16.mxu0 0
    %2961 = vmatpush2.bf16.xpose.msra.mxu0 0
    %2962 = vmatprep.subr.bf16.mxu0 0
    %2963 = vmatpush2.bf16.xpose.msra.mxu0 0
    %2964 = vmatprep.subr.bf16.mxu0 0
    %2965 = vmatpush2.bf16.xpose.msra.mxu0 0
    %2966 = vmatprep.subr.bf16.mxu0 0
    %2967 = vmatpush2.bf16.xpose.msra.mxu0 0
    %2968 = vmatprep.mubr.bf16.mxu0 0
    %2969 = vmatmul.mubr.bf16.gmra.mxu0 %v2931
    %v2970 = vpop.f32.mrf.mxu0
    %v2971 = vadd.f32 0.0, %v2970
    %v2972 = vpop.f32.mrf.mxu0
    %v2973 = vpop.f32.mrf.mxu0
    %v2974 = vpop.f32.mrf.mxu0
    %2975 = vdwg.mxu0
    %v2976 = vmul.f32 %v2833, 0.35355338
    %v2977 = vmul.f32 %v2879, 0.35355338
    %v2978 = vmul.f32 %v2925, 0.35355338
    %v2979 = vmul.f32 %v2971, 0.35355338
    %v2980 = vadd.f32 %v2976, %v2767
    %v2981 = vadd.f32 %v2977, %v2767
    %v2982 = vadd.f32 %v2978, %v2767
    %v2983 = vadd.f32 %v2979, %v2767
    %v2984 = vsel %vm2322, %v2980, -inf
    %2985 = vmax.xlane.f32.xlu0 %v2984
    %v2986 = vpop.xlane.xlu0 %2985
    %v2987 = vsel %vm2322, %v2981, -inf
    %2988 = vmax.xlane.f32.xlu0 %v2987
    %v2989 = vpop.xlane.xlu0 %2988
    %v2990 = vsel %vm2322, %v2982, -inf
    %2991 = vmax.xlane.f32.xlu0 %v2990
    %v2992 = vpop.xlane.xlu0 %2991
    %v2993 = vsel %vm2322, %v2983, -inf
    %2994 = vmax.xlane.f32.xlu0 %v2993
    %v2995 = vpop.xlane.xlu0 %2994
    %v2996 = vsub.f32 %v2980, %v2986
    %v2997 = vsub.f32 %v2981, %v2989
    %v2998 = vsub.f32 %v2982, %v2992
    %v2999 = vsub.f32 %v2983, %v2995
    %v3000 = vmul.f32 %v2996, 1.442695
    %v3001 = vpow.pop %v3000
    %v3002 = vmul.f32 %v2997, 1.442695
    %v3003 = vpow.pop %v3002
    %v3004 = vmul.f32 %v2998, 1.442695
    %v3005 = vpow.pop %v3004
    %v3006 = vmul.f32 %v2999, 1.442695
    %v3007 = vpow.pop %v3006
    %v3008 = vsel %vm2322, %v3001, 0.0
    %3009 = vadd.xlane.f32.xlu0 %v3008
    %v3010 = vpop.xlane.xlu0 %3009
    %v3011 = vsel %vm2322, %v3003, 0.0
    %3012 = vadd.xlane.f32.xlu0 %v3011
    %v3013 = vpop.xlane.xlu0 %3012
    %v3014 = vsel %vm2322, %v3005, 0.0
    %3015 = vadd.xlane.f32.xlu0 %v3014
    %v3016 = vpop.xlane.xlu0 %3015
    %v3017 = vsel %vm2322, %v3007, 0.0
    %3018 = vadd.xlane.f32.xlu0 %v3017
    %v3019 = vpop.xlane.xlu0 %3018
    %v3020 = vrcp.pop %v3010
    %v3021 = vmul.f32 %v3001, %v3020
    %v3022 = vrcp.pop %v3013
    %v3023 = vmul.f32 %v3003, %v3022
    %v3024 = vrcp.pop %v3016
    %v3025 = vmul.f32 %v3005, %v3024
    %v3026 = vrcp.pop %v3019
    %v3027 = vmul.f32 %v3007, %v3026
    %v3028 = vpack.c.bf16 %v3021, %v3021
    %v3029 = vpack.c.bf16 %v3023, %v3023
    %v3030 = vpack.c.bf16 %v3025, %v3025
    %v3031 = vpack.c.bf16 %v3027, %v3027
    %3032 = vrot.lane.b32.xlu0 %v2784, 96
    %v3033 = vpop.permute.xlu0 %3032
    %v3035 = vsel %vm2322, %v3028, 0
    %v3038 = vsel %vm2376, %v3033, 0
    %3040 = vmatprep.subr.bf16.mxu0 0
    %3041 = vmatpush1.bf16.msra.mxu0 0
    %3042 = vmatprep.subr.bf16.mxu0 0
    %3043 = vmatpush1.bf16.msra.mxu0 0
    %3044 = vmatprep.subr.bf16.mxu0 0
    %3045 = vmatpush1.bf16.msra.mxu0 0
    %3046 = vmatprep.subr.bf16.mxu0 0
    %3047 = vmatpush1.bf16.msra.mxu0 0
    %3048 = vmatprep.subr.bf16.mxu0 0
    %3049 = vmatpush1.bf16.msra.mxu0 0
    %3050 = vmatprep.subr.bf16.mxu0 0
    %3051 = vmatpush1.bf16.msra.mxu0 0
    %3052 = vmatprep.subr.bf16.mxu0 0
    %3053 = vmatpush1.bf16.msra.mxu0 0
    %3054 = vmatprep.subr.bf16.mxu0 0
    %3055 = vmatpush1.bf16.msra.mxu0 %v3038
    %3056 = vmatprep.subr.bf16.mxu0 0
    %3057 = vmatpush2.bf16.msra.mxu0 0
    %3058 = vmatprep.subr.bf16.mxu0 0
    %3059 = vmatpush2.bf16.msra.mxu0 0
    %3060 = vmatprep.subr.bf16.mxu0 0
    %3061 = vmatpush2.bf16.msra.mxu0 0
    %3062 = vmatprep.subr.bf16.mxu0 0
    %3063 = vmatpush2.bf16.msra.mxu0 0
    %3064 = vmatprep.subr.bf16.mxu0 0
    %3065 = vmatpush2.bf16.msra.mxu0 0
    %3066 = vmatprep.subr.bf16.mxu0 0
    %3067 = vmatpush2.bf16.msra.mxu0 0
    %3068 = vmatprep.subr.bf16.mxu0 0
    %3069 = vmatpush2.bf16.msra.mxu0 0
    %3070 = vmatprep.subr.bf16.mxu0 0
    %3071 = vmatpush2.bf16.msra.mxu0 0
    %3072 = vmatprep.mubr.bf16.mxu0 0
    %3073 = vmatmul.mubr.bf16.gmra.mxu0 %v3035
    %v3074 = vpop.f32.mrf.mxu0
    %v3075 = vadd.f32 0.0, %v3074
    %v3076 = vpop.f32.mrf.mxu0
    %v3077 = vpop.f32.mrf.mxu0
    %v3078 = vpop.f32.mrf.mxu0
    %3079 = vdwg.mxu0
    %3080 = vrot.lane.b32.xlu0 %v2787, 96
    %v3081 = vpop.permute.xlu0 %3080
    %v3083 = vsel %vm2322, %v3029, 0
    %v3086 = vsel %vm2376, %v3081, 0
    %3088 = vmatprep.subr.bf16.mxu0 0
    %3089 = vmatpush1.bf16.msra.mxu0 0
    %3090 = vmatprep.subr.bf16.mxu0 0
    %3091 = vmatpush1.bf16.msra.mxu0 0
    %3092 = vmatprep.subr.bf16.mxu0 0
    %3093 = vmatpush1.bf16.msra.mxu0 0
    %3094 = vmatprep.subr.bf16.mxu0 0
    %3095 = vmatpush1.bf16.msra.mxu0 0
    %3096 = vmatprep.subr.bf16.mxu0 0
    %3097 = vmatpush1.bf16.msra.mxu0 0
    %3098 = vmatprep.subr.bf16.mxu0 0
    %3099 = vmatpush1.bf16.msra.mxu0 0
    %3100 = vmatprep.subr.bf16.mxu0 0
    %3101 = vmatpush1.bf16.msra.mxu0 0
    %3102 = vmatprep.subr.bf16.mxu0 0
    %3103 = vmatpush1.bf16.msra.mxu0 %v3086
    %3104 = vmatprep.subr.bf16.mxu0 0
    %3105 = vmatpush2.bf16.msra.mxu0 0
    %3106 = vmatprep.subr.bf16.mxu0 0
    %3107 = vmatpush2.bf16.msra.mxu0 0
    %3108 = vmatprep.subr.bf16.mxu0 0
    %3109 = vmatpush2.bf16.msra.mxu0 0
    %3110 = vmatprep.subr.bf16.mxu0 0
    %3111 = vmatpush2.bf16.msra.mxu0 0
    %3112 = vmatprep.subr.bf16.mxu0 0
    %3113 = vmatpush2.bf16.msra.mxu0 0
    %3114 = vmatprep.subr.bf16.mxu0 0
    %3115 = vmatpush2.bf16.msra.mxu0 0
    %3116 = vmatprep.subr.bf16.mxu0 0
    %3117 = vmatpush2.bf16.msra.mxu0 0
    %3118 = vmatprep.subr.bf16.mxu0 0
    %3119 = vmatpush2.bf16.msra.mxu0 0
    %3120 = vmatprep.mubr.bf16.mxu0 0
    %3121 = vmatmul.mubr.bf16.gmra.mxu0 %v3083
    %v3122 = vpop.f32.mrf.mxu0
    %v3123 = vadd.f32 0.0, %v3122
    %v3124 = vpop.f32.mrf.mxu0
    %v3125 = vpop.f32.mrf.mxu0
    %v3126 = vpop.f32.mrf.mxu0
    %3127 = vdwg.mxu0
    %3128 = vrot.lane.b32.xlu0 %v2789, 96
    %v3129 = vpop.permute.xlu0 %3128
    %v3131 = vsel %vm2322, %v3030, 0
    %v3134 = vsel %vm2376, %v3129, 0
    %3136 = vmatprep.subr.bf16.mxu0 0
    %3137 = vmatpush1.bf16.msra.mxu0 0
    %3138 = vmatprep.subr.bf16.mxu0 0
    %3139 = vmatpush1.bf16.msra.mxu0 0
    %3140 = vmatprep.subr.bf16.mxu0 0
    %3141 = vmatpush1.bf16.msra.mxu0 0
    %3142 = vmatprep.subr.bf16.mxu0 0
    %3143 = vmatpush1.bf16.msra.mxu0 0
    %3144 = vmatprep.subr.bf16.mxu0 0
    %3145 = vmatpush1.bf16.msra.mxu0 0
    %3146 = vmatprep.subr.bf16.mxu0 0
    %3147 = vmatpush1.bf16.msra.mxu0 0
    %3148 = vmatprep.subr.bf16.mxu0 0
    %3149 = vmatpush1.bf16.msra.mxu0 0
    %3150 = vmatprep.subr.bf16.mxu0 0
    %3151 = vmatpush1.bf16.msra.mxu0 %v3134
    %3152 = vmatprep.subr.bf16.mxu0 0
    %3153 = vmatpush2.bf16.msra.mxu0 0
    %3154 = vmatprep.subr.bf16.mxu0 0
    %3155 = vmatpush2.bf16.msra.mxu0 0
    %3156 = vmatprep.subr.bf16.mxu0 0
    %3157 = vmatpush2.bf16.msra.mxu0 0
    %3158 = vmatprep.subr.bf16.mxu0 0
    %3159 = vmatpush2.bf16.msra.mxu0 0
    %3160 = vmatprep.subr.bf16.mxu0 0
    %3161 = vmatpush2.bf16.msra.mxu0 0
    %3162 = vmatprep.subr.bf16.mxu0 0
    %3163 = vmatpush2.bf16.msra.mxu0 0
    %3164 = vmatprep.subr.bf16.mxu0 0
    %3165 = vmatpush2.bf16.msra.mxu0 0
    %3166 = vmatprep.subr.bf16.mxu0 0
    %3167 = vmatpush2.bf16.msra.mxu0 0
    %3168 = vmatprep.mubr.bf16.mxu0 0
    %3169 = vmatmul.mubr.bf16.gmra.mxu0 %v3131
    %v3170 = vpop.f32.mrf.mxu0
    %v3171 = vadd.f32 0.0, %v3170
    %v3172 = vpop.f32.mrf.mxu0
    %v3173 = vpop.f32.mrf.mxu0
    %v3174 = vpop.f32.mrf.mxu0
    %3175 = vdwg.mxu0
    %3176 = vrot.lane.b32.xlu0 %v2791, 96
    %v3177 = vpop.permute.xlu0 %3176
    %v3179 = vsel %vm2322, %v3031, 0
    %v3182 = vsel %vm2376, %v3177, 0
    %3184 = vmatprep.subr.bf16.mxu0 0
    %3185 = vmatpush1.bf16.msra.mxu0 0
    %3186 = vmatprep.subr.bf16.mxu0 0
    %3187 = vmatpush1.bf16.msra.mxu0 0
    %3188 = vmatprep.subr.bf16.mxu0 0
    %3189 = vmatpush1.bf16.msra.mxu0 0
    %3190 = vmatprep.subr.bf16.mxu0 0
    %3191 = vmatpush1.bf16.msra.mxu0 0
    %3192 = vmatprep.subr.bf16.mxu0 0
    %3193 = vmatpush1.bf16.msra.mxu0 0
    %3194 = vmatprep.subr.bf16.mxu0 0
    %3195 = vmatpush1.bf16.msra.mxu0 0
    %3196 = vmatprep.subr.bf16.mxu0 0
    %3197 = vmatpush1.bf16.msra.mxu0 0
    %3198 = vmatprep.subr.bf16.mxu0 0
    %3199 = vmatpush1.bf16.msra.mxu0 %v3182
    %3200 = vmatprep.subr.bf16.mxu0 0
    %3201 = vmatpush2.bf16.msra.mxu0 0
    %3202 = vmatprep.subr.bf16.mxu0 0
    %3203 = vmatpush2.bf16.msra.mxu0 0
    %3204 = vmatprep.subr.bf16.mxu0 0
    %3205 = vmatpush2.bf16.msra.mxu0 0
    %3206 = vmatprep.subr.bf16.mxu0 0
    %3207 = vmatpush2.bf16.msra.mxu0 0
    %3208 = vmatprep.subr.bf16.mxu0 0
    %3209 = vmatpush2.bf16.msra.mxu0 0
    %3210 = vmatprep.subr.bf16.mxu0 0
    %3211 = vmatpush2.bf16.msra.mxu0 0
    %3212 = vmatprep.subr.bf16.mxu0 0
    %3213 = vmatpush2.bf16.msra.mxu0 0
    %3214 = vmatprep.subr.bf16.mxu0 0
    %3215 = vmatpush2.bf16.msra.mxu0 0
    %3216 = vmatprep.mubr.bf16.mxu0 0
    %3217 = vmatmul.mubr.bf16.gmra.mxu0 %v3179
    %v3218 = vpop.f32.mrf.mxu0
    %v3219 = vadd.f32 0.0, %v3218
    %v3220 = vpop.f32.mrf.mxu0
    %v3221 = vpop.f32.mrf.mxu0
    %v3222 = vpop.f32.mrf.mxu0
    %3223 = vdwg.mxu0
    %v3224 = vpack.c.bf16 %v3075, %v3075
    %v3225 = vld [vmem:[%s12] sm:$0xf]
    %v3227 = vsel %vm373, %v3224, 0
    %v3230 = vsel %vm810, %v3225, 0
    %3232 = vmatprep.subr.bf16.mxu0 0
    %3233 = vmatpush1.bf16.msra.mxu0 0
    %3234 = vmatprep.subr.bf16.mxu0 0
    %3235 = vmatpush1.bf16.msra.mxu0 0
    %3236 = vmatprep.subr.bf16.mxu0 0
    %3237 = vmatpush1.bf16.msra.mxu0 0
    %3238 = vmatprep.subr.bf16.mxu0 0
    %3239 = vmatpush1.bf16.msra.mxu0 0
    %3240 = vmatprep.subr.bf16.mxu0 0
    %3241 = vmatpush1.bf16.msra.mxu0 0
    %3242 = vmatprep.subr.bf16.mxu0 0
    %3243 = vmatpush1.bf16.msra.mxu0 0
    %3244 = vmatprep.subr.bf16.mxu0 0
    %3245 = vmatpush1.bf16.msra.mxu0 0
    %3246 = vmatprep.subr.bf16.mxu0 0
    %3247 = vmatpush1.bf16.msra.mxu0 %v3230
    %3248 = vmatprep.subr.bf16.mxu0 0
    %3249 = vmatpush2.bf16.msra.mxu0 0
    %3250 = vmatprep.subr.bf16.mxu0 0
    %3251 = vmatpush2.bf16.msra.mxu0 0
    %3252 = vmatprep.subr.bf16.mxu0 0
    %3253 = vmatpush2.bf16.msra.mxu0 0
    %3254 = vmatprep.subr.bf16.mxu0 0
    %3255 = vmatpush2.bf16.msra.mxu0 0
    %3256 = vmatprep.subr.bf16.mxu0 0
    %3257 = vmatpush2.bf16.msra.mxu0 0
    %3258 = vmatprep.subr.bf16.mxu0 0
    %3259 = vmatpush2.bf16.msra.mxu0 0
    %3260 = vmatprep.subr.bf16.mxu0 0
    %3261 = vmatpush2.bf16.msra.mxu0 0
    %3262 = vmatprep.subr.bf16.mxu0 0
    %3263 = vmatpush2.bf16.msra.mxu0 0
    %3264 = vmatprep.mubr.bf16.mxu0 0
    %3265 = vmatmul.mubr.bf16.gmra.mxu0 %v3227
    %v3266 = vpop.f32.mrf.mxu0
    %v3267 = vadd.f32 0.0, %v3266
    %v3268 = vpop.f32.mrf.mxu0
    %v3269 = vpop.f32.mrf.mxu0
    %v3270 = vpop.f32.mrf.mxu0
    %3271 = vdwg.mxu0
    %v3272 = vadd.f32 %v2615, %v3267
    %v3273 = vpack.c.bf16 %v3123, %v3123
    %v3274 = vld [vmem:[%s2618] sm:$0xf]
    %v3276 = vsel %vm373, %v3273, 0
    %v3279 = vsel %vm810, %v3274, 0
    %3281 = vmatprep.subr.bf16.mxu0 0
    %3282 = vmatpush1.bf16.msra.mxu0 0
    %3283 = vmatprep.subr.bf16.mxu0 0
    %3284 = vmatpush1.bf16.msra.mxu0 0
    %3285 = vmatprep.subr.bf16.mxu0 0
    %3286 = vmatpush1.bf16.msra.mxu0 0
    %3287 = vmatprep.subr.bf16.mxu0 0
    %3288 = vmatpush1.bf16.msra.mxu0 0
    %3289 = vmatprep.subr.bf16.mxu0 0
    %3290 = vmatpush1.bf16.msra.mxu0 0
    %3291 = vmatprep.subr.bf16.mxu0 0
    %3292 = vmatpush1.bf16.msra.mxu0 0
    %3293 = vmatprep.subr.bf16.mxu0 0
    %3294 = vmatpush1.bf16.msra.mxu0 0
    %3295 = vmatprep.subr.bf16.mxu0 0
    %3296 = vmatpush1.bf16.msra.mxu0 %v3279
    %3297 = vmatprep.subr.bf16.mxu0 0
    %3298 = vmatpush2.bf16.msra.mxu0 0
    %3299 = vmatprep.subr.bf16.mxu0 0
    %3300 = vmatpush2.bf16.msra.mxu0 0
    %3301 = vmatprep.subr.bf16.mxu0 0
    %3302 = vmatpush2.bf16.msra.mxu0 0
    %3303 = vmatprep.subr.bf16.mxu0 0
    %3304 = vmatpush2.bf16.msra.mxu0 0
    %3305 = vmatprep.subr.bf16.mxu0 0
    %3306 = vmatpush2.bf16.msra.mxu0 0
    %3307 = vmatprep.subr.bf16.mxu0 0
    %3308 = vmatpush2.bf16.msra.mxu0 0
    %3309 = vmatprep.subr.bf16.mxu0 0
    %3310 = vmatpush2.bf16.msra.mxu0 0
    %3311 = vmatprep.subr.bf16.mxu0 0
    %3312 = vmatpush2.bf16.msra.mxu0 0
    %3313 = vmatprep.mubr.bf16.mxu0 0
    %3314 = vmatmul.mubr.bf16.gmra.mxu0 %v3276
    %v3315 = vpop.f32.mrf.mxu0
    %v3316 = vadd.f32 0.0, %v3315
    %v3317 = vpop.f32.mrf.mxu0
    %v3318 = vpop.f32.mrf.mxu0
    %v3319 = vpop.f32.mrf.mxu0
    %3320 = vdwg.mxu0
    %v3321 = vadd.f32 %v3272, %v3316
    %v3322 = vpack.c.bf16 %v3171, %v3171
    %v3323 = vld [vmem:[%s2668] sm:$0xf]
    %v3325 = vsel %vm373, %v3322, 0
    %v3328 = vsel %vm810, %v3323, 0
    %3330 = vmatprep.subr.bf16.mxu0 0
    %3331 = vmatpush1.bf16.msra.mxu0 0
    %3332 = vmatprep.subr.bf16.mxu0 0
    %3333 = vmatpush1.bf16.msra.mxu0 0
    %3334 = vmatprep.subr.bf16.mxu0 0
    %3335 = vmatpush1.bf16.msra.mxu0 0
    %3336 = vmatprep.subr.bf16.mxu0 0
    %3337 = vmatpush1.bf16.msra.mxu0 0
    %3338 = vmatprep.subr.bf16.mxu0 0
    %3339 = vmatpush1.bf16.msra.mxu0 0
    %3340 = vmatprep.subr.bf16.mxu0 0
    %3341 = vmatpush1.bf16.msra.mxu0 0
    %3342 = vmatprep.subr.bf16.mxu0 0
    %3343 = vmatpush1.bf16.msra.mxu0 0
    %3344 = vmatprep.subr.bf16.mxu0 0
    %3345 = vmatpush1.bf16.msra.mxu0 %v3328
    %3346 = vmatprep.subr.bf16.mxu0 0
    %3347 = vmatpush2.bf16.msra.mxu0 0
    %3348 = vmatprep.subr.bf16.mxu0 0
    %3349 = vmatpush2.bf16.msra.mxu0 0
    %3350 = vmatprep.subr.bf16.mxu0 0
    %3351 = vmatpush2.bf16.msra.mxu0 0
    %3352 = vmatprep.subr.bf16.mxu0 0
    %3353 = vmatpush2.bf16.msra.mxu0 0
    %3354 = vmatprep.subr.bf16.mxu0 0
    %3355 = vmatpush2.bf16.msra.mxu0 0
    %3356 = vmatprep.subr.bf16.mxu0 0
    %3357 = vmatpush2.bf16.msra.mxu0 0
    %3358 = vmatprep.subr.bf16.mxu0 0
    %3359 = vmatpush2.bf16.msra.mxu0 0
    %3360 = vmatprep.subr.bf16.mxu0 0
    %3361 = vmatpush2.bf16.msra.mxu0 0
    %3362 = vmatprep.mubr.bf16.mxu0 0
    %3363 = vmatmul.mubr.bf16.gmra.mxu0 %v3325
    %v3364 = vpop.f32.mrf.mxu0
    %v3365 = vadd.f32 0.0, %v3364
    %v3366 = vpop.f32.mrf.mxu0
    %v3367 = vpop.f32.mrf.mxu0
    %v3368 = vpop.f32.mrf.mxu0
    %3369 = vdwg.mxu0
    %v3370 = vadd.f32 %v3321, %v3365
    %v3371 = vpack.c.bf16 %v3219, %v3219
    %v3372 = vld [vmem:[%s2718] sm:$0xf]
    %v3374 = vsel %vm373, %v3371, 0
    %v3377 = vsel %vm810, %v3372, 0
    %3379 = vmatprep.subr.bf16.mxu0 0
    %3380 = vmatpush1.bf16.msra.mxu0 0
    %3381 = vmatprep.subr.bf16.mxu0 0
    %3382 = vmatpush1.bf16.msra.mxu0 0
    %3383 = vmatprep.subr.bf16.mxu0 0
    %3384 = vmatpush1.bf16.msra.mxu0 0
    %3385 = vmatprep.subr.bf16.mxu0 0
    %3386 = vmatpush1.bf16.msra.mxu0 0
    %3387 = vmatprep.subr.bf16.mxu0 0
    %3388 = vmatpush1.bf16.msra.mxu0 0
    %3389 = vmatprep.subr.bf16.mxu0 0
    %3390 = vmatpush1.bf16.msra.mxu0 0
    %3391 = vmatprep.subr.bf16.mxu0 0
    %3392 = vmatpush1.bf16.msra.mxu0 0
    %3393 = vmatprep.subr.bf16.mxu0 0
    %3394 = vmatpush1.bf16.msra.mxu0 %v3377
    %3395 = vmatprep.subr.bf16.mxu0 0
    %3396 = vmatpush2.bf16.msra.mxu0 0
    %3397 = vmatprep.subr.bf16.mxu0 0
    %3398 = vmatpush2.bf16.msra.mxu0 0
    %3399 = vmatprep.subr.bf16.mxu0 0
    %3400 = vmatpush2.bf16.msra.mxu0 0
    %3401 = vmatprep.subr.bf16.mxu0 0
    %3402 = vmatpush2.bf16.msra.mxu0 0
    %3403 = vmatprep.subr.bf16.mxu0 0
    %3404 = vmatpush2.bf16.msra.mxu0 0
    %3405 = vmatprep.subr.bf16.mxu0 0
    %3406 = vmatpush2.bf16.msra.mxu0 0
    %3407 = vmatprep.subr.bf16.mxu0 0
    %3408 = vmatpush2.bf16.msra.mxu0 0
    %3409 = vmatprep.subr.bf16.mxu0 0
    %3410 = vmatpush2.bf16.msra.mxu0 0
    %3411 = vmatprep.mubr.bf16.mxu0 0
    %3412 = vmatmul.mubr.bf16.gmra.mxu0 %v3374
    %v3413 = vpop.f32.mrf.mxu0
    %v3414 = vadd.f32 0.0, %v3413
    %v3415 = vpop.f32.mrf.mxu0
    %v3416 = vpop.f32.mrf.mxu0
    %v3417 = vpop.f32.mrf.mxu0
    %3418 = vdwg.mxu0
    %v3419 = vadd.f32 %v3370, %v3414
    %v3420 = vadd.f32 %v1920, %v2766
    %v3421 = vadd.f32 %v1921, %v3419
    %3422 = vst.msk [vmem:[%s18] sm:$0xff] %vm90, %v3420
    %s3423 = scalar_lea.vmem %s18, 8
    %3424 = vst.msk [vmem:[%s3423] sm:$0xff] %vm90, %v3421
    // Predicated region
    $region74: #{hoi_transformer_forward.3} parent=1 // pred_check
      _
    $region75: #{hoi_transformer_forward.3} parent=1 // pred_check_branch
      %3426 = sbr.rel (0) target = $region77
    $region76: #{hoi_transformer_forward.3} parent=1 // pred_region
      _
    $region77: #{hoi_transformer_forward.3} parent=1 // pred_fallthru
      _
    // Predicated region
    $region78: #{hoi_transformer_forward.3} parent=1 // pred_check
      _
    $region79: #{hoi_transformer_forward.3} parent=1 // pred_check_branch
      %3428 = sbr.rel (0) target = $region81
    $region80: #{hoi_transformer_forward.3} parent=1 // pred_region
      %s3430 = ssub.s32 256, 256
      %3431 = vsyncadd [#allocation3], %s3430
      %s3432 = sshll.u32 [#allocation2], 4
      %s3433 = int_to_ptr.vmem [resolvable:$true] %s3432
      %3438 = dma.vmem_to_hbm [thread:$0]  %s3433, 256, %s19, [#allocation3], 128, 128, 8
    $region81: #{hoi_transformer_forward.3} parent=1 // pred_fallthru
      _
    // Predicated region
    $region82: #{hoi_transformer_forward.3} parent=1 // pred_check
      _
    $region83: #{hoi_transformer_forward.3} parent=1 // pred_check_branch
      %3440 = sbr.rel (0) target = $region85
    $region84: #{hoi_transformer_forward.3} parent=1 // pred_region
      _
    $region85: #{hoi_transformer_forward.3} parent=1 // pred_fallthru
      _
    // Predicated region
    $region86: #{hoi_transformer_forward.3} parent=1 // pred_check
      _
    $region87: #{hoi_transformer_forward.3} parent=1 // pred_check_branch
      %3442 = sbr.rel (0) target = $region89
    $region88: #{hoi_transformer_forward.3} parent=1 // pred_region
      %3443 = dma.done [#allocation3], 256
    $region89: #{hoi_transformer_forward.3} parent=1 // pred_fallthru
      _
    %3444 = vsyncpa [#allocation3], 1

</llo_original>
